<compile_context>
chip_gen: v6e
topology: v6e:2x2x1
jax: 0.10.0
libtpu: 0.0.40
codegen_flags: <defaults>
</compile_context>

<pallas_src>
import jax
import jax.numpy as jnp
import numpy as np
from jax.experimental import pallas as pl
from jax.experimental.pallas import tpu as pltpu

_EPS = 1e-3                      # BatchNorm3d eps in the reference module
_C12 = 256                       # branch1a(192) + branch2a(48) padded to 256
# Leave headroom below the smallest physical VMEM (v7x: 64 MiB per TensorCore).
_VMEM_LIMIT = 48 * 1024 * 1024


def _pick_block_rows(m, cap=2048):
    """Largest row-block <= cap that divides m (multiple of 8), else m."""
    if m <= cap:
        return m
    for bm in range(cap - cap % 8, 7, -8):
        if m % bm == 0:
            return bm
    return m


def _pick_td(depth, hw, cap=4096):
    """Output-depth slices per grid step (MXU rows per matmul = td * H * W)."""
    best = 1
    for td in range(1, depth + 1):
        if depth % td == 0 and td * hw <= cap:
            best = td
    return best


# ---------------------------------------------------------------------------
# Kernel 1: all three 1x1x1 Conv3d branches (bias=False) + folded BN + ReLU.
# One input read, two lane-dense outputs:
#   o0  (M, 384) f32  -> branch0 (goes straight into the final concat)
#   o12 (M, 256) bf16 -> [branch1a | branch2a | zeros]  (feeds the 3x3x3 conv)
# ---------------------------------------------------------------------------
def fused_pointwise(x2d, w0, b0, w12, b12):
    M, Cin = x2d.shape
    C0 = int(w0.shape[1])
    C12 = int(w12.shape[1])
    bm = _pick_block_rows(M)

    def kernel(x_ref, w0_ref, b0_ref, w12_ref, b12_ref, o0_ref, o12_ref):
        x = x_ref[...]                                         # (bm, Cin) bf16
        y0 = jnp.dot(x, w0_ref[...], preferred_element_type=jnp.float32)
        o0_ref[...] = jnp.maximum(y0 + b0_ref[...], 0.0)
        y12 = jnp.dot(x, w12_ref[...], preferred_element_type=jnp.float32)
        o12_ref[...] = jnp.maximum(y12 + b12_ref[...], 0.0).astype(jnp.bfloat16)

    return pl.pallas_call(
        kernel,
        out_shape=(jax.ShapeDtypeStruct((M, C0), jnp.float32),
                   jax.ShapeDtypeStruct((M, C12), jnp.bfloat16)),
        grid=(M // bm,),
        in_specs=[
            pl.BlockSpec((bm, Cin), lambda i: (i, 0)),
            pl.BlockSpec((Cin, C0), lambda i: (0, 0)),
            pl.BlockSpec((1, C0), lambda i: (0, 0)),
            pl.BlockSpec((Cin, C12), lambda i: (0, 0)),
            pl.BlockSpec((1, C12), lambda i: (0, 0)),
        ],
        out_specs=(pl.BlockSpec((bm, C0), lambda i: (i, 0)),
                   pl.BlockSpec((bm, C12), lambda i: (i, 0))),
        compiler_params=pltpu.CompilerParams(
            dimension_semantics=("parallel",),
            vmem_limit_bytes=_VMEM_LIMIT,
        ),
    )(x2d, w0, b0, w12, b12)


# ---------------------------------------------------------------------------
# Kernel 2: fused 3x3x3 Conv3d (stride 1, pad 1, bias=False) + BN + ReLU for
# branch1b AND branch2b (block-diagonal weight over the 256-ch t12 slab).
# The zero-padded input slab is built once per batch in a VMEM scratch.
# ---------------------------------------------------------------------------
def conv3x3x3_bn_relu(x_ndhwc, w27, bias):
    """x: (N, D, H, W, Cin) bf16; w27: (27, Cin, Cout) bf16; bias: (1, Cout) f32."""
    N, D, H, W, Cin = x_ndhwc.shape
    Cout = int(w27.shape[-1])
    td = _pick_td(D, H * W)
    M = td * H * W
    nd = D // td
    Dp, Hp, Wp = D + 2, H + 2, W + 2

    def kernel(x_ref, w_ref, b_ref, o_ref, xpad_ref, acc_ref):
        dt = pl.program_id(1)

        @pl.when(dt == 0)                      # build the padded slab per batch
        def _():
            xpad_ref[...] = jnp.zeros_like(xpad_ref)
            xpad_ref[1:D + 1, 1:H + 1, 1:W + 1, :] = x_ref[...]

        d0 = dt * td
        for kd in range(3):
            for kh in range(3):
                c = None
                for kw in range(3):            # sum 3 kw taps before acc RMW
                    tap = xpad_ref[pl.ds(d0 + kd, td), kh:kh + H, kw:kw + W, :]
                    z = jnp.dot(tap.reshape(M, Cin),
                                w_ref[kd * 9 + kh * 3 + kw],
                                preferred_element_type=jnp.float32)
                    c = z if c is None else c + z
                if kd == 0 and kh == 0:
                    acc_ref[...] = c
                else:
                    acc_ref[...] += c
        o_ref[...] = jnp.maximum(acc_ref[...] + b_ref[...], 0.0)

    out = pl.pallas_call(
        kernel,
        out_shape=jax.ShapeDtypeStruct((N, nd, M, Cout), jnp.float32),
        grid=(N, nd),
        in_specs=[
            pl.BlockSpec((None, D, H, W, Cin), lambda n, dt: (n, 0, 0, 0, 0)),
            pl.BlockSpec((27, Cin, Cout), lambda n, dt: (0, 0, 0)),
            pl.BlockSpec((1, Cout), lambda n, dt: (0, 0)),
        ],
        out_specs=pl.BlockSpec((None, None, M, Cout), lambda n, dt: (n, dt, 0, 0)),
        scratch_shapes=[
            pltpu.VMEM((Dp, Hp, Wp, Cin), jnp.bfloat16),   # zero-padded slab
            pltpu.VMEM((M, Cout), jnp.float32),            # f32 accumulator
        ],
        compiler_params=pltpu.CompilerParams(
            dimension_semantics=("parallel", "arbitrary"),
            vmem_limit_bytes=_VMEM_LIMIT,
        ),
    )(x_ndhwc, w27, bias)
    return out.reshape(N, D, H, W, Cout)


# ---------------------------------------------------------------------------
# Kernel 3 (branch3): MaxPool3d(k=3, s=1, p=1) + 1x1x1 conv + BN + ReLU.
# Separable max (kw -> kh -> kd, 9 passes) in bf16; -inf padded slab built in
# VMEM once per batch; one (td*H*W, 832) x (832, 128) matmul per step.
# ---------------------------------------------------------------------------
def maxpool3_pointwise_bn_relu(x_ndhwc, w, bias):
    """x: (N, D, H, W, C) bf16; w: (C, Cout) bf16; bias: (1, Cout) f32."""
    N, D, H, W, C = x_ndhwc.shape
    Cout = int(w.shape[-1])
    td = _pick_td(D, H * W)
    M = td * H * W
    nd = D // td
    Dp, Hp, Wp = D + 2, H + 2, W + 2

    def kernel(x_ref, w_ref, b_ref, o_ref, xpad_ref, sa_ref, sb_ref):
        dt = pl.program_id(1)

        @pl.when(dt == 0)                      # -inf padded slab per batch
        def _():
            xpad_ref[...] = jnp.full_like(xpad_ref, -jnp.inf)
            xpad_ref[1:D + 1, 1:H + 1, 1:W + 1, :] = x_ref[...]

        d0 = dt * td
        # kw reduction: (td+2, Hp, W, C)
        sa_ref[...] = jnp.maximum(
            jnp.maximum(xpad_ref[pl.ds(d0, td + 2), :, 0:W, :],
                        xpad_ref[pl.ds(d0, td + 2), :, 1:W + 1, :]),
            xpad_ref[pl.ds(d0, td + 2), :, 2:W + 2, :])
        # kh reduction: (td+2, H, W, C)
        sb_ref[...] = jnp.maximum(
            jnp.maximum(sa_ref[:, 0:H], sa_ref[:, 1:H + 1]), sa_ref[:, 2:H + 2])
        # kd reduction: (td, H, W, C). -inf padding is safe: the centre tap is
        # always in-bounds so every pooled value reaching the dot is finite.
        sm = jnp.maximum(jnp.maximum(sb_ref[0:td], sb_ref[1:td + 1]),
                         sb_ref[2:td + 2])
        y = jnp.dot(sm.reshape(M, C), w_ref[...],
                    preferred_element_type=jnp.float32)
        o_ref[...] = jnp.maximum(y + b_ref[...], 0.0)

    out = pl.pallas_call(
        kernel,
        out_shape=jax.ShapeDtypeStruct((N, nd, M, Cout), jnp.float32),
        grid=(N, nd),
        in_specs=[
            pl.BlockSpec((None, D, H, W, C), lambda n, dt: (n, 0, 0, 0, 0)),
            pl.BlockSpec((C, Cout), lambda n, dt: (0, 0)),
            pl.BlockSpec((1, Cout), lambda n, dt: (0, 0)),
        ],
        out_specs=pl.BlockSpec((None, None, M, Cout), lambda n, dt: (n, dt, 0, 0)),
        scratch_shapes=[
            pltpu.VMEM((Dp, Hp, Wp, C), jnp.bfloat16),       # -inf padded slab
            pltpu.VMEM((td + 2, Hp, W, C), jnp.bfloat16),    # kw-reduced
            pltpu.VMEM((td + 2, H, W, C), jnp.bfloat16),     # kh-reduced
        ],
        compiler_params=pltpu.CompilerParams(
            dimension_semantics=("parallel", "arbitrary"),
            vmem_limit_bytes=_VMEM_LIMIT,
        ),
    )(x_ndhwc, w, bias)
    return out.reshape(N, D, H, W, Cout)


# ---------------------------------------------------------------------------
# Parameters (deterministic synthetic init; BN folded to scale/bias)
# ---------------------------------------------------------------------------
def init_params(key):
    ks = jax.random.split(key, 12)

    def conv_w(k, cin, cout, ksz=1):
        shape = (ksz, ksz, ksz, cin, cout) if ksz > 1 else (cin, cout)
        fan_in = cin * ksz ** 3
        return (jax.random.normal(k, shape, dtype=jnp.float32)
                * np.sqrt(2.0 / fan_in)).astype(jnp.float32)

    def bn(k, c):
        k1, k2, k3, k4 = jax.random.split(k, 4)
        gamma = jax.random.uniform(k1, (c,), minval=0.5, maxval=1.5, dtype=jnp.float32)
        beta = 0.1 * jax.random.normal(k2, (c,), dtype=jnp.float32)
        mean = 0.1 * jax.random.normal(k3, (c,), dtype=jnp.float32)
        var = jax.random.uniform(k4, (c,), minval=0.5, maxval=1.5, dtype=jnp.float32)
        scale = gamma / jnp.sqrt(var + _EPS)
        bias = beta - mean * scale
        return scale, bias

    p = {}
    p["b0_w"] = conv_w(ks[0], 832, 384);      p["b0_s"], p["b0_b"] = bn(ks[1], 384)
    p["b1a_w"] = conv_w(ks[2], 832, 192);     p["b1a_s"], p["b1a_b"] = bn(ks[3], 192)
    p["b1b_w"] = conv_w(ks[4], 192, 384, 3);  p["b1b_s"], p["b1b_b"] = bn(ks[5], 384)
    p["b2a_w"] = conv_w(ks[6], 832, 48);      p["b2a_s"], p["b2a_b"] = bn(ks[7], 48)
    p["b2b_w"] = conv_w(ks[8], 48, 128, 3);   p["b2b_s"], p["b2b_b"] = bn(ks[9], 128)
    p["b3_w"] = conv_w(ks[10], 832, 128);     p["b3_s"], p["b3_b"] = bn(ks[11], 128)
    return p


# ---------------------------------------------------------------------------
# Mixed_5c forward (Pallas kernels for all branch compute)
# ---------------------------------------------------------------------------
def mixed_5c(x_ncdhw, p):
    N, C, D, H, W = x_ncdhw.shape
    assert C == 832
    # One transpose+cast HBM pass shared by kernels 1 and 3.
    xl = jnp.transpose(x_ncdhw, (0, 2, 3, 4, 1)).astype(jnp.bfloat16)   # NDHWC bf16
    x2d = xl.reshape(N * D * H * W, C)

    # --- fold BN scale into weights (f32), cast to bf16 once -----------------
    w0 = (p["b0_w"] * p["b0_s"]).astype(jnp.bfloat16)                   # (832,384)
    b0 = p["b0_b"].reshape(1, -1)
    w12 = jnp.concatenate(
        [p["b1a_w"] * p["b1a_s"], p["b2a_w"] * p["b2a_s"],
         jnp.zeros((832, _C12 - 240), jnp.float32)], axis=1).astype(jnp.bfloat16)
    b12 = jnp.concatenate(
        [p["b1a_b"], p["b2a_b"], jnp.zeros((_C12 - 240,), jnp.float32)]).reshape(1, -1)

    # --- all three 1x1x1 branches: one fused matmul, lane-dense outputs ------
    y0_2d, t12_2d = fused_pointwise(x2d, w0, b0, w12, b12)
    y0 = y0_2d.reshape(N, D, H, W, 384)
    t12 = t12_2d.reshape(N, D, H, W, _C12)

    # --- fused branch1b+branch2b 3x3x3 conv (block-diagonal weights) ---------
    wc = jnp.zeros((3, 3, 3, _C12, 512), jnp.float32)
    wc = wc.at[..., 0:192, 0:384].set(p["b1b_w"] * p["b1b_s"])
    wc = wc.at[..., 192:240, 384:512].set(p["b2b_w"] * p["b2b_s"])
    w27 = wc.reshape(27, _C12, 512).astype(jnp.bfloat16)
    bc = jnp.concatenate([p["b1b_b"], p["b2b_b"]]).reshape(1, 512)
    y12 = conv3x3x3_bn_relu(t12, w27, bc)                   # (N,D,H,W,512) f32

    # --- branch3: maxpool + 1x1x1 conv ---------------------------------------
    w3 = (p["b3_w"] * p["b3_s"]).astype(jnp.bfloat16)
    b3 = p["b3_b"].reshape(1, -1)
    y3 = maxpool3_pointwise_bn_relu(xl, w3, b3)             # (N,D,H,W,128) f32

    out = jnp.concatenate([y0, y12, y3], axis=-1)           # (N,D,H,W,1024)
    return jnp.transpose(out, (0, 4, 1, 2, 3))              # NCDHW


# ---------------------------------------------------------------------------
# Pure-JAX reference (mirrors the kernels' bf16-operand / f32-accumulate math)
# ---------------------------------------------------------------------------
def mixed_5c_reference(x_ncdhw, p):
    xl = jnp.transpose(x_ncdhw, (0, 2, 3, 4, 1)).astype(jnp.bfloat16)

    def pw(x, w, s, b):
        w_eff = (w * s).astype(jnp.bfloat16)
        y = jnp.dot(x.reshape(-1, x.shape[-1]), w_eff,
                    preferred_element_type=jnp.float32)
        y = jnp.maximum(y + b.reshape(1, -1), 0.0)
        return y.reshape(x.shape[:-1] + (w.shape[-1],))

    def c3(x_bf, w, s, b):
        w_eff = (w * s).astype(jnp.bfloat16)
        y = jax.lax.conv_general_dilated(
            x_bf, w_eff, (1, 1, 1), [(1, 1)] * 3,
            dimension_numbers=("NDHWC", "DHWIO", "NDHWC"),
            preferred_element_type=jnp.float32)
        return jnp.maximum(y + b, 0.0)

    def mp(x_bf):
        return jax.lax.reduce_window(
            x_bf, jnp.array(-jnp.inf, x_bf.dtype), jax.lax.max,
            (1, 3, 3, 3, 1), (1, 1, 1, 1, 1),
            [(0, 0), (1, 1), (1, 1), (1, 1), (0, 0)])

    y0 = pw(xl, p["b0_w"], p["b0_s"], p["b0_b"])
    t1 = pw(xl, p["b1a_w"], p["b1a_s"], p["b1a_b"]).astype(jnp.bfloat16)
    t2 = pw(xl, p["b2a_w"], p["b2a_s"], p["b2a_b"]).astype(jnp.bfloat16)
    y1 = c3(t1, p["b1b_w"], p["b1b_s"], p["b1b_b"])
    y2 = c3(t2, p["b2b_w"], p["b2b_s"], p["b2b_b"])
    y3 = pw(mp(xl), p["b3_w"], p["b3_s"], p["b3_b"])
    out = jnp.concatenate([y0, y1, y2, y3], axis=-1)
    return jnp.transpose(out, (0, 4, 1, 2, 3))


if __name__ == "__main__":
    key = jax.random.PRNGKey(0)
    kx, kp = jax.random.split(key)
    # Small-but-consistent shapes: in_channels must be 832 for Mixed_5c.
    x = jax.random.normal(kx, (2, 832, 4, 8, 8), dtype=jnp.float32)
    params = init_params(kp)

    out = jax.block_until_ready(mixed_5c(x, params))
    assert out.shape == (2, 1024, 4, 8, 8), out.shape

    ref = jax.block_until_ready(mixed_5c_reference(x, params))
    err = float(jnp.max(jnp.abs(out - ref)))
    assert err < 1e-2, f"max abs error too large: {err}"

    print("KERNEL_OK")
</pallas_src>

<mosaic_0001>
module attributes {stable_mosaic.version = 11 : i64} {
  func.func @kernel(%arg0: i32, %arg1: memref<512x832xbf16, #tpu.memory_space<vmem>>, %arg2: memref<832x384xbf16, #tpu.memory_space<vmem>>, %arg3: memref<1x384xf32, #tpu.memory_space<vmem>>, %arg4: memref<832x256xbf16, #tpu.memory_space<vmem>>, %arg5: memref<1x256xf32, #tpu.memory_space<vmem>>, %arg6: memref<512x384xf32, #tpu.memory_space<vmem>>, %arg7: memref<512x256xbf16, #tpu.memory_space<vmem>>) attributes {dimension_semantics = [#tpu.dimension_semantics<parallel>], iteration_bounds = array<i64: 1>, scalar_prefetch = 0 : i64, scratch_operands = 0 : i64, tpu.core_type = #tpu.core_type<tc>, window_params = [{transform_indices = @transform_0, window_bounds = array<i64: 512, 832>}, {pipeline_mode = #tpu.pipeline_mode<synchronous>, transform_indices = @transform_1, window_bounds = array<i64: 832, 384>}, {pipeline_mode = #tpu.pipeline_mode<synchronous>, transform_indices = @transform_2, window_bounds = array<i64: 1, 384>}, {pipeline_mode = #tpu.pipeline_mode<synchronous>, transform_indices = @transform_3, window_bounds = array<i64: 832, 256>}, {pipeline_mode = #tpu.pipeline_mode<synchronous>, transform_indices = @transform_4, window_bounds = array<i64: 1, 256>}, {transform_indices = @transform_5, window_bounds = array<i64: 512, 384>}, {transform_indices = @transform_6, window_bounds = array<i64: 512, 256>}]} {
    %c0 = arith.constant 0 : index
    %c0_0 = arith.constant 0 : index
    %0 = vector.load %arg1[%c0, %c0_0] : memref<512x832xbf16, #tpu.memory_space<vmem>>, vector<512x832xbf16>
    %c0_1 = arith.constant 0 : index
    %c0_2 = arith.constant 0 : index
    %1 = vector.load %arg2[%c0_1, %c0_2] : memref<832x384xbf16, #tpu.memory_space<vmem>>, vector<832x384xbf16>
    %cst = arith.constant dense<0.000000e+00> : vector<512x384xf32>
    %2 = tpu.matmul %0, %1, %cst {dimension_numbers = #tpu.dot_dimension_numbers<[1], [0], [0], [1], [0, 0, 1, 1], [], []>} : vector<512x832xbf16>, vector<832x384xbf16>, vector<512x384xf32> -> vector<512x384xf32>
    %c0_3 = arith.constant 0 : index
    %c0_4 = arith.constant 0 : index
    %3 = vector.load %arg3[%c0_3, %c0_4] : memref<1x384xf32, #tpu.memory_space<vmem>>, vector<1x384xf32>
    %4 = vector.broadcast %3 : vector<1x384xf32> to vector<512x384xf32>
    %5 = arith.addf %2, %4 : vector<512x384xf32>
    %cst_5 = arith.constant 0.000000e+00 : f32
    %6 = vector.broadcast %cst_5 : f32 to vector<512x384xf32>
    %7 = arith.maximumf %5, %6 : vector<512x384xf32>
    %c0_6 = arith.constant 0 : index
    %c0_7 = arith.constant 0 : index
    %8 = vector.load %arg6[%c0_6, %c0_7] : memref<512x384xf32, #tpu.memory_space<vmem>>, vector<512x384xf32>
    tpu.vector_store %arg6[%c0_6, %c0_7], %7 {strides = array<i32>} : memref<512x384xf32, #tpu.memory_space<vmem>>, vector<512x384xf32>,
    %c0_8 = arith.constant 0 : index
    %c0_9 = arith.constant 0 : index
    %9 = vector.load %arg4[%c0_8, %c0_9] : memref<832x256xbf16, #tpu.memory_space<vmem>>, vector<832x256xbf16>
    %cst_10 = arith.constant dense<0.000000e+00> : vector<512x256xf32>
    %10 = tpu.matmul %0, %9, %cst_10 {dimension_numbers = #tpu.dot_dimension_numbers<[1], [0], [0], [1], [0, 0, 1, 1], [], []>} : vector<512x832xbf16>, vector<832x256xbf16>, vector<512x256xf32> -> vector<512x256xf32>
    %c0_11 = arith.constant 0 : index
    %c0_12 = arith.constant 0 : index
    %11 = vector.load %arg5[%c0_11, %c0_12] : memref<1x256xf32, #tpu.memory_space<vmem>>, vector<1x256xf32>
    %12 = vector.broadcast %11 : vector<1x256xf32> to vector<512x256xf32>
    %13 = arith.addf %10, %12 : vector<512x256xf32>
    %cst_13 = arith.constant 0.000000e+00 : f32
    %14 = vector.broadcast %cst_13 : f32 to vector<512x256xf32>
    %15 = arith.maximumf %13, %14 : vector<512x256xf32>
    %16 = arith.truncf %15 : vector<512x256xf32> to vector<512x256xbf16>
    %c0_14 = arith.constant 0 : index
    %c0_15 = arith.constant 0 : index
    %17 = vector.load %arg7[%c0_14, %c0_15] : memref<512x256xbf16, #tpu.memory_space<vmem>>, vector<512x256xbf16>
    tpu.vector_store %arg7[%c0_14, %c0_15], %16 {strides = array<i32>} : memref<512x256xbf16, #tpu.memory_space<vmem>>, vector<512x256xbf16>,
    return
  }
  func.func @transform_0(%arg0: i32) -> (i32, i32) {
    %c0_i32 = arith.constant 0 : i32
    %c0_i32_0 = arith.constant 0 : i32
    return %arg0, %c0_i32 : i32, i32
  }
  func.func @transform_1(%arg0: i32) -> (i32, i32) {
    %c0_i32 = arith.constant 0 : i32
    %c0_i32_0 = arith.constant 0 : i32
    %c0_i32_1 = arith.constant 0 : i32
    return %c0_i32, %c0_i32_0 : i32, i32
  }
  func.func @transform_2(%arg0: i32) -> (i32, i32) {
    %c0_i32 = arith.constant 0 : i32
    %c0_i32_0 = arith.constant 0 : i32
    %c0_i32_1 = arith.constant 0 : i32
    return %c0_i32, %c0_i32_0 : i32, i32
  }
  func.func @transform_3(%arg0: i32) -> (i32, i32) {
    %c0_i32 = arith.constant 0 : i32
    %c0_i32_0 = arith.constant 0 : i32
    %c0_i32_1 = arith.constant 0 : i32
    return %c0_i32, %c0_i32_0 : i32, i32
  }
  func.func @transform_4(%arg0: i32) -> (i32, i32) {
    %c0_i32 = arith.constant 0 : i32
    %c0_i32_0 = arith.constant 0 : i32
    %c0_i32_1 = arith.constant 0 : i32
    return %c0_i32, %c0_i32_0 : i32, i32
  }
  func.func @transform_5(%arg0: i32) -> (i32, i32) {
    %c0_i32 = arith.constant 0 : i32
    %c0_i32_0 = arith.constant 0 : i32
    return %arg0, %c0_i32 : i32, i32
  }
  func.func @transform_6(%arg0: i32) -> (i32, i32) {
    %c0_i32 = arith.constant 0 : i32
    %c0_i32_0 = arith.constant 0 : i32
    return %arg0, %c0_i32 : i32, i32
  }
}

</mosaic_0001>

<llo_original>
// kernel: tpu_custom_call.1
$region0: #{tpu_custom_call.1}
  #allocation0 [shape = 'u32[]', space=smem, size = 0x4, offset = 0x4, fixed_abs, tag = 'smem constant byte address 0x4 - core index']
  #allocation1 [shape = 'u32[144,128]{1,0:T(1,128)}', space=vmem, size = 0x12000, scoped, tag = 'internal scratch']
  %s0 = inlined_call_operand.vmem [shape: bf16[512,832], index: 0, kind: input, shape index: {}]
  %s1 = inlined_call_operand.vmem [shape: bf16[832,384], index: 1, kind: input, shape index: {}]
  %s2 = inlined_call_operand.vmem [shape: f32[1,384], index: 2, kind: input, shape index: {}]
  %s3 = inlined_call_operand.vmem [shape: bf16[832,256], index: 3, kind: input, shape index: {}]
  %s4 = inlined_call_operand.vmem [shape: f32[1,256], index: 4, kind: input, shape index: {}]
  %s5 = inlined_call_operand.hbm [shape: f32[512,384], index: 5, kind: output, shape index: {0}]
  %s6 = inlined_call_operand.hbm [shape: bf16[512,256], index: 6, kind: output, shape index: {1}]
  %7 = xla_tuple %s5, %s6
  %s8 = sld [smem:[#allocation0]]
  $region38: #{tpu_custom_call.1} parent=0
    _
  %s10 = ssub.s32 1, %s8
  %s11 = scalar_select 0, %s10, %s8
  $region1: #{tpu_custom_call.1} parent=0
    #allocation2 [shape = 'u8[786432]{0}', space=vmem, size = 0xc0000, scoped, tag = 'output window, operand 0, single buffered']
    #allocation3 [shape = 's32[1]{0}', space=sflag, size = 0x4, scoped, tag = 'scoped memory for tpu_custom_call.1']
    #allocation4 [shape = 'u8[262144]{0}', space=vmem, size = 0x40000, scoped, tag = 'output window, operand 1, single buffered']
    #allocation5 [shape = 's32[1]{0}', space=sflag, size = 0x4, scoped, tag = 'scoped memory for tpu_custom_call.1']
    %12 = vsyncpa [#allocation3], 0
    %13 = vsyncpa [#allocation5], 0
    // Predicated region
    $region2: #{tpu_custom_call.1} parent=1 // pred_check
      _
    $region3: #{tpu_custom_call.1} parent=1 // pred_check_branch
      %15 = sbr.rel (0) target = $region5
    $region4: #{tpu_custom_call.1} parent=1 // pred_region
      _
    $region5: #{tpu_custom_call.1} parent=1 // pred_fallthru
      _
    // Predicated region
    $region6: #{tpu_custom_call.1} parent=1 // pred_check
      _
    $region7: #{tpu_custom_call.1} parent=1 // pred_check_branch
      %17 = sbr.rel (0) target = $region9
    $region8: #{tpu_custom_call.1} parent=1 // pred_region
      _
    $region9: #{tpu_custom_call.1} parent=1 // pred_fallthru
      _
    // Predicated region
    $region10: #{tpu_custom_call.1} parent=1 // pred_check
      _
    $region11: #{tpu_custom_call.1} parent=1 // pred_check_branch
      %19 = sbr.rel (0) target = $region13
    $region12: #{tpu_custom_call.1} parent=1 // pred_region
      _
    $region13: #{tpu_custom_call.1} parent=1 // pred_fallthru
      _
    // Predicated region
    $region14: #{tpu_custom_call.1} parent=1 // pred_check
      _
    $region15: #{tpu_custom_call.1} parent=1 // pred_check_branch
      %21 = sbr.rel (0) target = $region17
    $region16: #{tpu_custom_call.1} parent=1 // pred_region
      _
    $region17: #{tpu_custom_call.1} parent=1 // pred_fallthru
      _
    // Predicated region
    $region18: #{tpu_custom_call.1} parent=1 // pred_check
      _
    $region19: #{tpu_custom_call.1} parent=1 // pred_check_branch
      %23 = sbr.rel (0) target = $region21
    $region20: #{tpu_custom_call.1} parent=1 // pred_region
      _
    $region21: #{tpu_custom_call.1} parent=1 // pred_fallthru
      _
    %v25 = vld [vmem:[%s0] sm:$0xff]
    %v26 = vld [vmem:[%s0 + $0x8] sm:$0xff]
    %v27 = vld [vmem:[%s0 + $0x10] sm:$0xff]
    %v28 = vld [vmem:[%s0 + $0x18] sm:$0xf]
    %v29 = vld [vmem:[%s0 + $0x1c] sm:$0xff]
    %v30 = vld [vmem:[%s0 + $0x24] sm:$0xff]
    %v31 = vld [vmem:[%s0 + $0x2c] sm:$0xff]
    %v32 = vld [vmem:[%s0 + $0x34] sm:$0xf]
    %v33 = vld [vmem:[%s0 + $0x38] sm:$0xff]
    %v34 = vld [vmem:[%s0 + $0x40] sm:$0xff]
    %v35 = vld [vmem:[%s0 + $0x48] sm:$0xff]
    %v36 = vld [vmem:[%s0 + $0x50] sm:$0xf]
    %v37 = vld [vmem:[%s0 + $0x54] sm:$0xff]
    %v38 = vld [vmem:[%s0 + $0x5c] sm:$0xff]
    %v39 = vld [vmem:[%s0 + $0x64] sm:$0xff]
    %v40 = vld [vmem:[%s0 + $0x6c] sm:$0xf]
    %v41 = vld [vmem:[%s0 + $0x70] sm:$0xff]
    %v42 = vld [vmem:[%s0 + $0x78] sm:$0xff]
    %v43 = vld [vmem:[%s0 + $0x80] sm:$0xff]
    %v44 = vld [vmem:[%s0 + $0x88] sm:$0xf]
    %v45 = vld [vmem:[%s0 + $0x8c] sm:$0xff]
    %v46 = vld [vmem:[%s0 + $0x94] sm:$0xff]
    %v47 = vld [vmem:[%s0 + $0x9c] sm:$0xff]
    %v48 = vld [vmem:[%s0 + $0xa4] sm:$0xf]
    %v49 = vld [vmem:[%s0 + $0xa8] sm:$0xff]
    %v50 = vld [vmem:[%s0 + $0xb0] sm:$0xff]
    %v51 = vld [vmem:[%s0 + $0xb8] sm:$0xff]
    %v52 = vld [vmem:[%s0 + $0xc0] sm:$0xf]
    %v53 = vld [vmem:[%s0 + $0xc4] sm:$0xff]
    %v54 = vld [vmem:[%s0 + $0xcc] sm:$0xff]
    %v55 = vld [vmem:[%s0 + $0xd4] sm:$0xff]
    %v56 = vld [vmem:[%s0 + $0xdc] sm:$0xf]
    %v57 = vld [vmem:[%s0 + $0xe0] sm:$0xff]
    %v58 = vld [vmem:[%s0 + $0xe8] sm:$0xff]
    %v59 = vld [vmem:[%s0 + $0xf0] sm:$0xff]
    %v60 = vld [vmem:[%s0 + $0xf8] sm:$0xf]
    %v61 = vld [vmem:[%s0 + $0xfc] sm:$0xff]
    %v62 = vld [vmem:[%s0 + $0x104] sm:$0xff]
    %v63 = vld [vmem:[%s0 + $0x10c] sm:$0xff]
    %v64 = vld [vmem:[%s0 + $0x114] sm:$0xf]
    %v65 = vld [vmem:[%s0 + $0x118] sm:$0xff]
    %v66 = vld [vmem:[%s0 + $0x120] sm:$0xff]
    %v67 = vld [vmem:[%s0 + $0x128] sm:$0xff]
    %v68 = vld [vmem:[%s0 + $0x130] sm:$0xf]
    %v69 = vld [vmem:[%s0 + $0x134] sm:$0xff]
    %v70 = vld [vmem:[%s0 + $0x13c] sm:$0xff]
    %v71 = vld [vmem:[%s0 + $0x144] sm:$0xff]
    %v72 = vld [vmem:[%s0 + $0x14c] sm:$0xf]
    %v73 = vld [vmem:[%s0 + $0x150] sm:$0xff]
    %v74 = vld [vmem:[%s0 + $0x158] sm:$0xff]
    %v75 = vld [vmem:[%s0 + $0x160] sm:$0xff]
    %v76 = vld [vmem:[%s0 + $0x168] sm:$0xf]
    %v77 = vld [vmem:[%s0 + $0x16c] sm:$0xff]
    %v78 = vld [vmem:[%s0 + $0x174] sm:$0xff]
    %v79 = vld [vmem:[%s0 + $0x17c] sm:$0xff]
    %v80 = vld [vmem:[%s0 + $0x184] sm:$0xf]
    %v81 = vld [vmem:[%s0 + $0x188] sm:$0xff]
    %v82 = vld [vmem:[%s0 + $0x190] sm:$0xff]
    %v83 = vld [vmem:[%s0 + $0x198] sm:$0xff]
    %v84 = vld [vmem:[%s0 + $0x1a0] sm:$0xf]
    %v85 = vld [vmem:[%s0 + $0x1a4] sm:$0xff]
    %v86 = vld [vmem:[%s0 + $0x1ac] sm:$0xff]
    %v87 = vld [vmem:[%s0 + $0x1b4] sm:$0xff]
    %v88 = vld [vmem:[%s0 + $0x1bc] sm:$0xf]
    %v89 = vld [vmem:[%s0 + $0x1c0] sm:$0xff]
    %v90 = vld [vmem:[%s0 + $0x1c8] sm:$0xff]
    %v91 = vld [vmem:[%s0 + $0x1d0] sm:$0xff]
    %v92 = vld [vmem:[%s0 + $0x1d8] sm:$0xf]
    %v93 = vld [vmem:[%s0 + $0x1dc] sm:$0xff]
    %v94 = vld [vmem:[%s0 + $0x1e4] sm:$0xff]
    %v95 = vld [vmem:[%s0 + $0x1ec] sm:$0xff]
    %v96 = vld [vmem:[%s0 + $0x1f4] sm:$0xf]
    %v97 = vld [vmem:[%s0 + $0x1f8] sm:$0xff]
    %v98 = vld [vmem:[%s0 + $0x200] sm:$0xff]
    %v99 = vld [vmem:[%s0 + $0x208] sm:$0xff]
    %v100 = vld [vmem:[%s0 + $0x210] sm:$0xf]
    %v101 = vld [vmem:[%s0 + $0x214] sm:$0xff]
    %v102 = vld [vmem:[%s0 + $0x21c] sm:$0xff]
    %v103 = vld [vmem:[%s0 + $0x224] sm:$0xff]
    %v104 = vld [vmem:[%s0 + $0x22c] sm:$0xf]
    %v105 = vld [vmem:[%s0 + $0x230] sm:$0xff]
    %v106 = vld [vmem:[%s0 + $0x238] sm:$0xff]
    %v107 = vld [vmem:[%s0 + $0x240] sm:$0xff]
    %v108 = vld [vmem:[%s0 + $0x248] sm:$0xf]
    %v109 = vld [vmem:[%s0 + $0x24c] sm:$0xff]
    %v110 = vld [vmem:[%s0 + $0x254] sm:$0xff]
    %v111 = vld [vmem:[%s0 + $0x25c] sm:$0xff]
    %v112 = vld [vmem:[%s0 + $0x264] sm:$0xf]
    %v113 = vld [vmem:[%s0 + $0x268] sm:$0xff]
    %v114 = vld [vmem:[%s0 + $0x270] sm:$0xff]
    %v115 = vld [vmem:[%s0 + $0x278] sm:$0xff]
    %v116 = vld [vmem:[%s0 + $0x280] sm:$0xf]
    %v117 = vld [vmem:[%s0 + $0x284] sm:$0xff]
    %v118 = vld [vmem:[%s0 + $0x28c] sm:$0xff]
    %v119 = vld [vmem:[%s0 + $0x294] sm:$0xff]
    %v120 = vld [vmem:[%s0 + $0x29c] sm:$0xf]
    %v121 = vld [vmem:[%s0 + $0x2a0] sm:$0xff]
    %v122 = vld [vmem:[%s0 + $0x2a8] sm:$0xff]
    %v123 = vld [vmem:[%s0 + $0x2b0] sm:$0xff]
    %v124 = vld [vmem:[%s0 + $0x2b8] sm:$0xf]
    %v125 = vld [vmem:[%s0 + $0x2bc] sm:$0xff]
    %v126 = vld [vmem:[%s0 + $0x2c4] sm:$0xff]
    %v127 = vld [vmem:[%s0 + $0x2cc] sm:$0xff]
    %v128 = vld [vmem:[%s0 + $0x2d4] sm:$0xf]
    %v129 = vld [vmem:[%s0 + $0x2d8] sm:$0xff]
    %v130 = vld [vmem:[%s0 + $0x2e0] sm:$0xff]
    %v131 = vld [vmem:[%s0 + $0x2e8] sm:$0xff]
    %v132 = vld [vmem:[%s0 + $0x2f0] sm:$0xf]
    %v133 = vld [vmem:[%s0 + $0x2f4] sm:$0xff]
    %v134 = vld [vmem:[%s0 + $0x2fc] sm:$0xff]
    %v135 = vld [vmem:[%s0 + $0x304] sm:$0xff]
    %v136 = vld [vmem:[%s0 + $0x30c] sm:$0xf]
    %v137 = vld [vmem:[%s0 + $0x310] sm:$0xff]
    %v138 = vld [vmem:[%s0 + $0x318] sm:$0xff]
    %v139 = vld [vmem:[%s0 + $0x320] sm:$0xff]
    %v140 = vld [vmem:[%s0 + $0x328] sm:$0xf]
    %v141 = vld [vmem:[%s0 + $0x32c] sm:$0xff]
    %v142 = vld [vmem:[%s0 + $0x334] sm:$0xff]
    %v143 = vld [vmem:[%s0 + $0x33c] sm:$0xff]
    %v144 = vld [vmem:[%s0 + $0x344] sm:$0xf]
    %v145 = vld [vmem:[%s0 + $0x348] sm:$0xff]
    %v146 = vld [vmem:[%s0 + $0x350] sm:$0xff]
    %v147 = vld [vmem:[%s0 + $0x358] sm:$0xff]
    %v148 = vld [vmem:[%s0 + $0x360] sm:$0xf]
    %v149 = vld [vmem:[%s0 + $0x364] sm:$0xff]
    %v150 = vld [vmem:[%s0 + $0x36c] sm:$0xff]
    %v151 = vld [vmem:[%s0 + $0x374] sm:$0xff]
    %v152 = vld [vmem:[%s0 + $0x37c] sm:$0xf]
    %v153 = vld [vmem:[%s0 + $0x380] sm:$0xff]
    %v154 = vld [vmem:[%s0 + $0x388] sm:$0xff]
    %v155 = vld [vmem:[%s0 + $0x390] sm:$0xff]
    %v156 = vld [vmem:[%s0 + $0x398] sm:$0xf]
    %v157 = vld [vmem:[%s0 + $0x39c] sm:$0xff]
    %v158 = vld [vmem:[%s0 + $0x3a4] sm:$0xff]
    %v159 = vld [vmem:[%s0 + $0x3ac] sm:$0xff]
    %v160 = vld [vmem:[%s0 + $0x3b4] sm:$0xf]
    %v161 = vld [vmem:[%s0 + $0x3b8] sm:$0xff]
    %v162 = vld [vmem:[%s0 + $0x3c0] sm:$0xff]
    %v163 = vld [vmem:[%s0 + $0x3c8] sm:$0xff]
    %v164 = vld [vmem:[%s0 + $0x3d0] sm:$0xf]
    %v165 = vld [vmem:[%s0 + $0x3d4] sm:$0xff]
    %v166 = vld [vmem:[%s0 + $0x3dc] sm:$0xff]
    %v167 = vld [vmem:[%s0 + $0x3e4] sm:$0xff]
    %v168 = vld [vmem:[%s0 + $0x3ec] sm:$0xf]
    %v169 = vld [vmem:[%s0 + $0x3f0] sm:$0xff]
    %v170 = vld [vmem:[%s0 + $0x3f8] sm:$0xff]
    %v171 = vld [vmem:[%s0 + $0x400] sm:$0xff]
    %v172 = vld [vmem:[%s0 + $0x408] sm:$0xf]
    %v173 = vld [vmem:[%s0 + $0x40c] sm:$0xff]
    %v174 = vld [vmem:[%s0 + $0x414] sm:$0xff]
    %v175 = vld [vmem:[%s0 + $0x41c] sm:$0xff]
    %v176 = vld [vmem:[%s0 + $0x424] sm:$0xf]
    %v177 = vld [vmem:[%s0 + $0x428] sm:$0xff]
    %v178 = vld [vmem:[%s0 + $0x430] sm:$0xff]
    %v179 = vld [vmem:[%s0 + $0x438] sm:$0xff]
    %v180 = vld [vmem:[%s0 + $0x440] sm:$0xf]
    %v181 = vld [vmem:[%s0 + $0x444] sm:$0xff]
    %v182 = vld [vmem:[%s0 + $0x44c] sm:$0xff]
    %v183 = vld [vmem:[%s0 + $0x454] sm:$0xff]
    %v184 = vld [vmem:[%s0 + $0x45c] sm:$0xf]
    %v185 = vld [vmem:[%s0 + $0x460] sm:$0xff]
    %v186 = vld [vmem:[%s0 + $0x468] sm:$0xff]
    %v187 = vld [vmem:[%s0 + $0x470] sm:$0xff]
    %v188 = vld [vmem:[%s0 + $0x478] sm:$0xf]
    %v189 = vld [vmem:[%s0 + $0x47c] sm:$0xff]
    %v190 = vld [vmem:[%s0 + $0x484] sm:$0xff]
    %v191 = vld [vmem:[%s0 + $0x48c] sm:$0xff]
    %v192 = vld [vmem:[%s0 + $0x494] sm:$0xf]
    %v193 = vld [vmem:[%s0 + $0x498] sm:$0xff]
    %v194 = vld [vmem:[%s0 + $0x4a0] sm:$0xff]
    %v195 = vld [vmem:[%s0 + $0x4a8] sm:$0xff]
    %v196 = vld [vmem:[%s0 + $0x4b0] sm:$0xf]
    %v197 = vld [vmem:[%s0 + $0x4b4] sm:$0xff]
    %v198 = vld [vmem:[%s0 + $0x4bc] sm:$0xff]
    %v199 = vld [vmem:[%s0 + $0x4c4] sm:$0xff]
    %v200 = vld [vmem:[%s0 + $0x4cc] sm:$0xf]
    %v201 = vld [vmem:[%s0 + $0x4d0] sm:$0xff]
    %v202 = vld [vmem:[%s0 + $0x4d8] sm:$0xff]
    %v203 = vld [vmem:[%s0 + $0x4e0] sm:$0xff]
    %v204 = vld [vmem:[%s0 + $0x4e8] sm:$0xf]
    %v205 = vld [vmem:[%s0 + $0x4ec] sm:$0xff]
    %v206 = vld [vmem:[%s0 + $0x4f4] sm:$0xff]
    %v207 = vld [vmem:[%s0 + $0x4fc] sm:$0xff]
    %v208 = vld [vmem:[%s0 + $0x504] sm:$0xf]
    %v209 = vld [vmem:[%s0 + $0x508] sm:$0xff]
    %v210 = vld [vmem:[%s0 + $0x510] sm:$0xff]
    %v211 = vld [vmem:[%s0 + $0x518] sm:$0xff]
    %v212 = vld [vmem:[%s0 + $0x520] sm:$0xf]
    %v213 = vld [vmem:[%s0 + $0x524] sm:$0xff]
    %v214 = vld [vmem:[%s0 + $0x52c] sm:$0xff]
    %v215 = vld [vmem:[%s0 + $0x534] sm:$0xff]
    %v216 = vld [vmem:[%s0 + $0x53c] sm:$0xf]
    %v217 = vld [vmem:[%s0 + $0x540] sm:$0xff]
    %v218 = vld [vmem:[%s0 + $0x548] sm:$0xff]
    %v219 = vld [vmem:[%s0 + $0x550] sm:$0xff]
    %v220 = vld [vmem:[%s0 + $0x558] sm:$0xf]
    %v221 = vld [vmem:[%s0 + $0x55c] sm:$0xff]
    %v222 = vld [vmem:[%s0 + $0x564] sm:$0xff]
    %v223 = vld [vmem:[%s0 + $0x56c] sm:$0xff]
    %v224 = vld [vmem:[%s0 + $0x574] sm:$0xf]
    %v225 = vld [vmem:[%s0 + $0x578] sm:$0xff]
    %v226 = vld [vmem:[%s0 + $0x580] sm:$0xff]
    %v227 = vld [vmem:[%s0 + $0x588] sm:$0xff]
    %v228 = vld [vmem:[%s0 + $0x590] sm:$0xf]
    %v229 = vld [vmem:[%s0 + $0x594] sm:$0xff]
    %v230 = vld [vmem:[%s0 + $0x59c] sm:$0xff]
    %v231 = vld [vmem:[%s0 + $0x5a4] sm:$0xff]
    %v232 = vld [vmem:[%s0 + $0x5ac] sm:$0xf]
    %v233 = vld [vmem:[%s0 + $0x5b0] sm:$0xff]
    %v234 = vld [vmem:[%s0 + $0x5b8] sm:$0xff]
    %v235 = vld [vmem:[%s0 + $0x5c0] sm:$0xff]
    %v236 = vld [vmem:[%s0 + $0x5c8] sm:$0xf]
    %v237 = vld [vmem:[%s0 + $0x5cc] sm:$0xff]
    %v238 = vld [vmem:[%s0 + $0x5d4] sm:$0xff]
    %v239 = vld [vmem:[%s0 + $0x5dc] sm:$0xff]
    %v240 = vld [vmem:[%s0 + $0x5e4] sm:$0xf]
    %v241 = vld [vmem:[%s0 + $0x5e8] sm:$0xff]
    %v242 = vld [vmem:[%s0 + $0x5f0] sm:$0xff]
    %v243 = vld [vmem:[%s0 + $0x5f8] sm:$0xff]
    %v244 = vld [vmem:[%s0 + $0x600] sm:$0xf]
    %v245 = vld [vmem:[%s0 + $0x604] sm:$0xff]
    %v246 = vld [vmem:[%s0 + $0x60c] sm:$0xff]
    %v247 = vld [vmem:[%s0 + $0x614] sm:$0xff]
    %v248 = vld [vmem:[%s0 + $0x61c] sm:$0xf]
    %v249 = vld [vmem:[%s0 + $0x620] sm:$0xff]
    %v250 = vld [vmem:[%s0 + $0x628] sm:$0xff]
    %v251 = vld [vmem:[%s0 + $0x630] sm:$0xff]
    %v252 = vld [vmem:[%s0 + $0x638] sm:$0xf]
    %v253 = vld [vmem:[%s0 + $0x63c] sm:$0xff]
    %v254 = vld [vmem:[%s0 + $0x644] sm:$0xff]
    %v255 = vld [vmem:[%s0 + $0x64c] sm:$0xff]
    %v256 = vld [vmem:[%s0 + $0x654] sm:$0xf]
    %v257 = vld [vmem:[%s0 + $0x658] sm:$0xff]
    %v258 = vld [vmem:[%s0 + $0x660] sm:$0xff]
    %v259 = vld [vmem:[%s0 + $0x668] sm:$0xff]
    %v260 = vld [vmem:[%s0 + $0x670] sm:$0xf]
    %v261 = vld [vmem:[%s0 + $0x674] sm:$0xff]
    %v262 = vld [vmem:[%s0 + $0x67c] sm:$0xff]
    %v263 = vld [vmem:[%s0 + $0x684] sm:$0xff]
    %v264 = vld [vmem:[%s0 + $0x68c] sm:$0xf]
    %v265 = vld [vmem:[%s0 + $0x690] sm:$0xff]
    %v266 = vld [vmem:[%s0 + $0x698] sm:$0xff]
    %v267 = vld [vmem:[%s0 + $0x6a0] sm:$0xff]
    %v268 = vld [vmem:[%s0 + $0x6a8] sm:$0xf]
    %v269 = vld [vmem:[%s0 + $0x6ac] sm:$0xff]
    %v270 = vld [vmem:[%s0 + $0x6b4] sm:$0xff]
    %v271 = vld [vmem:[%s0 + $0x6bc] sm:$0xff]
    %v272 = vld [vmem:[%s0 + $0x6c4] sm:$0xf]
    %v273 = vld [vmem:[%s0 + $0x6c8] sm:$0xff]
    %v274 = vld [vmem:[%s0 + $0x6d0] sm:$0xff]
    %v275 = vld [vmem:[%s0 + $0x6d8] sm:$0xff]
    %v276 = vld [vmem:[%s0 + $0x6e0] sm:$0xf]
    %v277 = vld [vmem:[%s0 + $0x6e4] sm:$0xff]
    %v278 = vld [vmem:[%s0 + $0x6ec] sm:$0xff]
    %v279 = vld [vmem:[%s0 + $0x6f4] sm:$0xff]
    %v280 = vld [vmem:[%s0 + $0x6fc] sm:$0xf]
    %v281 = vld [vmem:[%s1] sm:$0xff]
    %v282 = vld [vmem:[%s1 + $0x8] sm:$0xf]
    %v283 = vld [vmem:[%s1 + $0xc] sm:$0xff]
    %v284 = vld [vmem:[%s1 + $0x14] sm:$0xf]
    %v285 = vld [vmem:[%s1 + $0x18] sm:$0xff]
    %v286 = vld [vmem:[%s1 + $0x20] sm:$0xf]
    %v287 = vld [vmem:[%s1 + $0x24] sm:$0xff]
    %v288 = vld [vmem:[%s1 + $0x2c] sm:$0xf]
    %v289 = vld [vmem:[%s1 + $0x30] sm:$0xff]
    %v290 = vld [vmem:[%s1 + $0x38] sm:$0xf]
    %v291 = vld [vmem:[%s1 + $0x3c] sm:$0xff]
    %v292 = vld [vmem:[%s1 + $0x44] sm:$0xf]
    %v293 = vld [vmem:[%s1 + $0x48] sm:$0xff]
    %v294 = vld [vmem:[%s1 + $0x50] sm:$0xf]
    %v295 = vld [vmem:[%s1 + $0x54] sm:$0xff]
    %v296 = vld [vmem:[%s1 + $0x5c] sm:$0xf]
    %v297 = vld [vmem:[%s1 + $0x60] sm:$0xff]
    %v298 = vld [vmem:[%s1 + $0x68] sm:$0xf]
    %v299 = vld [vmem:[%s1 + $0x6c] sm:$0xff]
    %v300 = vld [vmem:[%s1 + $0x74] sm:$0xf]
    %v301 = vld [vmem:[%s1 + $0x78] sm:$0xff]
    %v302 = vld [vmem:[%s1 + $0x80] sm:$0xf]
    %v303 = vld [vmem:[%s1 + $0x84] sm:$0xff]
    %v304 = vld [vmem:[%s1 + $0x8c] sm:$0xf]
    %v305 = vld [vmem:[%s1 + $0x90] sm:$0xff]
    %v306 = vld [vmem:[%s1 + $0x98] sm:$0xf]
    %v307 = vld [vmem:[%s1 + $0x9c] sm:$0xff]
    %v308 = vld [vmem:[%s1 + $0xa4] sm:$0xf]
    %v309 = vld [vmem:[%s1 + $0xa8] sm:$0xff]
    %v310 = vld [vmem:[%s1 + $0xb0] sm:$0xf]
    %v311 = vld [vmem:[%s1 + $0xb4] sm:$0xff]
    %v312 = vld [vmem:[%s1 + $0xbc] sm:$0xf]
    %v313 = vld [vmem:[%s1 + $0xc0] sm:$0xff]
    %v314 = vld [vmem:[%s1 + $0xc8] sm:$0xf]
    %v315 = vld [vmem:[%s1 + $0xcc] sm:$0xff]
    %v316 = vld [vmem:[%s1 + $0xd4] sm:$0xf]
    %v317 = vld [vmem:[%s1 + $0xd8] sm:$0xff]
    %v318 = vld [vmem:[%s1 + $0xe0] sm:$0xf]
    %v319 = vld [vmem:[%s1 + $0xe4] sm:$0xff]
    %v320 = vld [vmem:[%s1 + $0xec] sm:$0xf]
    %v321 = vld [vmem:[%s1 + $0xf0] sm:$0xff]
    %v322 = vld [vmem:[%s1 + $0xf8] sm:$0xf]
    %v323 = vld [vmem:[%s1 + $0xfc] sm:$0xff]
    %v324 = vld [vmem:[%s1 + $0x104] sm:$0xf]
    %v325 = vld [vmem:[%s1 + $0x108] sm:$0xff]
    %v326 = vld [vmem:[%s1 + $0x110] sm:$0xf]
    %v327 = vld [vmem:[%s1 + $0x114] sm:$0xff]
    %v328 = vld [vmem:[%s1 + $0x11c] sm:$0xf]
    %v329 = vld [vmem:[%s1 + $0x120] sm:$0xff]
    %v330 = vld [vmem:[%s1 + $0x128] sm:$0xf]
    %v331 = vld [vmem:[%s1 + $0x12c] sm:$0xff]
    %v332 = vld [vmem:[%s1 + $0x134] sm:$0xf]
    %v333 = vld [vmem:[%s1 + $0x138] sm:$0xff]
    %v334 = vld [vmem:[%s1 + $0x140] sm:$0xf]
    %v335 = vld [vmem:[%s1 + $0x144] sm:$0xff]
    %v336 = vld [vmem:[%s1 + $0x14c] sm:$0xf]
    %v337 = vld [vmem:[%s1 + $0x150] sm:$0xff]
    %v338 = vld [vmem:[%s1 + $0x158] sm:$0xf]
    %v339 = vld [vmem:[%s1 + $0x15c] sm:$0xff]
    %v340 = vld [vmem:[%s1 + $0x164] sm:$0xf]
    %v341 = vld [vmem:[%s1 + $0x168] sm:$0xff]
    %v342 = vld [vmem:[%s1 + $0x170] sm:$0xf]
    %v343 = vld [vmem:[%s1 + $0x174] sm:$0xff]
    %v344 = vld [vmem:[%s1 + $0x17c] sm:$0xf]
    %v345 = vld [vmem:[%s1 + $0x180] sm:$0xff]
    %v346 = vld [vmem:[%s1 + $0x188] sm:$0xf]
    %v347 = vld [vmem:[%s1 + $0x18c] sm:$0xff]
    %v348 = vld [vmem:[%s1 + $0x194] sm:$0xf]
    %v349 = vld [vmem:[%s1 + $0x198] sm:$0xff]
    %v350 = vld [vmem:[%s1 + $0x1a0] sm:$0xf]
    %v351 = vld [vmem:[%s1 + $0x1a4] sm:$0xff]
    %v352 = vld [vmem:[%s1 + $0x1ac] sm:$0xf]
    %v353 = vld [vmem:[%s1 + $0x1b0] sm:$0xff]
    %v354 = vld [vmem:[%s1 + $0x1b8] sm:$0xf]
    %v355 = vld [vmem:[%s1 + $0x1bc] sm:$0xff]
    %v356 = vld [vmem:[%s1 + $0x1c4] sm:$0xf]
    %v357 = vld [vmem:[%s1 + $0x1c8] sm:$0xff]
    %v358 = vld [vmem:[%s1 + $0x1d0] sm:$0xf]
    %v359 = vld [vmem:[%s1 + $0x1d4] sm:$0xff]
    %v360 = vld [vmem:[%s1 + $0x1dc] sm:$0xf]
    %v361 = vld [vmem:[%s1 + $0x1e0] sm:$0xff]
    %v362 = vld [vmem:[%s1 + $0x1e8] sm:$0xf]
    %v363 = vld [vmem:[%s1 + $0x1ec] sm:$0xff]
    %v364 = vld [vmem:[%s1 + $0x1f4] sm:$0xf]
    %v365 = vld [vmem:[%s1 + $0x1f8] sm:$0xff]
    %v366 = vld [vmem:[%s1 + $0x200] sm:$0xf]
    %v367 = vld [vmem:[%s1 + $0x204] sm:$0xff]
    %v368 = vld [vmem:[%s1 + $0x20c] sm:$0xf]
    %v369 = vld [vmem:[%s1 + $0x210] sm:$0xff]
    %v370 = vld [vmem:[%s1 + $0x218] sm:$0xf]
    %v371 = vld [vmem:[%s1 + $0x21c] sm:$0xff]
    %v372 = vld [vmem:[%s1 + $0x224] sm:$0xf]
    %v373 = vld [vmem:[%s1 + $0x228] sm:$0xff]
    %v374 = vld [vmem:[%s1 + $0x230] sm:$0xf]
    %v375 = vld [vmem:[%s1 + $0x234] sm:$0xff]
    %v376 = vld [vmem:[%s1 + $0x23c] sm:$0xf]
    %v377 = vld [vmem:[%s1 + $0x240] sm:$0xff]
    %v378 = vld [vmem:[%s1 + $0x248] sm:$0xf]
    %v379 = vld [vmem:[%s1 + $0x24c] sm:$0xff]
    %v380 = vld [vmem:[%s1 + $0x254] sm:$0xf]
    %v381 = vld [vmem:[%s1 + $0x258] sm:$0xff]
    %v382 = vld [vmem:[%s1 + $0x260] sm:$0xf]
    %v383 = vld [vmem:[%s1 + $0x264] sm:$0xff]
    %v384 = vld [vmem:[%s1 + $0x26c] sm:$0xf]
    %v385 = vld [vmem:[%s1 + $0x270] sm:$0xff]
    %v386 = vld [vmem:[%s1 + $0x278] sm:$0xf]
    %v387 = vld [vmem:[%s1 + $0x27c] sm:$0xff]
    %v388 = vld [vmem:[%s1 + $0x284] sm:$0xf]
    %v389 = vld [vmem:[%s1 + $0x288] sm:$0xff]
    %v390 = vld [vmem:[%s1 + $0x290] sm:$0xf]
    %v391 = vld [vmem:[%s1 + $0x294] sm:$0xff]
    %v392 = vld [vmem:[%s1 + $0x29c] sm:$0xf]
    %v393 = vld [vmem:[%s1 + $0x2a0] sm:$0xff]
    %v394 = vld [vmem:[%s1 + $0x2a8] sm:$0xf]
    %v395 = vld [vmem:[%s1 + $0x2ac] sm:$0xff]
    %v396 = vld [vmem:[%s1 + $0x2b4] sm:$0xf]
    %v397 = vld [vmem:[%s1 + $0x2b8] sm:$0xff]
    %v398 = vld [vmem:[%s1 + $0x2c0] sm:$0xf]
    %v399 = vld [vmem:[%s1 + $0x2c4] sm:$0xff]
    %v400 = vld [vmem:[%s1 + $0x2cc] sm:$0xf]
    %v401 = vld [vmem:[%s1 + $0x2d0] sm:$0xff]
    %v402 = vld [vmem:[%s1 + $0x2d8] sm:$0xf]
    %v403 = vld [vmem:[%s1 + $0x2dc] sm:$0xff]
    %v404 = vld [vmem:[%s1 + $0x2e4] sm:$0xf]
    %v405 = vld [vmem:[%s1 + $0x2e8] sm:$0xff]
    %v406 = vld [vmem:[%s1 + $0x2f0] sm:$0xf]
    %v407 = vld [vmem:[%s1 + $0x2f4] sm:$0xff]
    %v408 = vld [vmem:[%s1 + $0x2fc] sm:$0xf]
    %v409 = vld [vmem:[%s1 + $0x300] sm:$0xff]
    %v410 = vld [vmem:[%s1 + $0x308] sm:$0xf]
    %v411 = vld [vmem:[%s1 + $0x30c] sm:$0xff]
    %v412 = vld [vmem:[%s1 + $0x314] sm:$0xf]
    %v413 = vld [vmem:[%s1 + $0x318] sm:$0xff]
    %v414 = vld [vmem:[%s1 + $0x320] sm:$0xf]
    %v415 = vld [vmem:[%s1 + $0x324] sm:$0xff]
    %v416 = vld [vmem:[%s1 + $0x32c] sm:$0xf]
    %v417 = vld [vmem:[%s1 + $0x330] sm:$0xff]
    %v418 = vld [vmem:[%s1 + $0x338] sm:$0xf]
    %v419 = vld [vmem:[%s1 + $0x33c] sm:$0xff]
    %v420 = vld [vmem:[%s1 + $0x344] sm:$0xf]
    %v421 = vld [vmem:[%s1 + $0x348] sm:$0xff]
    %v422 = vld [vmem:[%s1 + $0x350] sm:$0xf]
    %v423 = vld [vmem:[%s1 + $0x354] sm:$0xff]
    %v424 = vld [vmem:[%s1 + $0x35c] sm:$0xf]
    %v425 = vld [vmem:[%s1 + $0x360] sm:$0xff]
    %v426 = vld [vmem:[%s1 + $0x368] sm:$0xf]
    %v427 = vld [vmem:[%s1 + $0x36c] sm:$0xff]
    %v428 = vld [vmem:[%s1 + $0x374] sm:$0xf]
    %v429 = vld [vmem:[%s1 + $0x378] sm:$0xff]
    %v430 = vld [vmem:[%s1 + $0x380] sm:$0xf]
    %v431 = vld [vmem:[%s1 + $0x384] sm:$0xff]
    %v432 = vld [vmem:[%s1 + $0x38c] sm:$0xf]
    %v433 = vld [vmem:[%s1 + $0x390] sm:$0xff]
    %v434 = vld [vmem:[%s1 + $0x398] sm:$0xf]
    %v435 = vld [vmem:[%s1 + $0x39c] sm:$0xff]
    %v436 = vld [vmem:[%s1 + $0x3a4] sm:$0xf]
    %v437 = vld [vmem:[%s1 + $0x3a8] sm:$0xff]
    %v438 = vld [vmem:[%s1 + $0x3b0] sm:$0xf]
    %v439 = vld [vmem:[%s1 + $0x3b4] sm:$0xff]
    %v440 = vld [vmem:[%s1 + $0x3bc] sm:$0xf]
    %v441 = vld [vmem:[%s1 + $0x3c0] sm:$0xff]
    %v442 = vld [vmem:[%s1 + $0x3c8] sm:$0xf]
    %v443 = vld [vmem:[%s1 + $0x3cc] sm:$0xff]
    %v444 = vld [vmem:[%s1 + $0x3d4] sm:$0xf]
    %v445 = vld [vmem:[%s1 + $0x3d8] sm:$0xff]
    %v446 = vld [vmem:[%s1 + $0x3e0] sm:$0xf]
    %v447 = vld [vmem:[%s1 + $0x3e4] sm:$0xff]
    %v448 = vld [vmem:[%s1 + $0x3ec] sm:$0xf]
    %v449 = vld [vmem:[%s1 + $0x3f0] sm:$0xff]
    %v450 = vld [vmem:[%s1 + $0x3f8] sm:$0xf]
    %v451 = vld [vmem:[%s1 + $0x3fc] sm:$0xff]
    %v452 = vld [vmem:[%s1 + $0x404] sm:$0xf]
    %v453 = vld [vmem:[%s1 + $0x408] sm:$0xff]
    %v454 = vld [vmem:[%s1 + $0x410] sm:$0xf]
    %v455 = vld [vmem:[%s1 + $0x414] sm:$0xff]
    %v456 = vld [vmem:[%s1 + $0x41c] sm:$0xf]
    %v457 = vld [vmem:[%s1 + $0x420] sm:$0xff]
    %v458 = vld [vmem:[%s1 + $0x428] sm:$0xf]
    %v459 = vld [vmem:[%s1 + $0x42c] sm:$0xff]
    %v460 = vld [vmem:[%s1 + $0x434] sm:$0xf]
    %v461 = vld [vmem:[%s1 + $0x438] sm:$0xff]
    %v462 = vld [vmem:[%s1 + $0x440] sm:$0xf]
    %v463 = vld [vmem:[%s1 + $0x444] sm:$0xff]
    %v464 = vld [vmem:[%s1 + $0x44c] sm:$0xf]
    %v465 = vld [vmem:[%s1 + $0x450] sm:$0xff]
    %v466 = vld [vmem:[%s1 + $0x458] sm:$0xf]
    %v467 = vld [vmem:[%s1 + $0x45c] sm:$0xff]
    %v468 = vld [vmem:[%s1 + $0x464] sm:$0xf]
    %v469 = vld [vmem:[%s1 + $0x468] sm:$0xff]
    %v470 = vld [vmem:[%s1 + $0x470] sm:$0xf]
    %v471 = vld [vmem:[%s1 + $0x474] sm:$0xff]
    %v472 = vld [vmem:[%s1 + $0x47c] sm:$0xf]
    %v473 = vld [vmem:[%s1 + $0x480] sm:$0xff]
    %v474 = vld [vmem:[%s1 + $0x488] sm:$0xf]
    %v475 = vld [vmem:[%s1 + $0x48c] sm:$0xff]
    %v476 = vld [vmem:[%s1 + $0x494] sm:$0xf]
    %v477 = vld [vmem:[%s1 + $0x498] sm:$0xff]
    %v478 = vld [vmem:[%s1 + $0x4a0] sm:$0xf]
    %v479 = vld [vmem:[%s1 + $0x4a4] sm:$0xff]
    %v480 = vld [vmem:[%s1 + $0x4ac] sm:$0xf]
    %v481 = vld [vmem:[%s1 + $0x4b0] sm:$0xff]
    %v482 = vld [vmem:[%s1 + $0x4b8] sm:$0xf]
    %v483 = vld [vmem:[%s1 + $0x4bc] sm:$0xff]
    %v484 = vld [vmem:[%s1 + $0x4c4] sm:$0xf]
    %v485 = vld [vmem:[%s1 + $0x4c8] sm:$0xff]
    %v486 = vld [vmem:[%s1 + $0x4d0] sm:$0xf]
    %v487 = vld [vmem:[%s1 + $0x4d4] sm:$0xff]
    %v488 = vld [vmem:[%s1 + $0x4dc] sm:$0xf]
    %v489 = vld [vmem:[%s2] sm:$0x7]
    %v491 = vlaneseq
    %v492 = vshrl.u32 %v491, 7
    %v493 = vsub.s32 0, %v492
    %v494 = vrot.slane %v489, %v493
    %v495 = vlaneseq
    %v496 = vshrl.u32 %v495, 7
    %v497 = vsub.s32 1, %v496
    %v498 = vrot.slane %v489, %v497
    %v499 = vlaneseq
    %v500 = vshrl.u32 %v499, 7
    %v501 = vsub.s32 2, %v500
    %v502 = vrot.slane %v489, %v501
    %v762 = vunpack.c.l.b16 %v25
    %v763 = vunpack.c.h.b16 %v25
    %v764 = vunpack.c.l.b16 %v26
    %v765 = vunpack.c.h.b16 %v26
    %v766 = vunpack.c.l.b16 %v27
    %v767 = vunpack.c.h.b16 %v27
    %v768 = vunpack.c.l.b16 %v28
    %v769 = vunpack.c.l.b16 %v29
    %v770 = vunpack.c.h.b16 %v29
    %v771 = vunpack.c.l.b16 %v30
    %v772 = vunpack.c.h.b16 %v30
    %v773 = vunpack.c.l.b16 %v31
    %v774 = vunpack.c.h.b16 %v31
    %v775 = vunpack.c.l.b16 %v32
    %v776 = vunpack.c.l.b16 %v33
    %v777 = vunpack.c.h.b16 %v33
    %v778 = vunpack.c.l.b16 %v34
    %v779 = vunpack.c.h.b16 %v34
    %v780 = vunpack.c.l.b16 %v35
    %v781 = vunpack.c.h.b16 %v35
    %v782 = vunpack.c.l.b16 %v36
    %v783 = vunpack.c.l.b16 %v37
    %v784 = vunpack.c.h.b16 %v37
    %v785 = vunpack.c.l.b16 %v38
    %v786 = vunpack.c.h.b16 %v38
    %v787 = vunpack.c.l.b16 %v39
    %v788 = vunpack.c.h.b16 %v39
    %v789 = vunpack.c.l.b16 %v40
    %v790 = vunpack.c.l.b16 %v41
    %v791 = vunpack.c.h.b16 %v41
    %v792 = vunpack.c.l.b16 %v42
    %v793 = vunpack.c.h.b16 %v42
    %v794 = vunpack.c.l.b16 %v43
    %v795 = vunpack.c.h.b16 %v43
    %v796 = vunpack.c.l.b16 %v44
    %v797 = vunpack.c.l.b16 %v45
    %v798 = vunpack.c.h.b16 %v45
    %v799 = vunpack.c.l.b16 %v46
    %v800 = vunpack.c.h.b16 %v46
    %v801 = vunpack.c.l.b16 %v47
    %v802 = vunpack.c.h.b16 %v47
    %v803 = vunpack.c.l.b16 %v48
    %v804 = vunpack.c.l.b16 %v49
    %v805 = vunpack.c.h.b16 %v49
    %v806 = vunpack.c.l.b16 %v50
    %v807 = vunpack.c.h.b16 %v50
    %v808 = vunpack.c.l.b16 %v51
    %v809 = vunpack.c.h.b16 %v51
    %v810 = vunpack.c.l.b16 %v52
    %v811 = vunpack.c.l.b16 %v53
    %v812 = vunpack.c.h.b16 %v53
    %v813 = vunpack.c.l.b16 %v54
    %v814 = vunpack.c.h.b16 %v54
    %v815 = vunpack.c.l.b16 %v55
    %v816 = vunpack.c.h.b16 %v55
    %v817 = vunpack.c.l.b16 %v56
    %v818 = vunpack.c.l.b16 %v57
    %v819 = vunpack.c.h.b16 %v57
    %v820 = vunpack.c.l.b16 %v58
    %v821 = vunpack.c.h.b16 %v58
    %v822 = vunpack.c.l.b16 %v59
    %v823 = vunpack.c.h.b16 %v59
    %v824 = vunpack.c.l.b16 %v60
    %v825 = vunpack.c.l.b16 %v61
    %v826 = vunpack.c.h.b16 %v61
    %v827 = vunpack.c.l.b16 %v62
    %v828 = vunpack.c.h.b16 %v62
    %v829 = vunpack.c.l.b16 %v63
    %v830 = vunpack.c.h.b16 %v63
    %v831 = vunpack.c.l.b16 %v64
    %v832 = vunpack.c.l.b16 %v65
    %v833 = vunpack.c.h.b16 %v65
    %v834 = vunpack.c.l.b16 %v66
    %v835 = vunpack.c.h.b16 %v66
    %v836 = vunpack.c.l.b16 %v67
    %v837 = vunpack.c.h.b16 %v67
    %v838 = vunpack.c.l.b16 %v68
    %v839 = vunpack.c.l.b16 %v69
    %v840 = vunpack.c.h.b16 %v69
    %v841 = vunpack.c.l.b16 %v70
    %v842 = vunpack.c.h.b16 %v70
    %v843 = vunpack.c.l.b16 %v71
    %v844 = vunpack.c.h.b16 %v71
    %v845 = vunpack.c.l.b16 %v72
    %v846 = vunpack.c.l.b16 %v73
    %v847 = vunpack.c.h.b16 %v73
    %v848 = vunpack.c.l.b16 %v74
    %v849 = vunpack.c.h.b16 %v74
    %v850 = vunpack.c.l.b16 %v75
    %v851 = vunpack.c.h.b16 %v75
    %v852 = vunpack.c.l.b16 %v76
    %v853 = vunpack.c.l.b16 %v77
    %v854 = vunpack.c.h.b16 %v77
    %v855 = vunpack.c.l.b16 %v78
    %v856 = vunpack.c.h.b16 %v78
    %v857 = vunpack.c.l.b16 %v79
    %v858 = vunpack.c.h.b16 %v79
    %v859 = vunpack.c.l.b16 %v80
    %v860 = vunpack.c.l.b16 %v81
    %v861 = vunpack.c.h.b16 %v81
    %v862 = vunpack.c.l.b16 %v82
    %v863 = vunpack.c.h.b16 %v82
    %v864 = vunpack.c.l.b16 %v83
    %v865 = vunpack.c.h.b16 %v83
    %v866 = vunpack.c.l.b16 %v84
    %v867 = vunpack.c.l.b16 %v85
    %v868 = vunpack.c.h.b16 %v85
    %v869 = vunpack.c.l.b16 %v86
    %v870 = vunpack.c.h.b16 %v86
    %v871 = vunpack.c.l.b16 %v87
    %v872 = vunpack.c.h.b16 %v87
    %v873 = vunpack.c.l.b16 %v88
    %v874 = vunpack.c.l.b16 %v89
    %v875 = vunpack.c.h.b16 %v89
    %v876 = vunpack.c.l.b16 %v90
    %v877 = vunpack.c.h.b16 %v90
    %v878 = vunpack.c.l.b16 %v91
    %v879 = vunpack.c.h.b16 %v91
    %v880 = vunpack.c.l.b16 %v92
    %v881 = vunpack.c.l.b16 %v93
    %v882 = vunpack.c.h.b16 %v93
    %v883 = vunpack.c.l.b16 %v94
    %v884 = vunpack.c.h.b16 %v94
    %v885 = vunpack.c.l.b16 %v95
    %v886 = vunpack.c.h.b16 %v95
    %v887 = vunpack.c.l.b16 %v96
    %v888 = vunpack.c.l.b16 %v97
    %v889 = vunpack.c.h.b16 %v97
    %v890 = vunpack.c.l.b16 %v98
    %v891 = vunpack.c.h.b16 %v98
    %v892 = vunpack.c.l.b16 %v99
    %v893 = vunpack.c.h.b16 %v99
    %v894 = vunpack.c.l.b16 %v100
    %v895 = vunpack.c.l.b16 %v101
    %v896 = vunpack.c.h.b16 %v101
    %v897 = vunpack.c.l.b16 %v102
    %v898 = vunpack.c.h.b16 %v102
    %v899 = vunpack.c.l.b16 %v103
    %v900 = vunpack.c.h.b16 %v103
    %v901 = vunpack.c.l.b16 %v104
    %v902 = vunpack.c.l.b16 %v105
    %v903 = vunpack.c.h.b16 %v105
    %v904 = vunpack.c.l.b16 %v106
    %v905 = vunpack.c.h.b16 %v106
    %v906 = vunpack.c.l.b16 %v107
    %v907 = vunpack.c.h.b16 %v107
    %v908 = vunpack.c.l.b16 %v108
    %v909 = vunpack.c.l.b16 %v109
    %v910 = vunpack.c.h.b16 %v109
    %v911 = vunpack.c.l.b16 %v110
    %v912 = vunpack.c.h.b16 %v110
    %v913 = vunpack.c.l.b16 %v111
    %v914 = vunpack.c.h.b16 %v111
    %v915 = vunpack.c.l.b16 %v112
    %v916 = vunpack.c.l.b16 %v113
    %v917 = vunpack.c.h.b16 %v113
    %v918 = vunpack.c.l.b16 %v114
    %v919 = vunpack.c.h.b16 %v114
    %v920 = vunpack.c.l.b16 %v115
    %v921 = vunpack.c.h.b16 %v115
    %v922 = vunpack.c.l.b16 %v116
    %v923 = vunpack.c.l.b16 %v117
    %v924 = vunpack.c.h.b16 %v117
    %v925 = vunpack.c.l.b16 %v118
    %v926 = vunpack.c.h.b16 %v118
    %v927 = vunpack.c.l.b16 %v119
    %v928 = vunpack.c.h.b16 %v119
    %v929 = vunpack.c.l.b16 %v120
    %v930 = vunpack.c.l.b16 %v121
    %v931 = vunpack.c.h.b16 %v121
    %v932 = vunpack.c.l.b16 %v122
    %v933 = vunpack.c.h.b16 %v122
    %v934 = vunpack.c.l.b16 %v123
    %v935 = vunpack.c.h.b16 %v123
    %v936 = vunpack.c.l.b16 %v124
    %v937 = vunpack.c.l.b16 %v125
    %v938 = vunpack.c.h.b16 %v125
    %v939 = vunpack.c.l.b16 %v126
    %v940 = vunpack.c.h.b16 %v126
    %v941 = vunpack.c.l.b16 %v127
    %v942 = vunpack.c.h.b16 %v127
    %v943 = vunpack.c.l.b16 %v128
    %v944 = vunpack.c.l.b16 %v129
    %v945 = vunpack.c.h.b16 %v129
    %v946 = vunpack.c.l.b16 %v130
    %v947 = vunpack.c.h.b16 %v130
    %v948 = vunpack.c.l.b16 %v131
    %v949 = vunpack.c.h.b16 %v131
    %v950 = vunpack.c.l.b16 %v132
    %v951 = vunpack.c.l.b16 %v133
    %v952 = vunpack.c.h.b16 %v133
    %v953 = vunpack.c.l.b16 %v134
    %v954 = vunpack.c.h.b16 %v134
    %v955 = vunpack.c.l.b16 %v135
    %v956 = vunpack.c.h.b16 %v135
    %v957 = vunpack.c.l.b16 %v136
    %v958 = vunpack.c.l.b16 %v137
    %v959 = vunpack.c.h.b16 %v137
    %v960 = vunpack.c.l.b16 %v138
    %v961 = vunpack.c.h.b16 %v138
    %v962 = vunpack.c.l.b16 %v139
    %v963 = vunpack.c.h.b16 %v139
    %v964 = vunpack.c.l.b16 %v140
    %v965 = vunpack.c.l.b16 %v141
    %v966 = vunpack.c.h.b16 %v141
    %v967 = vunpack.c.l.b16 %v142
    %v968 = vunpack.c.h.b16 %v142
    %v969 = vunpack.c.l.b16 %v143
    %v970 = vunpack.c.h.b16 %v143
    %v971 = vunpack.c.l.b16 %v144
    %v972 = vunpack.c.l.b16 %v145
    %v973 = vunpack.c.h.b16 %v145
    %v974 = vunpack.c.l.b16 %v146
    %v975 = vunpack.c.h.b16 %v146
    %v976 = vunpack.c.l.b16 %v147
    %v977 = vunpack.c.h.b16 %v147
    %v978 = vunpack.c.l.b16 %v148
    %v979 = vunpack.c.l.b16 %v149
    %v980 = vunpack.c.h.b16 %v149
    %v981 = vunpack.c.l.b16 %v150
    %v982 = vunpack.c.h.b16 %v150
    %v983 = vunpack.c.l.b16 %v151
    %v984 = vunpack.c.h.b16 %v151
    %v985 = vunpack.c.l.b16 %v152
    %v986 = vunpack.c.l.b16 %v153
    %v987 = vunpack.c.h.b16 %v153
    %v988 = vunpack.c.l.b16 %v154
    %v989 = vunpack.c.h.b16 %v154
    %v990 = vunpack.c.l.b16 %v155
    %v991 = vunpack.c.h.b16 %v155
    %v992 = vunpack.c.l.b16 %v156
    %v993 = vunpack.c.l.b16 %v157
    %v994 = vunpack.c.h.b16 %v157
    %v995 = vunpack.c.l.b16 %v158
    %v996 = vunpack.c.h.b16 %v158
    %v997 = vunpack.c.l.b16 %v159
    %v998 = vunpack.c.h.b16 %v159
    %v999 = vunpack.c.l.b16 %v160
    %v1000 = vunpack.c.l.b16 %v161
    %v1001 = vunpack.c.h.b16 %v161
    %v1002 = vunpack.c.l.b16 %v162
    %v1003 = vunpack.c.h.b16 %v162
    %v1004 = vunpack.c.l.b16 %v163
    %v1005 = vunpack.c.h.b16 %v163
    %v1006 = vunpack.c.l.b16 %v164
    %v1007 = vunpack.c.l.b16 %v165
    %v1008 = vunpack.c.h.b16 %v165
    %v1009 = vunpack.c.l.b16 %v166
    %v1010 = vunpack.c.h.b16 %v166
    %v1011 = vunpack.c.l.b16 %v167
    %v1012 = vunpack.c.h.b16 %v167
    %v1013 = vunpack.c.l.b16 %v168
    %v1014 = vunpack.c.l.b16 %v169
    %v1015 = vunpack.c.h.b16 %v169
    %v1016 = vunpack.c.l.b16 %v170
    %v1017 = vunpack.c.h.b16 %v170
    %v1018 = vunpack.c.l.b16 %v171
    %v1019 = vunpack.c.h.b16 %v171
    %v1020 = vunpack.c.l.b16 %v172
    %v1021 = vunpack.c.l.b16 %v173
    %v1022 = vunpack.c.h.b16 %v173
    %v1023 = vunpack.c.l.b16 %v174
    %v1024 = vunpack.c.h.b16 %v174
    %v1025 = vunpack.c.l.b16 %v175
    %v1026 = vunpack.c.h.b16 %v175
    %v1027 = vunpack.c.l.b16 %v176
    %v1028 = vunpack.c.l.b16 %v177
    %v1029 = vunpack.c.h.b16 %v177
    %v1030 = vunpack.c.l.b16 %v178
    %v1031 = vunpack.c.h.b16 %v178
    %v1032 = vunpack.c.l.b16 %v179
    %v1033 = vunpack.c.h.b16 %v179
    %v1034 = vunpack.c.l.b16 %v180
    %v1035 = vunpack.c.l.b16 %v181
    %v1036 = vunpack.c.h.b16 %v181
    %v1037 = vunpack.c.l.b16 %v182
    %v1038 = vunpack.c.h.b16 %v182
    %v1039 = vunpack.c.l.b16 %v183
    %v1040 = vunpack.c.h.b16 %v183
    %v1041 = vunpack.c.l.b16 %v184
    %v1042 = vunpack.c.l.b16 %v185
    %v1043 = vunpack.c.h.b16 %v185
    %v1044 = vunpack.c.l.b16 %v186
    %v1045 = vunpack.c.h.b16 %v186
    %v1046 = vunpack.c.l.b16 %v187
    %v1047 = vunpack.c.h.b16 %v187
    %v1048 = vunpack.c.l.b16 %v188
    %v1049 = vunpack.c.l.b16 %v189
    %v1050 = vunpack.c.h.b16 %v189
    %v1051 = vunpack.c.l.b16 %v190
    %v1052 = vunpack.c.h.b16 %v190
    %v1053 = vunpack.c.l.b16 %v191
    %v1054 = vunpack.c.h.b16 %v191
    %v1055 = vunpack.c.l.b16 %v192
    %v1056 = vunpack.c.l.b16 %v193
    %v1057 = vunpack.c.h.b16 %v193
    %v1058 = vunpack.c.l.b16 %v194
    %v1059 = vunpack.c.h.b16 %v194
    %v1060 = vunpack.c.l.b16 %v195
    %v1061 = vunpack.c.h.b16 %v195
    %v1062 = vunpack.c.l.b16 %v196
    %v1063 = vunpack.c.l.b16 %v197
    %v1064 = vunpack.c.h.b16 %v197
    %v1065 = vunpack.c.l.b16 %v198
    %v1066 = vunpack.c.h.b16 %v198
    %v1067 = vunpack.c.l.b16 %v199
    %v1068 = vunpack.c.h.b16 %v199
    %v1069 = vunpack.c.l.b16 %v200
    %v1070 = vunpack.c.l.b16 %v201
    %v1071 = vunpack.c.h.b16 %v201
    %v1072 = vunpack.c.l.b16 %v202
    %v1073 = vunpack.c.h.b16 %v202
    %v1074 = vunpack.c.l.b16 %v203
    %v1075 = vunpack.c.h.b16 %v203
    %v1076 = vunpack.c.l.b16 %v204
    %v1077 = vunpack.c.l.b16 %v205
    %v1078 = vunpack.c.h.b16 %v205
    %v1079 = vunpack.c.l.b16 %v206
    %v1080 = vunpack.c.h.b16 %v206
    %v1081 = vunpack.c.l.b16 %v207
    %v1082 = vunpack.c.h.b16 %v207
    %v1083 = vunpack.c.l.b16 %v208
    %v1084 = vunpack.c.l.b16 %v209
    %v1085 = vunpack.c.h.b16 %v209
    %v1086 = vunpack.c.l.b16 %v210
    %v1087 = vunpack.c.h.b16 %v210
    %v1088 = vunpack.c.l.b16 %v211
    %v1089 = vunpack.c.h.b16 %v211
    %v1090 = vunpack.c.l.b16 %v212
    %v1091 = vunpack.c.l.b16 %v213
    %v1092 = vunpack.c.h.b16 %v213
    %v1093 = vunpack.c.l.b16 %v214
    %v1094 = vunpack.c.h.b16 %v214
    %v1095 = vunpack.c.l.b16 %v215
    %v1096 = vunpack.c.h.b16 %v215
    %v1097 = vunpack.c.l.b16 %v216
    %v1098 = vunpack.c.l.b16 %v217
    %v1099 = vunpack.c.h.b16 %v217
    %v1100 = vunpack.c.l.b16 %v218
    %v1101 = vunpack.c.h.b16 %v218
    %v1102 = vunpack.c.l.b16 %v219
    %v1103 = vunpack.c.h.b16 %v219
    %v1104 = vunpack.c.l.b16 %v220
    %v1105 = vunpack.c.l.b16 %v221
    %v1106 = vunpack.c.h.b16 %v221
    %v1107 = vunpack.c.l.b16 %v222
    %v1108 = vunpack.c.h.b16 %v222
    %v1109 = vunpack.c.l.b16 %v223
    %v1110 = vunpack.c.h.b16 %v223
    %v1111 = vunpack.c.l.b16 %v224
    %v1112 = vunpack.c.l.b16 %v225
    %v1113 = vunpack.c.h.b16 %v225
    %v1114 = vunpack.c.l.b16 %v226
    %v1115 = vunpack.c.h.b16 %v226
    %v1116 = vunpack.c.l.b16 %v227
    %v1117 = vunpack.c.h.b16 %v227
    %v1118 = vunpack.c.l.b16 %v228
    %v1119 = vunpack.c.l.b16 %v229
    %v1120 = vunpack.c.h.b16 %v229
    %v1121 = vunpack.c.l.b16 %v230
    %v1122 = vunpack.c.h.b16 %v230
    %v1123 = vunpack.c.l.b16 %v231
    %v1124 = vunpack.c.h.b16 %v231
    %v1125 = vunpack.c.l.b16 %v232
    %v1126 = vunpack.c.l.b16 %v233
    %v1127 = vunpack.c.h.b16 %v233
    %v1128 = vunpack.c.l.b16 %v234
    %v1129 = vunpack.c.h.b16 %v234
    %v1130 = vunpack.c.l.b16 %v235
    %v1131 = vunpack.c.h.b16 %v235
    %v1132 = vunpack.c.l.b16 %v236
    %v1133 = vunpack.c.l.b16 %v237
    %v1134 = vunpack.c.h.b16 %v237
    %v1135 = vunpack.c.l.b16 %v238
    %v1136 = vunpack.c.h.b16 %v238
    %v1137 = vunpack.c.l.b16 %v239
    %v1138 = vunpack.c.h.b16 %v239
    %v1139 = vunpack.c.l.b16 %v240
    %v1140 = vunpack.c.l.b16 %v241
    %v1141 = vunpack.c.h.b16 %v241
    %v1142 = vunpack.c.l.b16 %v242
    %v1143 = vunpack.c.h.b16 %v242
    %v1144 = vunpack.c.l.b16 %v243
    %v1145 = vunpack.c.h.b16 %v243
    %v1146 = vunpack.c.l.b16 %v244
    %v1147 = vunpack.c.l.b16 %v245
    %v1148 = vunpack.c.h.b16 %v245
    %v1149 = vunpack.c.l.b16 %v246
    %v1150 = vunpack.c.h.b16 %v246
    %v1151 = vunpack.c.l.b16 %v247
    %v1152 = vunpack.c.h.b16 %v247
    %v1153 = vunpack.c.l.b16 %v248
    %v1154 = vunpack.c.l.b16 %v249
    %v1155 = vunpack.c.h.b16 %v249
    %v1156 = vunpack.c.l.b16 %v250
    %v1157 = vunpack.c.h.b16 %v250
    %v1158 = vunpack.c.l.b16 %v251
    %v1159 = vunpack.c.h.b16 %v251
    %v1160 = vunpack.c.l.b16 %v252
    %v1161 = vunpack.c.l.b16 %v253
    %v1162 = vunpack.c.h.b16 %v253
    %v1163 = vunpack.c.l.b16 %v254
    %v1164 = vunpack.c.h.b16 %v254
    %v1165 = vunpack.c.l.b16 %v255
    %v1166 = vunpack.c.h.b16 %v255
    %v1167 = vunpack.c.l.b16 %v256
    %v1168 = vunpack.c.l.b16 %v257
    %v1169 = vunpack.c.h.b16 %v257
    %v1170 = vunpack.c.l.b16 %v258
    %v1171 = vunpack.c.h.b16 %v258
    %v1172 = vunpack.c.l.b16 %v259
    %v1173 = vunpack.c.h.b16 %v259
    %v1174 = vunpack.c.l.b16 %v260
    %v1175 = vunpack.c.l.b16 %v261
    %v1176 = vunpack.c.h.b16 %v261
    %v1177 = vunpack.c.l.b16 %v262
    %v1178 = vunpack.c.h.b16 %v262
    %v1179 = vunpack.c.l.b16 %v263
    %v1180 = vunpack.c.h.b16 %v263
    %v1181 = vunpack.c.l.b16 %v264
    %v1182 = vunpack.c.l.b16 %v265
    %v1183 = vunpack.c.h.b16 %v265
    %v1184 = vunpack.c.l.b16 %v266
    %v1185 = vunpack.c.h.b16 %v266
    %v1186 = vunpack.c.l.b16 %v267
    %v1187 = vunpack.c.h.b16 %v267
    %v1188 = vunpack.c.l.b16 %v268
    %v1189 = vunpack.c.l.b16 %v269
    %v1190 = vunpack.c.h.b16 %v269
    %v1191 = vunpack.c.l.b16 %v270
    %v1192 = vunpack.c.h.b16 %v270
    %v1193 = vunpack.c.l.b16 %v271
    %v1194 = vunpack.c.h.b16 %v271
    %v1195 = vunpack.c.l.b16 %v272
    %v1196 = vunpack.c.l.b16 %v273
    %v1197 = vunpack.c.h.b16 %v273
    %v1198 = vunpack.c.l.b16 %v274
    %v1199 = vunpack.c.h.b16 %v274
    %v1200 = vunpack.c.l.b16 %v275
    %v1201 = vunpack.c.h.b16 %v275
    %v1202 = vunpack.c.l.b16 %v276
    %v1203 = vunpack.c.l.b16 %v277
    %v1204 = vunpack.c.h.b16 %v277
    %v1205 = vunpack.c.l.b16 %v278
    %v1206 = vunpack.c.h.b16 %v278
    %v1207 = vunpack.c.l.b16 %v279
    %v1208 = vunpack.c.h.b16 %v279
    %v1209 = vunpack.c.l.b16 %v280
    %v1210 = vpack.c.b16 %v769, %v762
    %v1211 = vpack.c.b16 %v770, %v763
    %v1212 = vpack.c.b16 %v771, %v764
    %v1213 = vpack.c.b16 %v772, %v765
    %v1214 = vpack.c.b16 %v773, %v766
    %v1215 = vpack.c.b16 %v774, %v767
    %v1216 = vpack.c.b16 %v775, %v768
    %v1217 = vpack.c.b16 %v783, %v776
    %v1218 = vpack.c.b16 %v784, %v777
    %v1219 = vpack.c.b16 %v785, %v778
    %v1220 = vpack.c.b16 %v786, %v779
    %v1221 = vpack.c.b16 %v787, %v780
    %v1222 = vpack.c.b16 %v788, %v781
    %v1223 = vpack.c.b16 %v789, %v782
    %v1224 = vpack.c.b16 %v797, %v790
    %v1225 = vpack.c.b16 %v798, %v791
    %v1226 = vpack.c.b16 %v799, %v792
    %v1227 = vpack.c.b16 %v800, %v793
    %v1228 = vpack.c.b16 %v801, %v794
    %v1229 = vpack.c.b16 %v802, %v795
    %v1230 = vpack.c.b16 %v803, %v796
    %v1231 = vpack.c.b16 %v811, %v804
    %v1232 = vpack.c.b16 %v812, %v805
    %v1233 = vpack.c.b16 %v813, %v806
    %v1234 = vpack.c.b16 %v814, %v807
    %v1235 = vpack.c.b16 %v815, %v808
    %v1236 = vpack.c.b16 %v816, %v809
    %v1237 = vpack.c.b16 %v817, %v810
    %v1238 = vpack.c.b16 %v825, %v818
    %v1239 = vpack.c.b16 %v826, %v819
    %v1240 = vpack.c.b16 %v827, %v820
    %v1241 = vpack.c.b16 %v828, %v821
    %v1242 = vpack.c.b16 %v829, %v822
    %v1243 = vpack.c.b16 %v830, %v823
    %v1244 = vpack.c.b16 %v831, %v824
    %v1245 = vpack.c.b16 %v839, %v832
    %v1246 = vpack.c.b16 %v840, %v833
    %v1247 = vpack.c.b16 %v841, %v834
    %v1248 = vpack.c.b16 %v842, %v835
    %v1249 = vpack.c.b16 %v843, %v836
    %v1250 = vpack.c.b16 %v844, %v837
    %v1251 = vpack.c.b16 %v845, %v838
    %v1252 = vpack.c.b16 %v853, %v846
    %v1253 = vpack.c.b16 %v854, %v847
    %v1254 = vpack.c.b16 %v855, %v848
    %v1255 = vpack.c.b16 %v856, %v849
    %v1256 = vpack.c.b16 %v857, %v850
    %v1257 = vpack.c.b16 %v858, %v851
    %v1258 = vpack.c.b16 %v859, %v852
    %v1259 = vpack.c.b16 %v867, %v860
    %v1260 = vpack.c.b16 %v868, %v861
    %v1261 = vpack.c.b16 %v869, %v862
    %v1262 = vpack.c.b16 %v870, %v863
    %v1263 = vpack.c.b16 %v871, %v864
    %v1264 = vpack.c.b16 %v872, %v865
    %v1265 = vpack.c.b16 %v873, %v866
    %v1266 = vpack.c.b16 %v881, %v874
    %v1267 = vpack.c.b16 %v882, %v875
    %v1268 = vpack.c.b16 %v883, %v876
    %v1269 = vpack.c.b16 %v884, %v877
    %v1270 = vpack.c.b16 %v885, %v878
    %v1271 = vpack.c.b16 %v886, %v879
    %v1272 = vpack.c.b16 %v887, %v880
    %v1273 = vpack.c.b16 %v895, %v888
    %v1274 = vpack.c.b16 %v896, %v889
    %v1275 = vpack.c.b16 %v897, %v890
    %v1276 = vpack.c.b16 %v898, %v891
    %v1277 = vpack.c.b16 %v899, %v892
    %v1278 = vpack.c.b16 %v900, %v893
    %v1279 = vpack.c.b16 %v901, %v894
    %v1280 = vpack.c.b16 %v909, %v902
    %v1281 = vpack.c.b16 %v910, %v903
    %v1282 = vpack.c.b16 %v911, %v904
    %v1283 = vpack.c.b16 %v912, %v905
    %v1284 = vpack.c.b16 %v913, %v906
    %v1285 = vpack.c.b16 %v914, %v907
    %v1286 = vpack.c.b16 %v915, %v908
    %v1287 = vpack.c.b16 %v923, %v916
    %v1288 = vpack.c.b16 %v924, %v917
    %v1289 = vpack.c.b16 %v925, %v918
    %v1290 = vpack.c.b16 %v926, %v919
    %v1291 = vpack.c.b16 %v927, %v920
    %v1292 = vpack.c.b16 %v928, %v921
    %v1293 = vpack.c.b16 %v929, %v922
    %v1294 = vpack.c.b16 %v937, %v930
    %v1295 = vpack.c.b16 %v938, %v931
    %v1296 = vpack.c.b16 %v939, %v932
    %v1297 = vpack.c.b16 %v940, %v933
    %v1298 = vpack.c.b16 %v941, %v934
    %v1299 = vpack.c.b16 %v942, %v935
    %v1300 = vpack.c.b16 %v943, %v936
    %v1301 = vpack.c.b16 %v951, %v944
    %v1302 = vpack.c.b16 %v952, %v945
    %v1303 = vpack.c.b16 %v953, %v946
    %v1304 = vpack.c.b16 %v954, %v947
    %v1305 = vpack.c.b16 %v955, %v948
    %v1306 = vpack.c.b16 %v956, %v949
    %v1307 = vpack.c.b16 %v957, %v950
    %v1308 = vpack.c.b16 %v965, %v958
    %v1309 = vpack.c.b16 %v966, %v959
    %v1310 = vpack.c.b16 %v967, %v960
    %v1311 = vpack.c.b16 %v968, %v961
    %v1312 = vpack.c.b16 %v969, %v962
    %v1313 = vpack.c.b16 %v970, %v963
    %v1314 = vpack.c.b16 %v971, %v964
    %v1315 = vpack.c.b16 %v979, %v972
    %v1316 = vpack.c.b16 %v980, %v973
    %v1317 = vpack.c.b16 %v981, %v974
    %v1318 = vpack.c.b16 %v982, %v975
    %v1319 = vpack.c.b16 %v983, %v976
    %v1320 = vpack.c.b16 %v984, %v977
    %v1321 = vpack.c.b16 %v985, %v978
    %v1322 = vpack.c.b16 %v993, %v986
    %v1323 = vpack.c.b16 %v994, %v987
    %v1324 = vpack.c.b16 %v995, %v988
    %v1325 = vpack.c.b16 %v996, %v989
    %v1326 = vpack.c.b16 %v997, %v990
    %v1327 = vpack.c.b16 %v998, %v991
    %v1328 = vpack.c.b16 %v999, %v992
    %v1329 = vpack.c.b16 %v1007, %v1000
    %v1330 = vpack.c.b16 %v1008, %v1001
    %v1331 = vpack.c.b16 %v1009, %v1002
    %v1332 = vpack.c.b16 %v1010, %v1003
    %v1333 = vpack.c.b16 %v1011, %v1004
    %v1334 = vpack.c.b16 %v1012, %v1005
    %v1335 = vpack.c.b16 %v1013, %v1006
    %v1336 = vpack.c.b16 %v1021, %v1014
    %v1337 = vpack.c.b16 %v1022, %v1015
    %v1338 = vpack.c.b16 %v1023, %v1016
    %v1339 = vpack.c.b16 %v1024, %v1017
    %v1340 = vpack.c.b16 %v1025, %v1018
    %v1341 = vpack.c.b16 %v1026, %v1019
    %v1342 = vpack.c.b16 %v1027, %v1020
    %v1343 = vpack.c.b16 %v1035, %v1028
    %v1344 = vpack.c.b16 %v1036, %v1029
    %v1345 = vpack.c.b16 %v1037, %v1030
    %v1346 = vpack.c.b16 %v1038, %v1031
    %v1347 = vpack.c.b16 %v1039, %v1032
    %v1348 = vpack.c.b16 %v1040, %v1033
    %v1349 = vpack.c.b16 %v1041, %v1034
    %v1350 = vpack.c.b16 %v1049, %v1042
    %v1351 = vpack.c.b16 %v1050, %v1043
    %v1352 = vpack.c.b16 %v1051, %v1044
    %v1353 = vpack.c.b16 %v1052, %v1045
    %v1354 = vpack.c.b16 %v1053, %v1046
    %v1355 = vpack.c.b16 %v1054, %v1047
    %v1356 = vpack.c.b16 %v1055, %v1048
    %v1357 = vpack.c.b16 %v1063, %v1056
    %v1358 = vpack.c.b16 %v1064, %v1057
    %v1359 = vpack.c.b16 %v1065, %v1058
    %v1360 = vpack.c.b16 %v1066, %v1059
    %v1361 = vpack.c.b16 %v1067, %v1060
    %v1362 = vpack.c.b16 %v1068, %v1061
    %v1363 = vpack.c.b16 %v1069, %v1062
    %v1364 = vpack.c.b16 %v1077, %v1070
    %v1365 = vpack.c.b16 %v1078, %v1071
    %v1366 = vpack.c.b16 %v1079, %v1072
    %v1367 = vpack.c.b16 %v1080, %v1073
    %v1368 = vpack.c.b16 %v1081, %v1074
    %v1369 = vpack.c.b16 %v1082, %v1075
    %v1370 = vpack.c.b16 %v1083, %v1076
    %v1371 = vpack.c.b16 %v1091, %v1084
    %v1372 = vpack.c.b16 %v1092, %v1085
    %v1373 = vpack.c.b16 %v1093, %v1086
    %v1374 = vpack.c.b16 %v1094, %v1087
    %v1375 = vpack.c.b16 %v1095, %v1088
    %v1376 = vpack.c.b16 %v1096, %v1089
    %v1377 = vpack.c.b16 %v1097, %v1090
    %v1378 = vpack.c.b16 %v1105, %v1098
    %v1379 = vpack.c.b16 %v1106, %v1099
    %v1380 = vpack.c.b16 %v1107, %v1100
    %v1381 = vpack.c.b16 %v1108, %v1101
    %v1382 = vpack.c.b16 %v1109, %v1102
    %v1383 = vpack.c.b16 %v1110, %v1103
    %v1384 = vpack.c.b16 %v1111, %v1104
    %v1385 = vpack.c.b16 %v1119, %v1112
    %v1386 = vpack.c.b16 %v1120, %v1113
    %v1387 = vpack.c.b16 %v1121, %v1114
    %v1388 = vpack.c.b16 %v1122, %v1115
    %v1389 = vpack.c.b16 %v1123, %v1116
    %v1390 = vpack.c.b16 %v1124, %v1117
    %v1391 = vpack.c.b16 %v1125, %v1118
    %v1392 = vpack.c.b16 %v1133, %v1126
    %v1393 = vpack.c.b16 %v1134, %v1127
    %v1394 = vpack.c.b16 %v1135, %v1128
    %v1395 = vpack.c.b16 %v1136, %v1129
    %v1396 = vpack.c.b16 %v1137, %v1130
    %v1397 = vpack.c.b16 %v1138, %v1131
    %v1398 = vpack.c.b16 %v1139, %v1132
    %v1399 = vpack.c.b16 %v1147, %v1140
    %v1400 = vpack.c.b16 %v1148, %v1141
    %v1401 = vpack.c.b16 %v1149, %v1142
    %v1402 = vpack.c.b16 %v1150, %v1143
    %v1403 = vpack.c.b16 %v1151, %v1144
    %v1404 = vpack.c.b16 %v1152, %v1145
    %v1405 = vpack.c.b16 %v1153, %v1146
    %v1406 = vpack.c.b16 %v1161, %v1154
    %v1407 = vpack.c.b16 %v1162, %v1155
    %v1408 = vpack.c.b16 %v1163, %v1156
    %v1409 = vpack.c.b16 %v1164, %v1157
    %v1410 = vpack.c.b16 %v1165, %v1158
    %v1411 = vpack.c.b16 %v1166, %v1159
    %v1412 = vpack.c.b16 %v1167, %v1160
    %v1413 = vpack.c.b16 %v1175, %v1168
    %v1414 = vpack.c.b16 %v1176, %v1169
    %v1415 = vpack.c.b16 %v1177, %v1170
    %v1416 = vpack.c.b16 %v1178, %v1171
    %v1417 = vpack.c.b16 %v1179, %v1172
    %v1418 = vpack.c.b16 %v1180, %v1173
    %v1419 = vpack.c.b16 %v1181, %v1174
    %v1420 = vpack.c.b16 %v1189, %v1182
    %v1421 = vpack.c.b16 %v1190, %v1183
    %v1422 = vpack.c.b16 %v1191, %v1184
    %v1423 = vpack.c.b16 %v1192, %v1185
    %v1424 = vpack.c.b16 %v1193, %v1186
    %v1425 = vpack.c.b16 %v1194, %v1187
    %v1426 = vpack.c.b16 %v1195, %v1188
    %v1427 = vpack.c.b16 %v1203, %v1196
    %v1428 = vpack.c.b16 %v1204, %v1197
    %v1429 = vpack.c.b16 %v1205, %v1198
    %v1430 = vpack.c.b16 %v1206, %v1199
    %v1431 = vpack.c.b16 %v1207, %v1200
    %v1432 = vpack.c.b16 %v1208, %v1201
    %v1433 = vpack.c.b16 %v1209, %v1202
    %v1834 = vunpack.c.l.b16 %v281
    %v1835 = vunpack.c.h.b16 %v281
    %v1836 = vunpack.c.l.b16 %v282
    %v1837 = vunpack.c.l.b16 %v283
    %v1838 = vunpack.c.h.b16 %v283
    %v1839 = vunpack.c.l.b16 %v284
    %v1840 = vunpack.c.l.b16 %v285
    %v1841 = vunpack.c.h.b16 %v285
    %v1842 = vunpack.c.l.b16 %v286
    %v1843 = vunpack.c.l.b16 %v287
    %v1844 = vunpack.c.h.b16 %v287
    %v1845 = vunpack.c.l.b16 %v288
    %v1846 = vunpack.c.l.b16 %v289
    %v1847 = vunpack.c.h.b16 %v289
    %v1848 = vunpack.c.l.b16 %v290
    %v1849 = vunpack.c.l.b16 %v291
    %v1850 = vunpack.c.h.b16 %v291
    %v1851 = vunpack.c.l.b16 %v292
    %v1852 = vunpack.c.l.b16 %v293
    %v1853 = vunpack.c.h.b16 %v293
    %v1854 = vunpack.c.l.b16 %v294
    %v1855 = vunpack.c.l.b16 %v295
    %v1856 = vunpack.c.h.b16 %v295
    %v1857 = vunpack.c.l.b16 %v296
    %v1858 = vunpack.c.l.b16 %v297
    %v1859 = vunpack.c.h.b16 %v297
    %v1860 = vunpack.c.l.b16 %v298
    %v1861 = vunpack.c.l.b16 %v299
    %v1862 = vunpack.c.h.b16 %v299
    %v1863 = vunpack.c.l.b16 %v300
    %v1864 = vunpack.c.l.b16 %v301
    %v1865 = vunpack.c.h.b16 %v301
    %v1866 = vunpack.c.l.b16 %v302
    %v1867 = vunpack.c.l.b16 %v303
    %v1868 = vunpack.c.h.b16 %v303
    %v1869 = vunpack.c.l.b16 %v304
    %v1870 = vunpack.c.l.b16 %v305
    %v1871 = vunpack.c.h.b16 %v305
    %v1872 = vunpack.c.l.b16 %v306
    %v1873 = vunpack.c.l.b16 %v307
    %v1874 = vunpack.c.h.b16 %v307
    %v1875 = vunpack.c.l.b16 %v308
    %v1876 = vunpack.c.l.b16 %v309
    %v1877 = vunpack.c.h.b16 %v309
    %v1878 = vunpack.c.l.b16 %v310
    %v1879 = vunpack.c.l.b16 %v311
    %v1880 = vunpack.c.h.b16 %v311
    %v1881 = vunpack.c.l.b16 %v312
    %v1882 = vunpack.c.l.b16 %v313
    %v1883 = vunpack.c.h.b16 %v313
    %v1884 = vunpack.c.l.b16 %v314
    %v1885 = vunpack.c.l.b16 %v315
    %v1886 = vunpack.c.h.b16 %v315
    %v1887 = vunpack.c.l.b16 %v316
    %v1888 = vunpack.c.l.b16 %v317
    %v1889 = vunpack.c.h.b16 %v317
    %v1890 = vunpack.c.l.b16 %v318
    %v1891 = vunpack.c.l.b16 %v319
    %v1892 = vunpack.c.h.b16 %v319
    %v1893 = vunpack.c.l.b16 %v320
    %v1894 = vunpack.c.l.b16 %v321
    %v1895 = vunpack.c.h.b16 %v321
    %v1896 = vunpack.c.l.b16 %v322
    %v1897 = vunpack.c.l.b16 %v323
    %v1898 = vunpack.c.h.b16 %v323
    %v1899 = vunpack.c.l.b16 %v324
    %v1900 = vunpack.c.l.b16 %v325
    %v1901 = vunpack.c.h.b16 %v325
    %v1902 = vunpack.c.l.b16 %v326
    %v1903 = vunpack.c.l.b16 %v327
    %v1904 = vunpack.c.h.b16 %v327
    %v1905 = vunpack.c.l.b16 %v328
    %v1906 = vunpack.c.l.b16 %v329
    %v1907 = vunpack.c.h.b16 %v329
    %v1908 = vunpack.c.l.b16 %v330
    %v1909 = vunpack.c.l.b16 %v331
    %v1910 = vunpack.c.h.b16 %v331
    %v1911 = vunpack.c.l.b16 %v332
    %v1912 = vunpack.c.l.b16 %v333
    %v1913 = vunpack.c.h.b16 %v333
    %v1914 = vunpack.c.l.b16 %v334
    %v1915 = vunpack.c.l.b16 %v335
    %v1916 = vunpack.c.h.b16 %v335
    %v1917 = vunpack.c.l.b16 %v336
    %v1918 = vunpack.c.l.b16 %v337
    %v1919 = vunpack.c.h.b16 %v337
    %v1920 = vunpack.c.l.b16 %v338
    %v1921 = vunpack.c.l.b16 %v339
    %v1922 = vunpack.c.h.b16 %v339
    %v1923 = vunpack.c.l.b16 %v340
    %v1924 = vunpack.c.l.b16 %v341
    %v1925 = vunpack.c.h.b16 %v341
    %v1926 = vunpack.c.l.b16 %v342
    %v1927 = vunpack.c.l.b16 %v343
    %v1928 = vunpack.c.h.b16 %v343
    %v1929 = vunpack.c.l.b16 %v344
    %v1930 = vunpack.c.l.b16 %v345
    %v1931 = vunpack.c.h.b16 %v345
    %v1932 = vunpack.c.l.b16 %v346
    %v1933 = vunpack.c.l.b16 %v347
    %v1934 = vunpack.c.h.b16 %v347
    %v1935 = vunpack.c.l.b16 %v348
    %v1936 = vunpack.c.l.b16 %v349
    %v1937 = vunpack.c.h.b16 %v349
    %v1938 = vunpack.c.l.b16 %v350
    %v1939 = vunpack.c.l.b16 %v351
    %v1940 = vunpack.c.h.b16 %v351
    %v1941 = vunpack.c.l.b16 %v352
    %v1942 = vunpack.c.l.b16 %v353
    %v1943 = vunpack.c.h.b16 %v353
    %v1944 = vunpack.c.l.b16 %v354
    %v1945 = vunpack.c.l.b16 %v355
    %v1946 = vunpack.c.h.b16 %v355
    %v1947 = vunpack.c.l.b16 %v356
    %v1948 = vunpack.c.l.b16 %v357
    %v1949 = vunpack.c.h.b16 %v357
    %v1950 = vunpack.c.l.b16 %v358
    %v1951 = vunpack.c.l.b16 %v359
    %v1952 = vunpack.c.h.b16 %v359
    %v1953 = vunpack.c.l.b16 %v360
    %v1954 = vunpack.c.l.b16 %v361
    %v1955 = vunpack.c.h.b16 %v361
    %v1956 = vunpack.c.l.b16 %v362
    %v1957 = vunpack.c.l.b16 %v363
    %v1958 = vunpack.c.h.b16 %v363
    %v1959 = vunpack.c.l.b16 %v364
    %v1960 = vunpack.c.l.b16 %v365
    %v1961 = vunpack.c.h.b16 %v365
    %v1962 = vunpack.c.l.b16 %v366
    %v1963 = vunpack.c.l.b16 %v367
    %v1964 = vunpack.c.h.b16 %v367
    %v1965 = vunpack.c.l.b16 %v368
    %v1966 = vunpack.c.l.b16 %v369
    %v1967 = vunpack.c.h.b16 %v369
    %v1968 = vunpack.c.l.b16 %v370
    %v1969 = vunpack.c.l.b16 %v371
    %v1970 = vunpack.c.h.b16 %v371
    %v1971 = vunpack.c.l.b16 %v372
    %v1972 = vunpack.c.l.b16 %v373
    %v1973 = vunpack.c.h.b16 %v373
    %v1974 = vunpack.c.l.b16 %v374
    %v1975 = vunpack.c.l.b16 %v375
    %v1976 = vunpack.c.h.b16 %v375
    %v1977 = vunpack.c.l.b16 %v376
    %v1978 = vunpack.c.l.b16 %v377
    %v1979 = vunpack.c.h.b16 %v377
    %v1980 = vunpack.c.l.b16 %v378
    %v1981 = vunpack.c.l.b16 %v379
    %v1982 = vunpack.c.h.b16 %v379
    %v1983 = vunpack.c.l.b16 %v380
    %v1984 = vunpack.c.l.b16 %v381
    %v1985 = vunpack.c.h.b16 %v381
    %v1986 = vunpack.c.l.b16 %v382
    %v1987 = vunpack.c.l.b16 %v383
    %v1988 = vunpack.c.h.b16 %v383
    %v1989 = vunpack.c.l.b16 %v384
    %v1990 = vunpack.c.l.b16 %v385
    %v1991 = vunpack.c.h.b16 %v385
    %v1992 = vunpack.c.l.b16 %v386
    %v1993 = vunpack.c.l.b16 %v387
    %v1994 = vunpack.c.h.b16 %v387
    %v1995 = vunpack.c.l.b16 %v388
    %v1996 = vunpack.c.l.b16 %v389
    %v1997 = vunpack.c.h.b16 %v389
    %v1998 = vunpack.c.l.b16 %v390
    %v1999 = vunpack.c.l.b16 %v391
    %v2000 = vunpack.c.h.b16 %v391
    %v2001 = vunpack.c.l.b16 %v392
    %v2002 = vunpack.c.l.b16 %v393
    %v2003 = vunpack.c.h.b16 %v393
    %v2004 = vunpack.c.l.b16 %v394
    %v2005 = vunpack.c.l.b16 %v395
    %v2006 = vunpack.c.h.b16 %v395
    %v2007 = vunpack.c.l.b16 %v396
    %v2008 = vunpack.c.l.b16 %v397
    %v2009 = vunpack.c.h.b16 %v397
    %v2010 = vunpack.c.l.b16 %v398
    %v2011 = vunpack.c.l.b16 %v399
    %v2012 = vunpack.c.h.b16 %v399
    %v2013 = vunpack.c.l.b16 %v400
    %v2014 = vunpack.c.l.b16 %v401
    %v2015 = vunpack.c.h.b16 %v401
    %v2016 = vunpack.c.l.b16 %v402
    %v2017 = vunpack.c.l.b16 %v403
    %v2018 = vunpack.c.h.b16 %v403
    %v2019 = vunpack.c.l.b16 %v404
    %v2020 = vunpack.c.l.b16 %v405
    %v2021 = vunpack.c.h.b16 %v405
    %v2022 = vunpack.c.l.b16 %v406
    %v2023 = vunpack.c.l.b16 %v407
    %v2024 = vunpack.c.h.b16 %v407
    %v2025 = vunpack.c.l.b16 %v408
    %v2026 = vunpack.c.l.b16 %v409
    %v2027 = vunpack.c.h.b16 %v409
    %v2028 = vunpack.c.l.b16 %v410
    %v2029 = vunpack.c.l.b16 %v411
    %v2030 = vunpack.c.h.b16 %v411
    %v2031 = vunpack.c.l.b16 %v412
    %v2032 = vunpack.c.l.b16 %v413
    %v2033 = vunpack.c.h.b16 %v413
    %v2034 = vunpack.c.l.b16 %v414
    %v2035 = vunpack.c.l.b16 %v415
    %v2036 = vunpack.c.h.b16 %v415
    %v2037 = vunpack.c.l.b16 %v416
    %v2038 = vunpack.c.l.b16 %v417
    %v2039 = vunpack.c.h.b16 %v417
    %v2040 = vunpack.c.l.b16 %v418
    %v2041 = vunpack.c.l.b16 %v419
    %v2042 = vunpack.c.h.b16 %v419
    %v2043 = vunpack.c.l.b16 %v420
    %v2044 = vunpack.c.l.b16 %v421
    %v2045 = vunpack.c.h.b16 %v421
    %v2046 = vunpack.c.l.b16 %v422
    %v2047 = vunpack.c.l.b16 %v423
    %v2048 = vunpack.c.h.b16 %v423
    %v2049 = vunpack.c.l.b16 %v424
    %v2050 = vunpack.c.l.b16 %v425
    %v2051 = vunpack.c.h.b16 %v425
    %v2052 = vunpack.c.l.b16 %v426
    %v2053 = vunpack.c.l.b16 %v427
    %v2054 = vunpack.c.h.b16 %v427
    %v2055 = vunpack.c.l.b16 %v428
    %v2056 = vunpack.c.l.b16 %v429
    %v2057 = vunpack.c.h.b16 %v429
    %v2058 = vunpack.c.l.b16 %v430
    %v2059 = vunpack.c.l.b16 %v431
    %v2060 = vunpack.c.h.b16 %v431
    %v2061 = vunpack.c.l.b16 %v432
    %v2062 = vunpack.c.l.b16 %v433
    %v2063 = vunpack.c.h.b16 %v433
    %v2064 = vunpack.c.l.b16 %v434
    %v2065 = vunpack.c.l.b16 %v435
    %v2066 = vunpack.c.h.b16 %v435
    %v2067 = vunpack.c.l.b16 %v436
    %v2068 = vunpack.c.l.b16 %v437
    %v2069 = vunpack.c.h.b16 %v437
    %v2070 = vunpack.c.l.b16 %v438
    %v2071 = vunpack.c.l.b16 %v439
    %v2072 = vunpack.c.h.b16 %v439
    %v2073 = vunpack.c.l.b16 %v440
    %v2074 = vunpack.c.l.b16 %v441
    %v2075 = vunpack.c.h.b16 %v441
    %v2076 = vunpack.c.l.b16 %v442
    %v2077 = vunpack.c.l.b16 %v443
    %v2078 = vunpack.c.h.b16 %v443
    %v2079 = vunpack.c.l.b16 %v444
    %v2080 = vunpack.c.l.b16 %v445
    %v2081 = vunpack.c.h.b16 %v445
    %v2082 = vunpack.c.l.b16 %v446
    %v2083 = vunpack.c.l.b16 %v447
    %v2084 = vunpack.c.h.b16 %v447
    %v2085 = vunpack.c.l.b16 %v448
    %v2086 = vunpack.c.l.b16 %v449
    %v2087 = vunpack.c.h.b16 %v449
    %v2088 = vunpack.c.l.b16 %v450
    %v2089 = vunpack.c.l.b16 %v451
    %v2090 = vunpack.c.h.b16 %v451
    %v2091 = vunpack.c.l.b16 %v452
    %v2092 = vunpack.c.l.b16 %v453
    %v2093 = vunpack.c.h.b16 %v453
    %v2094 = vunpack.c.l.b16 %v454
    %v2095 = vunpack.c.l.b16 %v455
    %v2096 = vunpack.c.h.b16 %v455
    %v2097 = vunpack.c.l.b16 %v456
    %v2098 = vunpack.c.l.b16 %v457
    %v2099 = vunpack.c.h.b16 %v457
    %v2100 = vunpack.c.l.b16 %v458
    %v2101 = vunpack.c.l.b16 %v459
    %v2102 = vunpack.c.h.b16 %v459
    %v2103 = vunpack.c.l.b16 %v460
    %v2104 = vunpack.c.l.b16 %v461
    %v2105 = vunpack.c.h.b16 %v461
    %v2106 = vunpack.c.l.b16 %v462
    %v2107 = vunpack.c.l.b16 %v463
    %v2108 = vunpack.c.h.b16 %v463
    %v2109 = vunpack.c.l.b16 %v464
    %v2110 = vunpack.c.l.b16 %v465
    %v2111 = vunpack.c.h.b16 %v465
    %v2112 = vunpack.c.l.b16 %v466
    %v2113 = vunpack.c.l.b16 %v467
    %v2114 = vunpack.c.h.b16 %v467
    %v2115 = vunpack.c.l.b16 %v468
    %v2116 = vunpack.c.l.b16 %v469
    %v2117 = vunpack.c.h.b16 %v469
    %v2118 = vunpack.c.l.b16 %v470
    %v2119 = vunpack.c.l.b16 %v471
    %v2120 = vunpack.c.h.b16 %v471
    %v2121 = vunpack.c.l.b16 %v472
    %v2122 = vunpack.c.l.b16 %v473
    %v2123 = vunpack.c.h.b16 %v473
    %v2124 = vunpack.c.l.b16 %v474
    %v2125 = vunpack.c.l.b16 %v475
    %v2126 = vunpack.c.h.b16 %v475
    %v2127 = vunpack.c.l.b16 %v476
    %v2128 = vunpack.c.l.b16 %v477
    %v2129 = vunpack.c.h.b16 %v477
    %v2130 = vunpack.c.l.b16 %v478
    %v2131 = vunpack.c.l.b16 %v479
    %v2132 = vunpack.c.h.b16 %v479
    %v2133 = vunpack.c.l.b16 %v480
    %v2134 = vunpack.c.l.b16 %v481
    %v2135 = vunpack.c.h.b16 %v481
    %v2136 = vunpack.c.l.b16 %v482
    %v2137 = vunpack.c.l.b16 %v483
    %v2138 = vunpack.c.h.b16 %v483
    %v2139 = vunpack.c.l.b16 %v484
    %v2140 = vunpack.c.l.b16 %v485
    %v2141 = vunpack.c.h.b16 %v485
    %v2142 = vunpack.c.l.b16 %v486
    %v2143 = vunpack.c.l.b16 %v487
    %v2144 = vunpack.c.h.b16 %v487
    %v2145 = vunpack.c.l.b16 %v488
    %v2146 = vpack.c.b16 %v1837, %v1834
    %v2147 = vpack.c.b16 %v1838, %v1835
    %v2148 = vpack.c.b16 %v1839, %v1836
    %v2149 = vpack.c.b16 %v1843, %v1840
    %v2150 = vpack.c.b16 %v1844, %v1841
    %v2151 = vpack.c.b16 %v1845, %v1842
    %v2152 = vpack.c.b16 %v1849, %v1846
    %v2153 = vpack.c.b16 %v1850, %v1847
    %v2154 = vpack.c.b16 %v1851, %v1848
    %v2155 = vpack.c.b16 %v1855, %v1852
    %v2156 = vpack.c.b16 %v1856, %v1853
    %v2157 = vpack.c.b16 %v1857, %v1854
    %v2158 = vpack.c.b16 %v1861, %v1858
    %v2159 = vpack.c.b16 %v1862, %v1859
    %v2160 = vpack.c.b16 %v1863, %v1860
    %v2161 = vpack.c.b16 %v1867, %v1864
    %v2162 = vpack.c.b16 %v1868, %v1865
    %v2163 = vpack.c.b16 %v1869, %v1866
    %v2164 = vpack.c.b16 %v1873, %v1870
    %v2165 = vpack.c.b16 %v1874, %v1871
    %v2166 = vpack.c.b16 %v1875, %v1872
    %v2167 = vpack.c.b16 %v1879, %v1876
    %v2168 = vpack.c.b16 %v1880, %v1877
    %v2169 = vpack.c.b16 %v1881, %v1878
    %v2170 = vpack.c.b16 %v1885, %v1882
    %v2171 = vpack.c.b16 %v1886, %v1883
    %v2172 = vpack.c.b16 %v1887, %v1884
    %v2173 = vpack.c.b16 %v1891, %v1888
    %v2174 = vpack.c.b16 %v1892, %v1889
    %v2175 = vpack.c.b16 %v1893, %v1890
    %v2176 = vpack.c.b16 %v1897, %v1894
    %v2177 = vpack.c.b16 %v1898, %v1895
    %v2178 = vpack.c.b16 %v1899, %v1896
    %v2179 = vpack.c.b16 %v1903, %v1900
    %v2180 = vpack.c.b16 %v1904, %v1901
    %v2181 = vpack.c.b16 %v1905, %v1902
    %v2182 = vpack.c.b16 %v1909, %v1906
    %v2183 = vpack.c.b16 %v1910, %v1907
    %v2184 = vpack.c.b16 %v1911, %v1908
    %v2185 = vpack.c.b16 %v1915, %v1912
    %v2186 = vpack.c.b16 %v1916, %v1913
    %v2187 = vpack.c.b16 %v1917, %v1914
    %v2188 = vpack.c.b16 %v1921, %v1918
    %v2189 = vpack.c.b16 %v1922, %v1919
    %v2190 = vpack.c.b16 %v1923, %v1920
    %v2191 = vpack.c.b16 %v1927, %v1924
    %v2192 = vpack.c.b16 %v1928, %v1925
    %v2193 = vpack.c.b16 %v1929, %v1926
    %v2194 = vpack.c.b16 %v1933, %v1930
    %v2195 = vpack.c.b16 %v1934, %v1931
    %v2196 = vpack.c.b16 %v1935, %v1932
    %v2197 = vpack.c.b16 %v1939, %v1936
    %v2198 = vpack.c.b16 %v1940, %v1937
    %v2199 = vpack.c.b16 %v1941, %v1938
    %v2200 = vpack.c.b16 %v1945, %v1942
    %v2201 = vpack.c.b16 %v1946, %v1943
    %v2202 = vpack.c.b16 %v1947, %v1944
    %v2203 = vpack.c.b16 %v1951, %v1948
    %v2204 = vpack.c.b16 %v1952, %v1949
    %v2205 = vpack.c.b16 %v1953, %v1950
    %v2206 = vpack.c.b16 %v1957, %v1954
    %v2207 = vpack.c.b16 %v1958, %v1955
    %v2208 = vpack.c.b16 %v1959, %v1956
    %v2209 = vpack.c.b16 %v1963, %v1960
    %v2210 = vpack.c.b16 %v1964, %v1961
    %v2211 = vpack.c.b16 %v1965, %v1962
    %v2212 = vpack.c.b16 %v1969, %v1966
    %v2213 = vpack.c.b16 %v1970, %v1967
    %v2214 = vpack.c.b16 %v1971, %v1968
    %v2215 = vpack.c.b16 %v1975, %v1972
    %v2216 = vpack.c.b16 %v1976, %v1973
    %v2217 = vpack.c.b16 %v1977, %v1974
    %v2218 = vpack.c.b16 %v1981, %v1978
    %v2219 = vpack.c.b16 %v1982, %v1979
    %v2220 = vpack.c.b16 %v1983, %v1980
    %v2221 = vpack.c.b16 %v1987, %v1984
    %v2222 = vpack.c.b16 %v1988, %v1985
    %v2223 = vpack.c.b16 %v1989, %v1986
    %v2224 = vpack.c.b16 %v1993, %v1990
    %v2225 = vpack.c.b16 %v1994, %v1991
    %v2226 = vpack.c.b16 %v1995, %v1992
    %v2227 = vpack.c.b16 %v1999, %v1996
    %v2228 = vpack.c.b16 %v2000, %v1997
    %v2229 = vpack.c.b16 %v2001, %v1998
    %v2230 = vpack.c.b16 %v2005, %v2002
    %v2231 = vpack.c.b16 %v2006, %v2003
    %v2232 = vpack.c.b16 %v2007, %v2004
    %v2233 = vpack.c.b16 %v2011, %v2008
    %v2234 = vpack.c.b16 %v2012, %v2009
    %v2235 = vpack.c.b16 %v2013, %v2010
    %v2236 = vpack.c.b16 %v2017, %v2014
    %v2237 = vpack.c.b16 %v2018, %v2015
    %v2238 = vpack.c.b16 %v2019, %v2016
    %v2239 = vpack.c.b16 %v2023, %v2020
    %v2240 = vpack.c.b16 %v2024, %v2021
    %v2241 = vpack.c.b16 %v2025, %v2022
    %v2242 = vpack.c.b16 %v2029, %v2026
    %v2243 = vpack.c.b16 %v2030, %v2027
    %v2244 = vpack.c.b16 %v2031, %v2028
    %v2245 = vpack.c.b16 %v2035, %v2032
    %v2246 = vpack.c.b16 %v2036, %v2033
    %v2247 = vpack.c.b16 %v2037, %v2034
    %v2248 = vpack.c.b16 %v2041, %v2038
    %v2249 = vpack.c.b16 %v2042, %v2039
    %v2250 = vpack.c.b16 %v2043, %v2040
    %v2251 = vpack.c.b16 %v2047, %v2044
    %v2252 = vpack.c.b16 %v2048, %v2045
    %v2253 = vpack.c.b16 %v2049, %v2046
    %v2254 = vpack.c.b16 %v2053, %v2050
    %v2255 = vpack.c.b16 %v2054, %v2051
    %v2256 = vpack.c.b16 %v2055, %v2052
    %v2257 = vpack.c.b16 %v2059, %v2056
    %v2258 = vpack.c.b16 %v2060, %v2057
    %v2259 = vpack.c.b16 %v2061, %v2058
    %v2260 = vpack.c.b16 %v2065, %v2062
    %v2261 = vpack.c.b16 %v2066, %v2063
    %v2262 = vpack.c.b16 %v2067, %v2064
    %v2263 = vpack.c.b16 %v2071, %v2068
    %v2264 = vpack.c.b16 %v2072, %v2069
    %v2265 = vpack.c.b16 %v2073, %v2070
    %v2266 = vpack.c.b16 %v2077, %v2074
    %v2267 = vpack.c.b16 %v2078, %v2075
    %v2268 = vpack.c.b16 %v2079, %v2076
    %v2269 = vpack.c.b16 %v2083, %v2080
    %v2270 = vpack.c.b16 %v2084, %v2081
    %v2271 = vpack.c.b16 %v2085, %v2082
    %v2272 = vpack.c.b16 %v2089, %v2086
    %v2273 = vpack.c.b16 %v2090, %v2087
    %v2274 = vpack.c.b16 %v2091, %v2088
    %v2275 = vpack.c.b16 %v2095, %v2092
    %v2276 = vpack.c.b16 %v2096, %v2093
    %v2277 = vpack.c.b16 %v2097, %v2094
    %v2278 = vpack.c.b16 %v2101, %v2098
    %v2279 = vpack.c.b16 %v2102, %v2099
    %v2280 = vpack.c.b16 %v2103, %v2100
    %v2281 = vpack.c.b16 %v2107, %v2104
    %v2282 = vpack.c.b16 %v2108, %v2105
    %v2283 = vpack.c.b16 %v2109, %v2106
    %v2284 = vpack.c.b16 %v2113, %v2110
    %v2285 = vpack.c.b16 %v2114, %v2111
    %v2286 = vpack.c.b16 %v2115, %v2112
    %v2287 = vpack.c.b16 %v2119, %v2116
    %v2288 = vpack.c.b16 %v2120, %v2117
    %v2289 = vpack.c.b16 %v2121, %v2118
    %v2290 = vpack.c.b16 %v2125, %v2122
    %v2291 = vpack.c.b16 %v2126, %v2123
    %v2292 = vpack.c.b16 %v2127, %v2124
    %v2293 = vpack.c.b16 %v2131, %v2128
    %v2294 = vpack.c.b16 %v2132, %v2129
    %v2295 = vpack.c.b16 %v2133, %v2130
    %v2296 = vpack.c.b16 %v2137, %v2134
    %v2297 = vpack.c.b16 %v2138, %v2135
    %v2298 = vpack.c.b16 %v2139, %v2136
    %v2299 = vpack.c.b16 %v2143, %v2140
    %v2300 = vpack.c.b16 %v2144, %v2141
    %v2301 = vpack.c.b16 %v2145, %v2142
    %vm2458 = vcmask 523264
    %v2460 = vsel %vm2458, %v1216, 0
    %v2463 = vsel %vm2458, %v1223, 0
    %v2466 = vsel %vm2458, %v1230, 0
    %v2469 = vsel %vm2458, %v1237, 0
    %v2472 = vsel %vm2458, %v1244, 0
    %v2475 = vsel %vm2458, %v1251, 0
    %v2478 = vsel %vm2458, %v1258, 0
    %v2481 = vsel %vm2458, %v1265, 0
    %v2484 = vsel %vm2458, %v1272, 0
    %v2487 = vsel %vm2458, %v1279, 0
    %v2490 = vsel %vm2458, %v1286, 0
    %v2493 = vsel %vm2458, %v1293, 0
    %v2496 = vsel %vm2458, %v1300, 0
    %v2499 = vsel %vm2458, %v1307, 0
    %v2502 = vsel %vm2458, %v1314, 0
    %v2505 = vsel %vm2458, %v1321, 0
    %v2508 = vsel %vm2458, %v1328, 0
    %v2511 = vsel %vm2458, %v1335, 0
    %v2514 = vsel %vm2458, %v1342, 0
    %v2517 = vsel %vm2458, %v1349, 0
    %v2520 = vsel %vm2458, %v1356, 0
    %v2523 = vsel %vm2458, %v1363, 0
    %v2526 = vsel %vm2458, %v1370, 0
    %v2529 = vsel %vm2458, %v1377, 0
    %v2532 = vsel %vm2458, %v1384, 0
    %v2535 = vsel %vm2458, %v1391, 0
    %v2538 = vsel %vm2458, %v1398, 0
    %v2541 = vsel %vm2458, %v1405, 0
    %v2544 = vsel %vm2458, %v1412, 0
    %v2547 = vsel %vm2458, %v1419, 0
    %v2550 = vsel %vm2458, %v1426, 0
    %v2553 = vsel %vm2458, %v1433, 0
    %2555 = vmatprep.subr.bf16.mxu0 %v2168
    %2556 = vmatpush1.bf16.msra.mxu0 %v2167
    %2557 = vmatprep.subr.bf16.mxu0 %v2165
    %2558 = vmatpush1.bf16.msra.mxu0 %v2164
    %2559 = vmatprep.subr.bf16.mxu0 %v2162
    %2560 = vmatpush1.bf16.msra.mxu0 %v2161
    %2561 = vmatprep.subr.bf16.mxu0 %v2159
    %2562 = vmatpush1.bf16.msra.mxu0 %v2158
    %2563 = vmatprep.subr.bf16.mxu0 %v2156
    %2564 = vmatpush1.bf16.msra.mxu0 %v2155
    %2565 = vmatprep.subr.bf16.mxu0 %v2153
    %2566 = vmatpush1.bf16.msra.mxu0 %v2152
    %2567 = vmatprep.subr.bf16.mxu0 %v2150
    %2568 = vmatpush1.bf16.msra.mxu0 %v2149
    %2569 = vmatprep.subr.bf16.mxu0 %v2147
    %2570 = vmatpush1.bf16.msra.mxu0 %v2146
    %2571 = vmatprep.subr.bf16.mxu0 %v2192
    %2572 = vmatpush2.bf16.msra.mxu0 %v2191
    %2573 = vmatprep.subr.bf16.mxu0 %v2189
    %2574 = vmatpush2.bf16.msra.mxu0 %v2188
    %2575 = vmatprep.subr.bf16.mxu0 %v2186
    %2576 = vmatpush2.bf16.msra.mxu0 %v2185
    %2577 = vmatprep.subr.bf16.mxu0 %v2183
    %2578 = vmatpush2.bf16.msra.mxu0 %v2182
    %2579 = vmatprep.subr.bf16.mxu0 %v2180
    %2580 = vmatpush2.bf16.msra.mxu0 %v2179
    %2581 = vmatprep.subr.bf16.mxu0 %v2177
    %2582 = vmatpush2.bf16.msra.mxu0 %v2176
    %2583 = vmatprep.subr.bf16.mxu0 %v2174
    %2584 = vmatpush2.bf16.msra.mxu0 %v2173
    %2585 = vmatprep.subr.bf16.mxu0 %v2171
    %2586 = vmatpush2.bf16.msra.mxu0 %v2170
    %2587 = vmatprep.mubr.bf16.mxu0 %v1211
    %2588 = vmatmul.mubr.bf16.gmra.mxu0 %v1210
    %v2589 = vpop.f32.mrf.mxu0
    %v2590 = vadd.f32 %v494, %v2589
    %v2591 = vpop.f32.mrf.mxu0
    %v2592 = vadd.f32 %v498, %v2591
    %v2593 = vpop.f32.mrf.mxu0
    %v2594 = vadd.f32 %v494, %v2593
    %v2595 = vpop.f32.mrf.mxu0
    %v2596 = vadd.f32 %v498, %v2595
    %2597 = vmatprep.mubr.bf16.mxu0 %v1218
    %2598 = vmatmul.mubr.bf16.gmra.mxu0 %v1217
    %v2599 = vpop.f32.mrf.mxu0
    %v2600 = vadd.f32 %v494, %v2599
    %v2601 = vpop.f32.mrf.mxu0
    %v2602 = vadd.f32 %v498, %v2601
    %v2603 = vpop.f32.mrf.mxu0
    %v2604 = vadd.f32 %v494, %v2603
    %v2605 = vpop.f32.mrf.mxu0
    %v2606 = vadd.f32 %v498, %v2605
    %2607 = vmatprep.mubr.bf16.mxu0 %v1225
    %2608 = vmatmul.mubr.bf16.gmra.mxu0 %v1224
    %v2609 = vpop.f32.mrf.mxu0
    %v2610 = vadd.f32 %v494, %v2609
    %v2611 = vpop.f32.mrf.mxu0
    %v2612 = vadd.f32 %v498, %v2611
    %v2613 = vpop.f32.mrf.mxu0
    %v2614 = vadd.f32 %v494, %v2613
    %v2615 = vpop.f32.mrf.mxu0
    %v2616 = vadd.f32 %v498, %v2615
    %2617 = vmatprep.mubr.bf16.mxu0 %v1232
    %2618 = vmatmul.mubr.bf16.gmra.mxu0 %v1231
    %v2619 = vpop.f32.mrf.mxu0
    %v2620 = vadd.f32 %v494, %v2619
    %v2621 = vpop.f32.mrf.mxu0
    %v2622 = vadd.f32 %v498, %v2621
    %v2623 = vpop.f32.mrf.mxu0
    %v2624 = vadd.f32 %v494, %v2623
    %v2625 = vpop.f32.mrf.mxu0
    %v2626 = vadd.f32 %v498, %v2625
    %2627 = vmatprep.mubr.bf16.mxu0 %v1239
    %2628 = vmatmul.mubr.bf16.gmra.mxu0 %v1238
    %v2629 = vpop.f32.mrf.mxu0
    %v2630 = vadd.f32 %v494, %v2629
    %v2631 = vpop.f32.mrf.mxu0
    %v2632 = vadd.f32 %v498, %v2631
    %v2633 = vpop.f32.mrf.mxu0
    %v2634 = vadd.f32 %v494, %v2633
    %v2635 = vpop.f32.mrf.mxu0
    %v2636 = vadd.f32 %v498, %v2635
    %2637 = vmatprep.mubr.bf16.mxu0 %v1246
    %2638 = vmatmul.mubr.bf16.gmra.mxu0 %v1245
    %v2639 = vpop.f32.mrf.mxu0
    %v2640 = vadd.f32 %v494, %v2639
    %v2641 = vpop.f32.mrf.mxu0
    %v2642 = vadd.f32 %v498, %v2641
    %v2643 = vpop.f32.mrf.mxu0
    %v2644 = vadd.f32 %v494, %v2643
    %v2645 = vpop.f32.mrf.mxu0
    %v2646 = vadd.f32 %v498, %v2645
    %2647 = vmatprep.mubr.bf16.mxu0 %v1253
    %2648 = vmatmul.mubr.bf16.gmra.mxu0 %v1252
    %v2649 = vpop.f32.mrf.mxu0
    %v2650 = vadd.f32 %v494, %v2649
    %v2651 = vpop.f32.mrf.mxu0
    %v2652 = vadd.f32 %v498, %v2651
    %v2653 = vpop.f32.mrf.mxu0
    %v2654 = vadd.f32 %v494, %v2653
    %v2655 = vpop.f32.mrf.mxu0
    %v2656 = vadd.f32 %v498, %v2655
    %2657 = vmatprep.mubr.bf16.mxu0 %v1260
    %2658 = vmatmul.mubr.bf16.gmra.mxu0 %v1259
    %v2659 = vpop.f32.mrf.mxu0
    %v2660 = vadd.f32 %v494, %v2659
    %v2661 = vpop.f32.mrf.mxu0
    %v2662 = vadd.f32 %v498, %v2661
    %v2663 = vpop.f32.mrf.mxu0
    %v2664 = vadd.f32 %v494, %v2663
    %v2665 = vpop.f32.mrf.mxu0
    %v2666 = vadd.f32 %v498, %v2665
    %2667 = vmatprep.mubr.bf16.mxu0 %v1267
    %2668 = vmatmul.mubr.bf16.gmra.mxu0 %v1266
    %v2669 = vpop.f32.mrf.mxu0
    %v2670 = vadd.f32 %v494, %v2669
    %v2671 = vpop.f32.mrf.mxu0
    %v2672 = vadd.f32 %v498, %v2671
    %v2673 = vpop.f32.mrf.mxu0
    %v2674 = vadd.f32 %v494, %v2673
    %v2675 = vpop.f32.mrf.mxu0
    %v2676 = vadd.f32 %v498, %v2675
    %2677 = vmatprep.mubr.bf16.mxu0 %v1274
    %2678 = vmatmul.mubr.bf16.gmra.mxu0 %v1273
    %v2679 = vpop.f32.mrf.mxu0
    %v2680 = vadd.f32 %v494, %v2679
    %v2681 = vpop.f32.mrf.mxu0
    %v2682 = vadd.f32 %v498, %v2681
    %v2683 = vpop.f32.mrf.mxu0
    %v2684 = vadd.f32 %v494, %v2683
    %v2685 = vpop.f32.mrf.mxu0
    %v2686 = vadd.f32 %v498, %v2685
    %2687 = vmatprep.mubr.bf16.mxu0 %v1281
    %2688 = vmatmul.mubr.bf16.gmra.mxu0 %v1280
    %v2689 = vpop.f32.mrf.mxu0
    %v2690 = vadd.f32 %v494, %v2689
    %v2691 = vpop.f32.mrf.mxu0
    %v2692 = vadd.f32 %v498, %v2691
    %v2693 = vpop.f32.mrf.mxu0
    %v2694 = vadd.f32 %v494, %v2693
    %v2695 = vpop.f32.mrf.mxu0
    %v2696 = vadd.f32 %v498, %v2695
    %2697 = vmatprep.mubr.bf16.mxu0 %v1288
    %2698 = vmatmul.mubr.bf16.gmra.mxu0 %v1287
    %v2699 = vpop.f32.mrf.mxu0
    %v2700 = vadd.f32 %v494, %v2699
    %v2701 = vpop.f32.mrf.mxu0
    %v2702 = vadd.f32 %v498, %v2701
    %v2703 = vpop.f32.mrf.mxu0
    %v2704 = vadd.f32 %v494, %v2703
    %v2705 = vpop.f32.mrf.mxu0
    %v2706 = vadd.f32 %v498, %v2705
    %2707 = vmatprep.mubr.bf16.mxu0 %v1295
    %2708 = vmatmul.mubr.bf16.gmra.mxu0 %v1294
    %v2709 = vpop.f32.mrf.mxu0
    %v2710 = vadd.f32 %v494, %v2709
    %v2711 = vpop.f32.mrf.mxu0
    %v2712 = vadd.f32 %v498, %v2711
    %v2713 = vpop.f32.mrf.mxu0
    %v2714 = vadd.f32 %v494, %v2713
    %v2715 = vpop.f32.mrf.mxu0
    %v2716 = vadd.f32 %v498, %v2715
    %2717 = vmatprep.mubr.bf16.mxu0 %v1302
    %2718 = vmatmul.mubr.bf16.gmra.mxu0 %v1301
    %v2719 = vpop.f32.mrf.mxu0
    %v2720 = vadd.f32 %v494, %v2719
    %v2721 = vpop.f32.mrf.mxu0
    %v2722 = vadd.f32 %v498, %v2721
    %v2723 = vpop.f32.mrf.mxu0
    %v2724 = vadd.f32 %v494, %v2723
    %v2725 = vpop.f32.mrf.mxu0
    %v2726 = vadd.f32 %v498, %v2725
    %2727 = vmatprep.mubr.bf16.mxu0 %v1309
    %2728 = vmatmul.mubr.bf16.gmra.mxu0 %v1308
    %v2729 = vpop.f32.mrf.mxu0
    %v2730 = vadd.f32 %v494, %v2729
    %v2731 = vpop.f32.mrf.mxu0
    %v2732 = vadd.f32 %v498, %v2731
    %v2733 = vpop.f32.mrf.mxu0
    %v2734 = vadd.f32 %v494, %v2733
    %v2735 = vpop.f32.mrf.mxu0
    %v2736 = vadd.f32 %v498, %v2735
    %2737 = vmatprep.mubr.bf16.mxu0 %v1316
    %2738 = vmatmul.mubr.bf16.gmra.mxu0 %v1315
    %v2739 = vpop.f32.mrf.mxu0
    %v2740 = vadd.f32 %v494, %v2739
    %v2741 = vpop.f32.mrf.mxu0
    %v2742 = vadd.f32 %v498, %v2741
    %v2743 = vpop.f32.mrf.mxu0
    %v2744 = vadd.f32 %v494, %v2743
    %v2745 = vpop.f32.mrf.mxu0
    %v2746 = vadd.f32 %v498, %v2745
    %2747 = vmatprep.mubr.bf16.mxu0 %v1323
    %2748 = vmatmul.mubr.bf16.gmra.mxu0 %v1322
    %v2749 = vpop.f32.mrf.mxu0
    %v2750 = vadd.f32 %v494, %v2749
    %v2751 = vpop.f32.mrf.mxu0
    %v2752 = vadd.f32 %v498, %v2751
    %v2753 = vpop.f32.mrf.mxu0
    %v2754 = vadd.f32 %v494, %v2753
    %v2755 = vpop.f32.mrf.mxu0
    %v2756 = vadd.f32 %v498, %v2755
    %2757 = vmatprep.mubr.bf16.mxu0 %v1330
    %2758 = vmatmul.mubr.bf16.gmra.mxu0 %v1329
    %v2759 = vpop.f32.mrf.mxu0
    %v2760 = vadd.f32 %v494, %v2759
    %v2761 = vpop.f32.mrf.mxu0
    %v2762 = vadd.f32 %v498, %v2761
    %v2763 = vpop.f32.mrf.mxu0
    %v2764 = vadd.f32 %v494, %v2763
    %v2765 = vpop.f32.mrf.mxu0
    %v2766 = vadd.f32 %v498, %v2765
    %2767 = vmatprep.mubr.bf16.mxu0 %v1337
    %2768 = vmatmul.mubr.bf16.gmra.mxu0 %v1336
    %v2769 = vpop.f32.mrf.mxu0
    %v2770 = vadd.f32 %v494, %v2769
    %v2771 = vpop.f32.mrf.mxu0
    %v2772 = vadd.f32 %v498, %v2771
    %v2773 = vpop.f32.mrf.mxu0
    %v2774 = vadd.f32 %v494, %v2773
    %v2775 = vpop.f32.mrf.mxu0
    %v2776 = vadd.f32 %v498, %v2775
    %2777 = vmatprep.mubr.bf16.mxu0 %v1344
    %2778 = vmatmul.mubr.bf16.gmra.mxu0 %v1343
    %v2779 = vpop.f32.mrf.mxu0
    %v2780 = vadd.f32 %v494, %v2779
    %v2781 = vpop.f32.mrf.mxu0
    %v2782 = vadd.f32 %v498, %v2781
    %v2783 = vpop.f32.mrf.mxu0
    %v2784 = vadd.f32 %v494, %v2783
    %v2785 = vpop.f32.mrf.mxu0
    %v2786 = vadd.f32 %v498, %v2785
    %2787 = vmatprep.mubr.bf16.mxu0 %v1351
    %2788 = vmatmul.mubr.bf16.gmra.mxu0 %v1350
    %v2789 = vpop.f32.mrf.mxu0
    %v2790 = vadd.f32 %v494, %v2789
    %v2791 = vpop.f32.mrf.mxu0
    %v2792 = vadd.f32 %v498, %v2791
    %v2793 = vpop.f32.mrf.mxu0
    %v2794 = vadd.f32 %v494, %v2793
    %v2795 = vpop.f32.mrf.mxu0
    %v2796 = vadd.f32 %v498, %v2795
    %2797 = vmatprep.mubr.bf16.mxu0 %v1358
    %2798 = vmatmul.mubr.bf16.gmra.mxu0 %v1357
    %v2799 = vpop.f32.mrf.mxu0
    %v2800 = vadd.f32 %v494, %v2799
    %v2801 = vpop.f32.mrf.mxu0
    %v2802 = vadd.f32 %v498, %v2801
    %v2803 = vpop.f32.mrf.mxu0
    %v2804 = vadd.f32 %v494, %v2803
    %v2805 = vpop.f32.mrf.mxu0
    %v2806 = vadd.f32 %v498, %v2805
    %2807 = vmatprep.mubr.bf16.mxu0 %v1365
    %2808 = vmatmul.mubr.bf16.gmra.mxu0 %v1364
    %v2809 = vpop.f32.mrf.mxu0
    %v2810 = vadd.f32 %v494, %v2809
    %v2811 = vpop.f32.mrf.mxu0
    %v2812 = vadd.f32 %v498, %v2811
    %v2813 = vpop.f32.mrf.mxu0
    %v2814 = vadd.f32 %v494, %v2813
    %v2815 = vpop.f32.mrf.mxu0
    %v2816 = vadd.f32 %v498, %v2815
    %2817 = vmatprep.mubr.bf16.mxu0 %v1372
    %2818 = vmatmul.mubr.bf16.gmra.mxu0 %v1371
    %v2819 = vpop.f32.mrf.mxu0
    %v2820 = vadd.f32 %v494, %v2819
    %v2821 = vpop.f32.mrf.mxu0
    %v2822 = vadd.f32 %v498, %v2821
    %v2823 = vpop.f32.mrf.mxu0
    %v2824 = vadd.f32 %v494, %v2823
    %v2825 = vpop.f32.mrf.mxu0
    %v2826 = vadd.f32 %v498, %v2825
    %2827 = vmatprep.mubr.bf16.mxu0 %v1379
    %2828 = vmatmul.mubr.bf16.gmra.mxu0 %v1378
    %v2829 = vpop.f32.mrf.mxu0
    %v2830 = vadd.f32 %v494, %v2829
    %v2831 = vpop.f32.mrf.mxu0
    %v2832 = vadd.f32 %v498, %v2831
    %v2833 = vpop.f32.mrf.mxu0
    %v2834 = vadd.f32 %v494, %v2833
    %v2835 = vpop.f32.mrf.mxu0
    %v2836 = vadd.f32 %v498, %v2835
    %2837 = vmatprep.mubr.bf16.mxu0 %v1386
    %2838 = vmatmul.mubr.bf16.gmra.mxu0 %v1385
    %v2839 = vpop.f32.mrf.mxu0
    %v2840 = vadd.f32 %v494, %v2839
    %v2841 = vpop.f32.mrf.mxu0
    %v2842 = vadd.f32 %v498, %v2841
    %v2843 = vpop.f32.mrf.mxu0
    %v2844 = vadd.f32 %v494, %v2843
    %v2845 = vpop.f32.mrf.mxu0
    %v2846 = vadd.f32 %v498, %v2845
    %2847 = vmatprep.mubr.bf16.mxu0 %v1393
    %2848 = vmatmul.mubr.bf16.gmra.mxu0 %v1392
    %v2849 = vpop.f32.mrf.mxu0
    %v2850 = vadd.f32 %v494, %v2849
    %v2851 = vpop.f32.mrf.mxu0
    %v2852 = vadd.f32 %v498, %v2851
    %v2853 = vpop.f32.mrf.mxu0
    %v2854 = vadd.f32 %v494, %v2853
    %v2855 = vpop.f32.mrf.mxu0
    %v2856 = vadd.f32 %v498, %v2855
    %2857 = vmatprep.mubr.bf16.mxu0 %v1400
    %2858 = vmatmul.mubr.bf16.gmra.mxu0 %v1399
    %v2859 = vpop.f32.mrf.mxu0
    %v2860 = vadd.f32 %v494, %v2859
    %v2861 = vpop.f32.mrf.mxu0
    %v2862 = vadd.f32 %v498, %v2861
    %v2863 = vpop.f32.mrf.mxu0
    %v2864 = vadd.f32 %v494, %v2863
    %v2865 = vpop.f32.mrf.mxu0
    %v2866 = vadd.f32 %v498, %v2865
    %2867 = vmatprep.mubr.bf16.mxu0 %v1407
    %2868 = vmatmul.mubr.bf16.gmra.mxu0 %v1406
    %v2869 = vpop.f32.mrf.mxu0
    %v2870 = vadd.f32 %v494, %v2869
    %v2871 = vpop.f32.mrf.mxu0
    %v2872 = vadd.f32 %v498, %v2871
    %v2873 = vpop.f32.mrf.mxu0
    %v2874 = vadd.f32 %v494, %v2873
    %v2875 = vpop.f32.mrf.mxu0
    %v2876 = vadd.f32 %v498, %v2875
    %2877 = vmatprep.mubr.bf16.mxu0 %v1414
    %2878 = vmatmul.mubr.bf16.gmra.mxu0 %v1413
    %v2879 = vpop.f32.mrf.mxu0
    %v2880 = vadd.f32 %v494, %v2879
    %v2881 = vpop.f32.mrf.mxu0
    %v2882 = vadd.f32 %v498, %v2881
    %v2883 = vpop.f32.mrf.mxu0
    %v2884 = vadd.f32 %v494, %v2883
    %v2885 = vpop.f32.mrf.mxu0
    %v2886 = vadd.f32 %v498, %v2885
    %2887 = vmatprep.mubr.bf16.mxu0 %v1421
    %2888 = vmatmul.mubr.bf16.gmra.mxu0 %v1420
    %v2889 = vpop.f32.mrf.mxu0
    %v2890 = vadd.f32 %v494, %v2889
    %v2891 = vpop.f32.mrf.mxu0
    %v2892 = vadd.f32 %v498, %v2891
    %v2893 = vpop.f32.mrf.mxu0
    %v2894 = vadd.f32 %v494, %v2893
    %v2895 = vpop.f32.mrf.mxu0
    %v2896 = vadd.f32 %v498, %v2895
    %2897 = vmatprep.mubr.bf16.mxu0 %v1428
    %2898 = vmatmul.mubr.bf16.gmra.mxu0 %v1427
    %v2899 = vpop.f32.mrf.mxu0
    %v2900 = vadd.f32 %v494, %v2899
    %v2901 = vpop.f32.mrf.mxu0
    %v2902 = vadd.f32 %v498, %v2901
    %v2903 = vpop.f32.mrf.mxu0
    %v2904 = vadd.f32 %v494, %v2903
    %v2905 = vpop.f32.mrf.mxu0
    %v2906 = vadd.f32 %v498, %v2905
    %2907 = vdwg.mxu0
    %2908 = vmatprep.subr.bf16.mxu0 %v2216
    %2909 = vmatpush1.bf16.msra.mxu0 %v2215
    %2910 = vmatprep.subr.bf16.mxu0 %v2213
    %2911 = vmatpush1.bf16.msra.mxu0 %v2212
    %2912 = vmatprep.subr.bf16.mxu0 %v2210
    %2913 = vmatpush1.bf16.msra.mxu0 %v2209
    %2914 = vmatprep.subr.bf16.mxu0 %v2207
    %2915 = vmatpush1.bf16.msra.mxu0 %v2206
    %2916 = vmatprep.subr.bf16.mxu0 %v2204
    %2917 = vmatpush1.bf16.msra.mxu0 %v2203
    %2918 = vmatprep.subr.bf16.mxu0 %v2201
    %2919 = vmatpush1.bf16.msra.mxu0 %v2200
    %2920 = vmatprep.subr.bf16.mxu0 %v2198
    %2921 = vmatpush1.bf16.msra.mxu0 %v2197
    %2922 = vmatprep.subr.bf16.mxu0 %v2195
    %2923 = vmatpush1.bf16.msra.mxu0 %v2194
    %2924 = vmatprep.subr.bf16.mxu0 %v2240
    %2925 = vmatpush2.bf16.msra.mxu0 %v2239
    %2926 = vmatprep.subr.bf16.mxu0 %v2237
    %2927 = vmatpush2.bf16.msra.mxu0 %v2236
    %2928 = vmatprep.subr.bf16.mxu0 %v2234
    %2929 = vmatpush2.bf16.msra.mxu0 %v2233
    %2930 = vmatprep.subr.bf16.mxu0 %v2231
    %2931 = vmatpush2.bf16.msra.mxu0 %v2230
    %2932 = vmatprep.subr.bf16.mxu0 %v2228
    %2933 = vmatpush2.bf16.msra.mxu0 %v2227
    %2934 = vmatprep.subr.bf16.mxu0 %v2225
    %2935 = vmatpush2.bf16.msra.mxu0 %v2224
    %2936 = vmatprep.subr.bf16.mxu0 %v2222
    %2937 = vmatpush2.bf16.msra.mxu0 %v2221
    %2938 = vmatprep.subr.bf16.mxu0 %v2219
    %2939 = vmatpush2.bf16.msra.mxu0 %v2218
    %2940 = vmatprep.mubr.bf16.mxu0 %v1213
    %2941 = vmatmul.mubr.bf16.gmra.mxu0 %v1212
    %v2942 = vpop.f32.mrf.mxu0
    %v2943 = vadd.f32 %v2590, %v2942
    %v2944 = vpop.f32.mrf.mxu0
    %v2945 = vadd.f32 %v2592, %v2944
    %v2946 = vpop.f32.mrf.mxu0
    %v2947 = vadd.f32 %v2594, %v2946
    %v2948 = vpop.f32.mrf.mxu0
    %v2949 = vadd.f32 %v2596, %v2948
    %2950 = vmatprep.mubr.bf16.mxu0 %v1220
    %2951 = vmatmul.mubr.bf16.gmra.mxu0 %v1219
    %v2952 = vpop.f32.mrf.mxu0
    %v2953 = vadd.f32 %v2600, %v2952
    %v2954 = vpop.f32.mrf.mxu0
    %v2955 = vadd.f32 %v2602, %v2954
    %v2956 = vpop.f32.mrf.mxu0
    %v2957 = vadd.f32 %v2604, %v2956
    %v2958 = vpop.f32.mrf.mxu0
    %v2959 = vadd.f32 %v2606, %v2958
    %2960 = vmatprep.mubr.bf16.mxu0 %v1227
    %2961 = vmatmul.mubr.bf16.gmra.mxu0 %v1226
    %v2962 = vpop.f32.mrf.mxu0
    %v2963 = vadd.f32 %v2610, %v2962
    %v2964 = vpop.f32.mrf.mxu0
    %v2965 = vadd.f32 %v2612, %v2964
    %v2966 = vpop.f32.mrf.mxu0
    %v2967 = vadd.f32 %v2614, %v2966
    %v2968 = vpop.f32.mrf.mxu0
    %v2969 = vadd.f32 %v2616, %v2968
    %2970 = vmatprep.mubr.bf16.mxu0 %v1234
    %2971 = vmatmul.mubr.bf16.gmra.mxu0 %v1233
    %v2972 = vpop.f32.mrf.mxu0
    %v2973 = vadd.f32 %v2620, %v2972
    %v2974 = vpop.f32.mrf.mxu0
    %v2975 = vadd.f32 %v2622, %v2974
    %v2976 = vpop.f32.mrf.mxu0
    %v2977 = vadd.f32 %v2624, %v2976
    %v2978 = vpop.f32.mrf.mxu0
    %v2979 = vadd.f32 %v2626, %v2978
    %2980 = vmatprep.mubr.bf16.mxu0 %v1241
    %2981 = vmatmul.mubr.bf16.gmra.mxu0 %v1240
    %v2982 = vpop.f32.mrf.mxu0
    %v2983 = vadd.f32 %v2630, %v2982
    %v2984 = vpop.f32.mrf.mxu0
    %v2985 = vadd.f32 %v2632, %v2984
    %v2986 = vpop.f32.mrf.mxu0
    %v2987 = vadd.f32 %v2634, %v2986
    %v2988 = vpop.f32.mrf.mxu0
    %v2989 = vadd.f32 %v2636, %v2988
    %2990 = vmatprep.mubr.bf16.mxu0 %v1248
    %2991 = vmatmul.mubr.bf16.gmra.mxu0 %v1247
    %v2992 = vpop.f32.mrf.mxu0
    %v2993 = vadd.f32 %v2640, %v2992
    %v2994 = vpop.f32.mrf.mxu0
    %v2995 = vadd.f32 %v2642, %v2994
    %v2996 = vpop.f32.mrf.mxu0
    %v2997 = vadd.f32 %v2644, %v2996
    %v2998 = vpop.f32.mrf.mxu0
    %v2999 = vadd.f32 %v2646, %v2998
    %3000 = vmatprep.mubr.bf16.mxu0 %v1255
    %3001 = vmatmul.mubr.bf16.gmra.mxu0 %v1254
    %v3002 = vpop.f32.mrf.mxu0
    %v3003 = vadd.f32 %v2650, %v3002
    %v3004 = vpop.f32.mrf.mxu0
    %v3005 = vadd.f32 %v2652, %v3004
    %v3006 = vpop.f32.mrf.mxu0
    %v3007 = vadd.f32 %v2654, %v3006
    %v3008 = vpop.f32.mrf.mxu0
    %v3009 = vadd.f32 %v2656, %v3008
    %3010 = vmatprep.mubr.bf16.mxu0 %v1262
    %3011 = vmatmul.mubr.bf16.gmra.mxu0 %v1261
    %v3012 = vpop.f32.mrf.mxu0
    %v3013 = vadd.f32 %v2660, %v3012
    %v3014 = vpop.f32.mrf.mxu0
    %v3015 = vadd.f32 %v2662, %v3014
    %v3016 = vpop.f32.mrf.mxu0
    %v3017 = vadd.f32 %v2664, %v3016
    %v3018 = vpop.f32.mrf.mxu0
    %v3019 = vadd.f32 %v2666, %v3018
    %3020 = vmatprep.mubr.bf16.mxu0 %v1269
    %3021 = vmatmul.mubr.bf16.gmra.mxu0 %v1268
    %v3022 = vpop.f32.mrf.mxu0
    %v3023 = vadd.f32 %v2670, %v3022
    %v3024 = vpop.f32.mrf.mxu0
    %v3025 = vadd.f32 %v2672, %v3024
    %v3026 = vpop.f32.mrf.mxu0
    %v3027 = vadd.f32 %v2674, %v3026
    %v3028 = vpop.f32.mrf.mxu0
    %v3029 = vadd.f32 %v2676, %v3028
    %3030 = vmatprep.mubr.bf16.mxu0 %v1276
    %3031 = vmatmul.mubr.bf16.gmra.mxu0 %v1275
    %v3032 = vpop.f32.mrf.mxu0
    %v3033 = vadd.f32 %v2680, %v3032
    %v3034 = vpop.f32.mrf.mxu0
    %v3035 = vadd.f32 %v2682, %v3034
    %v3036 = vpop.f32.mrf.mxu0
    %v3037 = vadd.f32 %v2684, %v3036
    %v3038 = vpop.f32.mrf.mxu0
    %v3039 = vadd.f32 %v2686, %v3038
    %3040 = vmatprep.mubr.bf16.mxu0 %v1283
    %3041 = vmatmul.mubr.bf16.gmra.mxu0 %v1282
    %v3042 = vpop.f32.mrf.mxu0
    %v3043 = vadd.f32 %v2690, %v3042
    %v3044 = vpop.f32.mrf.mxu0
    %v3045 = vadd.f32 %v2692, %v3044
    %v3046 = vpop.f32.mrf.mxu0
    %v3047 = vadd.f32 %v2694, %v3046
    %v3048 = vpop.f32.mrf.mxu0
    %v3049 = vadd.f32 %v2696, %v3048
    %3050 = vmatprep.mubr.bf16.mxu0 %v1290
    %3051 = vmatmul.mubr.bf16.gmra.mxu0 %v1289
    %v3052 = vpop.f32.mrf.mxu0
    %v3053 = vadd.f32 %v2700, %v3052
    %v3054 = vpop.f32.mrf.mxu0
    %v3055 = vadd.f32 %v2702, %v3054
    %v3056 = vpop.f32.mrf.mxu0
    %v3057 = vadd.f32 %v2704, %v3056
    %v3058 = vpop.f32.mrf.mxu0
    %v3059 = vadd.f32 %v2706, %v3058
    %3060 = vmatprep.mubr.bf16.mxu0 %v1297
    %3061 = vmatmul.mubr.bf16.gmra.mxu0 %v1296
    %v3062 = vpop.f32.mrf.mxu0
    %v3063 = vadd.f32 %v2710, %v3062
    %v3064 = vpop.f32.mrf.mxu0
    %v3065 = vadd.f32 %v2712, %v3064
    %v3066 = vpop.f32.mrf.mxu0
    %v3067 = vadd.f32 %v2714, %v3066
    %v3068 = vpop.f32.mrf.mxu0
    %v3069 = vadd.f32 %v2716, %v3068
    %3070 = vmatprep.mubr.bf16.mxu0 %v1304
    %3071 = vmatmul.mubr.bf16.gmra.mxu0 %v1303
    %v3072 = vpop.f32.mrf.mxu0
    %v3073 = vadd.f32 %v2720, %v3072
    %v3074 = vpop.f32.mrf.mxu0
    %v3075 = vadd.f32 %v2722, %v3074
    %v3076 = vpop.f32.mrf.mxu0
    %v3077 = vadd.f32 %v2724, %v3076
    %v3078 = vpop.f32.mrf.mxu0
    %v3079 = vadd.f32 %v2726, %v3078
    %3080 = vmatprep.mubr.bf16.mxu0 %v1311
    %3081 = vmatmul.mubr.bf16.gmra.mxu0 %v1310
    %v3082 = vpop.f32.mrf.mxu0
    %v3083 = vadd.f32 %v2730, %v3082
    %v3084 = vpop.f32.mrf.mxu0
    %v3085 = vadd.f32 %v2732, %v3084
    %v3086 = vpop.f32.mrf.mxu0
    %v3087 = vadd.f32 %v2734, %v3086
    %v3088 = vpop.f32.mrf.mxu0
    %v3089 = vadd.f32 %v2736, %v3088
    %3090 = vmatprep.mubr.bf16.mxu0 %v1318
    %3091 = vmatmul.mubr.bf16.gmra.mxu0 %v1317
    %v3092 = vpop.f32.mrf.mxu0
    %v3093 = vadd.f32 %v2740, %v3092
    %v3094 = vpop.f32.mrf.mxu0
    %v3095 = vadd.f32 %v2742, %v3094
    %v3096 = vpop.f32.mrf.mxu0
    %v3097 = vadd.f32 %v2744, %v3096
    %v3098 = vpop.f32.mrf.mxu0
    %v3099 = vadd.f32 %v2746, %v3098
    %3100 = vmatprep.mubr.bf16.mxu0 %v1325
    %3101 = vmatmul.mubr.bf16.gmra.mxu0 %v1324
    %v3102 = vpop.f32.mrf.mxu0
    %v3103 = vadd.f32 %v2750, %v3102
    %v3104 = vpop.f32.mrf.mxu0
    %v3105 = vadd.f32 %v2752, %v3104
    %v3106 = vpop.f32.mrf.mxu0
    %v3107 = vadd.f32 %v2754, %v3106
    %v3108 = vpop.f32.mrf.mxu0
    %v3109 = vadd.f32 %v2756, %v3108
    %3110 = vmatprep.mubr.bf16.mxu0 %v1332
    %3111 = vmatmul.mubr.bf16.gmra.mxu0 %v1331
    %v3112 = vpop.f32.mrf.mxu0
    %v3113 = vadd.f32 %v2760, %v3112
    %v3114 = vpop.f32.mrf.mxu0
    %v3115 = vadd.f32 %v2762, %v3114
    %v3116 = vpop.f32.mrf.mxu0
    %v3117 = vadd.f32 %v2764, %v3116
    %v3118 = vpop.f32.mrf.mxu0
    %v3119 = vadd.f32 %v2766, %v3118
    %3120 = vmatprep.mubr.bf16.mxu0 %v1339
    %3121 = vmatmul.mubr.bf16.gmra.mxu0 %v1338
    %v3122 = vpop.f32.mrf.mxu0
    %v3123 = vadd.f32 %v2770, %v3122
    %v3124 = vpop.f32.mrf.mxu0
    %v3125 = vadd.f32 %v2772, %v3124
    %v3126 = vpop.f32.mrf.mxu0
    %v3127 = vadd.f32 %v2774, %v3126
    %v3128 = vpop.f32.mrf.mxu0
    %v3129 = vadd.f32 %v2776, %v3128
    %3130 = vmatprep.mubr.bf16.mxu0 %v1346
    %3131 = vmatmul.mubr.bf16.gmra.mxu0 %v1345
    %v3132 = vpop.f32.mrf.mxu0
    %v3133 = vadd.f32 %v2780, %v3132
    %v3134 = vpop.f32.mrf.mxu0
    %v3135 = vadd.f32 %v2782, %v3134
    %v3136 = vpop.f32.mrf.mxu0
    %v3137 = vadd.f32 %v2784, %v3136
    %v3138 = vpop.f32.mrf.mxu0
    %v3139 = vadd.f32 %v2786, %v3138
    %3140 = vmatprep.mubr.bf16.mxu0 %v1353
    %3141 = vmatmul.mubr.bf16.gmra.mxu0 %v1352
    %v3142 = vpop.f32.mrf.mxu0
    %v3143 = vadd.f32 %v2790, %v3142
    %v3144 = vpop.f32.mrf.mxu0
    %v3145 = vadd.f32 %v2792, %v3144
    %v3146 = vpop.f32.mrf.mxu0
    %v3147 = vadd.f32 %v2794, %v3146
    %v3148 = vpop.f32.mrf.mxu0
    %v3149 = vadd.f32 %v2796, %v3148
    %3150 = vmatprep.mubr.bf16.mxu0 %v1360
    %3151 = vmatmul.mubr.bf16.gmra.mxu0 %v1359
    %v3152 = vpop.f32.mrf.mxu0
    %v3153 = vadd.f32 %v2800, %v3152
    %v3154 = vpop.f32.mrf.mxu0
    %v3155 = vadd.f32 %v2802, %v3154
    %v3156 = vpop.f32.mrf.mxu0
    %v3157 = vadd.f32 %v2804, %v3156
    %v3158 = vpop.f32.mrf.mxu0
    %v3159 = vadd.f32 %v2806, %v3158
    %3160 = vmatprep.mubr.bf16.mxu0 %v1367
    %3161 = vmatmul.mubr.bf16.gmra.mxu0 %v1366
    %v3162 = vpop.f32.mrf.mxu0
    %v3163 = vadd.f32 %v2810, %v3162
    %v3164 = vpop.f32.mrf.mxu0
    %v3165 = vadd.f32 %v2812, %v3164
    %v3166 = vpop.f32.mrf.mxu0
    %v3167 = vadd.f32 %v2814, %v3166
    %v3168 = vpop.f32.mrf.mxu0
    %v3169 = vadd.f32 %v2816, %v3168
    %3170 = vmatprep.mubr.bf16.mxu0 %v1374
    %3171 = vmatmul.mubr.bf16.gmra.mxu0 %v1373
    %v3172 = vpop.f32.mrf.mxu0
    %v3173 = vadd.f32 %v2820, %v3172
    %v3174 = vpop.f32.mrf.mxu0
    %v3175 = vadd.f32 %v2822, %v3174
    %v3176 = vpop.f32.mrf.mxu0
    %v3177 = vadd.f32 %v2824, %v3176
    %v3178 = vpop.f32.mrf.mxu0
    %v3179 = vadd.f32 %v2826, %v3178
    %3180 = vmatprep.mubr.bf16.mxu0 %v1381
    %3181 = vmatmul.mubr.bf16.gmra.mxu0 %v1380
    %v3182 = vpop.f32.mrf.mxu0
    %v3183 = vadd.f32 %v2830, %v3182
    %v3184 = vpop.f32.mrf.mxu0
    %v3185 = vadd.f32 %v2832, %v3184
    %v3186 = vpop.f32.mrf.mxu0
    %v3187 = vadd.f32 %v2834, %v3186
    %v3188 = vpop.f32.mrf.mxu0
    %v3189 = vadd.f32 %v2836, %v3188
    %3190 = vmatprep.mubr.bf16.mxu0 %v1388
    %3191 = vmatmul.mubr.bf16.gmra.mxu0 %v1387
    %v3192 = vpop.f32.mrf.mxu0
    %v3193 = vadd.f32 %v2840, %v3192
    %v3194 = vpop.f32.mrf.mxu0
    %v3195 = vadd.f32 %v2842, %v3194
    %v3196 = vpop.f32.mrf.mxu0
    %v3197 = vadd.f32 %v2844, %v3196
    %v3198 = vpop.f32.mrf.mxu0
    %v3199 = vadd.f32 %v2846, %v3198
    %3200 = vmatprep.mubr.bf16.mxu0 %v1395
    %3201 = vmatmul.mubr.bf16.gmra.mxu0 %v1394
    %v3202 = vpop.f32.mrf.mxu0
    %v3203 = vadd.f32 %v2850, %v3202
    %v3204 = vpop.f32.mrf.mxu0
    %v3205 = vadd.f32 %v2852, %v3204
    %v3206 = vpop.f32.mrf.mxu0
    %v3207 = vadd.f32 %v2854, %v3206
    %v3208 = vpop.f32.mrf.mxu0
    %v3209 = vadd.f32 %v2856, %v3208
    %3210 = vmatprep.mubr.bf16.mxu0 %v1402
    %3211 = vmatmul.mubr.bf16.gmra.mxu0 %v1401
    %v3212 = vpop.f32.mrf.mxu0
    %v3213 = vadd.f32 %v2860, %v3212
    %v3214 = vpop.f32.mrf.mxu0
    %v3215 = vadd.f32 %v2862, %v3214
    %v3216 = vpop.f32.mrf.mxu0
    %v3217 = vadd.f32 %v2864, %v3216
    %v3218 = vpop.f32.mrf.mxu0
    %v3219 = vadd.f32 %v2866, %v3218
    %3220 = vmatprep.mubr.bf16.mxu0 %v1409
    %3221 = vmatmul.mubr.bf16.gmra.mxu0 %v1408
    %v3222 = vpop.f32.mrf.mxu0
    %v3223 = vadd.f32 %v2870, %v3222
    %v3224 = vpop.f32.mrf.mxu0
    %v3225 = vadd.f32 %v2872, %v3224
    %v3226 = vpop.f32.mrf.mxu0
    %v3227 = vadd.f32 %v2874, %v3226
    %v3228 = vpop.f32.mrf.mxu0
    %v3229 = vadd.f32 %v2876, %v3228
    %3230 = vmatprep.mubr.bf16.mxu0 %v1416
    %3231 = vmatmul.mubr.bf16.gmra.mxu0 %v1415
    %v3232 = vpop.f32.mrf.mxu0
    %v3233 = vadd.f32 %v2880, %v3232
    %v3234 = vpop.f32.mrf.mxu0
    %v3235 = vadd.f32 %v2882, %v3234
    %v3236 = vpop.f32.mrf.mxu0
    %v3237 = vadd.f32 %v2884, %v3236
    %v3238 = vpop.f32.mrf.mxu0
    %v3239 = vadd.f32 %v2886, %v3238
    %3240 = vmatprep.mubr.bf16.mxu0 %v1423
    %3241 = vmatmul.mubr.bf16.gmra.mxu0 %v1422
    %v3242 = vpop.f32.mrf.mxu0
    %v3243 = vadd.f32 %v2890, %v3242
    %v3244 = vpop.f32.mrf.mxu0
    %v3245 = vadd.f32 %v2892, %v3244
    %v3246 = vpop.f32.mrf.mxu0
    %v3247 = vadd.f32 %v2894, %v3246
    %v3248 = vpop.f32.mrf.mxu0
    %v3249 = vadd.f32 %v2896, %v3248
    %3250 = vmatprep.mubr.bf16.mxu0 %v1430
    %3251 = vmatmul.mubr.bf16.gmra.mxu0 %v1429
    %v3252 = vpop.f32.mrf.mxu0
    %v3253 = vadd.f32 %v2900, %v3252
    %v3254 = vpop.f32.mrf.mxu0
    %v3255 = vadd.f32 %v2902, %v3254
    %v3256 = vpop.f32.mrf.mxu0
    %v3257 = vadd.f32 %v2904, %v3256
    %v3258 = vpop.f32.mrf.mxu0
    %v3259 = vadd.f32 %v2906, %v3258
    %3260 = vdwg.mxu0
    %3261 = vmatprep.subr.bf16.mxu0 %v2264
    %3262 = vmatpush1.bf16.msra.mxu0 %v2263
    %3263 = vmatprep.subr.bf16.mxu0 %v2261
    %3264 = vmatpush1.bf16.msra.mxu0 %v2260
    %3265 = vmatprep.subr.bf16.mxu0 %v2258
    %3266 = vmatpush1.bf16.msra.mxu0 %v2257
    %3267 = vmatprep.subr.bf16.mxu0 %v2255
    %3268 = vmatpush1.bf16.msra.mxu0 %v2254
    %3269 = vmatprep.subr.bf16.mxu0 %v2252
    %3270 = vmatpush1.bf16.msra.mxu0 %v2251
    %3271 = vmatprep.subr.bf16.mxu0 %v2249
    %3272 = vmatpush1.bf16.msra.mxu0 %v2248
    %3273 = vmatprep.subr.bf16.mxu0 %v2246
    %3274 = vmatpush1.bf16.msra.mxu0 %v2245
    %3275 = vmatprep.subr.bf16.mxu0 %v2243
    %3276 = vmatpush1.bf16.msra.mxu0 %v2242
    %3277 = vmatprep.subr.bf16.mxu0 %v2288
    %3278 = vmatpush2.bf16.msra.mxu0 %v2287
    %3279 = vmatprep.subr.bf16.mxu0 %v2285
    %3280 = vmatpush2.bf16.msra.mxu0 %v2284
    %3281 = vmatprep.subr.bf16.mxu0 %v2282
    %3282 = vmatpush2.bf16.msra.mxu0 %v2281
    %3283 = vmatprep.subr.bf16.mxu0 %v2279
    %3284 = vmatpush2.bf16.msra.mxu0 %v2278
    %3285 = vmatprep.subr.bf16.mxu0 %v2276
    %3286 = vmatpush2.bf16.msra.mxu0 %v2275
    %3287 = vmatprep.subr.bf16.mxu0 %v2273
    %3288 = vmatpush2.bf16.msra.mxu0 %v2272
    %3289 = vmatprep.subr.bf16.mxu0 %v2270
    %3290 = vmatpush2.bf16.msra.mxu0 %v2269
    %3291 = vmatprep.subr.bf16.mxu0 %v2267
    %3292 = vmatpush2.bf16.msra.mxu0 %v2266
    %3293 = vmatprep.mubr.bf16.mxu0 %v1215
    %3294 = vmatmul.mubr.bf16.gmra.mxu0 %v1214
    %v3295 = vpop.f32.mrf.mxu0
    %v3296 = vadd.f32 %v2943, %v3295
    %v3297 = vpop.f32.mrf.mxu0
    %v3298 = vadd.f32 %v2945, %v3297
    %v3299 = vpop.f32.mrf.mxu0
    %v3300 = vadd.f32 %v2947, %v3299
    %v3301 = vpop.f32.mrf.mxu0
    %v3302 = vadd.f32 %v2949, %v3301
    %3303 = vmatprep.mubr.bf16.mxu0 %v1222
    %3304 = vmatmul.mubr.bf16.gmra.mxu0 %v1221
    %v3305 = vpop.f32.mrf.mxu0
    %v3306 = vadd.f32 %v2953, %v3305
    %v3307 = vpop.f32.mrf.mxu0
    %v3308 = vadd.f32 %v2955, %v3307
    %v3309 = vpop.f32.mrf.mxu0
    %v3310 = vadd.f32 %v2957, %v3309
    %v3311 = vpop.f32.mrf.mxu0
    %v3312 = vadd.f32 %v2959, %v3311
    %3313 = vmatprep.mubr.bf16.mxu0 %v1229
    %3314 = vmatmul.mubr.bf16.gmra.mxu0 %v1228
    %v3315 = vpop.f32.mrf.mxu0
    %v3316 = vadd.f32 %v2963, %v3315
    %v3317 = vpop.f32.mrf.mxu0
    %v3318 = vadd.f32 %v2965, %v3317
    %v3319 = vpop.f32.mrf.mxu0
    %v3320 = vadd.f32 %v2967, %v3319
    %v3321 = vpop.f32.mrf.mxu0
    %v3322 = vadd.f32 %v2969, %v3321
    %3323 = vmatprep.mubr.bf16.mxu0 %v1236
    %3324 = vmatmul.mubr.bf16.gmra.mxu0 %v1235
    %v3325 = vpop.f32.mrf.mxu0
    %v3326 = vadd.f32 %v2973, %v3325
    %v3327 = vpop.f32.mrf.mxu0
    %v3328 = vadd.f32 %v2975, %v3327
    %v3329 = vpop.f32.mrf.mxu0
    %v3330 = vadd.f32 %v2977, %v3329
    %v3331 = vpop.f32.mrf.mxu0
    %v3332 = vadd.f32 %v2979, %v3331
    %3333 = vmatprep.mubr.bf16.mxu0 %v1243
    %3334 = vmatmul.mubr.bf16.gmra.mxu0 %v1242
    %v3335 = vpop.f32.mrf.mxu0
    %v3336 = vadd.f32 %v2983, %v3335
    %v3337 = vpop.f32.mrf.mxu0
    %v3338 = vadd.f32 %v2985, %v3337
    %v3339 = vpop.f32.mrf.mxu0
    %v3340 = vadd.f32 %v2987, %v3339
    %v3341 = vpop.f32.mrf.mxu0
    %v3342 = vadd.f32 %v2989, %v3341
    %3343 = vmatprep.mubr.bf16.mxu0 %v1250
    %3344 = vmatmul.mubr.bf16.gmra.mxu0 %v1249
    %v3345 = vpop.f32.mrf.mxu0
    %v3346 = vadd.f32 %v2993, %v3345
    %v3347 = vpop.f32.mrf.mxu0
    %v3348 = vadd.f32 %v2995, %v3347
    %v3349 = vpop.f32.mrf.mxu0
    %v3350 = vadd.f32 %v2997, %v3349
    %v3351 = vpop.f32.mrf.mxu0
    %v3352 = vadd.f32 %v2999, %v3351
    %3353 = vmatprep.mubr.bf16.mxu0 %v1257
    %3354 = vmatmul.mubr.bf16.gmra.mxu0 %v1256
    %v3355 = vpop.f32.mrf.mxu0
    %v3356 = vadd.f32 %v3003, %v3355
    %v3357 = vpop.f32.mrf.mxu0
    %v3358 = vadd.f32 %v3005, %v3357
    %v3359 = vpop.f32.mrf.mxu0
    %v3360 = vadd.f32 %v3007, %v3359
    %v3361 = vpop.f32.mrf.mxu0
    %v3362 = vadd.f32 %v3009, %v3361
    %3363 = vmatprep.mubr.bf16.mxu0 %v1264
    %3364 = vmatmul.mubr.bf16.gmra.mxu0 %v1263
    %v3365 = vpop.f32.mrf.mxu0
    %v3366 = vadd.f32 %v3013, %v3365
    %v3367 = vpop.f32.mrf.mxu0
    %v3368 = vadd.f32 %v3015, %v3367
    %v3369 = vpop.f32.mrf.mxu0
    %v3370 = vadd.f32 %v3017, %v3369
    %v3371 = vpop.f32.mrf.mxu0
    %v3372 = vadd.f32 %v3019, %v3371
    %3373 = vmatprep.mubr.bf16.mxu0 %v1271
    %3374 = vmatmul.mubr.bf16.gmra.mxu0 %v1270
    %v3375 = vpop.f32.mrf.mxu0
    %v3376 = vadd.f32 %v3023, %v3375
    %v3377 = vpop.f32.mrf.mxu0
    %v3378 = vadd.f32 %v3025, %v3377
    %v3379 = vpop.f32.mrf.mxu0
    %v3380 = vadd.f32 %v3027, %v3379
    %v3381 = vpop.f32.mrf.mxu0
    %v3382 = vadd.f32 %v3029, %v3381
    %3383 = vmatprep.mubr.bf16.mxu0 %v1278
    %3384 = vmatmul.mubr.bf16.gmra.mxu0 %v1277
    %v3385 = vpop.f32.mrf.mxu0
    %v3386 = vadd.f32 %v3033, %v3385
    %v3387 = vpop.f32.mrf.mxu0
    %v3388 = vadd.f32 %v3035, %v3387
    %v3389 = vpop.f32.mrf.mxu0
    %v3390 = vadd.f32 %v3037, %v3389
    %v3391 = vpop.f32.mrf.mxu0
    %v3392 = vadd.f32 %v3039, %v3391
    %3393 = vmatprep.mubr.bf16.mxu0 %v1285
    %3394 = vmatmul.mubr.bf16.gmra.mxu0 %v1284
    %v3395 = vpop.f32.mrf.mxu0
    %v3396 = vadd.f32 %v3043, %v3395
    %v3397 = vpop.f32.mrf.mxu0
    %v3398 = vadd.f32 %v3045, %v3397
    %v3399 = vpop.f32.mrf.mxu0
    %v3400 = vadd.f32 %v3047, %v3399
    %v3401 = vpop.f32.mrf.mxu0
    %v3402 = vadd.f32 %v3049, %v3401
    %3403 = vmatprep.mubr.bf16.mxu0 %v1292
    %3404 = vmatmul.mubr.bf16.gmra.mxu0 %v1291
    %v3405 = vpop.f32.mrf.mxu0
    %v3406 = vadd.f32 %v3053, %v3405
    %v3407 = vpop.f32.mrf.mxu0
    %v3408 = vadd.f32 %v3055, %v3407
    %v3409 = vpop.f32.mrf.mxu0
    %v3410 = vadd.f32 %v3057, %v3409
    %v3411 = vpop.f32.mrf.mxu0
    %v3412 = vadd.f32 %v3059, %v3411
    %3413 = vmatprep.mubr.bf16.mxu0 %v1299
    %3414 = vmatmul.mubr.bf16.gmra.mxu0 %v1298
    %v3415 = vpop.f32.mrf.mxu0
    %v3416 = vadd.f32 %v3063, %v3415
    %v3417 = vpop.f32.mrf.mxu0
    %v3418 = vadd.f32 %v3065, %v3417
    %v3419 = vpop.f32.mrf.mxu0
    %v3420 = vadd.f32 %v3067, %v3419
    %v3421 = vpop.f32.mrf.mxu0
    %v3422 = vadd.f32 %v3069, %v3421
    %3423 = vmatprep.mubr.bf16.mxu0 %v1306
    %3424 = vmatmul.mubr.bf16.gmra.mxu0 %v1305
    %v3425 = vpop.f32.mrf.mxu0
    %v3426 = vadd.f32 %v3073, %v3425
    %v3427 = vpop.f32.mrf.mxu0
    %v3428 = vadd.f32 %v3075, %v3427
    %v3429 = vpop.f32.mrf.mxu0
    %v3430 = vadd.f32 %v3077, %v3429
    %v3431 = vpop.f32.mrf.mxu0
    %v3432 = vadd.f32 %v3079, %v3431
    %3433 = vmatprep.mubr.bf16.mxu0 %v1313
    %3434 = vmatmul.mubr.bf16.gmra.mxu0 %v1312
    %v3435 = vpop.f32.mrf.mxu0
    %v3436 = vadd.f32 %v3083, %v3435
    %v3437 = vpop.f32.mrf.mxu0
    %v3438 = vadd.f32 %v3085, %v3437
    %v3439 = vpop.f32.mrf.mxu0
    %v3440 = vadd.f32 %v3087, %v3439
    %v3441 = vpop.f32.mrf.mxu0
    %v3442 = vadd.f32 %v3089, %v3441
    %3443 = vmatprep.mubr.bf16.mxu0 %v1320
    %3444 = vmatmul.mubr.bf16.gmra.mxu0 %v1319
    %v3445 = vpop.f32.mrf.mxu0
    %v3446 = vadd.f32 %v3093, %v3445
    %v3447 = vpop.f32.mrf.mxu0
    %v3448 = vadd.f32 %v3095, %v3447
    %v3449 = vpop.f32.mrf.mxu0
    %v3450 = vadd.f32 %v3097, %v3449
    %v3451 = vpop.f32.mrf.mxu0
    %v3452 = vadd.f32 %v3099, %v3451
    %3453 = vmatprep.mubr.bf16.mxu0 %v1327
    %3454 = vmatmul.mubr.bf16.gmra.mxu0 %v1326
    %v3455 = vpop.f32.mrf.mxu0
    %v3456 = vadd.f32 %v3103, %v3455
    %v3457 = vpop.f32.mrf.mxu0
    %v3458 = vadd.f32 %v3105, %v3457
    %v3459 = vpop.f32.mrf.mxu0
    %v3460 = vadd.f32 %v3107, %v3459
    %v3461 = vpop.f32.mrf.mxu0
    %v3462 = vadd.f32 %v3109, %v3461
    %3463 = vmatprep.mubr.bf16.mxu0 %v1334
    %3464 = vmatmul.mubr.bf16.gmra.mxu0 %v1333
    %v3465 = vpop.f32.mrf.mxu0
    %v3466 = vadd.f32 %v3113, %v3465
    %v3467 = vpop.f32.mrf.mxu0
    %v3468 = vadd.f32 %v3115, %v3467
    %v3469 = vpop.f32.mrf.mxu0
    %v3470 = vadd.f32 %v3117, %v3469
    %v3471 = vpop.f32.mrf.mxu0
    %v3472 = vadd.f32 %v3119, %v3471
    %3473 = vmatprep.mubr.bf16.mxu0 %v1341
    %3474 = vmatmul.mubr.bf16.gmra.mxu0 %v1340
    %v3475 = vpop.f32.mrf.mxu0
    %v3476 = vadd.f32 %v3123, %v3475
    %v3477 = vpop.f32.mrf.mxu0
    %v3478 = vadd.f32 %v3125, %v3477
    %v3479 = vpop.f32.mrf.mxu0
    %v3480 = vadd.f32 %v3127, %v3479
    %v3481 = vpop.f32.mrf.mxu0
    %v3482 = vadd.f32 %v3129, %v3481
    %3483 = vmatprep.mubr.bf16.mxu0 %v1348
    %3484 = vmatmul.mubr.bf16.gmra.mxu0 %v1347
    %v3485 = vpop.f32.mrf.mxu0
    %v3486 = vadd.f32 %v3133, %v3485
    %v3487 = vpop.f32.mrf.mxu0
    %v3488 = vadd.f32 %v3135, %v3487
    %v3489 = vpop.f32.mrf.mxu0
    %v3490 = vadd.f32 %v3137, %v3489
    %v3491 = vpop.f32.mrf.mxu0
    %v3492 = vadd.f32 %v3139, %v3491
    %3493 = vmatprep.mubr.bf16.mxu0 %v1355
    %3494 = vmatmul.mubr.bf16.gmra.mxu0 %v1354
    %v3495 = vpop.f32.mrf.mxu0
    %v3496 = vadd.f32 %v3143, %v3495
    %v3497 = vpop.f32.mrf.mxu0
    %v3498 = vadd.f32 %v3145, %v3497
    %v3499 = vpop.f32.mrf.mxu0
    %v3500 = vadd.f32 %v3147, %v3499
    %v3501 = vpop.f32.mrf.mxu0
    %v3502 = vadd.f32 %v3149, %v3501
    %3503 = vmatprep.mubr.bf16.mxu0 %v1362
    %3504 = vmatmul.mubr.bf16.gmra.mxu0 %v1361
    %v3505 = vpop.f32.mrf.mxu0
    %v3506 = vadd.f32 %v3153, %v3505
    %v3507 = vpop.f32.mrf.mxu0
    %v3508 = vadd.f32 %v3155, %v3507
    %v3509 = vpop.f32.mrf.mxu0
    %v3510 = vadd.f32 %v3157, %v3509
    %v3511 = vpop.f32.mrf.mxu0
    %v3512 = vadd.f32 %v3159, %v3511
    %3513 = vmatprep.mubr.bf16.mxu0 %v1369
    %3514 = vmatmul.mubr.bf16.gmra.mxu0 %v1368
    %v3515 = vpop.f32.mrf.mxu0
    %v3516 = vadd.f32 %v3163, %v3515
    %v3517 = vpop.f32.mrf.mxu0
    %v3518 = vadd.f32 %v3165, %v3517
    %v3519 = vpop.f32.mrf.mxu0
    %v3520 = vadd.f32 %v3167, %v3519
    %v3521 = vpop.f32.mrf.mxu0
    %v3522 = vadd.f32 %v3169, %v3521
    %3523 = vmatprep.mubr.bf16.mxu0 %v1376
    %3524 = vmatmul.mubr.bf16.gmra.mxu0 %v1375
    %v3525 = vpop.f32.mrf.mxu0
    %v3526 = vadd.f32 %v3173, %v3525
    %v3527 = vpop.f32.mrf.mxu0
    %v3528 = vadd.f32 %v3175, %v3527
    %v3529 = vpop.f32.mrf.mxu0
    %v3530 = vadd.f32 %v3177, %v3529
    %v3531 = vpop.f32.mrf.mxu0
    %v3532 = vadd.f32 %v3179, %v3531
    %3533 = vmatprep.mubr.bf16.mxu0 %v1383
    %3534 = vmatmul.mubr.bf16.gmra.mxu0 %v1382
    %v3535 = vpop.f32.mrf.mxu0
    %v3536 = vadd.f32 %v3183, %v3535
    %v3537 = vpop.f32.mrf.mxu0
    %v3538 = vadd.f32 %v3185, %v3537
    %v3539 = vpop.f32.mrf.mxu0
    %v3540 = vadd.f32 %v3187, %v3539
    %v3541 = vpop.f32.mrf.mxu0
    %v3542 = vadd.f32 %v3189, %v3541
    %3543 = vmatprep.mubr.bf16.mxu0 %v1390
    %3544 = vmatmul.mubr.bf16.gmra.mxu0 %v1389
    %v3545 = vpop.f32.mrf.mxu0
    %v3546 = vadd.f32 %v3193, %v3545
    %v3547 = vpop.f32.mrf.mxu0
    %v3548 = vadd.f32 %v3195, %v3547
    %v3549 = vpop.f32.mrf.mxu0
    %v3550 = vadd.f32 %v3197, %v3549
    %v3551 = vpop.f32.mrf.mxu0
    %v3552 = vadd.f32 %v3199, %v3551
    %3553 = vmatprep.mubr.bf16.mxu0 %v1397
    %3554 = vmatmul.mubr.bf16.gmra.mxu0 %v1396
    %v3555 = vpop.f32.mrf.mxu0
    %v3556 = vadd.f32 %v3203, %v3555
    %v3557 = vpop.f32.mrf.mxu0
    %v3558 = vadd.f32 %v3205, %v3557
    %v3559 = vpop.f32.mrf.mxu0
    %v3560 = vadd.f32 %v3207, %v3559
    %v3561 = vpop.f32.mrf.mxu0
    %v3562 = vadd.f32 %v3209, %v3561
    %3563 = vmatprep.mubr.bf16.mxu0 %v1404
    %3564 = vmatmul.mubr.bf16.gmra.mxu0 %v1403
    %v3565 = vpop.f32.mrf.mxu0
    %v3566 = vadd.f32 %v3213, %v3565
    %v3567 = vpop.f32.mrf.mxu0
    %v3568 = vadd.f32 %v3215, %v3567
    %v3569 = vpop.f32.mrf.mxu0
    %v3570 = vadd.f32 %v3217, %v3569
    %v3571 = vpop.f32.mrf.mxu0
    %v3572 = vadd.f32 %v3219, %v3571
    %3573 = vmatprep.mubr.bf16.mxu0 %v1411
    %3574 = vmatmul.mubr.bf16.gmra.mxu0 %v1410
    %v3575 = vpop.f32.mrf.mxu0
    %v3576 = vadd.f32 %v3223, %v3575
    %v3577 = vpop.f32.mrf.mxu0
    %v3578 = vadd.f32 %v3225, %v3577
    %v3579 = vpop.f32.mrf.mxu0
    %v3580 = vadd.f32 %v3227, %v3579
    %v3581 = vpop.f32.mrf.mxu0
    %v3582 = vadd.f32 %v3229, %v3581
    %3583 = vmatprep.mubr.bf16.mxu0 %v1418
    %3584 = vmatmul.mubr.bf16.gmra.mxu0 %v1417
    %v3585 = vpop.f32.mrf.mxu0
    %v3586 = vadd.f32 %v3233, %v3585
    %v3587 = vpop.f32.mrf.mxu0
    %v3588 = vadd.f32 %v3235, %v3587
    %v3589 = vpop.f32.mrf.mxu0
    %v3590 = vadd.f32 %v3237, %v3589
    %v3591 = vpop.f32.mrf.mxu0
    %v3592 = vadd.f32 %v3239, %v3591
    %3593 = vmatprep.mubr.bf16.mxu0 %v1425
    %3594 = vmatmul.mubr.bf16.gmra.mxu0 %v1424
    %v3595 = vpop.f32.mrf.mxu0
    %v3596 = vadd.f32 %v3243, %v3595
    %v3597 = vpop.f32.mrf.mxu0
    %v3598 = vadd.f32 %v3245, %v3597
    %v3599 = vpop.f32.mrf.mxu0
    %v3600 = vadd.f32 %v3247, %v3599
    %v3601 = vpop.f32.mrf.mxu0
    %v3602 = vadd.f32 %v3249, %v3601
    %3603 = vmatprep.mubr.bf16.mxu0 %v1432
    %3604 = vmatmul.mubr.bf16.gmra.mxu0 %v1431
    %v3605 = vpop.f32.mrf.mxu0
    %v3606 = vadd.f32 %v3253, %v3605
    %v3607 = vpop.f32.mrf.mxu0
    %v3608 = vadd.f32 %v3255, %v3607
    %v3609 = vpop.f32.mrf.mxu0
    %v3610 = vadd.f32 %v3257, %v3609
    %v3611 = vpop.f32.mrf.mxu0
    %v3612 = vadd.f32 %v3259, %v3611
    %3613 = vdwg.mxu0
    %3614 = vmatprep.subr.bf16.mxu0 0
    %3615 = vmatpush1.bf16.msra.mxu0 0
    %3616 = vmatprep.subr.bf16.mxu0 0
    %3617 = vmatpush1.bf16.msra.mxu0 0
    %3618 = vmatprep.subr.bf16.mxu0 0
    %3619 = vmatpush1.bf16.msra.mxu0 0
    %3620 = vmatprep.subr.bf16.mxu0 0
    %3621 = vmatpush1.bf16.msra.mxu0 0
    %3622 = vmatprep.subr.bf16.mxu0 %v2300
    %3623 = vmatpush1.bf16.msra.mxu0 %v2299
    %3624 = vmatprep.subr.bf16.mxu0 %v2297
    %3625 = vmatpush1.bf16.msra.mxu0 %v2296
    %3626 = vmatprep.subr.bf16.mxu0 %v2294
    %3627 = vmatpush1.bf16.msra.mxu0 %v2293
    %3628 = vmatprep.subr.bf16.mxu0 %v2291
    %3629 = vmatpush1.bf16.msra.mxu0 %v2290
    %3630 = vmatprep.subr.bf16.mxu0 0
    %3631 = vmatpush2.bf16.msra.mxu0 0
    %3632 = vmatprep.subr.bf16.mxu0 0
    %3633 = vmatpush2.bf16.msra.mxu0 0
    %3634 = vmatprep.subr.bf16.mxu0 0
    %3635 = vmatpush2.bf16.msra.mxu0 0
    %3636 = vmatprep.subr.bf16.mxu0 0
    %3637 = vmatpush2.bf16.msra.mxu0 0
    %3638 = vmatprep.subr.bf16.mxu0 0
    %3639 = vmatpush2.bf16.msra.mxu0 0
    %3640 = vmatprep.subr.bf16.mxu0 0
    %3641 = vmatpush2.bf16.msra.mxu0 0
    %3642 = vmatprep.subr.bf16.mxu0 0
    %3643 = vmatpush2.bf16.msra.mxu0 0
    %3644 = vmatprep.subr.bf16.mxu0 0
    %3645 = vmatpush2.bf16.msra.mxu0 0
    %3646 = vmatprep.mubr.bf16.mxu0 0
    %3647 = vmatmul.mubr.bf16.gmra.mxu0 %v2460
    %v3648 = vpop.f32.mrf.mxu0
    %v3649 = vadd.f32 %v3296, %v3648
    %v3650 = vpop.f32.mrf.mxu0
    %v3651 = vadd.f32 %v3298, %v3650
    %v3652 = vpop.f32.mrf.mxu0
    %v3653 = vadd.f32 %v3300, %v3652
    %v3654 = vpop.f32.mrf.mxu0
    %v3655 = vadd.f32 %v3302, %v3654
    %3656 = vmatprep.mubr.bf16.mxu0 0
    %3657 = vmatmul.mubr.bf16.gmra.mxu0 %v2463
    %v3658 = vpop.f32.mrf.mxu0
    %v3659 = vadd.f32 %v3306, %v3658
    %v3660 = vpop.f32.mrf.mxu0
    %v3661 = vadd.f32 %v3308, %v3660
    %v3662 = vpop.f32.mrf.mxu0
    %v3663 = vadd.f32 %v3310, %v3662
    %v3664 = vpop.f32.mrf.mxu0
    %v3665 = vadd.f32 %v3312, %v3664
    %3666 = vmatprep.mubr.bf16.mxu0 0
    %3667 = vmatmul.mubr.bf16.gmra.mxu0 %v2466
    %v3668 = vpop.f32.mrf.mxu0
    %v3669 = vadd.f32 %v3316, %v3668
    %v3670 = vpop.f32.mrf.mxu0
    %v3671 = vadd.f32 %v3318, %v3670
    %v3672 = vpop.f32.mrf.mxu0
    %v3673 = vadd.f32 %v3320, %v3672
    %v3674 = vpop.f32.mrf.mxu0
    %v3675 = vadd.f32 %v3322, %v3674
    %3676 = vmatprep.mubr.bf16.mxu0 0
    %3677 = vmatmul.mubr.bf16.gmra.mxu0 %v2469
    %v3678 = vpop.f32.mrf.mxu0
    %v3679 = vadd.f32 %v3326, %v3678
    %v3680 = vpop.f32.mrf.mxu0
    %v3681 = vadd.f32 %v3328, %v3680
    %v3682 = vpop.f32.mrf.mxu0
    %v3683 = vadd.f32 %v3330, %v3682
    %v3684 = vpop.f32.mrf.mxu0
    %v3685 = vadd.f32 %v3332, %v3684
    %3686 = vmatprep.mubr.bf16.mxu0 0
    %3687 = vmatmul.mubr.bf16.gmra.mxu0 %v2472
    %v3688 = vpop.f32.mrf.mxu0
    %v3689 = vadd.f32 %v3336, %v3688
    %v3690 = vpop.f32.mrf.mxu0
    %v3691 = vadd.f32 %v3338, %v3690
    %v3692 = vpop.f32.mrf.mxu0
    %v3693 = vadd.f32 %v3340, %v3692
    %v3694 = vpop.f32.mrf.mxu0
    %v3695 = vadd.f32 %v3342, %v3694
    %3696 = vmatprep.mubr.bf16.mxu0 0
    %3697 = vmatmul.mubr.bf16.gmra.mxu0 %v2475
    %v3698 = vpop.f32.mrf.mxu0
    %v3699 = vadd.f32 %v3346, %v3698
    %v3700 = vpop.f32.mrf.mxu0
    %v3701 = vadd.f32 %v3348, %v3700
    %v3702 = vpop.f32.mrf.mxu0
    %v3703 = vadd.f32 %v3350, %v3702
    %v3704 = vpop.f32.mrf.mxu0
    %v3705 = vadd.f32 %v3352, %v3704
    %3706 = vmatprep.mubr.bf16.mxu0 0
    %3707 = vmatmul.mubr.bf16.gmra.mxu0 %v2478
    %v3708 = vpop.f32.mrf.mxu0
    %v3709 = vadd.f32 %v3356, %v3708
    %v3710 = vpop.f32.mrf.mxu0
    %v3711 = vadd.f32 %v3358, %v3710
    %v3712 = vpop.f32.mrf.mxu0
    %v3713 = vadd.f32 %v3360, %v3712
    %v3714 = vpop.f32.mrf.mxu0
    %v3715 = vadd.f32 %v3362, %v3714
    %3716 = vmatprep.mubr.bf16.mxu0 0
    %3717 = vmatmul.mubr.bf16.gmra.mxu0 %v2481
    %v3718 = vpop.f32.mrf.mxu0
    %v3719 = vadd.f32 %v3366, %v3718
    %v3720 = vpop.f32.mrf.mxu0
    %v3721 = vadd.f32 %v3368, %v3720
    %v3722 = vpop.f32.mrf.mxu0
    %v3723 = vadd.f32 %v3370, %v3722
    %v3724 = vpop.f32.mrf.mxu0
    %v3725 = vadd.f32 %v3372, %v3724
    %3726 = vmatprep.mubr.bf16.mxu0 0
    %3727 = vmatmul.mubr.bf16.gmra.mxu0 %v2484
    %v3728 = vpop.f32.mrf.mxu0
    %v3729 = vadd.f32 %v3376, %v3728
    %v3730 = vpop.f32.mrf.mxu0
    %v3731 = vadd.f32 %v3378, %v3730
    %v3732 = vpop.f32.mrf.mxu0
    %v3733 = vadd.f32 %v3380, %v3732
    %v3734 = vpop.f32.mrf.mxu0
    %v3735 = vadd.f32 %v3382, %v3734
    %3736 = vmatprep.mubr.bf16.mxu0 0
    %3737 = vmatmul.mubr.bf16.gmra.mxu0 %v2487
    %v3738 = vpop.f32.mrf.mxu0
    %v3739 = vadd.f32 %v3386, %v3738
    %v3740 = vpop.f32.mrf.mxu0
    %v3741 = vadd.f32 %v3388, %v3740
    %v3742 = vpop.f32.mrf.mxu0
    %v3743 = vadd.f32 %v3390, %v3742
    %v3744 = vpop.f32.mrf.mxu0
    %v3745 = vadd.f32 %v3392, %v3744
    %3746 = vmatprep.mubr.bf16.mxu0 0
    %3747 = vmatmul.mubr.bf16.gmra.mxu0 %v2490
    %v3748 = vpop.f32.mrf.mxu0
    %v3749 = vadd.f32 %v3396, %v3748
    %v3750 = vpop.f32.mrf.mxu0
    %v3751 = vadd.f32 %v3398, %v3750
    %v3752 = vpop.f32.mrf.mxu0
    %v3753 = vadd.f32 %v3400, %v3752
    %v3754 = vpop.f32.mrf.mxu0
    %v3755 = vadd.f32 %v3402, %v3754
    %3756 = vmatprep.mubr.bf16.mxu0 0
    %3757 = vmatmul.mubr.bf16.gmra.mxu0 %v2493
    %v3758 = vpop.f32.mrf.mxu0
    %v3759 = vadd.f32 %v3406, %v3758
    %v3760 = vpop.f32.mrf.mxu0
    %v3761 = vadd.f32 %v3408, %v3760
    %v3762 = vpop.f32.mrf.mxu0
    %v3763 = vadd.f32 %v3410, %v3762
    %v3764 = vpop.f32.mrf.mxu0
    %v3765 = vadd.f32 %v3412, %v3764
    %3766 = vmatprep.mubr.bf16.mxu0 0
    %3767 = vmatmul.mubr.bf16.gmra.mxu0 %v2496
    %v3768 = vpop.f32.mrf.mxu0
    %v3769 = vadd.f32 %v3416, %v3768
    %v3770 = vpop.f32.mrf.mxu0
    %v3771 = vadd.f32 %v3418, %v3770
    %v3772 = vpop.f32.mrf.mxu0
    %v3773 = vadd.f32 %v3420, %v3772
    %v3774 = vpop.f32.mrf.mxu0
    %v3775 = vadd.f32 %v3422, %v3774
    %3776 = vmatprep.mubr.bf16.mxu0 0
    %3777 = vmatmul.mubr.bf16.gmra.mxu0 %v2499
    %v3778 = vpop.f32.mrf.mxu0
    %v3779 = vadd.f32 %v3426, %v3778
    %v3780 = vpop.f32.mrf.mxu0
    %v3781 = vadd.f32 %v3428, %v3780
    %v3782 = vpop.f32.mrf.mxu0
    %v3783 = vadd.f32 %v3430, %v3782
    %v3784 = vpop.f32.mrf.mxu0
    %v3785 = vadd.f32 %v3432, %v3784
    %3786 = vmatprep.mubr.bf16.mxu0 0
    %3787 = vmatmul.mubr.bf16.gmra.mxu0 %v2502
    %v3788 = vpop.f32.mrf.mxu0
    %v3789 = vadd.f32 %v3436, %v3788
    %v3790 = vpop.f32.mrf.mxu0
    %v3791 = vadd.f32 %v3438, %v3790
    %v3792 = vpop.f32.mrf.mxu0
    %v3793 = vadd.f32 %v3440, %v3792
    %v3794 = vpop.f32.mrf.mxu0
    %v3795 = vadd.f32 %v3442, %v3794
    %3796 = vmatprep.mubr.bf16.mxu0 0
    %3797 = vmatmul.mubr.bf16.gmra.mxu0 %v2505
    %v3798 = vpop.f32.mrf.mxu0
    %v3799 = vadd.f32 %v3446, %v3798
    %v3800 = vpop.f32.mrf.mxu0
    %v3801 = vadd.f32 %v3448, %v3800
    %v3802 = vpop.f32.mrf.mxu0
    %v3803 = vadd.f32 %v3450, %v3802
    %v3804 = vpop.f32.mrf.mxu0
    %v3805 = vadd.f32 %v3452, %v3804
    %3806 = vmatprep.mubr.bf16.mxu0 0
    %3807 = vmatmul.mubr.bf16.gmra.mxu0 %v2508
    %v3808 = vpop.f32.mrf.mxu0
    %v3809 = vadd.f32 %v3456, %v3808
    %v3810 = vpop.f32.mrf.mxu0
    %v3811 = vadd.f32 %v3458, %v3810
    %v3812 = vpop.f32.mrf.mxu0
    %v3813 = vadd.f32 %v3460, %v3812
    %v3814 = vpop.f32.mrf.mxu0
    %v3815 = vadd.f32 %v3462, %v3814
    %3816 = vmatprep.mubr.bf16.mxu0 0
    %3817 = vmatmul.mubr.bf16.gmra.mxu0 %v2511
    %v3818 = vpop.f32.mrf.mxu0
    %v3819 = vadd.f32 %v3466, %v3818
    %v3820 = vpop.f32.mrf.mxu0
    %v3821 = vadd.f32 %v3468, %v3820
    %v3822 = vpop.f32.mrf.mxu0
    %v3823 = vadd.f32 %v3470, %v3822
    %v3824 = vpop.f32.mrf.mxu0
    %v3825 = vadd.f32 %v3472, %v3824
    %3826 = vmatprep.mubr.bf16.mxu0 0
    %3827 = vmatmul.mubr.bf16.gmra.mxu0 %v2514
    %v3828 = vpop.f32.mrf.mxu0
    %v3829 = vadd.f32 %v3476, %v3828
    %v3830 = vpop.f32.mrf.mxu0
    %v3831 = vadd.f32 %v3478, %v3830
    %v3832 = vpop.f32.mrf.mxu0
    %v3833 = vadd.f32 %v3480, %v3832
    %v3834 = vpop.f32.mrf.mxu0
    %v3835 = vadd.f32 %v3482, %v3834
    %3836 = vmatprep.mubr.bf16.mxu0 0
    %3837 = vmatmul.mubr.bf16.gmra.mxu0 %v2517
    %v3838 = vpop.f32.mrf.mxu0
    %v3839 = vadd.f32 %v3486, %v3838
    %v3840 = vpop.f32.mrf.mxu0
    %v3841 = vadd.f32 %v3488, %v3840
    %v3842 = vpop.f32.mrf.mxu0
    %v3843 = vadd.f32 %v3490, %v3842
    %v3844 = vpop.f32.mrf.mxu0
    %v3845 = vadd.f32 %v3492, %v3844
    %3846 = vmatprep.mubr.bf16.mxu0 0
    %3847 = vmatmul.mubr.bf16.gmra.mxu0 %v2520
    %v3848 = vpop.f32.mrf.mxu0
    %v3849 = vadd.f32 %v3496, %v3848
    %v3850 = vpop.f32.mrf.mxu0
    %v3851 = vadd.f32 %v3498, %v3850
    %v3852 = vpop.f32.mrf.mxu0
    %v3853 = vadd.f32 %v3500, %v3852
    %v3854 = vpop.f32.mrf.mxu0
    %v3855 = vadd.f32 %v3502, %v3854
    %3856 = vmatprep.mubr.bf16.mxu0 0
    %3857 = vmatmul.mubr.bf16.gmra.mxu0 %v2523
    %v3858 = vpop.f32.mrf.mxu0
    %v3859 = vadd.f32 %v3506, %v3858
    %v3860 = vpop.f32.mrf.mxu0
    %v3861 = vadd.f32 %v3508, %v3860
    %v3862 = vpop.f32.mrf.mxu0
    %v3863 = vadd.f32 %v3510, %v3862
    %v3864 = vpop.f32.mrf.mxu0
    %v3865 = vadd.f32 %v3512, %v3864
    %3866 = vmatprep.mubr.bf16.mxu0 0
    %3867 = vmatmul.mubr.bf16.gmra.mxu0 %v2526
    %v3868 = vpop.f32.mrf.mxu0
    %v3869 = vadd.f32 %v3516, %v3868
    %v3870 = vpop.f32.mrf.mxu0
    %v3871 = vadd.f32 %v3518, %v3870
    %v3872 = vpop.f32.mrf.mxu0
    %v3873 = vadd.f32 %v3520, %v3872
    %v3874 = vpop.f32.mrf.mxu0
    %v3875 = vadd.f32 %v3522, %v3874
    %3876 = vmatprep.mubr.bf16.mxu0 0
    %3877 = vmatmul.mubr.bf16.gmra.mxu0 %v2529
    %v3878 = vpop.f32.mrf.mxu0
    %v3879 = vadd.f32 %v3526, %v3878
    %v3880 = vpop.f32.mrf.mxu0
    %v3881 = vadd.f32 %v3528, %v3880
    %v3882 = vpop.f32.mrf.mxu0
    %v3883 = vadd.f32 %v3530, %v3882
    %v3884 = vpop.f32.mrf.mxu0
    %v3885 = vadd.f32 %v3532, %v3884
    %3886 = vmatprep.mubr.bf16.mxu0 0
    %3887 = vmatmul.mubr.bf16.gmra.mxu0 %v2532
    %v3888 = vpop.f32.mrf.mxu0
    %v3889 = vadd.f32 %v3536, %v3888
    %v3890 = vpop.f32.mrf.mxu0
    %v3891 = vadd.f32 %v3538, %v3890
    %v3892 = vpop.f32.mrf.mxu0
    %v3893 = vadd.f32 %v3540, %v3892
    %v3894 = vpop.f32.mrf.mxu0
    %v3895 = vadd.f32 %v3542, %v3894
    %3896 = vmatprep.mubr.bf16.mxu0 0
    %3897 = vmatmul.mubr.bf16.gmra.mxu0 %v2535
    %v3898 = vpop.f32.mrf.mxu0
    %v3899 = vadd.f32 %v3546, %v3898
    %v3900 = vpop.f32.mrf.mxu0
    %v3901 = vadd.f32 %v3548, %v3900
    %v3902 = vpop.f32.mrf.mxu0
    %v3903 = vadd.f32 %v3550, %v3902
    %v3904 = vpop.f32.mrf.mxu0
    %v3905 = vadd.f32 %v3552, %v3904
    %3906 = vmatprep.mubr.bf16.mxu0 0
    %3907 = vmatmul.mubr.bf16.gmra.mxu0 %v2538
    %v3908 = vpop.f32.mrf.mxu0
    %v3909 = vadd.f32 %v3556, %v3908
    %v3910 = vpop.f32.mrf.mxu0
    %v3911 = vadd.f32 %v3558, %v3910
    %v3912 = vpop.f32.mrf.mxu0
    %v3913 = vadd.f32 %v3560, %v3912
    %v3914 = vpop.f32.mrf.mxu0
    %v3915 = vadd.f32 %v3562, %v3914
    %3916 = vmatprep.mubr.bf16.mxu0 0
    %3917 = vmatmul.mubr.bf16.gmra.mxu0 %v2541
    %v3918 = vpop.f32.mrf.mxu0
    %v3919 = vadd.f32 %v3566, %v3918
    %v3920 = vpop.f32.mrf.mxu0
    %v3921 = vadd.f32 %v3568, %v3920
    %v3922 = vpop.f32.mrf.mxu0
    %v3923 = vadd.f32 %v3570, %v3922
    %v3924 = vpop.f32.mrf.mxu0
    %v3925 = vadd.f32 %v3572, %v3924
    %3926 = vmatprep.mubr.bf16.mxu0 0
    %3927 = vmatmul.mubr.bf16.gmra.mxu0 %v2544
    %v3928 = vpop.f32.mrf.mxu0
    %v3929 = vadd.f32 %v3576, %v3928
    %v3930 = vpop.f32.mrf.mxu0
    %v3931 = vadd.f32 %v3578, %v3930
    %v3932 = vpop.f32.mrf.mxu0
    %v3933 = vadd.f32 %v3580, %v3932
    %v3934 = vpop.f32.mrf.mxu0
    %v3935 = vadd.f32 %v3582, %v3934
    %3936 = vmatprep.mubr.bf16.mxu0 0
    %3937 = vmatmul.mubr.bf16.gmra.mxu0 %v2547
    %v3938 = vpop.f32.mrf.mxu0
    %v3939 = vadd.f32 %v3586, %v3938
    %v3940 = vpop.f32.mrf.mxu0
    %v3941 = vadd.f32 %v3588, %v3940
    %v3942 = vpop.f32.mrf.mxu0
    %v3943 = vadd.f32 %v3590, %v3942
    %v3944 = vpop.f32.mrf.mxu0
    %v3945 = vadd.f32 %v3592, %v3944
    %3946 = vmatprep.mubr.bf16.mxu0 0
    %3947 = vmatmul.mubr.bf16.gmra.mxu0 %v2550
    %v3948 = vpop.f32.mrf.mxu0
    %v3949 = vadd.f32 %v3596, %v3948
    %v3950 = vpop.f32.mrf.mxu0
    %v3951 = vadd.f32 %v3598, %v3950
    %v3952 = vpop.f32.mrf.mxu0
    %v3953 = vadd.f32 %v3600, %v3952
    %v3954 = vpop.f32.mrf.mxu0
    %v3955 = vadd.f32 %v3602, %v3954
    %3956 = vmatprep.mubr.bf16.mxu0 0
    %3957 = vmatmul.mubr.bf16.gmra.mxu0 %v2553
    %v3958 = vpop.f32.mrf.mxu0
    %v3959 = vadd.f32 %v3606, %v3958
    %v3960 = vpop.f32.mrf.mxu0
    %v3961 = vadd.f32 %v3608, %v3960
    %v3962 = vpop.f32.mrf.mxu0
    %v3963 = vadd.f32 %v3610, %v3962
    %v3964 = vpop.f32.mrf.mxu0
    %v3965 = vadd.f32 %v3612, %v3964
    %3966 = vdwg.mxu0
    %3967 = vmatprep.subr.bf16.mxu0 0
    %3968 = vmatpush1.bf16.msra.mxu0 %v2169
    %3969 = vmatprep.subr.bf16.mxu0 0
    %3970 = vmatpush1.bf16.msra.mxu0 %v2166
    %3971 = vmatprep.subr.bf16.mxu0 0
    %3972 = vmatpush1.bf16.msra.mxu0 %v2163
    %3973 = vmatprep.subr.bf16.mxu0 0
    %3974 = vmatpush1.bf16.msra.mxu0 %v2160
    %3975 = vmatprep.subr.bf16.mxu0 0
    %3976 = vmatpush1.bf16.msra.mxu0 %v2157
    %3977 = vmatprep.subr.bf16.mxu0 0
    %3978 = vmatpush1.bf16.msra.mxu0 %v2154
    %3979 = vmatprep.subr.bf16.mxu0 0
    %3980 = vmatpush1.bf16.msra.mxu0 %v2151
    %3981 = vmatprep.subr.bf16.mxu0 0
    %3982 = vmatpush1.bf16.msra.mxu0 %v2148
    %3983 = vmatprep.subr.bf16.mxu0 0
    %3984 = vmatpush2.bf16.msra.mxu0 %v2193
    %3985 = vmatprep.subr.bf16.mxu0 0
    %3986 = vmatpush2.bf16.msra.mxu0 %v2190
    %3987 = vmatprep.subr.bf16.mxu0 0
    %3988 = vmatpush2.bf16.msra.mxu0 %v2187
    %3989 = vmatprep.subr.bf16.mxu0 0
    %3990 = vmatpush2.bf16.msra.mxu0 %v2184
    %3991 = vmatprep.subr.bf16.mxu0 0
    %3992 = vmatpush2.bf16.msra.mxu0 %v2181
    %3993 = vmatprep.subr.bf16.mxu0 0
    %3994 = vmatpush2.bf16.msra.mxu0 %v2178
    %3995 = vmatprep.subr.bf16.mxu0 0
    %3996 = vmatpush2.bf16.msra.mxu0 %v2175
    %3997 = vmatprep.subr.bf16.mxu0 0
    %3998 = vmatpush2.bf16.msra.mxu0 %v2172
    %3999 = vmatprep.mubr.bf16.mxu0 %v1211
    %4000 = vmatmul.mubr.bf16.gmra.mxu0 %v1210
    %v4001 = vpop.f32.mrf.mxu0
    %v4002 = vadd.f32 %v502, %v4001
    %v4003 = vpop.f32.mrf.mxu0
    %v4004 = vpop.f32.mrf.mxu0
    %v4005 = vadd.f32 %v502, %v4004
    %v4006 = vpop.f32.mrf.mxu0
    %4007 = vmatprep.mubr.bf16.mxu0 %v1218
    %4008 = vmatmul.mubr.bf16.gmra.mxu0 %v1217
    %v4009 = vpop.f32.mrf.mxu0
    %v4010 = vadd.f32 %v502, %v4009
    %v4011 = vpop.f32.mrf.mxu0
    %v4012 = vpop.f32.mrf.mxu0
    %v4013 = vadd.f32 %v502, %v4012
    %v4014 = vpop.f32.mrf.mxu0
    %4015 = vmatprep.mubr.bf16.mxu0 %v1225
    %4016 = vmatmul.mubr.bf16.gmra.mxu0 %v1224
    %v4017 = vpop.f32.mrf.mxu0
    %v4018 = vadd.f32 %v502, %v4017
    %v4019 = vpop.f32.mrf.mxu0
    %v4020 = vpop.f32.mrf.mxu0
    %v4021 = vadd.f32 %v502, %v4020
    %v4022 = vpop.f32.mrf.mxu0
    %4023 = vmatprep.mubr.bf16.mxu0 %v1232
    %4024 = vmatmul.mubr.bf16.gmra.mxu0 %v1231
    %v4025 = vpop.f32.mrf.mxu0
    %v4026 = vadd.f32 %v502, %v4025
    %v4027 = vpop.f32.mrf.mxu0
    %v4028 = vpop.f32.mrf.mxu0
    %v4029 = vadd.f32 %v502, %v4028
    %v4030 = vpop.f32.mrf.mxu0
    %4031 = vmatprep.mubr.bf16.mxu0 %v1239
    %4032 = vmatmul.mubr.bf16.gmra.mxu0 %v1238
    %v4033 = vpop.f32.mrf.mxu0
    %v4034 = vadd.f32 %v502, %v4033
    %v4035 = vpop.f32.mrf.mxu0
    %v4036 = vpop.f32.mrf.mxu0
    %v4037 = vadd.f32 %v502, %v4036
    %v4038 = vpop.f32.mrf.mxu0
    %4039 = vmatprep.mubr.bf16.mxu0 %v1246
    %4040 = vmatmul.mubr.bf16.gmra.mxu0 %v1245
    %v4041 = vpop.f32.mrf.mxu0
    %v4042 = vadd.f32 %v502, %v4041
    %v4043 = vpop.f32.mrf.mxu0
    %v4044 = vpop.f32.mrf.mxu0
    %v4045 = vadd.f32 %v502, %v4044
    %v4046 = vpop.f32.mrf.mxu0
    %4047 = vmatprep.mubr.bf16.mxu0 %v1253
    %4048 = vmatmul.mubr.bf16.gmra.mxu0 %v1252
    %v4049 = vpop.f32.mrf.mxu0
    %v4050 = vadd.f32 %v502, %v4049
    %v4051 = vpop.f32.mrf.mxu0
    %v4052 = vpop.f32.mrf.mxu0
    %v4053 = vadd.f32 %v502, %v4052
    %v4054 = vpop.f32.mrf.mxu0
    %4055 = vmatprep.mubr.bf16.mxu0 %v1260
    %4056 = vmatmul.mubr.bf16.gmra.mxu0 %v1259
    %v4057 = vpop.f32.mrf.mxu0
    %v4058 = vadd.f32 %v502, %v4057
    %v4059 = vpop.f32.mrf.mxu0
    %v4060 = vpop.f32.mrf.mxu0
    %v4061 = vadd.f32 %v502, %v4060
    %v4062 = vpop.f32.mrf.mxu0
    %4063 = vmatprep.mubr.bf16.mxu0 %v1267
    %4064 = vmatmul.mubr.bf16.gmra.mxu0 %v1266
    %v4065 = vpop.f32.mrf.mxu0
    %v4066 = vadd.f32 %v502, %v4065
    %v4067 = vpop.f32.mrf.mxu0
    %v4068 = vpop.f32.mrf.mxu0
    %v4069 = vadd.f32 %v502, %v4068
    %v4070 = vpop.f32.mrf.mxu0
    %4071 = vmatprep.mubr.bf16.mxu0 %v1274
    %4072 = vmatmul.mubr.bf16.gmra.mxu0 %v1273
    %v4073 = vpop.f32.mrf.mxu0
    %v4074 = vadd.f32 %v502, %v4073
    %v4075 = vpop.f32.mrf.mxu0
    %v4076 = vpop.f32.mrf.mxu0
    %v4077 = vadd.f32 %v502, %v4076
    %v4078 = vpop.f32.mrf.mxu0
    %4079 = vmatprep.mubr.bf16.mxu0 %v1281
    %4080 = vmatmul.mubr.bf16.gmra.mxu0 %v1280
    %v4081 = vpop.f32.mrf.mxu0
    %v4082 = vadd.f32 %v502, %v4081
    %v4083 = vpop.f32.mrf.mxu0
    %v4084 = vpop.f32.mrf.mxu0
    %v4085 = vadd.f32 %v502, %v4084
    %v4086 = vpop.f32.mrf.mxu0
    %4087 = vmatprep.mubr.bf16.mxu0 %v1288
    %4088 = vmatmul.mubr.bf16.gmra.mxu0 %v1287
    %v4089 = vpop.f32.mrf.mxu0
    %v4090 = vadd.f32 %v502, %v4089
    %v4091 = vpop.f32.mrf.mxu0
    %v4092 = vpop.f32.mrf.mxu0
    %v4093 = vadd.f32 %v502, %v4092
    %v4094 = vpop.f32.mrf.mxu0
    %4095 = vmatprep.mubr.bf16.mxu0 %v1295
    %4096 = vmatmul.mubr.bf16.gmra.mxu0 %v1294
    %v4097 = vpop.f32.mrf.mxu0
    %v4098 = vadd.f32 %v502, %v4097
    %v4099 = vpop.f32.mrf.mxu0
    %v4100 = vpop.f32.mrf.mxu0
    %v4101 = vadd.f32 %v502, %v4100
    %v4102 = vpop.f32.mrf.mxu0
    %4103 = vmatprep.mubr.bf16.mxu0 %v1302
    %4104 = vmatmul.mubr.bf16.gmra.mxu0 %v1301
    %v4105 = vpop.f32.mrf.mxu0
    %v4106 = vadd.f32 %v502, %v4105
    %v4107 = vpop.f32.mrf.mxu0
    %v4108 = vpop.f32.mrf.mxu0
    %v4109 = vadd.f32 %v502, %v4108
    %v4110 = vpop.f32.mrf.mxu0
    %4111 = vmatprep.mubr.bf16.mxu0 %v1309
    %4112 = vmatmul.mubr.bf16.gmra.mxu0 %v1308
    %v4113 = vpop.f32.mrf.mxu0
    %v4114 = vadd.f32 %v502, %v4113
    %v4115 = vpop.f32.mrf.mxu0
    %v4116 = vpop.f32.mrf.mxu0
    %v4117 = vadd.f32 %v502, %v4116
    %v4118 = vpop.f32.mrf.mxu0
    %4119 = vmatprep.mubr.bf16.mxu0 %v1316
    %4120 = vmatmul.mubr.bf16.gmra.mxu0 %v1315
    %v4121 = vpop.f32.mrf.mxu0
    %v4122 = vadd.f32 %v502, %v4121
    %v4123 = vpop.f32.mrf.mxu0
    %v4124 = vpop.f32.mrf.mxu0
    %v4125 = vadd.f32 %v502, %v4124
    %v4126 = vpop.f32.mrf.mxu0
    %4127 = vmatprep.mubr.bf16.mxu0 %v1323
    %4128 = vmatmul.mubr.bf16.gmra.mxu0 %v1322
    %v4129 = vpop.f32.mrf.mxu0
    %v4130 = vadd.f32 %v502, %v4129
    %v4131 = vpop.f32.mrf.mxu0
    %v4132 = vpop.f32.mrf.mxu0
    %v4133 = vadd.f32 %v502, %v4132
    %v4134 = vpop.f32.mrf.mxu0
    %4135 = vmatprep.mubr.bf16.mxu0 %v1330
    %4136 = vmatmul.mubr.bf16.gmra.mxu0 %v1329
    %v4137 = vpop.f32.mrf.mxu0
    %v4138 = vadd.f32 %v502, %v4137
    %v4139 = vpop.f32.mrf.mxu0
    %v4140 = vpop.f32.mrf.mxu0
    %v4141 = vadd.f32 %v502, %v4140
    %v4142 = vpop.f32.mrf.mxu0
    %4143 = vmatprep.mubr.bf16.mxu0 %v1337
    %4144 = vmatmul.mubr.bf16.gmra.mxu0 %v1336
    %v4145 = vpop.f32.mrf.mxu0
    %v4146 = vadd.f32 %v502, %v4145
    %v4147 = vpop.f32.mrf.mxu0
    %v4148 = vpop.f32.mrf.mxu0
    %v4149 = vadd.f32 %v502, %v4148
    %v4150 = vpop.f32.mrf.mxu0
    %4151 = vmatprep.mubr.bf16.mxu0 %v1344
    %4152 = vmatmul.mubr.bf16.gmra.mxu0 %v1343
    %v4153 = vpop.f32.mrf.mxu0
    %v4154 = vadd.f32 %v502, %v4153
    %v4155 = vpop.f32.mrf.mxu0
    %v4156 = vpop.f32.mrf.mxu0
    %v4157 = vadd.f32 %v502, %v4156
    %v4158 = vpop.f32.mrf.mxu0
    %4159 = vmatprep.mubr.bf16.mxu0 %v1351
    %4160 = vmatmul.mubr.bf16.gmra.mxu0 %v1350
    %v4161 = vpop.f32.mrf.mxu0
    %v4162 = vadd.f32 %v502, %v4161
    %v4163 = vpop.f32.mrf.mxu0
    %v4164 = vpop.f32.mrf.mxu0
    %v4165 = vadd.f32 %v502, %v4164
    %v4166 = vpop.f32.mrf.mxu0
    %4167 = vmatprep.mubr.bf16.mxu0 %v1358
    %4168 = vmatmul.mubr.bf16.gmra.mxu0 %v1357
    %v4169 = vpop.f32.mrf.mxu0
    %v4170 = vadd.f32 %v502, %v4169
    %v4171 = vpop.f32.mrf.mxu0
    %v4172 = vpop.f32.mrf.mxu0
    %v4173 = vadd.f32 %v502, %v4172
    %v4174 = vpop.f32.mrf.mxu0
    %4175 = vmatprep.mubr.bf16.mxu0 %v1365
    %4176 = vmatmul.mubr.bf16.gmra.mxu0 %v1364
    %v4177 = vpop.f32.mrf.mxu0
    %v4178 = vadd.f32 %v502, %v4177
    %v4179 = vpop.f32.mrf.mxu0
    %v4180 = vpop.f32.mrf.mxu0
    %v4181 = vadd.f32 %v502, %v4180
    %v4182 = vpop.f32.mrf.mxu0
    %4183 = vmatprep.mubr.bf16.mxu0 %v1372
    %4184 = vmatmul.mubr.bf16.gmra.mxu0 %v1371
    %v4185 = vpop.f32.mrf.mxu0
    %v4186 = vadd.f32 %v502, %v4185
    %v4187 = vpop.f32.mrf.mxu0
    %v4188 = vpop.f32.mrf.mxu0
    %v4189 = vadd.f32 %v502, %v4188
    %v4190 = vpop.f32.mrf.mxu0
    %4191 = vmatprep.mubr.bf16.mxu0 %v1379
    %4192 = vmatmul.mubr.bf16.gmra.mxu0 %v1378
    %v4193 = vpop.f32.mrf.mxu0
    %v4194 = vadd.f32 %v502, %v4193
    %v4195 = vpop.f32.mrf.mxu0
    %v4196 = vpop.f32.mrf.mxu0
    %v4197 = vadd.f32 %v502, %v4196
    %v4198 = vpop.f32.mrf.mxu0
    %4199 = vmatprep.mubr.bf16.mxu0 %v1386
    %4200 = vmatmul.mubr.bf16.gmra.mxu0 %v1385
    %v4201 = vpop.f32.mrf.mxu0
    %v4202 = vadd.f32 %v502, %v4201
    %v4203 = vpop.f32.mrf.mxu0
    %v4204 = vpop.f32.mrf.mxu0
    %v4205 = vadd.f32 %v502, %v4204
    %v4206 = vpop.f32.mrf.mxu0
    %4207 = vmatprep.mubr.bf16.mxu0 %v1393
    %4208 = vmatmul.mubr.bf16.gmra.mxu0 %v1392
    %v4209 = vpop.f32.mrf.mxu0
    %v4210 = vadd.f32 %v502, %v4209
    %v4211 = vpop.f32.mrf.mxu0
    %v4212 = vpop.f32.mrf.mxu0
    %v4213 = vadd.f32 %v502, %v4212
    %v4214 = vpop.f32.mrf.mxu0
    %4215 = vmatprep.mubr.bf16.mxu0 %v1400
    %4216 = vmatmul.mubr.bf16.gmra.mxu0 %v1399
    %v4217 = vpop.f32.mrf.mxu0
    %v4218 = vadd.f32 %v502, %v4217
    %v4219 = vpop.f32.mrf.mxu0
    %v4220 = vpop.f32.mrf.mxu0
    %v4221 = vadd.f32 %v502, %v4220
    %v4222 = vpop.f32.mrf.mxu0
    %4223 = vmatprep.mubr.bf16.mxu0 %v1407
    %4224 = vmatmul.mubr.bf16.gmra.mxu0 %v1406
    %v4225 = vpop.f32.mrf.mxu0
    %v4226 = vadd.f32 %v502, %v4225
    %v4227 = vpop.f32.mrf.mxu0
    %v4228 = vpop.f32.mrf.mxu0
    %v4229 = vadd.f32 %v502, %v4228
    %v4230 = vpop.f32.mrf.mxu0
    %4231 = vmatprep.mubr.bf16.mxu0 %v1414
    %4232 = vmatmul.mubr.bf16.gmra.mxu0 %v1413
    %v4233 = vpop.f32.mrf.mxu0
    %v4234 = vadd.f32 %v502, %v4233
    %v4235 = vpop.f32.mrf.mxu0
    %v4236 = vpop.f32.mrf.mxu0
    %v4237 = vadd.f32 %v502, %v4236
    %v4238 = vpop.f32.mrf.mxu0
    %4239 = vmatprep.mubr.bf16.mxu0 %v1421
    %4240 = vmatmul.mubr.bf16.gmra.mxu0 %v1420
    %v4241 = vpop.f32.mrf.mxu0
    %v4242 = vadd.f32 %v502, %v4241
    %v4243 = vpop.f32.mrf.mxu0
    %v4244 = vpop.f32.mrf.mxu0
    %v4245 = vadd.f32 %v502, %v4244
    %v4246 = vpop.f32.mrf.mxu0
    %4247 = vmatprep.mubr.bf16.mxu0 %v1428
    %4248 = vmatmul.mubr.bf16.gmra.mxu0 %v1427
    %v4249 = vpop.f32.mrf.mxu0
    %v4250 = vadd.f32 %v502, %v4249
    %v4251 = vpop.f32.mrf.mxu0
    %v4252 = vpop.f32.mrf.mxu0
    %v4253 = vadd.f32 %v502, %v4252
    %v4254 = vpop.f32.mrf.mxu0
    %4255 = vdwg.mxu0
    %4256 = vmatprep.subr.bf16.mxu0 0
    %4257 = vmatpush1.bf16.msra.mxu0 %v2217
    %4258 = vmatprep.subr.bf16.mxu0 0
    %4259 = vmatpush1.bf16.msra.mxu0 %v2214
    %4260 = vmatprep.subr.bf16.mxu0 0
    %4261 = vmatpush1.bf16.msra.mxu0 %v2211
    %4262 = vmatprep.subr.bf16.mxu0 0
    %4263 = vmatpush1.bf16.msra.mxu0 %v2208
    %4264 = vmatprep.subr.bf16.mxu0 0
    %4265 = vmatpush1.bf16.msra.mxu0 %v2205
    %4266 = vmatprep.subr.bf16.mxu0 0
    %4267 = vmatpush1.bf16.msra.mxu0 %v2202
    %4268 = vmatprep.subr.bf16.mxu0 0
    %4269 = vmatpush1.bf16.msra.mxu0 %v2199
    %4270 = vmatprep.subr.bf16.mxu0 0
    %4271 = vmatpush1.bf16.msra.mxu0 %v2196
    %4272 = vmatprep.subr.bf16.mxu0 0
    %4273 = vmatpush2.bf16.msra.mxu0 %v2241
    %4274 = vmatprep.subr.bf16.mxu0 0
    %4275 = vmatpush2.bf16.msra.mxu0 %v2238
    %4276 = vmatprep.subr.bf16.mxu0 0
    %4277 = vmatpush2.bf16.msra.mxu0 %v2235
    %4278 = vmatprep.subr.bf16.mxu0 0
    %4279 = vmatpush2.bf16.msra.mxu0 %v2232
    %4280 = vmatprep.subr.bf16.mxu0 0
    %4281 = vmatpush2.bf16.msra.mxu0 %v2229
    %4282 = vmatprep.subr.bf16.mxu0 0
    %4283 = vmatpush2.bf16.msra.mxu0 %v2226
    %4284 = vmatprep.subr.bf16.mxu0 0
    %4285 = vmatpush2.bf16.msra.mxu0 %v2223
    %4286 = vmatprep.subr.bf16.mxu0 0
    %4287 = vmatpush2.bf16.msra.mxu0 %v2220
    %4288 = vmatprep.mubr.bf16.mxu0 %v1213
    %4289 = vmatmul.mubr.bf16.gmra.mxu0 %v1212
    %v4290 = vpop.f32.mrf.mxu0
    %v4291 = vadd.f32 %v4002, %v4290
    %v4292 = vpop.f32.mrf.mxu0
    %v4293 = vpop.f32.mrf.mxu0
    %v4294 = vadd.f32 %v4005, %v4293
    %v4295 = vpop.f32.mrf.mxu0
    %4296 = vmatprep.mubr.bf16.mxu0 %v1220
    %4297 = vmatmul.mubr.bf16.gmra.mxu0 %v1219
    %v4298 = vpop.f32.mrf.mxu0
    %v4299 = vadd.f32 %v4010, %v4298
    %v4300 = vpop.f32.mrf.mxu0
    %v4301 = vpop.f32.mrf.mxu0
    %v4302 = vadd.f32 %v4013, %v4301
    %v4303 = vpop.f32.mrf.mxu0
    %4304 = vmatprep.mubr.bf16.mxu0 %v1227
    %4305 = vmatmul.mubr.bf16.gmra.mxu0 %v1226
    %v4306 = vpop.f32.mrf.mxu0
    %v4307 = vadd.f32 %v4018, %v4306
    %v4308 = vpop.f32.mrf.mxu0
    %v4309 = vpop.f32.mrf.mxu0
    %v4310 = vadd.f32 %v4021, %v4309
    %v4311 = vpop.f32.mrf.mxu0
    %4312 = vmatprep.mubr.bf16.mxu0 %v1234
    %4313 = vmatmul.mubr.bf16.gmra.mxu0 %v1233
    %v4314 = vpop.f32.mrf.mxu0
    %v4315 = vadd.f32 %v4026, %v4314
    %v4316 = vpop.f32.mrf.mxu0
    %v4317 = vpop.f32.mrf.mxu0
    %v4318 = vadd.f32 %v4029, %v4317
    %v4319 = vpop.f32.mrf.mxu0
    %4320 = vmatprep.mubr.bf16.mxu0 %v1241
    %4321 = vmatmul.mubr.bf16.gmra.mxu0 %v1240
    %v4322 = vpop.f32.mrf.mxu0
    %v4323 = vadd.f32 %v4034, %v4322
    %v4324 = vpop.f32.mrf.mxu0
    %v4325 = vpop.f32.mrf.mxu0
    %v4326 = vadd.f32 %v4037, %v4325
    %v4327 = vpop.f32.mrf.mxu0
    %4328 = vmatprep.mubr.bf16.mxu0 %v1248
    %4329 = vmatmul.mubr.bf16.gmra.mxu0 %v1247
    %v4330 = vpop.f32.mrf.mxu0
    %v4331 = vadd.f32 %v4042, %v4330
    %v4332 = vpop.f32.mrf.mxu0
    %v4333 = vpop.f32.mrf.mxu0
    %v4334 = vadd.f32 %v4045, %v4333
    %v4335 = vpop.f32.mrf.mxu0
    %4336 = vmatprep.mubr.bf16.mxu0 %v1255
    %4337 = vmatmul.mubr.bf16.gmra.mxu0 %v1254
    %v4338 = vpop.f32.mrf.mxu0
    %v4339 = vadd.f32 %v4050, %v4338
    %v4340 = vpop.f32.mrf.mxu0
    %v4341 = vpop.f32.mrf.mxu0
    %v4342 = vadd.f32 %v4053, %v4341
    %v4343 = vpop.f32.mrf.mxu0
    %4344 = vmatprep.mubr.bf16.mxu0 %v1262
    %4345 = vmatmul.mubr.bf16.gmra.mxu0 %v1261
    %v4346 = vpop.f32.mrf.mxu0
    %v4347 = vadd.f32 %v4058, %v4346
    %v4348 = vpop.f32.mrf.mxu0
    %v4349 = vpop.f32.mrf.mxu0
    %v4350 = vadd.f32 %v4061, %v4349
    %v4351 = vpop.f32.mrf.mxu0
    %4352 = vmatprep.mubr.bf16.mxu0 %v1269
    %4353 = vmatmul.mubr.bf16.gmra.mxu0 %v1268
    %v4354 = vpop.f32.mrf.mxu0
    %v4355 = vadd.f32 %v4066, %v4354
    %v4356 = vpop.f32.mrf.mxu0
    %v4357 = vpop.f32.mrf.mxu0
    %v4358 = vadd.f32 %v4069, %v4357
    %v4359 = vpop.f32.mrf.mxu0
    %4360 = vmatprep.mubr.bf16.mxu0 %v1276
    %4361 = vmatmul.mubr.bf16.gmra.mxu0 %v1275
    %v4362 = vpop.f32.mrf.mxu0
    %v4363 = vadd.f32 %v4074, %v4362
    %v4364 = vpop.f32.mrf.mxu0
    %v4365 = vpop.f32.mrf.mxu0
    %v4366 = vadd.f32 %v4077, %v4365
    %v4367 = vpop.f32.mrf.mxu0
    %4368 = vmatprep.mubr.bf16.mxu0 %v1283
    %4369 = vmatmul.mubr.bf16.gmra.mxu0 %v1282
    %v4370 = vpop.f32.mrf.mxu0
    %v4371 = vadd.f32 %v4082, %v4370
    %v4372 = vpop.f32.mrf.mxu0
    %v4373 = vpop.f32.mrf.mxu0
    %v4374 = vadd.f32 %v4085, %v4373
    %v4375 = vpop.f32.mrf.mxu0
    %4376 = vmatprep.mubr.bf16.mxu0 %v1290
    %4377 = vmatmul.mubr.bf16.gmra.mxu0 %v1289
    %v4378 = vpop.f32.mrf.mxu0
    %v4379 = vadd.f32 %v4090, %v4378
    %v4380 = vpop.f32.mrf.mxu0
    %v4381 = vpop.f32.mrf.mxu0
    %v4382 = vadd.f32 %v4093, %v4381
    %v4383 = vpop.f32.mrf.mxu0
    %4384 = vmatprep.mubr.bf16.mxu0 %v1297
    %4385 = vmatmul.mubr.bf16.gmra.mxu0 %v1296
    %v4386 = vpop.f32.mrf.mxu0
    %v4387 = vadd.f32 %v4098, %v4386
    %v4388 = vpop.f32.mrf.mxu0
    %v4389 = vpop.f32.mrf.mxu0
    %v4390 = vadd.f32 %v4101, %v4389
    %v4391 = vpop.f32.mrf.mxu0
    %4392 = vmatprep.mubr.bf16.mxu0 %v1304
    %4393 = vmatmul.mubr.bf16.gmra.mxu0 %v1303
    %v4394 = vpop.f32.mrf.mxu0
    %v4395 = vadd.f32 %v4106, %v4394
    %v4396 = vpop.f32.mrf.mxu0
    %v4397 = vpop.f32.mrf.mxu0
    %v4398 = vadd.f32 %v4109, %v4397
    %v4399 = vpop.f32.mrf.mxu0
    %4400 = vmatprep.mubr.bf16.mxu0 %v1311
    %4401 = vmatmul.mubr.bf16.gmra.mxu0 %v1310
    %v4402 = vpop.f32.mrf.mxu0
    %v4403 = vadd.f32 %v4114, %v4402
    %v4404 = vpop.f32.mrf.mxu0
    %v4405 = vpop.f32.mrf.mxu0
    %v4406 = vadd.f32 %v4117, %v4405
    %v4407 = vpop.f32.mrf.mxu0
    %4408 = vmatprep.mubr.bf16.mxu0 %v1318
    %4409 = vmatmul.mubr.bf16.gmra.mxu0 %v1317
    %v4410 = vpop.f32.mrf.mxu0
    %v4411 = vadd.f32 %v4122, %v4410
    %v4412 = vpop.f32.mrf.mxu0
    %v4413 = vpop.f32.mrf.mxu0
    %v4414 = vadd.f32 %v4125, %v4413
    %v4415 = vpop.f32.mrf.mxu0
    %4416 = vmatprep.mubr.bf16.mxu0 %v1325
    %4417 = vmatmul.mubr.bf16.gmra.mxu0 %v1324
    %v4418 = vpop.f32.mrf.mxu0
    %v4419 = vadd.f32 %v4130, %v4418
    %v4420 = vpop.f32.mrf.mxu0
    %v4421 = vpop.f32.mrf.mxu0
    %v4422 = vadd.f32 %v4133, %v4421
    %v4423 = vpop.f32.mrf.mxu0
    %4424 = vmatprep.mubr.bf16.mxu0 %v1332
    %4425 = vmatmul.mubr.bf16.gmra.mxu0 %v1331
    %v4426 = vpop.f32.mrf.mxu0
    %v4427 = vadd.f32 %v4138, %v4426
    %v4428 = vpop.f32.mrf.mxu0
    %v4429 = vpop.f32.mrf.mxu0
    %v4430 = vadd.f32 %v4141, %v4429
    %v4431 = vpop.f32.mrf.mxu0
    %4432 = vmatprep.mubr.bf16.mxu0 %v1339
    %4433 = vmatmul.mubr.bf16.gmra.mxu0 %v1338
    %v4434 = vpop.f32.mrf.mxu0
    %v4435 = vadd.f32 %v4146, %v4434
    %v4436 = vpop.f32.mrf.mxu0
    %v4437 = vpop.f32.mrf.mxu0
    %v4438 = vadd.f32 %v4149, %v4437
    %v4439 = vpop.f32.mrf.mxu0
    %4440 = vmatprep.mubr.bf16.mxu0 %v1346
    %4441 = vmatmul.mubr.bf16.gmra.mxu0 %v1345
    %v4442 = vpop.f32.mrf.mxu0
    %v4443 = vadd.f32 %v4154, %v4442
    %v4444 = vpop.f32.mrf.mxu0
    %v4445 = vpop.f32.mrf.mxu0
    %v4446 = vadd.f32 %v4157, %v4445
    %v4447 = vpop.f32.mrf.mxu0
    %4448 = vmatprep.mubr.bf16.mxu0 %v1353
    %4449 = vmatmul.mubr.bf16.gmra.mxu0 %v1352
    %v4450 = vpop.f32.mrf.mxu0
    %v4451 = vadd.f32 %v4162, %v4450
    %v4452 = vpop.f32.mrf.mxu0
    %v4453 = vpop.f32.mrf.mxu0
    %v4454 = vadd.f32 %v4165, %v4453
    %v4455 = vpop.f32.mrf.mxu0
    %4456 = vmatprep.mubr.bf16.mxu0 %v1360
    %4457 = vmatmul.mubr.bf16.gmra.mxu0 %v1359
    %v4458 = vpop.f32.mrf.mxu0
    %v4459 = vadd.f32 %v4170, %v4458
    %v4460 = vpop.f32.mrf.mxu0
    %v4461 = vpop.f32.mrf.mxu0
    %v4462 = vadd.f32 %v4173, %v4461
    %v4463 = vpop.f32.mrf.mxu0
    %4464 = vmatprep.mubr.bf16.mxu0 %v1367
    %4465 = vmatmul.mubr.bf16.gmra.mxu0 %v1366
    %v4466 = vpop.f32.mrf.mxu0
    %v4467 = vadd.f32 %v4178, %v4466
    %v4468 = vpop.f32.mrf.mxu0
    %v4469 = vpop.f32.mrf.mxu0
    %v4470 = vadd.f32 %v4181, %v4469
    %v4471 = vpop.f32.mrf.mxu0
    %4472 = vmatprep.mubr.bf16.mxu0 %v1374
    %4473 = vmatmul.mubr.bf16.gmra.mxu0 %v1373
    %v4474 = vpop.f32.mrf.mxu0
    %v4475 = vadd.f32 %v4186, %v4474
    %v4476 = vpop.f32.mrf.mxu0
    %v4477 = vpop.f32.mrf.mxu0
    %v4478 = vadd.f32 %v4189, %v4477
    %v4479 = vpop.f32.mrf.mxu0
    %4480 = vmatprep.mubr.bf16.mxu0 %v1381
    %4481 = vmatmul.mubr.bf16.gmra.mxu0 %v1380
    %v4482 = vpop.f32.mrf.mxu0
    %v4483 = vadd.f32 %v4194, %v4482
    %v4484 = vpop.f32.mrf.mxu0
    %v4485 = vpop.f32.mrf.mxu0
    %v4486 = vadd.f32 %v4197, %v4485
    %v4487 = vpop.f32.mrf.mxu0
    %4488 = vmatprep.mubr.bf16.mxu0 %v1388
    %4489 = vmatmul.mubr.bf16.gmra.mxu0 %v1387
    %v4490 = vpop.f32.mrf.mxu0
    %v4491 = vadd.f32 %v4202, %v4490
    %v4492 = vpop.f32.mrf.mxu0
    %v4493 = vpop.f32.mrf.mxu0
    %v4494 = vadd.f32 %v4205, %v4493
    %v4495 = vpop.f32.mrf.mxu0
    %4496 = vmatprep.mubr.bf16.mxu0 %v1395
    %4497 = vmatmul.mubr.bf16.gmra.mxu0 %v1394
    %v4498 = vpop.f32.mrf.mxu0
    %v4499 = vadd.f32 %v4210, %v4498
    %v4500 = vpop.f32.mrf.mxu0
    %v4501 = vpop.f32.mrf.mxu0
    %v4502 = vadd.f32 %v4213, %v4501
    %v4503 = vpop.f32.mrf.mxu0
    %4504 = vmatprep.mubr.bf16.mxu0 %v1402
    %4505 = vmatmul.mubr.bf16.gmra.mxu0 %v1401
    %v4506 = vpop.f32.mrf.mxu0
    %v4507 = vadd.f32 %v4218, %v4506
    %v4508 = vpop.f32.mrf.mxu0
    %v4509 = vpop.f32.mrf.mxu0
    %v4510 = vadd.f32 %v4221, %v4509
    %v4511 = vpop.f32.mrf.mxu0
    %4512 = vmatprep.mubr.bf16.mxu0 %v1409
    %4513 = vmatmul.mubr.bf16.gmra.mxu0 %v1408
    %v4514 = vpop.f32.mrf.mxu0
    %v4515 = vadd.f32 %v4226, %v4514
    %v4516 = vpop.f32.mrf.mxu0
    %v4517 = vpop.f32.mrf.mxu0
    %v4518 = vadd.f32 %v4229, %v4517
    %v4519 = vpop.f32.mrf.mxu0
    %4520 = vmatprep.mubr.bf16.mxu0 %v1416
    %4521 = vmatmul.mubr.bf16.gmra.mxu0 %v1415
    %v4522 = vpop.f32.mrf.mxu0
    %v4523 = vadd.f32 %v4234, %v4522
    %v4524 = vpop.f32.mrf.mxu0
    %v4525 = vpop.f32.mrf.mxu0
    %v4526 = vadd.f32 %v4237, %v4525
    %v4527 = vpop.f32.mrf.mxu0
    %4528 = vmatprep.mubr.bf16.mxu0 %v1423
    %4529 = vmatmul.mubr.bf16.gmra.mxu0 %v1422
    %v4530 = vpop.f32.mrf.mxu0
    %v4531 = vadd.f32 %v4242, %v4530
    %v4532 = vpop.f32.mrf.mxu0
    %v4533 = vpop.f32.mrf.mxu0
    %v4534 = vadd.f32 %v4245, %v4533
    %v4535 = vpop.f32.mrf.mxu0
    %4536 = vmatprep.mubr.bf16.mxu0 %v1430
    %4537 = vmatmul.mubr.bf16.gmra.mxu0 %v1429
    %v4538 = vpop.f32.mrf.mxu0
    %v4539 = vadd.f32 %v4250, %v4538
    %v4540 = vpop.f32.mrf.mxu0
    %v4541 = vpop.f32.mrf.mxu0
    %v4542 = vadd.f32 %v4253, %v4541
    %v4543 = vpop.f32.mrf.mxu0
    %4544 = vdwg.mxu0
    %4545 = vmatprep.subr.bf16.mxu0 0
    %4546 = vmatpush1.bf16.msra.mxu0 %v2265
    %4547 = vmatprep.subr.bf16.mxu0 0
    %4548 = vmatpush1.bf16.msra.mxu0 %v2262
    %4549 = vmatprep.subr.bf16.mxu0 0
    %4550 = vmatpush1.bf16.msra.mxu0 %v2259
    %4551 = vmatprep.subr.bf16.mxu0 0
    %4552 = vmatpush1.bf16.msra.mxu0 %v2256
    %4553 = vmatprep.subr.bf16.mxu0 0
    %4554 = vmatpush1.bf16.msra.mxu0 %v2253
    %4555 = vmatprep.subr.bf16.mxu0 0
    %4556 = vmatpush1.bf16.msra.mxu0 %v2250
    %4557 = vmatprep.subr.bf16.mxu0 0
    %4558 = vmatpush1.bf16.msra.mxu0 %v2247
    %4559 = vmatprep.subr.bf16.mxu0 0
    %4560 = vmatpush1.bf16.msra.mxu0 %v2244
    %4561 = vmatprep.subr.bf16.mxu0 0
    %4562 = vmatpush2.bf16.msra.mxu0 %v2289
    %4563 = vmatprep.subr.bf16.mxu0 0
    %4564 = vmatpush2.bf16.msra.mxu0 %v2286
    %4565 = vmatprep.subr.bf16.mxu0 0
    %4566 = vmatpush2.bf16.msra.mxu0 %v2283
    %4567 = vmatprep.subr.bf16.mxu0 0
    %4568 = vmatpush2.bf16.msra.mxu0 %v2280
    %4569 = vmatprep.subr.bf16.mxu0 0
    %4570 = vmatpush2.bf16.msra.mxu0 %v2277
    %4571 = vmatprep.subr.bf16.mxu0 0
    %4572 = vmatpush2.bf16.msra.mxu0 %v2274
    %4573 = vmatprep.subr.bf16.mxu0 0
    %4574 = vmatpush2.bf16.msra.mxu0 %v2271
    %4575 = vmatprep.subr.bf16.mxu0 0
    %4576 = vmatpush2.bf16.msra.mxu0 %v2268
    %4577 = vmatprep.mubr.bf16.mxu0 %v1215
    %4578 = vmatmul.mubr.bf16.gmra.mxu0 %v1214
    %v4579 = vpop.f32.mrf.mxu0
    %v4580 = vadd.f32 %v4291, %v4579
    %v4581 = vpop.f32.mrf.mxu0
    %v4582 = vpop.f32.mrf.mxu0
    %v4583 = vadd.f32 %v4294, %v4582
    %v4584 = vpop.f32.mrf.mxu0
    %4585 = vmatprep.mubr.bf16.mxu0 %v1222
    %4586 = vmatmul.mubr.bf16.gmra.mxu0 %v1221
    %v4587 = vpop.f32.mrf.mxu0
    %v4588 = vadd.f32 %v4299, %v4587
    %v4589 = vpop.f32.mrf.mxu0
    %v4590 = vpop.f32.mrf.mxu0
    %v4591 = vadd.f32 %v4302, %v4590
    %v4592 = vpop.f32.mrf.mxu0
    %4593 = vmatprep.mubr.bf16.mxu0 %v1229
    %4594 = vmatmul.mubr.bf16.gmra.mxu0 %v1228
    %v4595 = vpop.f32.mrf.mxu0
    %v4596 = vadd.f32 %v4307, %v4595
    %v4597 = vpop.f32.mrf.mxu0
    %v4598 = vpop.f32.mrf.mxu0
    %v4599 = vadd.f32 %v4310, %v4598
    %v4600 = vpop.f32.mrf.mxu0
    %4601 = vmatprep.mubr.bf16.mxu0 %v1236
    %4602 = vmatmul.mubr.bf16.gmra.mxu0 %v1235
    %v4603 = vpop.f32.mrf.mxu0
    %v4604 = vadd.f32 %v4315, %v4603
    %v4605 = vpop.f32.mrf.mxu0
    %v4606 = vpop.f32.mrf.mxu0
    %v4607 = vadd.f32 %v4318, %v4606
    %v4608 = vpop.f32.mrf.mxu0
    %4609 = vmatprep.mubr.bf16.mxu0 %v1243
    %4610 = vmatmul.mubr.bf16.gmra.mxu0 %v1242
    %v4611 = vpop.f32.mrf.mxu0
    %v4612 = vadd.f32 %v4323, %v4611
    %v4613 = vpop.f32.mrf.mxu0
    %v4614 = vpop.f32.mrf.mxu0
    %v4615 = vadd.f32 %v4326, %v4614
    %v4616 = vpop.f32.mrf.mxu0
    %4617 = vmatprep.mubr.bf16.mxu0 %v1250
    %4618 = vmatmul.mubr.bf16.gmra.mxu0 %v1249
    %v4619 = vpop.f32.mrf.mxu0
    %v4620 = vadd.f32 %v4331, %v4619
    %v4621 = vpop.f32.mrf.mxu0
    %v4622 = vpop.f32.mrf.mxu0
    %v4623 = vadd.f32 %v4334, %v4622
    %v4624 = vpop.f32.mrf.mxu0
    %4625 = vmatprep.mubr.bf16.mxu0 %v1257
    %4626 = vmatmul.mubr.bf16.gmra.mxu0 %v1256
    %v4627 = vpop.f32.mrf.mxu0
    %v4628 = vadd.f32 %v4339, %v4627
    %v4629 = vpop.f32.mrf.mxu0
    %v4630 = vpop.f32.mrf.mxu0
    %v4631 = vadd.f32 %v4342, %v4630
    %v4632 = vpop.f32.mrf.mxu0
    %4633 = vmatprep.mubr.bf16.mxu0 %v1264
    %4634 = vmatmul.mubr.bf16.gmra.mxu0 %v1263
    %v4635 = vpop.f32.mrf.mxu0
    %v4636 = vadd.f32 %v4347, %v4635
    %v4637 = vpop.f32.mrf.mxu0
    %v4638 = vpop.f32.mrf.mxu0
    %v4639 = vadd.f32 %v4350, %v4638
    %v4640 = vpop.f32.mrf.mxu0
    %4641 = vmatprep.mubr.bf16.mxu0 %v1271
    %4642 = vmatmul.mubr.bf16.gmra.mxu0 %v1270
    %v4643 = vpop.f32.mrf.mxu0
    %v4644 = vadd.f32 %v4355, %v4643
    %v4645 = vpop.f32.mrf.mxu0
    %v4646 = vpop.f32.mrf.mxu0
    %v4647 = vadd.f32 %v4358, %v4646
    %v4648 = vpop.f32.mrf.mxu0
    %4649 = vmatprep.mubr.bf16.mxu0 %v1278
    %4650 = vmatmul.mubr.bf16.gmra.mxu0 %v1277
    %v4651 = vpop.f32.mrf.mxu0
    %v4652 = vadd.f32 %v4363, %v4651
    %v4653 = vpop.f32.mrf.mxu0
    %v4654 = vpop.f32.mrf.mxu0
    %v4655 = vadd.f32 %v4366, %v4654
    %v4656 = vpop.f32.mrf.mxu0
    %4657 = vmatprep.mubr.bf16.mxu0 %v1285
    %4658 = vmatmul.mubr.bf16.gmra.mxu0 %v1284
    %v4659 = vpop.f32.mrf.mxu0
    %v4660 = vadd.f32 %v4371, %v4659
    %v4661 = vpop.f32.mrf.mxu0
    %v4662 = vpop.f32.mrf.mxu0
    %v4663 = vadd.f32 %v4374, %v4662
    %v4664 = vpop.f32.mrf.mxu0
    %4665 = vmatprep.mubr.bf16.mxu0 %v1292
    %4666 = vmatmul.mubr.bf16.gmra.mxu0 %v1291
    %v4667 = vpop.f32.mrf.mxu0
    %v4668 = vadd.f32 %v4379, %v4667
    %v4669 = vpop.f32.mrf.mxu0
    %v4670 = vpop.f32.mrf.mxu0
    %v4671 = vadd.f32 %v4382, %v4670
    %v4672 = vpop.f32.mrf.mxu0
    %4673 = vmatprep.mubr.bf16.mxu0 %v1299
    %4674 = vmatmul.mubr.bf16.gmra.mxu0 %v1298
    %v4675 = vpop.f32.mrf.mxu0
    %v4676 = vadd.f32 %v4387, %v4675
    %v4677 = vpop.f32.mrf.mxu0
    %v4678 = vpop.f32.mrf.mxu0
    %v4679 = vadd.f32 %v4390, %v4678
    %v4680 = vpop.f32.mrf.mxu0
    %4681 = vmatprep.mubr.bf16.mxu0 %v1306
    %4682 = vmatmul.mubr.bf16.gmra.mxu0 %v1305
    %v4683 = vpop.f32.mrf.mxu0
    %v4684 = vadd.f32 %v4395, %v4683
    %v4685 = vpop.f32.mrf.mxu0
    %v4686 = vpop.f32.mrf.mxu0
    %v4687 = vadd.f32 %v4398, %v4686
    %v4688 = vpop.f32.mrf.mxu0
    %4689 = vmatprep.mubr.bf16.mxu0 %v1313
    %4690 = vmatmul.mubr.bf16.gmra.mxu0 %v1312
    %v4691 = vpop.f32.mrf.mxu0
    %v4692 = vadd.f32 %v4403, %v4691
    %v4693 = vpop.f32.mrf.mxu0
    %v4694 = vpop.f32.mrf.mxu0
    %v4695 = vadd.f32 %v4406, %v4694
    %v4696 = vpop.f32.mrf.mxu0
    %4697 = vmatprep.mubr.bf16.mxu0 %v1320
    %4698 = vmatmul.mubr.bf16.gmra.mxu0 %v1319
    %v4699 = vpop.f32.mrf.mxu0
    %v4700 = vadd.f32 %v4411, %v4699
    %v4701 = vpop.f32.mrf.mxu0
    %v4702 = vpop.f32.mrf.mxu0
    %v4703 = vadd.f32 %v4414, %v4702
    %v4704 = vpop.f32.mrf.mxu0
    %4705 = vmatprep.mubr.bf16.mxu0 %v1327
    %4706 = vmatmul.mubr.bf16.gmra.mxu0 %v1326
    %v4707 = vpop.f32.mrf.mxu0
    %v4708 = vadd.f32 %v4419, %v4707
    %v4709 = vpop.f32.mrf.mxu0
    %v4710 = vpop.f32.mrf.mxu0
    %v4711 = vadd.f32 %v4422, %v4710
    %v4712 = vpop.f32.mrf.mxu0
    %4713 = vmatprep.mubr.bf16.mxu0 %v1334
    %4714 = vmatmul.mubr.bf16.gmra.mxu0 %v1333
    %v4715 = vpop.f32.mrf.mxu0
    %v4716 = vadd.f32 %v4427, %v4715
    %v4717 = vpop.f32.mrf.mxu0
    %v4718 = vpop.f32.mrf.mxu0
    %v4719 = vadd.f32 %v4430, %v4718
    %v4720 = vpop.f32.mrf.mxu0
    %4721 = vmatprep.mubr.bf16.mxu0 %v1341
    %4722 = vmatmul.mubr.bf16.gmra.mxu0 %v1340
    %v4723 = vpop.f32.mrf.mxu0
    %v4724 = vadd.f32 %v4435, %v4723
    %v4725 = vpop.f32.mrf.mxu0
    %v4726 = vpop.f32.mrf.mxu0
    %v4727 = vadd.f32 %v4438, %v4726
    %v4728 = vpop.f32.mrf.mxu0
    %4729 = vmatprep.mubr.bf16.mxu0 %v1348
    %4730 = vmatmul.mubr.bf16.gmra.mxu0 %v1347
    %v4731 = vpop.f32.mrf.mxu0
    %v4732 = vadd.f32 %v4443, %v4731
    %v4733 = vpop.f32.mrf.mxu0
    %v4734 = vpop.f32.mrf.mxu0
    %v4735 = vadd.f32 %v4446, %v4734
    %v4736 = vpop.f32.mrf.mxu0
    %4737 = vmatprep.mubr.bf16.mxu0 %v1355
    %4738 = vmatmul.mubr.bf16.gmra.mxu0 %v1354
    %v4739 = vpop.f32.mrf.mxu0
    %v4740 = vadd.f32 %v4451, %v4739
    %v4741 = vpop.f32.mrf.mxu0
    %v4742 = vpop.f32.mrf.mxu0
    %v4743 = vadd.f32 %v4454, %v4742
    %v4744 = vpop.f32.mrf.mxu0
    %4745 = vmatprep.mubr.bf16.mxu0 %v1362
    %4746 = vmatmul.mubr.bf16.gmra.mxu0 %v1361
    %v4747 = vpop.f32.mrf.mxu0
    %v4748 = vadd.f32 %v4459, %v4747
    %v4749 = vpop.f32.mrf.mxu0
    %v4750 = vpop.f32.mrf.mxu0
    %v4751 = vadd.f32 %v4462, %v4750
    %v4752 = vpop.f32.mrf.mxu0
    %4753 = vmatprep.mubr.bf16.mxu0 %v1369
    %4754 = vmatmul.mubr.bf16.gmra.mxu0 %v1368
    %v4755 = vpop.f32.mrf.mxu0
    %v4756 = vadd.f32 %v4467, %v4755
    %v4757 = vpop.f32.mrf.mxu0
    %v4758 = vpop.f32.mrf.mxu0
    %v4759 = vadd.f32 %v4470, %v4758
    %v4760 = vpop.f32.mrf.mxu0
    %4761 = vmatprep.mubr.bf16.mxu0 %v1376
    %4762 = vmatmul.mubr.bf16.gmra.mxu0 %v1375
    %v4763 = vpop.f32.mrf.mxu0
    %v4764 = vadd.f32 %v4475, %v4763
    %v4765 = vpop.f32.mrf.mxu0
    %v4766 = vpop.f32.mrf.mxu0
    %v4767 = vadd.f32 %v4478, %v4766
    %v4768 = vpop.f32.mrf.mxu0
    %4769 = vmatprep.mubr.bf16.mxu0 %v1383
    %4770 = vmatmul.mubr.bf16.gmra.mxu0 %v1382
    %v4771 = vpop.f32.mrf.mxu0
    %v4772 = vadd.f32 %v4483, %v4771
    %v4773 = vpop.f32.mrf.mxu0
    %v4774 = vpop.f32.mrf.mxu0
    %v4775 = vadd.f32 %v4486, %v4774
    %v4776 = vpop.f32.mrf.mxu0
    %4777 = vmatprep.mubr.bf16.mxu0 %v1390
    %4778 = vmatmul.mubr.bf16.gmra.mxu0 %v1389
    %v4779 = vpop.f32.mrf.mxu0
    %v4780 = vadd.f32 %v4491, %v4779
    %v4781 = vpop.f32.mrf.mxu0
    %v4782 = vpop.f32.mrf.mxu0
    %v4783 = vadd.f32 %v4494, %v4782
    %v4784 = vpop.f32.mrf.mxu0
    %4785 = vmatprep.mubr.bf16.mxu0 %v1397
    %4786 = vmatmul.mubr.bf16.gmra.mxu0 %v1396
    %v4787 = vpop.f32.mrf.mxu0
    %v4788 = vadd.f32 %v4499, %v4787
    %v4789 = vpop.f32.mrf.mxu0
    %v4790 = vpop.f32.mrf.mxu0
    %v4791 = vadd.f32 %v4502, %v4790
    %v4792 = vpop.f32.mrf.mxu0
    %4793 = vmatprep.mubr.bf16.mxu0 %v1404
    %4794 = vmatmul.mubr.bf16.gmra.mxu0 %v1403
    %v4795 = vpop.f32.mrf.mxu0
    %v4796 = vadd.f32 %v4507, %v4795
    %v4797 = vpop.f32.mrf.mxu0
    %v4798 = vpop.f32.mrf.mxu0
    %v4799 = vadd.f32 %v4510, %v4798
    %v4800 = vpop.f32.mrf.mxu0
    %4801 = vmatprep.mubr.bf16.mxu0 %v1411
    %4802 = vmatmul.mubr.bf16.gmra.mxu0 %v1410
    %v4803 = vpop.f32.mrf.mxu0
    %v4804 = vadd.f32 %v4515, %v4803
    %v4805 = vpop.f32.mrf.mxu0
    %v4806 = vpop.f32.mrf.mxu0
    %v4807 = vadd.f32 %v4518, %v4806
    %v4808 = vpop.f32.mrf.mxu0
    %4809 = vmatprep.mubr.bf16.mxu0 %v1418
    %4810 = vmatmul.mubr.bf16.gmra.mxu0 %v1417
    %v4811 = vpop.f32.mrf.mxu0
    %v4812 = vadd.f32 %v4523, %v4811
    %v4813 = vpop.f32.mrf.mxu0
    %v4814 = vpop.f32.mrf.mxu0
    %v4815 = vadd.f32 %v4526, %v4814
    %v4816 = vpop.f32.mrf.mxu0
    %4817 = vmatprep.mubr.bf16.mxu0 %v1425
    %4818 = vmatmul.mubr.bf16.gmra.mxu0 %v1424
    %v4819 = vpop.f32.mrf.mxu0
    %v4820 = vadd.f32 %v4531, %v4819
    %v4821 = vpop.f32.mrf.mxu0
    %v4822 = vpop.f32.mrf.mxu0
    %v4823 = vadd.f32 %v4534, %v4822
    %v4824 = vpop.f32.mrf.mxu0
    %4825 = vmatprep.mubr.bf16.mxu0 %v1432
    %4826 = vmatmul.mubr.bf16.gmra.mxu0 %v1431
    %v4827 = vpop.f32.mrf.mxu0
    %v4828 = vadd.f32 %v4539, %v4827
    %v4829 = vpop.f32.mrf.mxu0
    %v4830 = vpop.f32.mrf.mxu0
    %v4831 = vadd.f32 %v4542, %v4830
    %v4832 = vpop.f32.mrf.mxu0
    %4833 = vdwg.mxu0
    %4834 = vmatprep.subr.bf16.mxu0 0
    %4835 = vmatpush1.bf16.msra.mxu0 0
    %4836 = vmatprep.subr.bf16.mxu0 0
    %4837 = vmatpush1.bf16.msra.mxu0 0
    %4838 = vmatprep.subr.bf16.mxu0 0
    %4839 = vmatpush1.bf16.msra.mxu0 0
    %4840 = vmatprep.subr.bf16.mxu0 0
    %4841 = vmatpush1.bf16.msra.mxu0 0
    %4842 = vmatprep.subr.bf16.mxu0 0
    %4843 = vmatpush1.bf16.msra.mxu0 %v2301
    %4844 = vmatprep.subr.bf16.mxu0 0
    %4845 = vmatpush1.bf16.msra.mxu0 %v2298
    %4846 = vmatprep.subr.bf16.mxu0 0
    %4847 = vmatpush1.bf16.msra.mxu0 %v2295
    %4848 = vmatprep.subr.bf16.mxu0 0
    %4849 = vmatpush1.bf16.msra.mxu0 %v2292
    %4850 = vmatprep.subr.bf16.mxu0 0
    %4851 = vmatpush2.bf16.msra.mxu0 0
    %4852 = vmatprep.subr.bf16.mxu0 0
    %4853 = vmatpush2.bf16.msra.mxu0 0
    %4854 = vmatprep.subr.bf16.mxu0 0
    %4855 = vmatpush2.bf16.msra.mxu0 0
    %4856 = vmatprep.subr.bf16.mxu0 0
    %4857 = vmatpush2.bf16.msra.mxu0 0
    %4858 = vmatprep.subr.bf16.mxu0 0
    %4859 = vmatpush2.bf16.msra.mxu0 0
    %4860 = vmatprep.subr.bf16.mxu0 0
    %4861 = vmatpush2.bf16.msra.mxu0 0
    %4862 = vmatprep.subr.bf16.mxu0 0
    %4863 = vmatpush2.bf16.msra.mxu0 0
    %4864 = vmatprep.subr.bf16.mxu0 0
    %4865 = vmatpush2.bf16.msra.mxu0 0
    %4866 = vmatprep.mubr.bf16.mxu0 0
    %4867 = vmatmul.mubr.bf16.gmra.mxu0 %v2460
    %v4868 = vpop.f32.mrf.mxu0
    %v4869 = vadd.f32 %v4580, %v4868
    %v4870 = vpop.f32.mrf.mxu0
    %v4871 = vpop.f32.mrf.mxu0
    %v4872 = vadd.f32 %v4583, %v4871
    %v4873 = vpop.f32.mrf.mxu0
    %4874 = vmatprep.mubr.bf16.mxu0 0
    %4875 = vmatmul.mubr.bf16.gmra.mxu0 %v2463
    %v4876 = vpop.f32.mrf.mxu0
    %v4877 = vadd.f32 %v4588, %v4876
    %v4878 = vpop.f32.mrf.mxu0
    %v4879 = vpop.f32.mrf.mxu0
    %v4880 = vadd.f32 %v4591, %v4879
    %v4881 = vpop.f32.mrf.mxu0
    %4882 = vmatprep.mubr.bf16.mxu0 0
    %4883 = vmatmul.mubr.bf16.gmra.mxu0 %v2466
    %v4884 = vpop.f32.mrf.mxu0
    %v4885 = vadd.f32 %v4596, %v4884
    %v4886 = vpop.f32.mrf.mxu0
    %v4887 = vpop.f32.mrf.mxu0
    %v4888 = vadd.f32 %v4599, %v4887
    %v4889 = vpop.f32.mrf.mxu0
    %4890 = vmatprep.mubr.bf16.mxu0 0
    %4891 = vmatmul.mubr.bf16.gmra.mxu0 %v2469
    %v4892 = vpop.f32.mrf.mxu0
    %v4893 = vadd.f32 %v4604, %v4892
    %v4894 = vpop.f32.mrf.mxu0
    %v4895 = vpop.f32.mrf.mxu0
    %v4896 = vadd.f32 %v4607, %v4895
    %v4897 = vpop.f32.mrf.mxu0
    %4898 = vmatprep.mubr.bf16.mxu0 0
    %4899 = vmatmul.mubr.bf16.gmra.mxu0 %v2472
    %v4900 = vpop.f32.mrf.mxu0
    %v4901 = vadd.f32 %v4612, %v4900
    %v4902 = vpop.f32.mrf.mxu0
    %v4903 = vpop.f32.mrf.mxu0
    %v4904 = vadd.f32 %v4615, %v4903
    %v4905 = vpop.f32.mrf.mxu0
    %4906 = vmatprep.mubr.bf16.mxu0 0
    %4907 = vmatmul.mubr.bf16.gmra.mxu0 %v2475
    %v4908 = vpop.f32.mrf.mxu0
    %v4909 = vadd.f32 %v4620, %v4908
    %v4910 = vpop.f32.mrf.mxu0
    %v4911 = vpop.f32.mrf.mxu0
    %v4912 = vadd.f32 %v4623, %v4911
    %v4913 = vpop.f32.mrf.mxu0
    %4914 = vmatprep.mubr.bf16.mxu0 0
    %4915 = vmatmul.mubr.bf16.gmra.mxu0 %v2478
    %v4916 = vpop.f32.mrf.mxu0
    %v4917 = vadd.f32 %v4628, %v4916
    %v4918 = vpop.f32.mrf.mxu0
    %v4919 = vpop.f32.mrf.mxu0
    %v4920 = vadd.f32 %v4631, %v4919
    %v4921 = vpop.f32.mrf.mxu0
    %4922 = vmatprep.mubr.bf16.mxu0 0
    %4923 = vmatmul.mubr.bf16.gmra.mxu0 %v2481
    %v4924 = vpop.f32.mrf.mxu0
    %v4925 = vadd.f32 %v4636, %v4924
    %v4926 = vpop.f32.mrf.mxu0
    %v4927 = vpop.f32.mrf.mxu0
    %v4928 = vadd.f32 %v4639, %v4927
    %v4929 = vpop.f32.mrf.mxu0
    %4930 = vmatprep.mubr.bf16.mxu0 0
    %4931 = vmatmul.mubr.bf16.gmra.mxu0 %v2484
    %v4932 = vpop.f32.mrf.mxu0
    %v4933 = vadd.f32 %v4644, %v4932
    %v4934 = vpop.f32.mrf.mxu0
    %v4935 = vpop.f32.mrf.mxu0
    %v4936 = vadd.f32 %v4647, %v4935
    %v4937 = vpop.f32.mrf.mxu0
    %4938 = vmatprep.mubr.bf16.mxu0 0
    %4939 = vmatmul.mubr.bf16.gmra.mxu0 %v2487
    %v4940 = vpop.f32.mrf.mxu0
    %v4941 = vadd.f32 %v4652, %v4940
    %v4942 = vpop.f32.mrf.mxu0
    %v4943 = vpop.f32.mrf.mxu0
    %v4944 = vadd.f32 %v4655, %v4943
    %v4945 = vpop.f32.mrf.mxu0
    %4946 = vmatprep.mubr.bf16.mxu0 0
    %4947 = vmatmul.mubr.bf16.gmra.mxu0 %v2490
    %v4948 = vpop.f32.mrf.mxu0
    %v4949 = vadd.f32 %v4660, %v4948
    %v4950 = vpop.f32.mrf.mxu0
    %v4951 = vpop.f32.mrf.mxu0
    %v4952 = vadd.f32 %v4663, %v4951
    %v4953 = vpop.f32.mrf.mxu0
    %4954 = vmatprep.mubr.bf16.mxu0 0
    %4955 = vmatmul.mubr.bf16.gmra.mxu0 %v2493
    %v4956 = vpop.f32.mrf.mxu0
    %v4957 = vadd.f32 %v4668, %v4956
    %v4958 = vpop.f32.mrf.mxu0
    %v4959 = vpop.f32.mrf.mxu0
    %v4960 = vadd.f32 %v4671, %v4959
    %v4961 = vpop.f32.mrf.mxu0
    %4962 = vmatprep.mubr.bf16.mxu0 0
    %4963 = vmatmul.mubr.bf16.gmra.mxu0 %v2496
    %v4964 = vpop.f32.mrf.mxu0
    %v4965 = vadd.f32 %v4676, %v4964
    %v4966 = vpop.f32.mrf.mxu0
    %v4967 = vpop.f32.mrf.mxu0
    %v4968 = vadd.f32 %v4679, %v4967
    %v4969 = vpop.f32.mrf.mxu0
    %4970 = vmatprep.mubr.bf16.mxu0 0
    %4971 = vmatmul.mubr.bf16.gmra.mxu0 %v2499
    %v4972 = vpop.f32.mrf.mxu0
    %v4973 = vadd.f32 %v4684, %v4972
    %v4974 = vpop.f32.mrf.mxu0
    %v4975 = vpop.f32.mrf.mxu0
    %v4976 = vadd.f32 %v4687, %v4975
    %v4977 = vpop.f32.mrf.mxu0
    %4978 = vmatprep.mubr.bf16.mxu0 0
    %4979 = vmatmul.mubr.bf16.gmra.mxu0 %v2502
    %v4980 = vpop.f32.mrf.mxu0
    %v4981 = vadd.f32 %v4692, %v4980
    %v4982 = vpop.f32.mrf.mxu0
    %v4983 = vpop.f32.mrf.mxu0
    %v4984 = vadd.f32 %v4695, %v4983
    %v4985 = vpop.f32.mrf.mxu0
    %4986 = vmatprep.mubr.bf16.mxu0 0
    %4987 = vmatmul.mubr.bf16.gmra.mxu0 %v2505
    %v4988 = vpop.f32.mrf.mxu0
    %v4989 = vadd.f32 %v4700, %v4988
    %v4990 = vpop.f32.mrf.mxu0
    %v4991 = vpop.f32.mrf.mxu0
    %v4992 = vadd.f32 %v4703, %v4991
    %v4993 = vpop.f32.mrf.mxu0
    %4994 = vmatprep.mubr.bf16.mxu0 0
    %4995 = vmatmul.mubr.bf16.gmra.mxu0 %v2508
    %v4996 = vpop.f32.mrf.mxu0
    %v4997 = vadd.f32 %v4708, %v4996
    %v4998 = vpop.f32.mrf.mxu0
    %v4999 = vpop.f32.mrf.mxu0
    %v5000 = vadd.f32 %v4711, %v4999
    %v5001 = vpop.f32.mrf.mxu0
    %5002 = vmatprep.mubr.bf16.mxu0 0
    %5003 = vmatmul.mubr.bf16.gmra.mxu0 %v2511
    %v5004 = vpop.f32.mrf.mxu0
    %v5005 = vadd.f32 %v4716, %v5004
    %v5006 = vpop.f32.mrf.mxu0
    %v5007 = vpop.f32.mrf.mxu0
    %v5008 = vadd.f32 %v4719, %v5007
    %v5009 = vpop.f32.mrf.mxu0
    %5010 = vmatprep.mubr.bf16.mxu0 0
    %5011 = vmatmul.mubr.bf16.gmra.mxu0 %v2514
    %v5012 = vpop.f32.mrf.mxu0
    %v5013 = vadd.f32 %v4724, %v5012
    %v5014 = vpop.f32.mrf.mxu0
    %v5015 = vpop.f32.mrf.mxu0
    %v5016 = vadd.f32 %v4727, %v5015
    %v5017 = vpop.f32.mrf.mxu0
    %5018 = vmatprep.mubr.bf16.mxu0 0
    %5019 = vmatmul.mubr.bf16.gmra.mxu0 %v2517
    %v5020 = vpop.f32.mrf.mxu0
    %v5021 = vadd.f32 %v4732, %v5020
    %v5022 = vpop.f32.mrf.mxu0
    %v5023 = vpop.f32.mrf.mxu0
    %v5024 = vadd.f32 %v4735, %v5023
    %v5025 = vpop.f32.mrf.mxu0
    %5026 = vmatprep.mubr.bf16.mxu0 0
    %5027 = vmatmul.mubr.bf16.gmra.mxu0 %v2520
    %v5028 = vpop.f32.mrf.mxu0
    %v5029 = vadd.f32 %v4740, %v5028
    %v5030 = vpop.f32.mrf.mxu0
    %v5031 = vpop.f32.mrf.mxu0
    %v5032 = vadd.f32 %v4743, %v5031
    %v5033 = vpop.f32.mrf.mxu0
    %5034 = vmatprep.mubr.bf16.mxu0 0
    %5035 = vmatmul.mubr.bf16.gmra.mxu0 %v2523
    %v5036 = vpop.f32.mrf.mxu0
    %v5037 = vadd.f32 %v4748, %v5036
    %v5038 = vpop.f32.mrf.mxu0
    %v5039 = vpop.f32.mrf.mxu0
    %v5040 = vadd.f32 %v4751, %v5039
    %v5041 = vpop.f32.mrf.mxu0
    %5042 = vmatprep.mubr.bf16.mxu0 0
    %5043 = vmatmul.mubr.bf16.gmra.mxu0 %v2526
    %v5044 = vpop.f32.mrf.mxu0
    %v5045 = vadd.f32 %v4756, %v5044
    %v5046 = vpop.f32.mrf.mxu0
    %v5047 = vpop.f32.mrf.mxu0
    %v5048 = vadd.f32 %v4759, %v5047
    %v5049 = vpop.f32.mrf.mxu0
    %5050 = vmatprep.mubr.bf16.mxu0 0
    %5051 = vmatmul.mubr.bf16.gmra.mxu0 %v2529
    %v5052 = vpop.f32.mrf.mxu0
    %v5053 = vadd.f32 %v4764, %v5052
    %v5054 = vpop.f32.mrf.mxu0
    %v5055 = vpop.f32.mrf.mxu0
    %v5056 = vadd.f32 %v4767, %v5055
    %v5057 = vpop.f32.mrf.mxu0
    %5058 = vmatprep.mubr.bf16.mxu0 0
    %5059 = vmatmul.mubr.bf16.gmra.mxu0 %v2532
    %v5060 = vpop.f32.mrf.mxu0
    %v5061 = vadd.f32 %v4772, %v5060
    %v5062 = vpop.f32.mrf.mxu0
    %v5063 = vpop.f32.mrf.mxu0
    %v5064 = vadd.f32 %v4775, %v5063
    %v5065 = vpop.f32.mrf.mxu0
    %5066 = vmatprep.mubr.bf16.mxu0 0
    %5067 = vmatmul.mubr.bf16.gmra.mxu0 %v2535
    %v5068 = vpop.f32.mrf.mxu0
    %v5069 = vadd.f32 %v4780, %v5068
    %v5070 = vpop.f32.mrf.mxu0
    %v5071 = vpop.f32.mrf.mxu0
    %v5072 = vadd.f32 %v4783, %v5071
    %v5073 = vpop.f32.mrf.mxu0
    %5074 = vmatprep.mubr.bf16.mxu0 0
    %5075 = vmatmul.mubr.bf16.gmra.mxu0 %v2538
    %v5076 = vpop.f32.mrf.mxu0
    %v5077 = vadd.f32 %v4788, %v5076
    %v5078 = vpop.f32.mrf.mxu0
    %v5079 = vpop.f32.mrf.mxu0
    %v5080 = vadd.f32 %v4791, %v5079
    %v5081 = vpop.f32.mrf.mxu0
    %5082 = vmatprep.mubr.bf16.mxu0 0
    %5083 = vmatmul.mubr.bf16.gmra.mxu0 %v2541
    %v5084 = vpop.f32.mrf.mxu0
    %v5085 = vadd.f32 %v4796, %v5084
    %v5086 = vpop.f32.mrf.mxu0
    %v5087 = vpop.f32.mrf.mxu0
    %v5088 = vadd.f32 %v4799, %v5087
    %v5089 = vpop.f32.mrf.mxu0
    %5090 = vmatprep.mubr.bf16.mxu0 0
    %5091 = vmatmul.mubr.bf16.gmra.mxu0 %v2544
    %v5092 = vpop.f32.mrf.mxu0
    %v5093 = vadd.f32 %v4804, %v5092
    %v5094 = vpop.f32.mrf.mxu0
    %v5095 = vpop.f32.mrf.mxu0
    %v5096 = vadd.f32 %v4807, %v5095
    %v5097 = vpop.f32.mrf.mxu0
    %5098 = vmatprep.mubr.bf16.mxu0 0
    %5099 = vmatmul.mubr.bf16.gmra.mxu0 %v2547
    %v5100 = vpop.f32.mrf.mxu0
    %v5101 = vadd.f32 %v4812, %v5100
    %v5102 = vpop.f32.mrf.mxu0
    %v5103 = vpop.f32.mrf.mxu0
    %v5104 = vadd.f32 %v4815, %v5103
    %v5105 = vpop.f32.mrf.mxu0
    %5106 = vmatprep.mubr.bf16.mxu0 0
    %5107 = vmatmul.mubr.bf16.gmra.mxu0 %v2550
    %v5108 = vpop.f32.mrf.mxu0
    %v5109 = vadd.f32 %v4820, %v5108
    %v5110 = vpop.f32.mrf.mxu0
    %v5111 = vpop.f32.mrf.mxu0
    %v5112 = vadd.f32 %v4823, %v5111
    %v5113 = vpop.f32.mrf.mxu0
    %5114 = vmatprep.mubr.bf16.mxu0 0
    %5115 = vmatmul.mubr.bf16.gmra.mxu0 %v2553
    %v5116 = vpop.f32.mrf.mxu0
    %v5117 = vadd.f32 %v4828, %v5116
    %v5118 = vpop.f32.mrf.mxu0
    %v5119 = vpop.f32.mrf.mxu0
    %v5120 = vadd.f32 %v4831, %v5119
    %v5121 = vpop.f32.mrf.mxu0
    %5122 = vdwg.mxu0
    %v5123 = vmax.f32 %v3649, 0.0
    %v5124 = vmax.f32 %v3651, 0.0
    %v5125 = vmax.f32 %v4869, 0.0
    %v5126 = vmax.f32 %v3653, 0.0
    %v5127 = vmax.f32 %v3655, 0.0
    %v5128 = vmax.f32 %v4872, 0.0
    %v5129 = vmax.f32 %v3659, 0.0
    %v5130 = vmax.f32 %v3661, 0.0
    %v5131 = vmax.f32 %v4877, 0.0
    %v5132 = vmax.f32 %v3663, 0.0
    %v5133 = vmax.f32 %v3665, 0.0
    %v5134 = vmax.f32 %v4880, 0.0
    %v5135 = vmax.f32 %v3669, 0.0
    %v5136 = vmax.f32 %v3671, 0.0
    %v5137 = vmax.f32 %v4885, 0.0
    %v5138 = vmax.f32 %v3673, 0.0
    %v5139 = vmax.f32 %v3675, 0.0
    %v5140 = vmax.f32 %v4888, 0.0
    %v5141 = vmax.f32 %v3679, 0.0
    %v5142 = vmax.f32 %v3681, 0.0
    %v5143 = vmax.f32 %v4893, 0.0
    %v5144 = vmax.f32 %v3683, 0.0
    %v5145 = vmax.f32 %v3685, 0.0
    %v5146 = vmax.f32 %v4896, 0.0
    %v5147 = vmax.f32 %v3689, 0.0
    %v5148 = vmax.f32 %v3691, 0.0
    %v5149 = vmax.f32 %v4901, 0.0
    %v5150 = vmax.f32 %v3693, 0.0
    %v5151 = vmax.f32 %v3695, 0.0
    %v5152 = vmax.f32 %v4904, 0.0
    %v5153 = vmax.f32 %v3699, 0.0
    %v5154 = vmax.f32 %v3701, 0.0
    %v5155 = vmax.f32 %v4909, 0.0
    %v5156 = vmax.f32 %v3703, 0.0
    %v5157 = vmax.f32 %v3705, 0.0
    %v5158 = vmax.f32 %v4912, 0.0
    %v5159 = vmax.f32 %v3709, 0.0
    %v5160 = vmax.f32 %v3711, 0.0
    %v5161 = vmax.f32 %v4917, 0.0
    %v5162 = vmax.f32 %v3713, 0.0
    %v5163 = vmax.f32 %v3715, 0.0
    %v5164 = vmax.f32 %v4920, 0.0
    %v5165 = vmax.f32 %v3719, 0.0
    %v5166 = vmax.f32 %v3721, 0.0
    %v5167 = vmax.f32 %v4925, 0.0
    %v5168 = vmax.f32 %v3723, 0.0
    %v5169 = vmax.f32 %v3725, 0.0
    %v5170 = vmax.f32 %v4928, 0.0
    %v5171 = vmax.f32 %v3729, 0.0
    %v5172 = vmax.f32 %v3731, 0.0
    %v5173 = vmax.f32 %v4933, 0.0
    %v5174 = vmax.f32 %v3733, 0.0
    %v5175 = vmax.f32 %v3735, 0.0
    %v5176 = vmax.f32 %v4936, 0.0
    %v5177 = vmax.f32 %v3739, 0.0
    %v5178 = vmax.f32 %v3741, 0.0
    %v5179 = vmax.f32 %v4941, 0.0
    %v5180 = vmax.f32 %v3743, 0.0
    %v5181 = vmax.f32 %v3745, 0.0
    %v5182 = vmax.f32 %v4944, 0.0
    %v5183 = vmax.f32 %v3749, 0.0
    %v5184 = vmax.f32 %v3751, 0.0
    %v5185 = vmax.f32 %v4949, 0.0
    %v5186 = vmax.f32 %v3753, 0.0
    %v5187 = vmax.f32 %v3755, 0.0
    %v5188 = vmax.f32 %v4952, 0.0
    %v5189 = vmax.f32 %v3759, 0.0
    %v5190 = vmax.f32 %v3761, 0.0
    %v5191 = vmax.f32 %v4957, 0.0
    %v5192 = vmax.f32 %v3763, 0.0
    %v5193 = vmax.f32 %v3765, 0.0
    %v5194 = vmax.f32 %v4960, 0.0
    %v5195 = vmax.f32 %v3769, 0.0
    %v5196 = vmax.f32 %v3771, 0.0
    %v5197 = vmax.f32 %v4965, 0.0
    %v5198 = vmax.f32 %v3773, 0.0
    %v5199 = vmax.f32 %v3775, 0.0
    %v5200 = vmax.f32 %v4968, 0.0
    %v5201 = vmax.f32 %v3779, 0.0
    %v5202 = vmax.f32 %v3781, 0.0
    %v5203 = vmax.f32 %v4973, 0.0
    %v5204 = vmax.f32 %v3783, 0.0
    %v5205 = vmax.f32 %v3785, 0.0
    %v5206 = vmax.f32 %v4976, 0.0
    %v5207 = vmax.f32 %v3789, 0.0
    %v5208 = vmax.f32 %v3791, 0.0
    %v5209 = vmax.f32 %v4981, 0.0
    %v5210 = vmax.f32 %v3793, 0.0
    %v5211 = vmax.f32 %v3795, 0.0
    %v5212 = vmax.f32 %v4984, 0.0
    %v5213 = vmax.f32 %v3799, 0.0
    %v5214 = vmax.f32 %v3801, 0.0
    %v5215 = vmax.f32 %v4989, 0.0
    %v5216 = vmax.f32 %v3803, 0.0
    %v5217 = vmax.f32 %v3805, 0.0
    %v5218 = vmax.f32 %v4992, 0.0
    %v5219 = vmax.f32 %v3809, 0.0
    %v5220 = vmax.f32 %v3811, 0.0
    %v5221 = vmax.f32 %v4997, 0.0
    %v5222 = vmax.f32 %v3813, 0.0
    %v5223 = vmax.f32 %v3815, 0.0
    %v5224 = vmax.f32 %v5000, 0.0
    %v5225 = vmax.f32 %v3819, 0.0
    %v5226 = vmax.f32 %v3821, 0.0
    %v5227 = vmax.f32 %v5005, 0.0
    %v5228 = vmax.f32 %v3823, 0.0
    %v5229 = vmax.f32 %v3825, 0.0
    %v5230 = vmax.f32 %v5008, 0.0
    %v5231 = vmax.f32 %v3829, 0.0
    %v5232 = vmax.f32 %v3831, 0.0
    %v5233 = vmax.f32 %v5013, 0.0
    %v5234 = vmax.f32 %v3833, 0.0
    %v5235 = vmax.f32 %v3835, 0.0
    %v5236 = vmax.f32 %v5016, 0.0
    %v5237 = vmax.f32 %v3839, 0.0
    %v5238 = vmax.f32 %v3841, 0.0
    %v5239 = vmax.f32 %v5021, 0.0
    %v5240 = vmax.f32 %v3843, 0.0
    %v5241 = vmax.f32 %v3845, 0.0
    %v5242 = vmax.f32 %v5024, 0.0
    %v5243 = vmax.f32 %v3849, 0.0
    %v5244 = vmax.f32 %v3851, 0.0
    %v5245 = vmax.f32 %v5029, 0.0
    %v5246 = vmax.f32 %v3853, 0.0
    %v5247 = vmax.f32 %v3855, 0.0
    %v5248 = vmax.f32 %v5032, 0.0
    %v5249 = vmax.f32 %v3859, 0.0
    %v5250 = vmax.f32 %v3861, 0.0
    %v5251 = vmax.f32 %v5037, 0.0
    %v5252 = vmax.f32 %v3863, 0.0
    %v5253 = vmax.f32 %v3865, 0.0
    %v5254 = vmax.f32 %v5040, 0.0
    %v5255 = vmax.f32 %v3869, 0.0
    %v5256 = vmax.f32 %v3871, 0.0
    %v5257 = vmax.f32 %v5045, 0.0
    %v5258 = vmax.f32 %v3873, 0.0
    %v5259 = vmax.f32 %v3875, 0.0
    %v5260 = vmax.f32 %v5048, 0.0
    %v5261 = vmax.f32 %v3879, 0.0
    %v5262 = vmax.f32 %v3881, 0.0
    %v5263 = vmax.f32 %v5053, 0.0
    %v5264 = vmax.f32 %v3883, 0.0
    %v5265 = vmax.f32 %v3885, 0.0
    %v5266 = vmax.f32 %v5056, 0.0
    %v5267 = vmax.f32 %v3889, 0.0
    %v5268 = vmax.f32 %v3891, 0.0
    %v5269 = vmax.f32 %v5061, 0.0
    %v5270 = vmax.f32 %v3893, 0.0
    %v5271 = vmax.f32 %v3895, 0.0
    %v5272 = vmax.f32 %v5064, 0.0
    %v5273 = vmax.f32 %v3899, 0.0
    %v5274 = vmax.f32 %v3901, 0.0
    %v5275 = vmax.f32 %v5069, 0.0
    %v5276 = vmax.f32 %v3903, 0.0
    %v5277 = vmax.f32 %v3905, 0.0
    %v5278 = vmax.f32 %v5072, 0.0
    %v5279 = vmax.f32 %v3909, 0.0
    %v5280 = vmax.f32 %v3911, 0.0
    %v5281 = vmax.f32 %v5077, 0.0
    %v5282 = vmax.f32 %v3913, 0.0
    %v5283 = vmax.f32 %v3915, 0.0
    %v5284 = vmax.f32 %v5080, 0.0
    %v5285 = vmax.f32 %v3919, 0.0
    %v5286 = vmax.f32 %v3921, 0.0
    %v5287 = vmax.f32 %v5085, 0.0
    %v5288 = vmax.f32 %v3923, 0.0
    %v5289 = vmax.f32 %v3925, 0.0
    %v5290 = vmax.f32 %v5088, 0.0
    %v5291 = vmax.f32 %v3929, 0.0
    %v5292 = vmax.f32 %v3931, 0.0
    %v5293 = vmax.f32 %v5093, 0.0
    %v5294 = vmax.f32 %v3933, 0.0
    %v5295 = vmax.f32 %v3935, 0.0
    %v5296 = vmax.f32 %v5096, 0.0
    %v5297 = vmax.f32 %v3939, 0.0
    %v5298 = vmax.f32 %v3941, 0.0
    %v5299 = vmax.f32 %v5101, 0.0
    %v5300 = vmax.f32 %v3943, 0.0
    %v5301 = vmax.f32 %v3945, 0.0
    %v5302 = vmax.f32 %v5104, 0.0
    %v5303 = vmax.f32 %v3949, 0.0
    %v5304 = vmax.f32 %v3951, 0.0
    %v5305 = vmax.f32 %v5109, 0.0
    %v5306 = vmax.f32 %v3953, 0.0
    %v5307 = vmax.f32 %v3955, 0.0
    %v5308 = vmax.f32 %v5112, 0.0
    %v5309 = vmax.f32 %v3959, 0.0
    %v5310 = vmax.f32 %v3961, 0.0
    %v5311 = vmax.f32 %v5117, 0.0
    %v5312 = vmax.f32 %v3963, 0.0
    %v5313 = vmax.f32 %v3965, 0.0
    %v5314 = vmax.f32 %v5120, 0.0
    %5315 = vst [vmem:[#allocation2] sm:$0xff] %v5123
    %5316 = vst [vmem:[#allocation2 + $0x8] sm:$0xff] %v5124
    %5317 = vst [vmem:[#allocation2 + $0x10] sm:$0xff] %v5125
    %5318 = vst [vmem:[#allocation2 + $0x18] sm:$0xff] %v5126
    %5319 = vst [vmem:[#allocation2 + $0x20] sm:$0xff] %v5127
    %5320 = vst [vmem:[#allocation2 + $0x28] sm:$0xff] %v5128
    %5321 = vst [vmem:[#allocation2 + $0x30] sm:$0xff] %v5129
    %5322 = vst [vmem:[#allocation2 + $0x38] sm:$0xff] %v5130
    %5323 = vst [vmem:[#allocation2 + $0x40] sm:$0xff] %v5131
    %5324 = vst [vmem:[#allocation2 + $0x48] sm:$0xff] %v5132
    %5325 = vst [vmem:[#allocation2 + $0x50] sm:$0xff] %v5133
    %5326 = vst [vmem:[#allocation2 + $0x58] sm:$0xff] %v5134
    %5327 = vst [vmem:[#allocation2 + $0x60] sm:$0xff] %v5135
    %5328 = vst [vmem:[#allocation2 + $0x68] sm:$0xff] %v5136
    %5329 = vst [vmem:[#allocation2 + $0x70] sm:$0xff] %v5137
    %5330 = vst [vmem:[#allocation2 + $0x78] sm:$0xff] %v5138
    %5331 = vst [vmem:[#allocation2 + $0x80] sm:$0xff] %v5139
    %5332 = vst [vmem:[#allocation2 + $0x88] sm:$0xff] %v5140
    %5333 = vst [vmem:[#allocation2 + $0x90] sm:$0xff] %v5141
    %5334 = vst [vmem:[#allocation2 + $0x98] sm:$0xff] %v5142
    %5335 = vst [vmem:[#allocation2 + $0xa0] sm:$0xff] %v5143
    %5336 = vst [vmem:[#allocation2 + $0xa8] sm:$0xff] %v5144
    %5337 = vst [vmem:[#allocation2 + $0xb0] sm:$0xff] %v5145
    %5338 = vst [vmem:[#allocation2 + $0xb8] sm:$0xff] %v5146
    %5339 = vst [vmem:[#allocation2 + $0xc0] sm:$0xff] %v5147
    %5340 = vst [vmem:[#allocation2 + $0xc8] sm:$0xff] %v5148
    %5341 = vst [vmem:[#allocation2 + $0xd0] sm:$0xff] %v5149
    %5342 = vst [vmem:[#allocation2 + $0xd8] sm:$0xff] %v5150
    %5343 = vst [vmem:[#allocation2 + $0xe0] sm:$0xff] %v5151
    %5344 = vst [vmem:[#allocation2 + $0xe8] sm:$0xff] %v5152
    %5345 = vst [vmem:[#allocation2 + $0xf0] sm:$0xff] %v5153
    %5346 = vst [vmem:[#allocation2 + $0xf8] sm:$0xff] %v5154
    %5347 = vst [vmem:[#allocation2 + $0x100] sm:$0xff] %v5155
    %5348 = vst [vmem:[#allocation2 + $0x108] sm:$0xff] %v5156
    %5349 = vst [vmem:[#allocation2 + $0x110] sm:$0xff] %v5157
    %5350 = vst [vmem:[#allocation2 + $0x118] sm:$0xff] %v5158
    %5351 = vst [vmem:[#allocation2 + $0x120] sm:$0xff] %v5159
    %5352 = vst [vmem:[#allocation2 + $0x128] sm:$0xff] %v5160
    %5353 = vst [vmem:[#allocation2 + $0x130] sm:$0xff] %v5161
    %5354 = vst [vmem:[#allocation2 + $0x138] sm:$0xff] %v5162
    %5355 = vst [vmem:[#allocation2 + $0x140] sm:$0xff] %v5163
    %5356 = vst [vmem:[#allocation2 + $0x148] sm:$0xff] %v5164
    %5357 = vst [vmem:[#allocation2 + $0x150] sm:$0xff] %v5165
    %5358 = vst [vmem:[#allocation2 + $0x158] sm:$0xff] %v5166
    %5359 = vst [vmem:[#allocation2 + $0x160] sm:$0xff] %v5167
    %5360 = vst [vmem:[#allocation2 + $0x168] sm:$0xff] %v5168
    %5361 = vst [vmem:[#allocation2 + $0x170] sm:$0xff] %v5169
    %5362 = vst [vmem:[#allocation2 + $0x178] sm:$0xff] %v5170
    %5363 = vst [vmem:[#allocation2 + $0x180] sm:$0xff] %v5171
    %5364 = vst [vmem:[#allocation2 + $0x188] sm:$0xff] %v5172
    %5365 = vst [vmem:[#allocation2 + $0x190] sm:$0xff] %v5173
    %5366 = vst [vmem:[#allocation2 + $0x198] sm:$0xff] %v5174
    %5367 = vst [vmem:[#allocation2 + $0x1a0] sm:$0xff] %v5175
    %5368 = vst [vmem:[#allocation2 + $0x1a8] sm:$0xff] %v5176
    %5369 = vst [vmem:[#allocation2 + $0x1b0] sm:$0xff] %v5177
    %5370 = vst [vmem:[#allocation2 + $0x1b8] sm:$0xff] %v5178
    %5371 = vst [vmem:[#allocation2 + $0x1c0] sm:$0xff] %v5179
    %5372 = vst [vmem:[#allocation2 + $0x1c8] sm:$0xff] %v5180
    %5373 = vst [vmem:[#allocation2 + $0x1d0] sm:$0xff] %v5181
    %5374 = vst [vmem:[#allocation2 + $0x1d8] sm:$0xff] %v5182
    %5375 = vst [vmem:[#allocation2 + $0x1e0] sm:$0xff] %v5183
    %5376 = vst [vmem:[#allocation2 + $0x1e8] sm:$0xff] %v5184
    %5377 = vst [vmem:[#allocation2 + $0x1f0] sm:$0xff] %v5185
    %5378 = vst [vmem:[#allocation2 + $0x1f8] sm:$0xff] %v5186
    %5379 = vst [vmem:[#allocation2 + $0x200] sm:$0xff] %v5187
    %5380 = vst [vmem:[#allocation2 + $0x208] sm:$0xff] %v5188
    %5381 = vst [vmem:[#allocation2 + $0x210] sm:$0xff] %v5189
    %5382 = vst [vmem:[#allocation2 + $0x218] sm:$0xff] %v5190
    %5383 = vst [vmem:[#allocation2 + $0x220] sm:$0xff] %v5191
    %5384 = vst [vmem:[#allocation2 + $0x228] sm:$0xff] %v5192
    %5385 = vst [vmem:[#allocation2 + $0x230] sm:$0xff] %v5193
    %5386 = vst [vmem:[#allocation2 + $0x238] sm:$0xff] %v5194
    %5387 = vst [vmem:[#allocation2 + $0x240] sm:$0xff] %v5195
    %5388 = vst [vmem:[#allocation2 + $0x248] sm:$0xff] %v5196
    %5389 = vst [vmem:[#allocation2 + $0x250] sm:$0xff] %v5197
    %5390 = vst [vmem:[#allocation2 + $0x258] sm:$0xff] %v5198
    %5391 = vst [vmem:[#allocation2 + $0x260] sm:$0xff] %v5199
    %5392 = vst [vmem:[#allocation2 + $0x268] sm:$0xff] %v5200
    %5393 = vst [vmem:[#allocation2 + $0x270] sm:$0xff] %v5201
    %5394 = vst [vmem:[#allocation2 + $0x278] sm:$0xff] %v5202
    %5395 = vst [vmem:[#allocation2 + $0x280] sm:$0xff] %v5203
    %5396 = vst [vmem:[#allocation2 + $0x288] sm:$0xff] %v5204
    %5397 = vst [vmem:[#allocation2 + $0x290] sm:$0xff] %v5205
    %5398 = vst [vmem:[#allocation2 + $0x298] sm:$0xff] %v5206
    %5399 = vst [vmem:[#allocation2 + $0x2a0] sm:$0xff] %v5207
    %5400 = vst [vmem:[#allocation2 + $0x2a8] sm:$0xff] %v5208
    %5401 = vst [vmem:[#allocation2 + $0x2b0] sm:$0xff] %v5209
    %5402 = vst [vmem:[#allocation2 + $0x2b8] sm:$0xff] %v5210
    %5403 = vst [vmem:[#allocation2 + $0x2c0] sm:$0xff] %v5211
    %5404 = vst [vmem:[#allocation2 + $0x2c8] sm:$0xff] %v5212
    %5405 = vst [vmem:[#allocation2 + $0x2d0] sm:$0xff] %v5213
    %5406 = vst [vmem:[#allocation2 + $0x2d8] sm:$0xff] %v5214
    %5407 = vst [vmem:[#allocation2 + $0x2e0] sm:$0xff] %v5215
    %5408 = vst [vmem:[#allocation2 + $0x2e8] sm:$0xff] %v5216
    %5409 = vst [vmem:[#allocation2 + $0x2f0] sm:$0xff] %v5217
    %5410 = vst [vmem:[#allocation2 + $0x2f8] sm:$0xff] %v5218
    %5411 = vst [vmem:[#allocation2 + $0x300] sm:$0xff] %v5219
    %5412 = vst [vmem:[#allocation2 + $0x308] sm:$0xff] %v5220
    %5413 = vst [vmem:[#allocation2 + $0x310] sm:$0xff] %v5221
    %5414 = vst [vmem:[#allocation2 + $0x318] sm:$0xff] %v5222
    %5415 = vst [vmem:[#allocation2 + $0x320] sm:$0xff] %v5223
    %5416 = vst [vmem:[#allocation2 + $0x328] sm:$0xff] %v5224
    %5417 = vst [vmem:[#allocation2 + $0x330] sm:$0xff] %v5225
    %5418 = vst [vmem:[#allocation2 + $0x338] sm:$0xff] %v5226
    %5419 = vst [vmem:[#allocation2 + $0x340] sm:$0xff] %v5227
    %5420 = vst [vmem:[#allocation2 + $0x348] sm:$0xff] %v5228
    %5421 = vst [vmem:[#allocation2 + $0x350] sm:$0xff] %v5229
    %5422 = vst [vmem:[#allocation2 + $0x358] sm:$0xff] %v5230
    %5423 = vst [vmem:[#allocation2 + $0x360] sm:$0xff] %v5231
    %5424 = vst [vmem:[#allocation2 + $0x368] sm:$0xff] %v5232
    %5425 = vst [vmem:[#allocation2 + $0x370] sm:$0xff] %v5233
    %5426 = vst [vmem:[#allocation2 + $0x378] sm:$0xff] %v5234
    %5427 = vst [vmem:[#allocation2 + $0x380] sm:$0xff] %v5235
    %5428 = vst [vmem:[#allocation2 + $0x388] sm:$0xff] %v5236
    %5429 = vst [vmem:[#allocation2 + $0x390] sm:$0xff] %v5237
    %5430 = vst [vmem:[#allocation2 + $0x398] sm:$0xff] %v5238
    %5431 = vst [vmem:[#allocation2 + $0x3a0] sm:$0xff] %v5239
    %5432 = vst [vmem:[#allocation2 + $0x3a8] sm:$0xff] %v5240
    %5433 = vst [vmem:[#allocation2 + $0x3b0] sm:$0xff] %v5241
    %5434 = vst [vmem:[#allocation2 + $0x3b8] sm:$0xff] %v5242
    %5435 = vst [vmem:[#allocation2 + $0x3c0] sm:$0xff] %v5243
    %5436 = vst [vmem:[#allocation2 + $0x3c8] sm:$0xff] %v5244
    %5437 = vst [vmem:[#allocation2 + $0x3d0] sm:$0xff] %v5245
    %5438 = vst [vmem:[#allocation2 + $0x3d8] sm:$0xff] %v5246
    %5439 = vst [vmem:[#allocation2 + $0x3e0] sm:$0xff] %v5247
    %5440 = vst [vmem:[#allocation2 + $0x3e8] sm:$0xff] %v5248
    %5441 = vst [vmem:[#allocation2 + $0x3f0] sm:$0xff] %v5249
    %5442 = vst [vmem:[#allocation2 + $0x3f8] sm:$0xff] %v5250
    %5443 = vst [vmem:[#allocation2 + $0x400] sm:$0xff] %v5251
    %5444 = vst [vmem:[#allocation2 + $0x408] sm:$0xff] %v5252
    %5445 = vst [vmem:[#allocation2 + $0x410] sm:$0xff] %v5253
    %5446 = vst [vmem:[#allocation2 + $0x418] sm:$0xff] %v5254
    %5447 = vst [vmem:[#allocation2 + $0x420] sm:$0xff] %v5255
    %5448 = vst [vmem:[#allocation2 + $0x428] sm:$0xff] %v5256
    %5449 = vst [vmem:[#allocation2 + $0x430] sm:$0xff] %v5257
    %5450 = vst [vmem:[#allocation2 + $0x438] sm:$0xff] %v5258
    %5451 = vst [vmem:[#allocation2 + $0x440] sm:$0xff] %v5259
    %5452 = vst [vmem:[#allocation2 + $0x448] sm:$0xff] %v5260
    %5453 = vst [vmem:[#allocation2 + $0x450] sm:$0xff] %v5261
    %5454 = vst [vmem:[#allocation2 + $0x458] sm:$0xff] %v5262
    %5455 = vst [vmem:[#allocation2 + $0x460] sm:$0xff] %v5263
    %5456 = vst [vmem:[#allocation2 + $0x468] sm:$0xff] %v5264
    %5457 = vst [vmem:[#allocation2 + $0x470] sm:$0xff] %v5265
    %5458 = vst [vmem:[#allocation2 + $0x478] sm:$0xff] %v5266
    %5459 = vst [vmem:[#allocation2 + $0x480] sm:$0xff] %v5267
    %5460 = vst [vmem:[#allocation2 + $0x488] sm:$0xff] %v5268
    %5461 = vst [vmem:[#allocation2 + $0x490] sm:$0xff] %v5269
    %5462 = vst [vmem:[#allocation2 + $0x498] sm:$0xff] %v5270
    %5463 = vst [vmem:[#allocation2 + $0x4a0] sm:$0xff] %v5271
    %5464 = vst [vmem:[#allocation2 + $0x4a8] sm:$0xff] %v5272
    %5465 = vst [vmem:[#allocation2 + $0x4b0] sm:$0xff] %v5273
    %5466 = vst [vmem:[#allocation2 + $0x4b8] sm:$0xff] %v5274
    %5467 = vst [vmem:[#allocation2 + $0x4c0] sm:$0xff] %v5275
    %5468 = vst [vmem:[#allocation2 + $0x4c8] sm:$0xff] %v5276
    %5469 = vst [vmem:[#allocation2 + $0x4d0] sm:$0xff] %v5277
    %5470 = vst [vmem:[#allocation2 + $0x4d8] sm:$0xff] %v5278
    %5471 = vst [vmem:[#allocation2 + $0x4e0] sm:$0xff] %v5279
    %5472 = vst [vmem:[#allocation2 + $0x4e8] sm:$0xff] %v5280
    %5473 = vst [vmem:[#allocation2 + $0x4f0] sm:$0xff] %v5281
    %5474 = vst [vmem:[#allocation2 + $0x4f8] sm:$0xff] %v5282
    %5475 = vst [vmem:[#allocation2 + $0x500] sm:$0xff] %v5283
    %5476 = vst [vmem:[#allocation2 + $0x508] sm:$0xff] %v5284
    %5477 = vst [vmem:[#allocation2 + $0x510] sm:$0xff] %v5285
    %5478 = vst [vmem:[#allocation2 + $0x518] sm:$0xff] %v5286
    %5479 = vst [vmem:[#allocation2 + $0x520] sm:$0xff] %v5287
    %5480 = vst [vmem:[#allocation2 + $0x528] sm:$0xff] %v5288
    %5481 = vst [vmem:[#allocation2 + $0x530] sm:$0xff] %v5289
    %5482 = vst [vmem:[#allocation2 + $0x538] sm:$0xff] %v5290
    %5483 = vst [vmem:[#allocation2 + $0x540] sm:$0xff] %v5291
    %5484 = vst [vmem:[#allocation2 + $0x548] sm:$0xff] %v5292
    %5485 = vst [vmem:[#allocation2 + $0x550] sm:$0xff] %v5293
    %5486 = vst [vmem:[#allocation2 + $0x558] sm:$0xff] %v5294
    %5487 = vst [vmem:[#allocation2 + $0x560] sm:$0xff] %v5295
    %5488 = vst [vmem:[#allocation2 + $0x568] sm:$0xff] %v5296
    %5489 = vst [vmem:[#allocation2 + $0x570] sm:$0xff] %v5297
    %5490 = vst [vmem:[#allocation2 + $0x578] sm:$0xff] %v5298
    %5491 = vst [vmem:[#allocation2 + $0x580] sm:$0xff] %v5299
    %5492 = vst [vmem:[#allocation2 + $0x588] sm:$0xff] %v5300
    %5493 = vst [vmem:[#allocation2 + $0x590] sm:$0xff] %v5301
    %5494 = vst [vmem:[#allocation2 + $0x598] sm:$0xff] %v5302
    %5495 = vst [vmem:[#allocation2 + $0x5a0] sm:$0xff] %v5303
    %5496 = vst [vmem:[#allocation2 + $0x5a8] sm:$0xff] %v5304
    %5497 = vst [vmem:[#allocation2 + $0x5b0] sm:$0xff] %v5305
    %5498 = vst [vmem:[#allocation2 + $0x5b8] sm:$0xff] %v5306
    %5499 = vst [vmem:[#allocation2 + $0x5c0] sm:$0xff] %v5307
    %5500 = vst [vmem:[#allocation2 + $0x5c8] sm:$0xff] %v5308
    %5501 = vst [vmem:[#allocation2 + $0x5d0] sm:$0xff] %v5309
    %5502 = vst [vmem:[#allocation2 + $0x5d8] sm:$0xff] %v5310
    %5503 = vst [vmem:[#allocation2 + $0x5e0] sm:$0xff] %v5311
    %5504 = vst [vmem:[#allocation2 + $0x5e8] sm:$0xff] %v5312
    %5505 = vst [vmem:[#allocation2 + $0x5f0] sm:$0xff] %v5313
    %5506 = vst [vmem:[#allocation2 + $0x5f8] sm:$0xff] %v5314
    %v5507 = vld [vmem:[%s3] sm:$0xff]
    %v5508 = vld [vmem:[%s3 + $0x8] sm:$0xff]
    %v5509 = vld [vmem:[%s3 + $0x10] sm:$0xff]
    %v5510 = vld [vmem:[%s3 + $0x18] sm:$0xff]
    %v5511 = vld [vmem:[%s3 + $0x20] sm:$0xff]
    %v5512 = vld [vmem:[%s3 + $0x28] sm:$0xff]
    %v5513 = vld [vmem:[%s3 + $0x30] sm:$0xff]
    %v5514 = vld [vmem:[%s3 + $0x38] sm:$0xff]
    %v5515 = vld [vmem:[%s3 + $0x40] sm:$0xff]
    %v5516 = vld [vmem:[%s3 + $0x48] sm:$0xff]
    %v5517 = vld [vmem:[%s3 + $0x50] sm:$0xff]
    %v5518 = vld [vmem:[%s3 + $0x58] sm:$0xff]
    %v5519 = vld [vmem:[%s3 + $0x60] sm:$0xff]
    %v5520 = vld [vmem:[%s3 + $0x68] sm:$0xff]
    %v5521 = vld [vmem:[%s3 + $0x70] sm:$0xff]
    %v5522 = vld [vmem:[%s3 + $0x78] sm:$0xff]
    %v5523 = vld [vmem:[%s3 + $0x80] sm:$0xff]
    %v5524 = vld [vmem:[%s3 + $0x88] sm:$0xff]
    %v5525 = vld [vmem:[%s3 + $0x90] sm:$0xff]
    %v5526 = vld [vmem:[%s3 + $0x98] sm:$0xff]
    %v5527 = vld [vmem:[%s3 + $0xa0] sm:$0xff]
    %v5528 = vld [vmem:[%s3 + $0xa8] sm:$0xff]
    %v5529 = vld [vmem:[%s3 + $0xb0] sm:$0xff]
    %v5530 = vld [vmem:[%s3 + $0xb8] sm:$0xff]
    %v5531 = vld [vmem:[%s3 + $0xc0] sm:$0xff]
    %v5532 = vld [vmem:[%s3 + $0xc8] sm:$0xff]
    %v5533 = vld [vmem:[%s3 + $0xd0] sm:$0xff]
    %v5534 = vld [vmem:[%s3 + $0xd8] sm:$0xff]
    %v5535 = vld [vmem:[%s3 + $0xe0] sm:$0xff]
    %v5536 = vld [vmem:[%s3 + $0xe8] sm:$0xff]
    %v5537 = vld [vmem:[%s3 + $0xf0] sm:$0xff]
    %v5538 = vld [vmem:[%s3 + $0xf8] sm:$0xff]
    %v5539 = vld [vmem:[%s3 + $0x100] sm:$0xff]
    %v5540 = vld [vmem:[%s3 + $0x108] sm:$0xff]
    %v5541 = vld [vmem:[%s3 + $0x110] sm:$0xff]
    %v5542 = vld [vmem:[%s3 + $0x118] sm:$0xff]
    %v5543 = vld [vmem:[%s3 + $0x120] sm:$0xff]
    %v5544 = vld [vmem:[%s3 + $0x128] sm:$0xff]
    %v5545 = vld [vmem:[%s3 + $0x130] sm:$0xff]
    %v5546 = vld [vmem:[%s3 + $0x138] sm:$0xff]
    %v5547 = vld [vmem:[%s3 + $0x140] sm:$0xff]
    %v5548 = vld [vmem:[%s3 + $0x148] sm:$0xff]
    %v5549 = vld [vmem:[%s3 + $0x150] sm:$0xff]
    %v5550 = vld [vmem:[%s3 + $0x158] sm:$0xff]
    %v5551 = vld [vmem:[%s3 + $0x160] sm:$0xff]
    %v5552 = vld [vmem:[%s3 + $0x168] sm:$0xff]
    %v5553 = vld [vmem:[%s3 + $0x170] sm:$0xff]
    %v5554 = vld [vmem:[%s3 + $0x178] sm:$0xff]
    %v5555 = vld [vmem:[%s3 + $0x180] sm:$0xff]
    %v5556 = vld [vmem:[%s3 + $0x188] sm:$0xff]
    %v5557 = vld [vmem:[%s3 + $0x190] sm:$0xff]
    %v5558 = vld [vmem:[%s3 + $0x198] sm:$0xff]
    %v5559 = vld [vmem:[%s3 + $0x1a0] sm:$0xff]
    %v5560 = vld [vmem:[%s3 + $0x1a8] sm:$0xff]
    %v5561 = vld [vmem:[%s3 + $0x1b0] sm:$0xff]
    %v5562 = vld [vmem:[%s3 + $0x1b8] sm:$0xff]
    %v5563 = vld [vmem:[%s3 + $0x1c0] sm:$0xff]
    %v5564 = vld [vmem:[%s3 + $0x1c8] sm:$0xff]
    %v5565 = vld [vmem:[%s3 + $0x1d0] sm:$0xff]
    %v5566 = vld [vmem:[%s3 + $0x1d8] sm:$0xff]
    %v5567 = vld [vmem:[%s3 + $0x1e0] sm:$0xff]
    %v5568 = vld [vmem:[%s3 + $0x1e8] sm:$0xff]
    %v5569 = vld [vmem:[%s3 + $0x1f0] sm:$0xff]
    %v5570 = vld [vmem:[%s3 + $0x1f8] sm:$0xff]
    %v5571 = vld [vmem:[%s3 + $0x200] sm:$0xff]
    %v5572 = vld [vmem:[%s3 + $0x208] sm:$0xff]
    %v5573 = vld [vmem:[%s3 + $0x210] sm:$0xff]
    %v5574 = vld [vmem:[%s3 + $0x218] sm:$0xff]
    %v5575 = vld [vmem:[%s3 + $0x220] sm:$0xff]
    %v5576 = vld [vmem:[%s3 + $0x228] sm:$0xff]
    %v5577 = vld [vmem:[%s3 + $0x230] sm:$0xff]
    %v5578 = vld [vmem:[%s3 + $0x238] sm:$0xff]
    %v5579 = vld [vmem:[%s3 + $0x240] sm:$0xff]
    %v5580 = vld [vmem:[%s3 + $0x248] sm:$0xff]
    %v5581 = vld [vmem:[%s3 + $0x250] sm:$0xff]
    %v5582 = vld [vmem:[%s3 + $0x258] sm:$0xff]
    %v5583 = vld [vmem:[%s3 + $0x260] sm:$0xff]
    %v5584 = vld [vmem:[%s3 + $0x268] sm:$0xff]
    %v5585 = vld [vmem:[%s3 + $0x270] sm:$0xff]
    %v5586 = vld [vmem:[%s3 + $0x278] sm:$0xff]
    %v5587 = vld [vmem:[%s3 + $0x280] sm:$0xff]
    %v5588 = vld [vmem:[%s3 + $0x288] sm:$0xff]
    %v5589 = vld [vmem:[%s3 + $0x290] sm:$0xff]
    %v5590 = vld [vmem:[%s3 + $0x298] sm:$0xff]
    %v5591 = vld [vmem:[%s3 + $0x2a0] sm:$0xff]
    %v5592 = vld [vmem:[%s3 + $0x2a8] sm:$0xff]
    %v5593 = vld [vmem:[%s3 + $0x2b0] sm:$0xff]
    %v5594 = vld [vmem:[%s3 + $0x2b8] sm:$0xff]
    %v5595 = vld [vmem:[%s3 + $0x2c0] sm:$0xff]
    %v5596 = vld [vmem:[%s3 + $0x2c8] sm:$0xff]
    %v5597 = vld [vmem:[%s3 + $0x2d0] sm:$0xff]
    %v5598 = vld [vmem:[%s3 + $0x2d8] sm:$0xff]
    %v5599 = vld [vmem:[%s3 + $0x2e0] sm:$0xff]
    %v5600 = vld [vmem:[%s3 + $0x2e8] sm:$0xff]
    %v5601 = vld [vmem:[%s3 + $0x2f0] sm:$0xff]
    %v5602 = vld [vmem:[%s3 + $0x2f8] sm:$0xff]
    %v5603 = vld [vmem:[%s3 + $0x300] sm:$0xff]
    %v5604 = vld [vmem:[%s3 + $0x308] sm:$0xff]
    %v5605 = vld [vmem:[%s3 + $0x310] sm:$0xff]
    %v5606 = vld [vmem:[%s3 + $0x318] sm:$0xff]
    %v5607 = vld [vmem:[%s3 + $0x320] sm:$0xff]
    %v5608 = vld [vmem:[%s3 + $0x328] sm:$0xff]
    %v5609 = vld [vmem:[%s3 + $0x330] sm:$0xff]
    %v5610 = vld [vmem:[%s3 + $0x338] sm:$0xff]
    %v5611 = vld [vmem:[%s4] sm:$0x3]
    %v5613 = vlaneseq
    %v5614 = vshrl.u32 %v5613, 7
    %v5615 = vsub.s32 0, %v5614
    %v5616 = vrot.slane %v5611, %v5615
    %v5617 = vlaneseq
    %v5618 = vshrl.u32 %v5617, 7
    %v5619 = vsub.s32 1, %v5618
    %v5620 = vrot.slane %v5611, %v5619
    %v5727 = vunpack.c.l.b16 %v5507
    %v5728 = vunpack.c.h.b16 %v5507
    %v5729 = vunpack.c.l.b16 %v5508
    %v5730 = vunpack.c.h.b16 %v5508
    %v5731 = vunpack.c.l.b16 %v5509
    %v5732 = vunpack.c.h.b16 %v5509
    %v5733 = vunpack.c.l.b16 %v5510
    %v5734 = vunpack.c.h.b16 %v5510
    %v5735 = vunpack.c.l.b16 %v5511
    %v5736 = vunpack.c.h.b16 %v5511
    %v5737 = vunpack.c.l.b16 %v5512
    %v5738 = vunpack.c.h.b16 %v5512
    %v5739 = vunpack.c.l.b16 %v5513
    %v5740 = vunpack.c.h.b16 %v5513
    %v5741 = vunpack.c.l.b16 %v5514
    %v5742 = vunpack.c.h.b16 %v5514
    %v5743 = vunpack.c.l.b16 %v5515
    %v5744 = vunpack.c.h.b16 %v5515
    %v5745 = vunpack.c.l.b16 %v5516
    %v5746 = vunpack.c.h.b16 %v5516
    %v5747 = vunpack.c.l.b16 %v5517
    %v5748 = vunpack.c.h.b16 %v5517
    %v5749 = vunpack.c.l.b16 %v5518
    %v5750 = vunpack.c.h.b16 %v5518
    %v5751 = vunpack.c.l.b16 %v5519
    %v5752 = vunpack.c.h.b16 %v5519
    %v5753 = vunpack.c.l.b16 %v5520
    %v5754 = vunpack.c.h.b16 %v5520
    %v5755 = vunpack.c.l.b16 %v5521
    %v5756 = vunpack.c.h.b16 %v5521
    %v5757 = vunpack.c.l.b16 %v5522
    %v5758 = vunpack.c.h.b16 %v5522
    %v5759 = vunpack.c.l.b16 %v5523
    %v5760 = vunpack.c.h.b16 %v5523
    %v5761 = vunpack.c.l.b16 %v5524
    %v5762 = vunpack.c.h.b16 %v5524
    %v5763 = vunpack.c.l.b16 %v5525
    %v5764 = vunpack.c.h.b16 %v5525
    %v5765 = vunpack.c.l.b16 %v5526
    %v5766 = vunpack.c.h.b16 %v5526
    %v5767 = vunpack.c.l.b16 %v5527
    %v5768 = vunpack.c.h.b16 %v5527
    %v5769 = vunpack.c.l.b16 %v5528
    %v5770 = vunpack.c.h.b16 %v5528
    %v5771 = vunpack.c.l.b16 %v5529
    %v5772 = vunpack.c.h.b16 %v5529
    %v5773 = vunpack.c.l.b16 %v5530
    %v5774 = vunpack.c.h.b16 %v5530
    %v5775 = vunpack.c.l.b16 %v5531
    %v5776 = vunpack.c.h.b16 %v5531
    %v5777 = vunpack.c.l.b16 %v5532
    %v5778 = vunpack.c.h.b16 %v5532
    %v5779 = vunpack.c.l.b16 %v5533
    %v5780 = vunpack.c.h.b16 %v5533
    %v5781 = vunpack.c.l.b16 %v5534
    %v5782 = vunpack.c.h.b16 %v5534
    %v5783 = vunpack.c.l.b16 %v5535
    %v5784 = vunpack.c.h.b16 %v5535
    %v5785 = vunpack.c.l.b16 %v5536
    %v5786 = vunpack.c.h.b16 %v5536
    %v5787 = vunpack.c.l.b16 %v5537
    %v5788 = vunpack.c.h.b16 %v5537
    %v5789 = vunpack.c.l.b16 %v5538
    %v5790 = vunpack.c.h.b16 %v5538
    %v5791 = vunpack.c.l.b16 %v5539
    %v5792 = vunpack.c.h.b16 %v5539
    %v5793 = vunpack.c.l.b16 %v5540
    %v5794 = vunpack.c.h.b16 %v5540
    %v5795 = vunpack.c.l.b16 %v5541
    %v5796 = vunpack.c.h.b16 %v5541
    %v5797 = vunpack.c.l.b16 %v5542
    %v5798 = vunpack.c.h.b16 %v5542
    %v5799 = vunpack.c.l.b16 %v5543
    %v5800 = vunpack.c.h.b16 %v5543
    %v5801 = vunpack.c.l.b16 %v5544
    %v5802 = vunpack.c.h.b16 %v5544
    %v5803 = vunpack.c.l.b16 %v5545
    %v5804 = vunpack.c.h.b16 %v5545
    %v5805 = vunpack.c.l.b16 %v5546
    %v5806 = vunpack.c.h.b16 %v5546
    %v5807 = vunpack.c.l.b16 %v5547
    %v5808 = vunpack.c.h.b16 %v5547
    %v5809 = vunpack.c.l.b16 %v5548
    %v5810 = vunpack.c.h.b16 %v5548
    %v5811 = vunpack.c.l.b16 %v5549
    %v5812 = vunpack.c.h.b16 %v5549
    %v5813 = vunpack.c.l.b16 %v5550
    %v5814 = vunpack.c.h.b16 %v5550
    %v5815 = vunpack.c.l.b16 %v5551
    %v5816 = vunpack.c.h.b16 %v5551
    %v5817 = vunpack.c.l.b16 %v5552
    %v5818 = vunpack.c.h.b16 %v5552
    %v5819 = vunpack.c.l.b16 %v5553
    %v5820 = vunpack.c.h.b16 %v5553
    %v5821 = vunpack.c.l.b16 %v5554
    %v5822 = vunpack.c.h.b16 %v5554
    %v5823 = vunpack.c.l.b16 %v5555
    %v5824 = vunpack.c.h.b16 %v5555
    %v5825 = vunpack.c.l.b16 %v5556
    %v5826 = vunpack.c.h.b16 %v5556
    %v5827 = vunpack.c.l.b16 %v5557
    %v5828 = vunpack.c.h.b16 %v5557
    %v5829 = vunpack.c.l.b16 %v5558
    %v5830 = vunpack.c.h.b16 %v5558
    %v5831 = vunpack.c.l.b16 %v5559
    %v5832 = vunpack.c.h.b16 %v5559
    %v5833 = vunpack.c.l.b16 %v5560
    %v5834 = vunpack.c.h.b16 %v5560
    %v5835 = vunpack.c.l.b16 %v5561
    %v5836 = vunpack.c.h.b16 %v5561
    %v5837 = vunpack.c.l.b16 %v5562
    %v5838 = vunpack.c.h.b16 %v5562
    %v5839 = vunpack.c.l.b16 %v5563
    %v5840 = vunpack.c.h.b16 %v5563
    %v5841 = vunpack.c.l.b16 %v5564
    %v5842 = vunpack.c.h.b16 %v5564
    %v5843 = vunpack.c.l.b16 %v5565
    %v5844 = vunpack.c.h.b16 %v5565
    %v5845 = vunpack.c.l.b16 %v5566
    %v5846 = vunpack.c.h.b16 %v5566
    %v5847 = vunpack.c.l.b16 %v5567
    %v5848 = vunpack.c.h.b16 %v5567
    %v5849 = vunpack.c.l.b16 %v5568
    %v5850 = vunpack.c.h.b16 %v5568
    %v5851 = vunpack.c.l.b16 %v5569
    %v5852 = vunpack.c.h.b16 %v5569
    %v5853 = vunpack.c.l.b16 %v5570
    %v5854 = vunpack.c.h.b16 %v5570
    %v5855 = vunpack.c.l.b16 %v5571
    %v5856 = vunpack.c.h.b16 %v5571
    %v5857 = vunpack.c.l.b16 %v5572
    %v5858 = vunpack.c.h.b16 %v5572
    %v5859 = vunpack.c.l.b16 %v5573
    %v5860 = vunpack.c.h.b16 %v5573
    %v5861 = vunpack.c.l.b16 %v5574
    %v5862 = vunpack.c.h.b16 %v5574
    %v5863 = vunpack.c.l.b16 %v5575
    %v5864 = vunpack.c.h.b16 %v5575
    %v5865 = vunpack.c.l.b16 %v5576
    %v5866 = vunpack.c.h.b16 %v5576
    %v5867 = vunpack.c.l.b16 %v5577
    %v5868 = vunpack.c.h.b16 %v5577
    %v5869 = vunpack.c.l.b16 %v5578
    %v5870 = vunpack.c.h.b16 %v5578
    %v5871 = vunpack.c.l.b16 %v5579
    %v5872 = vunpack.c.h.b16 %v5579
    %v5873 = vunpack.c.l.b16 %v5580
    %v5874 = vunpack.c.h.b16 %v5580
    %v5875 = vunpack.c.l.b16 %v5581
    %v5876 = vunpack.c.h.b16 %v5581
    %v5877 = vunpack.c.l.b16 %v5582
    %v5878 = vunpack.c.h.b16 %v5582
    %v5879 = vunpack.c.l.b16 %v5583
    %v5880 = vunpack.c.h.b16 %v5583
    %v5881 = vunpack.c.l.b16 %v5584
    %v5882 = vunpack.c.h.b16 %v5584
    %v5883 = vunpack.c.l.b16 %v5585
    %v5884 = vunpack.c.h.b16 %v5585
    %v5885 = vunpack.c.l.b16 %v5586
    %v5886 = vunpack.c.h.b16 %v5586
    %v5887 = vunpack.c.l.b16 %v5587
    %v5888 = vunpack.c.h.b16 %v5587
    %v5889 = vunpack.c.l.b16 %v5588
    %v5890 = vunpack.c.h.b16 %v5588
    %v5891 = vunpack.c.l.b16 %v5589
    %v5892 = vunpack.c.h.b16 %v5589
    %v5893 = vunpack.c.l.b16 %v5590
    %v5894 = vunpack.c.h.b16 %v5590
    %v5895 = vunpack.c.l.b16 %v5591
    %v5896 = vunpack.c.h.b16 %v5591
    %v5897 = vunpack.c.l.b16 %v5592
    %v5898 = vunpack.c.h.b16 %v5592
    %v5899 = vunpack.c.l.b16 %v5593
    %v5900 = vunpack.c.h.b16 %v5593
    %v5901 = vunpack.c.l.b16 %v5594
    %v5902 = vunpack.c.h.b16 %v5594
    %v5903 = vunpack.c.l.b16 %v5595
    %v5904 = vunpack.c.h.b16 %v5595
    %v5905 = vunpack.c.l.b16 %v5596
    %v5906 = vunpack.c.h.b16 %v5596
    %v5907 = vunpack.c.l.b16 %v5597
    %v5908 = vunpack.c.h.b16 %v5597
    %v5909 = vunpack.c.l.b16 %v5598
    %v5910 = vunpack.c.h.b16 %v5598
    %v5911 = vunpack.c.l.b16 %v5599
    %v5912 = vunpack.c.h.b16 %v5599
    %v5913 = vunpack.c.l.b16 %v5600
    %v5914 = vunpack.c.h.b16 %v5600
    %v5915 = vunpack.c.l.b16 %v5601
    %v5916 = vunpack.c.h.b16 %v5601
    %v5917 = vunpack.c.l.b16 %v5602
    %v5918 = vunpack.c.h.b16 %v5602
    %v5919 = vunpack.c.l.b16 %v5603
    %v5920 = vunpack.c.h.b16 %v5603
    %v5921 = vunpack.c.l.b16 %v5604
    %v5922 = vunpack.c.h.b16 %v5604
    %v5923 = vunpack.c.l.b16 %v5605
    %v5924 = vunpack.c.h.b16 %v5605
    %v5925 = vunpack.c.l.b16 %v5606
    %v5926 = vunpack.c.h.b16 %v5606
    %v5927 = vunpack.c.l.b16 %v5607
    %v5928 = vunpack.c.h.b16 %v5607
    %v5929 = vunpack.c.l.b16 %v5608
    %v5930 = vunpack.c.h.b16 %v5608
    %v5931 = vunpack.c.l.b16 %v5609
    %v5932 = vunpack.c.h.b16 %v5609
    %v5933 = vunpack.c.l.b16 %v5610
    %v5934 = vunpack.c.h.b16 %v5610
    %v5935 = vpack.c.b16 %v5729, %v5727
    %v5936 = vpack.c.b16 %v5730, %v5728
    %v5937 = vpack.c.b16 %v5733, %v5731
    %v5938 = vpack.c.b16 %v5734, %v5732
    %v5939 = vpack.c.b16 %v5737, %v5735
    %v5940 = vpack.c.b16 %v5738, %v5736
    %v5941 = vpack.c.b16 %v5741, %v5739
    %v5942 = vpack.c.b16 %v5742, %v5740
    %v5943 = vpack.c.b16 %v5745, %v5743
    %v5944 = vpack.c.b16 %v5746, %v5744
    %v5945 = vpack.c.b16 %v5749, %v5747
    %v5946 = vpack.c.b16 %v5750, %v5748
    %v5947 = vpack.c.b16 %v5753, %v5751
    %v5948 = vpack.c.b16 %v5754, %v5752
    %v5949 = vpack.c.b16 %v5757, %v5755
    %v5950 = vpack.c.b16 %v5758, %v5756
    %v5951 = vpack.c.b16 %v5761, %v5759
    %v5952 = vpack.c.b16 %v5762, %v5760
    %v5953 = vpack.c.b16 %v5765, %v5763
    %v5954 = vpack.c.b16 %v5766, %v5764
    %v5955 = vpack.c.b16 %v5769, %v5767
    %v5956 = vpack.c.b16 %v5770, %v5768
    %v5957 = vpack.c.b16 %v5773, %v5771
    %v5958 = vpack.c.b16 %v5774, %v5772
    %v5959 = vpack.c.b16 %v5777, %v5775
    %v5960 = vpack.c.b16 %v5778, %v5776
    %v5961 = vpack.c.b16 %v5781, %v5779
    %v5962 = vpack.c.b16 %v5782, %v5780
    %v5963 = vpack.c.b16 %v5785, %v5783
    %v5964 = vpack.c.b16 %v5786, %v5784
    %v5965 = vpack.c.b16 %v5789, %v5787
    %v5966 = vpack.c.b16 %v5790, %v5788
    %v5967 = vpack.c.b16 %v5793, %v5791
    %v5968 = vpack.c.b16 %v5794, %v5792
    %v5969 = vpack.c.b16 %v5797, %v5795
    %v5970 = vpack.c.b16 %v5798, %v5796
    %v5971 = vpack.c.b16 %v5801, %v5799
    %v5972 = vpack.c.b16 %v5802, %v5800
    %v5973 = vpack.c.b16 %v5805, %v5803
    %v5974 = vpack.c.b16 %v5806, %v5804
    %v5975 = vpack.c.b16 %v5809, %v5807
    %v5976 = vpack.c.b16 %v5810, %v5808
    %v5977 = vpack.c.b16 %v5813, %v5811
    %v5978 = vpack.c.b16 %v5814, %v5812
    %v5979 = vpack.c.b16 %v5817, %v5815
    %v5980 = vpack.c.b16 %v5818, %v5816
    %v5981 = vpack.c.b16 %v5821, %v5819
    %v5982 = vpack.c.b16 %v5822, %v5820
    %v5983 = vpack.c.b16 %v5825, %v5823
    %v5984 = vpack.c.b16 %v5826, %v5824
    %v5985 = vpack.c.b16 %v5829, %v5827
    %v5986 = vpack.c.b16 %v5830, %v5828
    %v5987 = vpack.c.b16 %v5833, %v5831
    %v5988 = vpack.c.b16 %v5834, %v5832
    %v5989 = vpack.c.b16 %v5837, %v5835
    %v5990 = vpack.c.b16 %v5838, %v5836
    %v5991 = vpack.c.b16 %v5841, %v5839
    %v5992 = vpack.c.b16 %v5842, %v5840
    %v5993 = vpack.c.b16 %v5845, %v5843
    %v5994 = vpack.c.b16 %v5846, %v5844
    %v5995 = vpack.c.b16 %v5849, %v5847
    %v5996 = vpack.c.b16 %v5850, %v5848
    %v5997 = vpack.c.b16 %v5853, %v5851
    %v5998 = vpack.c.b16 %v5854, %v5852
    %v5999 = vpack.c.b16 %v5857, %v5855
    %v6000 = vpack.c.b16 %v5858, %v5856
    %v6001 = vpack.c.b16 %v5861, %v5859
    %v6002 = vpack.c.b16 %v5862, %v5860
    %v6003 = vpack.c.b16 %v5865, %v5863
    %v6004 = vpack.c.b16 %v5866, %v5864
    %v6005 = vpack.c.b16 %v5869, %v5867
    %v6006 = vpack.c.b16 %v5870, %v5868
    %v6007 = vpack.c.b16 %v5873, %v5871
    %v6008 = vpack.c.b16 %v5874, %v5872
    %v6009 = vpack.c.b16 %v5877, %v5875
    %v6010 = vpack.c.b16 %v5878, %v5876
    %v6011 = vpack.c.b16 %v5881, %v5879
    %v6012 = vpack.c.b16 %v5882, %v5880
    %v6013 = vpack.c.b16 %v5885, %v5883
    %v6014 = vpack.c.b16 %v5886, %v5884
    %v6015 = vpack.c.b16 %v5889, %v5887
    %v6016 = vpack.c.b16 %v5890, %v5888
    %v6017 = vpack.c.b16 %v5893, %v5891
    %v6018 = vpack.c.b16 %v5894, %v5892
    %v6019 = vpack.c.b16 %v5897, %v5895
    %v6020 = vpack.c.b16 %v5898, %v5896
    %v6021 = vpack.c.b16 %v5901, %v5899
    %v6022 = vpack.c.b16 %v5902, %v5900
    %v6023 = vpack.c.b16 %v5905, %v5903
    %v6024 = vpack.c.b16 %v5906, %v5904
    %v6025 = vpack.c.b16 %v5909, %v5907
    %v6026 = vpack.c.b16 %v5910, %v5908
    %v6027 = vpack.c.b16 %v5913, %v5911
    %v6028 = vpack.c.b16 %v5914, %v5912
    %v6029 = vpack.c.b16 %v5917, %v5915
    %v6030 = vpack.c.b16 %v5918, %v5916
    %v6031 = vpack.c.b16 %v5921, %v5919
    %v6032 = vpack.c.b16 %v5922, %v5920
    %v6033 = vpack.c.b16 %v5925, %v5923
    %v6034 = vpack.c.b16 %v5926, %v5924
    %v6035 = vpack.c.b16 %v5929, %v5927
    %v6036 = vpack.c.b16 %v5930, %v5928
    %v6037 = vpack.c.b16 %v5933, %v5931
    %v6038 = vpack.c.b16 %v5934, %v5932
    %6143 = vmatprep.subr.bf16.mxu0 %v5950
    %6144 = vmatpush1.bf16.msra.mxu0 %v5949
    %6145 = vmatprep.subr.bf16.mxu0 %v5948
    %6146 = vmatpush1.bf16.msra.mxu0 %v5947
    %6147 = vmatprep.subr.bf16.mxu0 %v5946
    %6148 = vmatpush1.bf16.msra.mxu0 %v5945
    %6149 = vmatprep.subr.bf16.mxu0 %v5944
    %6150 = vmatpush1.bf16.msra.mxu0 %v5943
    %6151 = vmatprep.subr.bf16.mxu0 %v5942
    %6152 = vmatpush1.bf16.msra.mxu0 %v5941
    %6153 = vmatprep.subr.bf16.mxu0 %v5940
    %6154 = vmatpush1.bf16.msra.mxu0 %v5939
    %6155 = vmatprep.subr.bf16.mxu0 %v5938
    %6156 = vmatpush1.bf16.msra.mxu0 %v5937
    %6157 = vmatprep.subr.bf16.mxu0 %v5936
    %6158 = vmatpush1.bf16.msra.mxu0 %v5935
    %6159 = vmatprep.subr.bf16.mxu0 %v5966
    %6160 = vmatpush2.bf16.msra.mxu0 %v5965
    %6161 = vmatprep.subr.bf16.mxu0 %v5964
    %6162 = vmatpush2.bf16.msra.mxu0 %v5963
    %6163 = vmatprep.subr.bf16.mxu0 %v5962
    %6164 = vmatpush2.bf16.msra.mxu0 %v5961
    %6165 = vmatprep.subr.bf16.mxu0 %v5960
    %6166 = vmatpush2.bf16.msra.mxu0 %v5959
    %6167 = vmatprep.subr.bf16.mxu0 %v5958
    %6168 = vmatpush2.bf16.msra.mxu0 %v5957
    %6169 = vmatprep.subr.bf16.mxu0 %v5956
    %6170 = vmatpush2.bf16.msra.mxu0 %v5955
    %6171 = vmatprep.subr.bf16.mxu0 %v5954
    %6172 = vmatpush2.bf16.msra.mxu0 %v5953
    %6173 = vmatprep.subr.bf16.mxu0 %v5952
    %6174 = vmatpush2.bf16.msra.mxu0 %v5951
    %6175 = vmatprep.mubr.bf16.mxu0 %v1211
    %6176 = vmatmul.mubr.bf16.gmra.mxu0 %v1210
    %v6177 = vpop.f32.mrf.mxu0
    %v6178 = vadd.f32 %v5616, %v6177
    %v6179 = vpop.f32.mrf.mxu0
    %v6180 = vadd.f32 %v5620, %v6179
    %v6181 = vpop.f32.mrf.mxu0
    %v6182 = vadd.f32 %v5616, %v6181
    %v6183 = vpop.f32.mrf.mxu0
    %v6184 = vadd.f32 %v5620, %v6183
    %6185 = vmatprep.mubr.bf16.mxu0 %v1218
    %6186 = vmatmul.mubr.bf16.gmra.mxu0 %v1217
    %v6187 = vpop.f32.mrf.mxu0
    %v6188 = vadd.f32 %v5616, %v6187
    %v6189 = vpop.f32.mrf.mxu0
    %v6190 = vadd.f32 %v5620, %v6189
    %v6191 = vpop.f32.mrf.mxu0
    %v6192 = vadd.f32 %v5616, %v6191
    %v6193 = vpop.f32.mrf.mxu0
    %v6194 = vadd.f32 %v5620, %v6193
    %6195 = vmatprep.mubr.bf16.mxu0 %v1225
    %6196 = vmatmul.mubr.bf16.gmra.mxu0 %v1224
    %v6197 = vpop.f32.mrf.mxu0
    %v6198 = vadd.f32 %v5616, %v6197
    %v6199 = vpop.f32.mrf.mxu0
    %v6200 = vadd.f32 %v5620, %v6199
    %v6201 = vpop.f32.mrf.mxu0
    %v6202 = vadd.f32 %v5616, %v6201
    %v6203 = vpop.f32.mrf.mxu0
    %v6204 = vadd.f32 %v5620, %v6203
    %6205 = vmatprep.mubr.bf16.mxu0 %v1232
    %6206 = vmatmul.mubr.bf16.gmra.mxu0 %v1231
    %v6207 = vpop.f32.mrf.mxu0
    %v6208 = vadd.f32 %v5616, %v6207
    %v6209 = vpop.f32.mrf.mxu0
    %v6210 = vadd.f32 %v5620, %v6209
    %v6211 = vpop.f32.mrf.mxu0
    %v6212 = vadd.f32 %v5616, %v6211
    %v6213 = vpop.f32.mrf.mxu0
    %v6214 = vadd.f32 %v5620, %v6213
    %6215 = vmatprep.mubr.bf16.mxu0 %v1239
    %6216 = vmatmul.mubr.bf16.gmra.mxu0 %v1238
    %v6217 = vpop.f32.mrf.mxu0
    %v6218 = vadd.f32 %v5616, %v6217
    %v6219 = vpop.f32.mrf.mxu0
    %v6220 = vadd.f32 %v5620, %v6219
    %v6221 = vpop.f32.mrf.mxu0
    %v6222 = vadd.f32 %v5616, %v6221
    %v6223 = vpop.f32.mrf.mxu0
    %v6224 = vadd.f32 %v5620, %v6223
    %6225 = vmatprep.mubr.bf16.mxu0 %v1246
    %6226 = vmatmul.mubr.bf16.gmra.mxu0 %v1245
    %v6227 = vpop.f32.mrf.mxu0
    %v6228 = vadd.f32 %v5616, %v6227
    %v6229 = vpop.f32.mrf.mxu0
    %v6230 = vadd.f32 %v5620, %v6229
    %v6231 = vpop.f32.mrf.mxu0
    %v6232 = vadd.f32 %v5616, %v6231
    %v6233 = vpop.f32.mrf.mxu0
    %v6234 = vadd.f32 %v5620, %v6233
    %6235 = vmatprep.mubr.bf16.mxu0 %v1253
    %6236 = vmatmul.mubr.bf16.gmra.mxu0 %v1252
    %v6237 = vpop.f32.mrf.mxu0
    %v6238 = vadd.f32 %v5616, %v6237
    %v6239 = vpop.f32.mrf.mxu0
    %v6240 = vadd.f32 %v5620, %v6239
    %v6241 = vpop.f32.mrf.mxu0
    %v6242 = vadd.f32 %v5616, %v6241
    %v6243 = vpop.f32.mrf.mxu0
    %v6244 = vadd.f32 %v5620, %v6243
    %6245 = vmatprep.mubr.bf16.mxu0 %v1260
    %6246 = vmatmul.mubr.bf16.gmra.mxu0 %v1259
    %v6247 = vpop.f32.mrf.mxu0
    %v6248 = vadd.f32 %v5616, %v6247
    %v6249 = vpop.f32.mrf.mxu0
    %v6250 = vadd.f32 %v5620, %v6249
    %v6251 = vpop.f32.mrf.mxu0
    %v6252 = vadd.f32 %v5616, %v6251
    %v6253 = vpop.f32.mrf.mxu0
    %v6254 = vadd.f32 %v5620, %v6253
    %6255 = vmatprep.mubr.bf16.mxu0 %v1267
    %6256 = vmatmul.mubr.bf16.gmra.mxu0 %v1266
    %v6257 = vpop.f32.mrf.mxu0
    %v6258 = vadd.f32 %v5616, %v6257
    %v6259 = vpop.f32.mrf.mxu0
    %v6260 = vadd.f32 %v5620, %v6259
    %v6261 = vpop.f32.mrf.mxu0
    %v6262 = vadd.f32 %v5616, %v6261
    %v6263 = vpop.f32.mrf.mxu0
    %v6264 = vadd.f32 %v5620, %v6263
    %6265 = vmatprep.mubr.bf16.mxu0 %v1274
    %6266 = vmatmul.mubr.bf16.gmra.mxu0 %v1273
    %v6267 = vpop.f32.mrf.mxu0
    %v6268 = vadd.f32 %v5616, %v6267
    %v6269 = vpop.f32.mrf.mxu0
    %v6270 = vadd.f32 %v5620, %v6269
    %v6271 = vpop.f32.mrf.mxu0
    %v6272 = vadd.f32 %v5616, %v6271
    %v6273 = vpop.f32.mrf.mxu0
    %v6274 = vadd.f32 %v5620, %v6273
    %6275 = vmatprep.mubr.bf16.mxu0 %v1281
    %6276 = vmatmul.mubr.bf16.gmra.mxu0 %v1280
    %v6277 = vpop.f32.mrf.mxu0
    %v6278 = vadd.f32 %v5616, %v6277
    %v6279 = vpop.f32.mrf.mxu0
    %v6280 = vadd.f32 %v5620, %v6279
    %v6281 = vpop.f32.mrf.mxu0
    %v6282 = vadd.f32 %v5616, %v6281
    %v6283 = vpop.f32.mrf.mxu0
    %v6284 = vadd.f32 %v5620, %v6283
    %6285 = vmatprep.mubr.bf16.mxu0 %v1288
    %6286 = vmatmul.mubr.bf16.gmra.mxu0 %v1287
    %v6287 = vpop.f32.mrf.mxu0
    %v6288 = vadd.f32 %v5616, %v6287
    %v6289 = vpop.f32.mrf.mxu0
    %v6290 = vadd.f32 %v5620, %v6289
    %v6291 = vpop.f32.mrf.mxu0
    %v6292 = vadd.f32 %v5616, %v6291
    %v6293 = vpop.f32.mrf.mxu0
    %v6294 = vadd.f32 %v5620, %v6293
    %6295 = vmatprep.mubr.bf16.mxu0 %v1295
    %6296 = vmatmul.mubr.bf16.gmra.mxu0 %v1294
    %v6297 = vpop.f32.mrf.mxu0
    %v6298 = vadd.f32 %v5616, %v6297
    %v6299 = vpop.f32.mrf.mxu0
    %v6300 = vadd.f32 %v5620, %v6299
    %v6301 = vpop.f32.mrf.mxu0
    %v6302 = vadd.f32 %v5616, %v6301
    %v6303 = vpop.f32.mrf.mxu0
    %v6304 = vadd.f32 %v5620, %v6303
    %6305 = vmatprep.mubr.bf16.mxu0 %v1302
    %6306 = vmatmul.mubr.bf16.gmra.mxu0 %v1301
    %v6307 = vpop.f32.mrf.mxu0
    %v6308 = vadd.f32 %v5616, %v6307
    %v6309 = vpop.f32.mrf.mxu0
    %v6310 = vadd.f32 %v5620, %v6309
    %v6311 = vpop.f32.mrf.mxu0
    %v6312 = vadd.f32 %v5616, %v6311
    %v6313 = vpop.f32.mrf.mxu0
    %v6314 = vadd.f32 %v5620, %v6313
    %6315 = vmatprep.mubr.bf16.mxu0 %v1309
    %6316 = vmatmul.mubr.bf16.gmra.mxu0 %v1308
    %v6317 = vpop.f32.mrf.mxu0
    %v6318 = vadd.f32 %v5616, %v6317
    %v6319 = vpop.f32.mrf.mxu0
    %v6320 = vadd.f32 %v5620, %v6319
    %v6321 = vpop.f32.mrf.mxu0
    %v6322 = vadd.f32 %v5616, %v6321
    %v6323 = vpop.f32.mrf.mxu0
    %v6324 = vadd.f32 %v5620, %v6323
    %6325 = vmatprep.mubr.bf16.mxu0 %v1316
    %6326 = vmatmul.mubr.bf16.gmra.mxu0 %v1315
    %v6327 = vpop.f32.mrf.mxu0
    %v6328 = vadd.f32 %v5616, %v6327
    %v6329 = vpop.f32.mrf.mxu0
    %v6330 = vadd.f32 %v5620, %v6329
    %v6331 = vpop.f32.mrf.mxu0
    %v6332 = vadd.f32 %v5616, %v6331
    %v6333 = vpop.f32.mrf.mxu0
    %v6334 = vadd.f32 %v5620, %v6333
    %6335 = vmatprep.mubr.bf16.mxu0 %v1323
    %6336 = vmatmul.mubr.bf16.gmra.mxu0 %v1322
    %v6337 = vpop.f32.mrf.mxu0
    %v6338 = vadd.f32 %v5616, %v6337
    %v6339 = vpop.f32.mrf.mxu0
    %v6340 = vadd.f32 %v5620, %v6339
    %v6341 = vpop.f32.mrf.mxu0
    %v6342 = vadd.f32 %v5616, %v6341
    %v6343 = vpop.f32.mrf.mxu0
    %v6344 = vadd.f32 %v5620, %v6343
    %6345 = vmatprep.mubr.bf16.mxu0 %v1330
    %6346 = vmatmul.mubr.bf16.gmra.mxu0 %v1329
    %v6347 = vpop.f32.mrf.mxu0
    %v6348 = vadd.f32 %v5616, %v6347
    %v6349 = vpop.f32.mrf.mxu0
    %v6350 = vadd.f32 %v5620, %v6349
    %v6351 = vpop.f32.mrf.mxu0
    %v6352 = vadd.f32 %v5616, %v6351
    %v6353 = vpop.f32.mrf.mxu0
    %v6354 = vadd.f32 %v5620, %v6353
    %6355 = vmatprep.mubr.bf16.mxu0 %v1337
    %6356 = vmatmul.mubr.bf16.gmra.mxu0 %v1336
    %v6357 = vpop.f32.mrf.mxu0
    %v6358 = vadd.f32 %v5616, %v6357
    %v6359 = vpop.f32.mrf.mxu0
    %v6360 = vadd.f32 %v5620, %v6359
    %v6361 = vpop.f32.mrf.mxu0
    %v6362 = vadd.f32 %v5616, %v6361
    %v6363 = vpop.f32.mrf.mxu0
    %v6364 = vadd.f32 %v5620, %v6363
    %6365 = vmatprep.mubr.bf16.mxu0 %v1344
    %6366 = vmatmul.mubr.bf16.gmra.mxu0 %v1343
    %v6367 = vpop.f32.mrf.mxu0
    %v6368 = vadd.f32 %v5616, %v6367
    %v6369 = vpop.f32.mrf.mxu0
    %v6370 = vadd.f32 %v5620, %v6369
    %v6371 = vpop.f32.mrf.mxu0
    %v6372 = vadd.f32 %v5616, %v6371
    %v6373 = vpop.f32.mrf.mxu0
    %v6374 = vadd.f32 %v5620, %v6373
    %6375 = vmatprep.mubr.bf16.mxu0 %v1351
    %6376 = vmatmul.mubr.bf16.gmra.mxu0 %v1350
    %v6377 = vpop.f32.mrf.mxu0
    %v6378 = vadd.f32 %v5616, %v6377
    %v6379 = vpop.f32.mrf.mxu0
    %v6380 = vadd.f32 %v5620, %v6379
    %v6381 = vpop.f32.mrf.mxu0
    %v6382 = vadd.f32 %v5616, %v6381
    %v6383 = vpop.f32.mrf.mxu0
    %v6384 = vadd.f32 %v5620, %v6383
    %6385 = vmatprep.mubr.bf16.mxu0 %v1358
    %6386 = vmatmul.mubr.bf16.gmra.mxu0 %v1357
    %v6387 = vpop.f32.mrf.mxu0
    %v6388 = vadd.f32 %v5616, %v6387
    %v6389 = vpop.f32.mrf.mxu0
    %v6390 = vadd.f32 %v5620, %v6389
    %v6391 = vpop.f32.mrf.mxu0
    %v6392 = vadd.f32 %v5616, %v6391
    %v6393 = vpop.f32.mrf.mxu0
    %v6394 = vadd.f32 %v5620, %v6393
    %6395 = vmatprep.mubr.bf16.mxu0 %v1365
    %6396 = vmatmul.mubr.bf16.gmra.mxu0 %v1364
    %v6397 = vpop.f32.mrf.mxu0
    %v6398 = vadd.f32 %v5616, %v6397
    %v6399 = vpop.f32.mrf.mxu0
    %v6400 = vadd.f32 %v5620, %v6399
    %v6401 = vpop.f32.mrf.mxu0
    %v6402 = vadd.f32 %v5616, %v6401
    %v6403 = vpop.f32.mrf.mxu0
    %v6404 = vadd.f32 %v5620, %v6403
    %6405 = vmatprep.mubr.bf16.mxu0 %v1372
    %6406 = vmatmul.mubr.bf16.gmra.mxu0 %v1371
    %v6407 = vpop.f32.mrf.mxu0
    %v6408 = vadd.f32 %v5616, %v6407
    %v6409 = vpop.f32.mrf.mxu0
    %v6410 = vadd.f32 %v5620, %v6409
    %v6411 = vpop.f32.mrf.mxu0
    %v6412 = vadd.f32 %v5616, %v6411
    %v6413 = vpop.f32.mrf.mxu0
    %v6414 = vadd.f32 %v5620, %v6413
    %6415 = vmatprep.mubr.bf16.mxu0 %v1379
    %6416 = vmatmul.mubr.bf16.gmra.mxu0 %v1378
    %v6417 = vpop.f32.mrf.mxu0
    %v6418 = vadd.f32 %v5616, %v6417
    %v6419 = vpop.f32.mrf.mxu0
    %v6420 = vadd.f32 %v5620, %v6419
    %v6421 = vpop.f32.mrf.mxu0
    %v6422 = vadd.f32 %v5616, %v6421
    %v6423 = vpop.f32.mrf.mxu0
    %v6424 = vadd.f32 %v5620, %v6423
    %6425 = vmatprep.mubr.bf16.mxu0 %v1386
    %6426 = vmatmul.mubr.bf16.gmra.mxu0 %v1385
    %v6427 = vpop.f32.mrf.mxu0
    %v6428 = vadd.f32 %v5616, %v6427
    %v6429 = vpop.f32.mrf.mxu0
    %v6430 = vadd.f32 %v5620, %v6429
    %v6431 = vpop.f32.mrf.mxu0
    %v6432 = vadd.f32 %v5616, %v6431
    %v6433 = vpop.f32.mrf.mxu0
    %v6434 = vadd.f32 %v5620, %v6433
    %6435 = vmatprep.mubr.bf16.mxu0 %v1393
    %6436 = vmatmul.mubr.bf16.gmra.mxu0 %v1392
    %v6437 = vpop.f32.mrf.mxu0
    %v6438 = vadd.f32 %v5616, %v6437
    %v6439 = vpop.f32.mrf.mxu0
    %v6440 = vadd.f32 %v5620, %v6439
    %v6441 = vpop.f32.mrf.mxu0
    %v6442 = vadd.f32 %v5616, %v6441
    %v6443 = vpop.f32.mrf.mxu0
    %v6444 = vadd.f32 %v5620, %v6443
    %6445 = vmatprep.mubr.bf16.mxu0 %v1400
    %6446 = vmatmul.mubr.bf16.gmra.mxu0 %v1399
    %v6447 = vpop.f32.mrf.mxu0
    %v6448 = vadd.f32 %v5616, %v6447
    %v6449 = vpop.f32.mrf.mxu0
    %v6450 = vadd.f32 %v5620, %v6449
    %v6451 = vpop.f32.mrf.mxu0
    %v6452 = vadd.f32 %v5616, %v6451
    %v6453 = vpop.f32.mrf.mxu0
    %v6454 = vadd.f32 %v5620, %v6453
    %6455 = vmatprep.mubr.bf16.mxu0 %v1407
    %6456 = vmatmul.mubr.bf16.gmra.mxu0 %v1406
    %v6457 = vpop.f32.mrf.mxu0
    %v6458 = vadd.f32 %v5616, %v6457
    %v6459 = vpop.f32.mrf.mxu0
    %v6460 = vadd.f32 %v5620, %v6459
    %v6461 = vpop.f32.mrf.mxu0
    %v6462 = vadd.f32 %v5616, %v6461
    %v6463 = vpop.f32.mrf.mxu0
    %v6464 = vadd.f32 %v5620, %v6463
    %6465 = vmatprep.mubr.bf16.mxu0 %v1414
    %6466 = vmatmul.mubr.bf16.gmra.mxu0 %v1413
    %v6467 = vpop.f32.mrf.mxu0
    %v6468 = vadd.f32 %v5616, %v6467
    %v6469 = vpop.f32.mrf.mxu0
    %v6470 = vadd.f32 %v5620, %v6469
    %v6471 = vpop.f32.mrf.mxu0
    %v6472 = vadd.f32 %v5616, %v6471
    %v6473 = vpop.f32.mrf.mxu0
    %v6474 = vadd.f32 %v5620, %v6473
    %6475 = vmatprep.mubr.bf16.mxu0 %v1421
    %6476 = vmatmul.mubr.bf16.gmra.mxu0 %v1420
    %v6477 = vpop.f32.mrf.mxu0
    %v6478 = vadd.f32 %v5616, %v6477
    %v6479 = vpop.f32.mrf.mxu0
    %v6480 = vadd.f32 %v5620, %v6479
    %v6481 = vpop.f32.mrf.mxu0
    %v6482 = vadd.f32 %v5616, %v6481
    %v6483 = vpop.f32.mrf.mxu0
    %v6484 = vadd.f32 %v5620, %v6483
    %6485 = vmatprep.mubr.bf16.mxu0 %v1428
    %6486 = vmatmul.mubr.bf16.gmra.mxu0 %v1427
    %v6487 = vpop.f32.mrf.mxu0
    %v6488 = vadd.f32 %v5616, %v6487
    %v6489 = vpop.f32.mrf.mxu0
    %v6490 = vadd.f32 %v5620, %v6489
    %v6491 = vpop.f32.mrf.mxu0
    %v6492 = vadd.f32 %v5616, %v6491
    %v6493 = vpop.f32.mrf.mxu0
    %v6494 = vadd.f32 %v5620, %v6493
    %6495 = vdwg.mxu0
    %6496 = vmatprep.subr.bf16.mxu0 %v5982
    %6497 = vmatpush1.bf16.msra.mxu0 %v5981
    %6498 = vmatprep.subr.bf16.mxu0 %v5980
    %6499 = vmatpush1.bf16.msra.mxu0 %v5979
    %6500 = vmatprep.subr.bf16.mxu0 %v5978
    %6501 = vmatpush1.bf16.msra.mxu0 %v5977
    %6502 = vmatprep.subr.bf16.mxu0 %v5976
    %6503 = vmatpush1.bf16.msra.mxu0 %v5975
    %6504 = vmatprep.subr.bf16.mxu0 %v5974
    %6505 = vmatpush1.bf16.msra.mxu0 %v5973
    %6506 = vmatprep.subr.bf16.mxu0 %v5972
    %6507 = vmatpush1.bf16.msra.mxu0 %v5971
    %6508 = vmatprep.subr.bf16.mxu0 %v5970
    %6509 = vmatpush1.bf16.msra.mxu0 %v5969
    %6510 = vmatprep.subr.bf16.mxu0 %v5968
    %6511 = vmatpush1.bf16.msra.mxu0 %v5967
    %6512 = vmatprep.subr.bf16.mxu0 %v5998
    %6513 = vmatpush2.bf16.msra.mxu0 %v5997
    %6514 = vmatprep.subr.bf16.mxu0 %v5996
    %6515 = vmatpush2.bf16.msra.mxu0 %v5995
    %6516 = vmatprep.subr.bf16.mxu0 %v5994
    %6517 = vmatpush2.bf16.msra.mxu0 %v5993
    %6518 = vmatprep.subr.bf16.mxu0 %v5992
    %6519 = vmatpush2.bf16.msra.mxu0 %v5991
    %6520 = vmatprep.subr.bf16.mxu0 %v5990
    %6521 = vmatpush2.bf16.msra.mxu0 %v5989
    %6522 = vmatprep.subr.bf16.mxu0 %v5988
    %6523 = vmatpush2.bf16.msra.mxu0 %v5987
    %6524 = vmatprep.subr.bf16.mxu0 %v5986
    %6525 = vmatpush2.bf16.msra.mxu0 %v5985
    %6526 = vmatprep.subr.bf16.mxu0 %v5984
    %6527 = vmatpush2.bf16.msra.mxu0 %v5983
    %6528 = vmatprep.mubr.bf16.mxu0 %v1213
    %6529 = vmatmul.mubr.bf16.gmra.mxu0 %v1212
    %v6530 = vpop.f32.mrf.mxu0
    %v6531 = vadd.f32 %v6178, %v6530
    %v6532 = vpop.f32.mrf.mxu0
    %v6533 = vadd.f32 %v6180, %v6532
    %v6534 = vpop.f32.mrf.mxu0
    %v6535 = vadd.f32 %v6182, %v6534
    %v6536 = vpop.f32.mrf.mxu0
    %v6537 = vadd.f32 %v6184, %v6536
    %6538 = vmatprep.mubr.bf16.mxu0 %v1220
    %6539 = vmatmul.mubr.bf16.gmra.mxu0 %v1219
    %v6540 = vpop.f32.mrf.mxu0
    %v6541 = vadd.f32 %v6188, %v6540
    %v6542 = vpop.f32.mrf.mxu0
    %v6543 = vadd.f32 %v6190, %v6542
    %v6544 = vpop.f32.mrf.mxu0
    %v6545 = vadd.f32 %v6192, %v6544
    %v6546 = vpop.f32.mrf.mxu0
    %v6547 = vadd.f32 %v6194, %v6546
    %6548 = vmatprep.mubr.bf16.mxu0 %v1227
    %6549 = vmatmul.mubr.bf16.gmra.mxu0 %v1226
    %v6550 = vpop.f32.mrf.mxu0
    %v6551 = vadd.f32 %v6198, %v6550
    %v6552 = vpop.f32.mrf.mxu0
    %v6553 = vadd.f32 %v6200, %v6552
    %v6554 = vpop.f32.mrf.mxu0
    %v6555 = vadd.f32 %v6202, %v6554
    %v6556 = vpop.f32.mrf.mxu0
    %v6557 = vadd.f32 %v6204, %v6556
    %6558 = vmatprep.mubr.bf16.mxu0 %v1234
    %6559 = vmatmul.mubr.bf16.gmra.mxu0 %v1233
    %v6560 = vpop.f32.mrf.mxu0
    %v6561 = vadd.f32 %v6208, %v6560
    %v6562 = vpop.f32.mrf.mxu0
    %v6563 = vadd.f32 %v6210, %v6562
    %v6564 = vpop.f32.mrf.mxu0
    %v6565 = vadd.f32 %v6212, %v6564
    %v6566 = vpop.f32.mrf.mxu0
    %v6567 = vadd.f32 %v6214, %v6566
    %6568 = vmatprep.mubr.bf16.mxu0 %v1241
    %6569 = vmatmul.mubr.bf16.gmra.mxu0 %v1240
    %v6570 = vpop.f32.mrf.mxu0
    %v6571 = vadd.f32 %v6218, %v6570
    %v6572 = vpop.f32.mrf.mxu0
    %v6573 = vadd.f32 %v6220, %v6572
    %v6574 = vpop.f32.mrf.mxu0
    %v6575 = vadd.f32 %v6222, %v6574
    %v6576 = vpop.f32.mrf.mxu0
    %v6577 = vadd.f32 %v6224, %v6576
    %6578 = vmatprep.mubr.bf16.mxu0 %v1248
    %6579 = vmatmul.mubr.bf16.gmra.mxu0 %v1247
    %v6580 = vpop.f32.mrf.mxu0
    %v6581 = vadd.f32 %v6228, %v6580
    %v6582 = vpop.f32.mrf.mxu0
    %v6583 = vadd.f32 %v6230, %v6582
    %v6584 = vpop.f32.mrf.mxu0
    %v6585 = vadd.f32 %v6232, %v6584
    %v6586 = vpop.f32.mrf.mxu0
    %v6587 = vadd.f32 %v6234, %v6586
    %6588 = vmatprep.mubr.bf16.mxu0 %v1255
    %6589 = vmatmul.mubr.bf16.gmra.mxu0 %v1254
    %v6590 = vpop.f32.mrf.mxu0
    %v6591 = vadd.f32 %v6238, %v6590
    %v6592 = vpop.f32.mrf.mxu0
    %v6593 = vadd.f32 %v6240, %v6592
    %v6594 = vpop.f32.mrf.mxu0
    %v6595 = vadd.f32 %v6242, %v6594
    %v6596 = vpop.f32.mrf.mxu0
    %v6597 = vadd.f32 %v6244, %v6596
    %6598 = vmatprep.mubr.bf16.mxu0 %v1262
    %6599 = vmatmul.mubr.bf16.gmra.mxu0 %v1261
    %v6600 = vpop.f32.mrf.mxu0
    %v6601 = vadd.f32 %v6248, %v6600
    %v6602 = vpop.f32.mrf.mxu0
    %v6603 = vadd.f32 %v6250, %v6602
    %v6604 = vpop.f32.mrf.mxu0
    %v6605 = vadd.f32 %v6252, %v6604
    %v6606 = vpop.f32.mrf.mxu0
    %v6607 = vadd.f32 %v6254, %v6606
    %6608 = vmatprep.mubr.bf16.mxu0 %v1269
    %6609 = vmatmul.mubr.bf16.gmra.mxu0 %v1268
    %v6610 = vpop.f32.mrf.mxu0
    %v6611 = vadd.f32 %v6258, %v6610
    %v6612 = vpop.f32.mrf.mxu0
    %v6613 = vadd.f32 %v6260, %v6612
    %v6614 = vpop.f32.mrf.mxu0
    %v6615 = vadd.f32 %v6262, %v6614
    %v6616 = vpop.f32.mrf.mxu0
    %v6617 = vadd.f32 %v6264, %v6616
    %6618 = vmatprep.mubr.bf16.mxu0 %v1276
    %6619 = vmatmul.mubr.bf16.gmra.mxu0 %v1275
    %v6620 = vpop.f32.mrf.mxu0
    %v6621 = vadd.f32 %v6268, %v6620
    %v6622 = vpop.f32.mrf.mxu0
    %v6623 = vadd.f32 %v6270, %v6622
    %v6624 = vpop.f32.mrf.mxu0
    %v6625 = vadd.f32 %v6272, %v6624
    %v6626 = vpop.f32.mrf.mxu0
    %v6627 = vadd.f32 %v6274, %v6626
    %6628 = vmatprep.mubr.bf16.mxu0 %v1283
    %6629 = vmatmul.mubr.bf16.gmra.mxu0 %v1282
    %v6630 = vpop.f32.mrf.mxu0
    %v6631 = vadd.f32 %v6278, %v6630
    %v6632 = vpop.f32.mrf.mxu0
    %v6633 = vadd.f32 %v6280, %v6632
    %v6634 = vpop.f32.mrf.mxu0
    %v6635 = vadd.f32 %v6282, %v6634
    %v6636 = vpop.f32.mrf.mxu0
    %v6637 = vadd.f32 %v6284, %v6636
    %6638 = vmatprep.mubr.bf16.mxu0 %v1290
    %6639 = vmatmul.mubr.bf16.gmra.mxu0 %v1289
    %v6640 = vpop.f32.mrf.mxu0
    %v6641 = vadd.f32 %v6288, %v6640
    %v6642 = vpop.f32.mrf.mxu0
    %v6643 = vadd.f32 %v6290, %v6642
    %v6644 = vpop.f32.mrf.mxu0
    %v6645 = vadd.f32 %v6292, %v6644
    %v6646 = vpop.f32.mrf.mxu0
    %v6647 = vadd.f32 %v6294, %v6646
    %6648 = vmatprep.mubr.bf16.mxu0 %v1297
    %6649 = vmatmul.mubr.bf16.gmra.mxu0 %v1296
    %v6650 = vpop.f32.mrf.mxu0
    %v6651 = vadd.f32 %v6298, %v6650
    %v6652 = vpop.f32.mrf.mxu0
    %v6653 = vadd.f32 %v6300, %v6652
    %v6654 = vpop.f32.mrf.mxu0
    %v6655 = vadd.f32 %v6302, %v6654
    %v6656 = vpop.f32.mrf.mxu0
    %v6657 = vadd.f32 %v6304, %v6656
    %6658 = vmatprep.mubr.bf16.mxu0 %v1304
    %6659 = vmatmul.mubr.bf16.gmra.mxu0 %v1303
    %v6660 = vpop.f32.mrf.mxu0
    %v6661 = vadd.f32 %v6308, %v6660
    %v6662 = vpop.f32.mrf.mxu0
    %v6663 = vadd.f32 %v6310, %v6662
    %v6664 = vpop.f32.mrf.mxu0
    %v6665 = vadd.f32 %v6312, %v6664
    %v6666 = vpop.f32.mrf.mxu0
    %v6667 = vadd.f32 %v6314, %v6666
    %6668 = vmatprep.mubr.bf16.mxu0 %v1311
    %6669 = vmatmul.mubr.bf16.gmra.mxu0 %v1310
    %v6670 = vpop.f32.mrf.mxu0
    %v6671 = vadd.f32 %v6318, %v6670
    %v6672 = vpop.f32.mrf.mxu0
    %v6673 = vadd.f32 %v6320, %v6672
    %v6674 = vpop.f32.mrf.mxu0
    %v6675 = vadd.f32 %v6322, %v6674
    %v6676 = vpop.f32.mrf.mxu0
    %v6677 = vadd.f32 %v6324, %v6676
    %6678 = vmatprep.mubr.bf16.mxu0 %v1318
    %6679 = vmatmul.mubr.bf16.gmra.mxu0 %v1317
    %v6680 = vpop.f32.mrf.mxu0
    %v6681 = vadd.f32 %v6328, %v6680
    %v6682 = vpop.f32.mrf.mxu0
    %v6683 = vadd.f32 %v6330, %v6682
    %v6684 = vpop.f32.mrf.mxu0
    %v6685 = vadd.f32 %v6332, %v6684
    %v6686 = vpop.f32.mrf.mxu0
    %v6687 = vadd.f32 %v6334, %v6686
    %6688 = vmatprep.mubr.bf16.mxu0 %v1325
    %6689 = vmatmul.mubr.bf16.gmra.mxu0 %v1324
    %v6690 = vpop.f32.mrf.mxu0
    %v6691 = vadd.f32 %v6338, %v6690
    %v6692 = vpop.f32.mrf.mxu0
    %v6693 = vadd.f32 %v6340, %v6692
    %v6694 = vpop.f32.mrf.mxu0
    %v6695 = vadd.f32 %v6342, %v6694
    %v6696 = vpop.f32.mrf.mxu0
    %v6697 = vadd.f32 %v6344, %v6696
    %6698 = vmatprep.mubr.bf16.mxu0 %v1332
    %6699 = vmatmul.mubr.bf16.gmra.mxu0 %v1331
    %v6700 = vpop.f32.mrf.mxu0
    %v6701 = vadd.f32 %v6348, %v6700
    %v6702 = vpop.f32.mrf.mxu0
    %v6703 = vadd.f32 %v6350, %v6702
    %v6704 = vpop.f32.mrf.mxu0
    %v6705 = vadd.f32 %v6352, %v6704
    %v6706 = vpop.f32.mrf.mxu0
    %v6707 = vadd.f32 %v6354, %v6706
    %6708 = vmatprep.mubr.bf16.mxu0 %v1339
    %6709 = vmatmul.mubr.bf16.gmra.mxu0 %v1338
    %v6710 = vpop.f32.mrf.mxu0
    %v6711 = vadd.f32 %v6358, %v6710
    %v6712 = vpop.f32.mrf.mxu0
    %v6713 = vadd.f32 %v6360, %v6712
    %v6714 = vpop.f32.mrf.mxu0
    %v6715 = vadd.f32 %v6362, %v6714
    %v6716 = vpop.f32.mrf.mxu0
    %v6717 = vadd.f32 %v6364, %v6716
    %6718 = vmatprep.mubr.bf16.mxu0 %v1346
    %6719 = vmatmul.mubr.bf16.gmra.mxu0 %v1345
    %v6720 = vpop.f32.mrf.mxu0
    %v6721 = vadd.f32 %v6368, %v6720
    %v6722 = vpop.f32.mrf.mxu0
    %v6723 = vadd.f32 %v6370, %v6722
    %v6724 = vpop.f32.mrf.mxu0
    %v6725 = vadd.f32 %v6372, %v6724
    %v6726 = vpop.f32.mrf.mxu0
    %v6727 = vadd.f32 %v6374, %v6726
    %6728 = vmatprep.mubr.bf16.mxu0 %v1353
    %6729 = vmatmul.mubr.bf16.gmra.mxu0 %v1352
    %v6730 = vpop.f32.mrf.mxu0
    %v6731 = vadd.f32 %v6378, %v6730
    %v6732 = vpop.f32.mrf.mxu0
    %v6733 = vadd.f32 %v6380, %v6732
    %v6734 = vpop.f32.mrf.mxu0
    %v6735 = vadd.f32 %v6382, %v6734
    %v6736 = vpop.f32.mrf.mxu0
    %v6737 = vadd.f32 %v6384, %v6736
    %6738 = vmatprep.mubr.bf16.mxu0 %v1360
    %6739 = vmatmul.mubr.bf16.gmra.mxu0 %v1359
    %v6740 = vpop.f32.mrf.mxu0
    %v6741 = vadd.f32 %v6388, %v6740
    %v6742 = vpop.f32.mrf.mxu0
    %v6743 = vadd.f32 %v6390, %v6742
    %v6744 = vpop.f32.mrf.mxu0
    %v6745 = vadd.f32 %v6392, %v6744
    %v6746 = vpop.f32.mrf.mxu0
    %v6747 = vadd.f32 %v6394, %v6746
    %6748 = vmatprep.mubr.bf16.mxu0 %v1367
    %6749 = vmatmul.mubr.bf16.gmra.mxu0 %v1366
    %v6750 = vpop.f32.mrf.mxu0
    %v6751 = vadd.f32 %v6398, %v6750
    %v6752 = vpop.f32.mrf.mxu0
    %v6753 = vadd.f32 %v6400, %v6752
    %v6754 = vpop.f32.mrf.mxu0
    %v6755 = vadd.f32 %v6402, %v6754
    %v6756 = vpop.f32.mrf.mxu0
    %v6757 = vadd.f32 %v6404, %v6756
    %6758 = vmatprep.mubr.bf16.mxu0 %v1374
    %6759 = vmatmul.mubr.bf16.gmra.mxu0 %v1373
    %v6760 = vpop.f32.mrf.mxu0
    %v6761 = vadd.f32 %v6408, %v6760
    %v6762 = vpop.f32.mrf.mxu0
    %v6763 = vadd.f32 %v6410, %v6762
    %v6764 = vpop.f32.mrf.mxu0
    %v6765 = vadd.f32 %v6412, %v6764
    %v6766 = vpop.f32.mrf.mxu0
    %v6767 = vadd.f32 %v6414, %v6766
    %6768 = vmatprep.mubr.bf16.mxu0 %v1381
    %6769 = vmatmul.mubr.bf16.gmra.mxu0 %v1380
    %v6770 = vpop.f32.mrf.mxu0
    %v6771 = vadd.f32 %v6418, %v6770
    %v6772 = vpop.f32.mrf.mxu0
    %v6773 = vadd.f32 %v6420, %v6772
    %v6774 = vpop.f32.mrf.mxu0
    %v6775 = vadd.f32 %v6422, %v6774
    %v6776 = vpop.f32.mrf.mxu0
    %v6777 = vadd.f32 %v6424, %v6776
    %6778 = vmatprep.mubr.bf16.mxu0 %v1388
    %6779 = vmatmul.mubr.bf16.gmra.mxu0 %v1387
    %v6780 = vpop.f32.mrf.mxu0
    %v6781 = vadd.f32 %v6428, %v6780
    %v6782 = vpop.f32.mrf.mxu0
    %v6783 = vadd.f32 %v6430, %v6782
    %v6784 = vpop.f32.mrf.mxu0
    %v6785 = vadd.f32 %v6432, %v6784
    %v6786 = vpop.f32.mrf.mxu0
    %v6787 = vadd.f32 %v6434, %v6786
    %6788 = vmatprep.mubr.bf16.mxu0 %v1395
    %6789 = vmatmul.mubr.bf16.gmra.mxu0 %v1394
    %v6790 = vpop.f32.mrf.mxu0
    %v6791 = vadd.f32 %v6438, %v6790
    %v6792 = vpop.f32.mrf.mxu0
    %v6793 = vadd.f32 %v6440, %v6792
    %v6794 = vpop.f32.mrf.mxu0
    %v6795 = vadd.f32 %v6442, %v6794
    %v6796 = vpop.f32.mrf.mxu0
    %v6797 = vadd.f32 %v6444, %v6796
    %6798 = vmatprep.mubr.bf16.mxu0 %v1402
    %6799 = vmatmul.mubr.bf16.gmra.mxu0 %v1401
    %v6800 = vpop.f32.mrf.mxu0
    %v6801 = vadd.f32 %v6448, %v6800
    %v6802 = vpop.f32.mrf.mxu0
    %v6803 = vadd.f32 %v6450, %v6802
    %v6804 = vpop.f32.mrf.mxu0
    %v6805 = vadd.f32 %v6452, %v6804
    %v6806 = vpop.f32.mrf.mxu0
    %v6807 = vadd.f32 %v6454, %v6806
    %6808 = vmatprep.mubr.bf16.mxu0 %v1409
    %6809 = vmatmul.mubr.bf16.gmra.mxu0 %v1408
    %v6810 = vpop.f32.mrf.mxu0
    %v6811 = vadd.f32 %v6458, %v6810
    %v6812 = vpop.f32.mrf.mxu0
    %v6813 = vadd.f32 %v6460, %v6812
    %v6814 = vpop.f32.mrf.mxu0
    %v6815 = vadd.f32 %v6462, %v6814
    %v6816 = vpop.f32.mrf.mxu0
    %v6817 = vadd.f32 %v6464, %v6816
    %6818 = vmatprep.mubr.bf16.mxu0 %v1416
    %6819 = vmatmul.mubr.bf16.gmra.mxu0 %v1415
    %v6820 = vpop.f32.mrf.mxu0
    %v6821 = vadd.f32 %v6468, %v6820
    %v6822 = vpop.f32.mrf.mxu0
    %v6823 = vadd.f32 %v6470, %v6822
    %v6824 = vpop.f32.mrf.mxu0
    %v6825 = vadd.f32 %v6472, %v6824
    %v6826 = vpop.f32.mrf.mxu0
    %v6827 = vadd.f32 %v6474, %v6826
    %6828 = vmatprep.mubr.bf16.mxu0 %v1423
    %6829 = vmatmul.mubr.bf16.gmra.mxu0 %v1422
    %v6830 = vpop.f32.mrf.mxu0
    %v6831 = vadd.f32 %v6478, %v6830
    %v6832 = vpop.f32.mrf.mxu0
    %v6833 = vadd.f32 %v6480, %v6832
    %v6834 = vpop.f32.mrf.mxu0
    %v6835 = vadd.f32 %v6482, %v6834
    %v6836 = vpop.f32.mrf.mxu0
    %v6837 = vadd.f32 %v6484, %v6836
    %6838 = vmatprep.mubr.bf16.mxu0 %v1430
    %6839 = vmatmul.mubr.bf16.gmra.mxu0 %v1429
    %v6840 = vpop.f32.mrf.mxu0
    %v6841 = vadd.f32 %v6488, %v6840
    %v6842 = vpop.f32.mrf.mxu0
    %v6843 = vadd.f32 %v6490, %v6842
    %v6844 = vpop.f32.mrf.mxu0
    %v6845 = vadd.f32 %v6492, %v6844
    %v6846 = vpop.f32.mrf.mxu0
    %v6847 = vadd.f32 %v6494, %v6846
    %6848 = vdwg.mxu0
    %6849 = vmatprep.subr.bf16.mxu0 %v6014
    %6850 = vmatpush1.bf16.msra.mxu0 %v6013
    %6851 = vmatprep.subr.bf16.mxu0 %v6012
    %6852 = vmatpush1.bf16.msra.mxu0 %v6011
    %6853 = vmatprep.subr.bf16.mxu0 %v6010
    %6854 = vmatpush1.bf16.msra.mxu0 %v6009
    %6855 = vmatprep.subr.bf16.mxu0 %v6008
    %6856 = vmatpush1.bf16.msra.mxu0 %v6007
    %6857 = vmatprep.subr.bf16.mxu0 %v6006
    %6858 = vmatpush1.bf16.msra.mxu0 %v6005
    %6859 = vmatprep.subr.bf16.mxu0 %v6004
    %6860 = vmatpush1.bf16.msra.mxu0 %v6003
    %6861 = vmatprep.subr.bf16.mxu0 %v6002
    %6862 = vmatpush1.bf16.msra.mxu0 %v6001
    %6863 = vmatprep.subr.bf16.mxu0 %v6000
    %6864 = vmatpush1.bf16.msra.mxu0 %v5999
    %6865 = vmatprep.subr.bf16.mxu0 %v6030
    %6866 = vmatpush2.bf16.msra.mxu0 %v6029
    %6867 = vmatprep.subr.bf16.mxu0 %v6028
    %6868 = vmatpush2.bf16.msra.mxu0 %v6027
    %6869 = vmatprep.subr.bf16.mxu0 %v6026
    %6870 = vmatpush2.bf16.msra.mxu0 %v6025
    %6871 = vmatprep.subr.bf16.mxu0 %v6024
    %6872 = vmatpush2.bf16.msra.mxu0 %v6023
    %6873 = vmatprep.subr.bf16.mxu0 %v6022
    %6874 = vmatpush2.bf16.msra.mxu0 %v6021
    %6875 = vmatprep.subr.bf16.mxu0 %v6020
    %6876 = vmatpush2.bf16.msra.mxu0 %v6019
    %6877 = vmatprep.subr.bf16.mxu0 %v6018
    %6878 = vmatpush2.bf16.msra.mxu0 %v6017
    %6879 = vmatprep.subr.bf16.mxu0 %v6016
    %6880 = vmatpush2.bf16.msra.mxu0 %v6015
    %6881 = vmatprep.mubr.bf16.mxu0 %v1215
    %6882 = vmatmul.mubr.bf16.gmra.mxu0 %v1214
    %v6883 = vpop.f32.mrf.mxu0
    %v6884 = vadd.f32 %v6531, %v6883
    %v6885 = vpop.f32.mrf.mxu0
    %v6886 = vadd.f32 %v6533, %v6885
    %v6887 = vpop.f32.mrf.mxu0
    %v6888 = vadd.f32 %v6535, %v6887
    %v6889 = vpop.f32.mrf.mxu0
    %v6890 = vadd.f32 %v6537, %v6889
    %6891 = vmatprep.mubr.bf16.mxu0 %v1222
    %6892 = vmatmul.mubr.bf16.gmra.mxu0 %v1221
    %v6893 = vpop.f32.mrf.mxu0
    %v6894 = vadd.f32 %v6541, %v6893
    %v6895 = vpop.f32.mrf.mxu0
    %v6896 = vadd.f32 %v6543, %v6895
    %v6897 = vpop.f32.mrf.mxu0
    %v6898 = vadd.f32 %v6545, %v6897
    %v6899 = vpop.f32.mrf.mxu0
    %v6900 = vadd.f32 %v6547, %v6899
    %6901 = vmatprep.mubr.bf16.mxu0 %v1229
    %6902 = vmatmul.mubr.bf16.gmra.mxu0 %v1228
    %v6903 = vpop.f32.mrf.mxu0
    %v6904 = vadd.f32 %v6551, %v6903
    %v6905 = vpop.f32.mrf.mxu0
    %v6906 = vadd.f32 %v6553, %v6905
    %v6907 = vpop.f32.mrf.mxu0
    %v6908 = vadd.f32 %v6555, %v6907
    %v6909 = vpop.f32.mrf.mxu0
    %v6910 = vadd.f32 %v6557, %v6909
    %6911 = vmatprep.mubr.bf16.mxu0 %v1236
    %6912 = vmatmul.mubr.bf16.gmra.mxu0 %v1235
    %v6913 = vpop.f32.mrf.mxu0
    %v6914 = vadd.f32 %v6561, %v6913
    %v6915 = vpop.f32.mrf.mxu0
    %v6916 = vadd.f32 %v6563, %v6915
    %v6917 = vpop.f32.mrf.mxu0
    %v6918 = vadd.f32 %v6565, %v6917
    %v6919 = vpop.f32.mrf.mxu0
    %v6920 = vadd.f32 %v6567, %v6919
    %6921 = vmatprep.mubr.bf16.mxu0 %v1243
    %6922 = vmatmul.mubr.bf16.gmra.mxu0 %v1242
    %v6923 = vpop.f32.mrf.mxu0
    %v6924 = vadd.f32 %v6571, %v6923
    %v6925 = vpop.f32.mrf.mxu0
    %v6926 = vadd.f32 %v6573, %v6925
    %v6927 = vpop.f32.mrf.mxu0
    %v6928 = vadd.f32 %v6575, %v6927
    %v6929 = vpop.f32.mrf.mxu0
    %v6930 = vadd.f32 %v6577, %v6929
    %6931 = vmatprep.mubr.bf16.mxu0 %v1250
    %6932 = vmatmul.mubr.bf16.gmra.mxu0 %v1249
    %v6933 = vpop.f32.mrf.mxu0
    %v6934 = vadd.f32 %v6581, %v6933
    %v6935 = vpop.f32.mrf.mxu0
    %v6936 = vadd.f32 %v6583, %v6935
    %v6937 = vpop.f32.mrf.mxu0
    %v6938 = vadd.f32 %v6585, %v6937
    %v6939 = vpop.f32.mrf.mxu0
    %v6940 = vadd.f32 %v6587, %v6939
    %6941 = vmatprep.mubr.bf16.mxu0 %v1257
    %6942 = vmatmul.mubr.bf16.gmra.mxu0 %v1256
    %v6943 = vpop.f32.mrf.mxu0
    %v6944 = vadd.f32 %v6591, %v6943
    %v6945 = vpop.f32.mrf.mxu0
    %v6946 = vadd.f32 %v6593, %v6945
    %v6947 = vpop.f32.mrf.mxu0
    %v6948 = vadd.f32 %v6595, %v6947
    %v6949 = vpop.f32.mrf.mxu0
    %v6950 = vadd.f32 %v6597, %v6949
    %6951 = vmatprep.mubr.bf16.mxu0 %v1264
    %6952 = vmatmul.mubr.bf16.gmra.mxu0 %v1263
    %v6953 = vpop.f32.mrf.mxu0
    %v6954 = vadd.f32 %v6601, %v6953
    %v6955 = vpop.f32.mrf.mxu0
    %v6956 = vadd.f32 %v6603, %v6955
    %v6957 = vpop.f32.mrf.mxu0
    %v6958 = vadd.f32 %v6605, %v6957
    %v6959 = vpop.f32.mrf.mxu0
    %v6960 = vadd.f32 %v6607, %v6959
    %6961 = vmatprep.mubr.bf16.mxu0 %v1271
    %6962 = vmatmul.mubr.bf16.gmra.mxu0 %v1270
    %v6963 = vpop.f32.mrf.mxu0
    %v6964 = vadd.f32 %v6611, %v6963
    %v6965 = vpop.f32.mrf.mxu0
    %v6966 = vadd.f32 %v6613, %v6965
    %v6967 = vpop.f32.mrf.mxu0
    %v6968 = vadd.f32 %v6615, %v6967
    %v6969 = vpop.f32.mrf.mxu0
    %v6970 = vadd.f32 %v6617, %v6969
    %6971 = vmatprep.mubr.bf16.mxu0 %v1278
    %6972 = vmatmul.mubr.bf16.gmra.mxu0 %v1277
    %v6973 = vpop.f32.mrf.mxu0
    %v6974 = vadd.f32 %v6621, %v6973
    %v6975 = vpop.f32.mrf.mxu0
    %v6976 = vadd.f32 %v6623, %v6975
    %v6977 = vpop.f32.mrf.mxu0
    %v6978 = vadd.f32 %v6625, %v6977
    %v6979 = vpop.f32.mrf.mxu0
    %v6980 = vadd.f32 %v6627, %v6979
    %6981 = vmatprep.mubr.bf16.mxu0 %v1285
    %6982 = vmatmul.mubr.bf16.gmra.mxu0 %v1284
    %v6983 = vpop.f32.mrf.mxu0
    %v6984 = vadd.f32 %v6631, %v6983
    %v6985 = vpop.f32.mrf.mxu0
    %v6986 = vadd.f32 %v6633, %v6985
    %v6987 = vpop.f32.mrf.mxu0
    %v6988 = vadd.f32 %v6635, %v6987
    %v6989 = vpop.f32.mrf.mxu0
    %v6990 = vadd.f32 %v6637, %v6989
    %6991 = vmatprep.mubr.bf16.mxu0 %v1292
    %6992 = vmatmul.mubr.bf16.gmra.mxu0 %v1291
    %v6993 = vpop.f32.mrf.mxu0
    %v6994 = vadd.f32 %v6641, %v6993
    %v6995 = vpop.f32.mrf.mxu0
    %v6996 = vadd.f32 %v6643, %v6995
    %v6997 = vpop.f32.mrf.mxu0
    %v6998 = vadd.f32 %v6645, %v6997
    %v6999 = vpop.f32.mrf.mxu0
    %v7000 = vadd.f32 %v6647, %v6999
    %7001 = vmatprep.mubr.bf16.mxu0 %v1299
    %7002 = vmatmul.mubr.bf16.gmra.mxu0 %v1298
    %v7003 = vpop.f32.mrf.mxu0
    %v7004 = vadd.f32 %v6651, %v7003
    %v7005 = vpop.f32.mrf.mxu0
    %v7006 = vadd.f32 %v6653, %v7005
    %v7007 = vpop.f32.mrf.mxu0
    %v7008 = vadd.f32 %v6655, %v7007
    %v7009 = vpop.f32.mrf.mxu0
    %v7010 = vadd.f32 %v6657, %v7009
    %7011 = vmatprep.mubr.bf16.mxu0 %v1306
    %7012 = vmatmul.mubr.bf16.gmra.mxu0 %v1305
    %v7013 = vpop.f32.mrf.mxu0
    %v7014 = vadd.f32 %v6661, %v7013
    %v7015 = vpop.f32.mrf.mxu0
    %v7016 = vadd.f32 %v6663, %v7015
    %v7017 = vpop.f32.mrf.mxu0
    %v7018 = vadd.f32 %v6665, %v7017
    %v7019 = vpop.f32.mrf.mxu0
    %v7020 = vadd.f32 %v6667, %v7019
    %7021 = vmatprep.mubr.bf16.mxu0 %v1313
    %7022 = vmatmul.mubr.bf16.gmra.mxu0 %v1312
    %v7023 = vpop.f32.mrf.mxu0
    %v7024 = vadd.f32 %v6671, %v7023
    %v7025 = vpop.f32.mrf.mxu0
    %v7026 = vadd.f32 %v6673, %v7025
    %v7027 = vpop.f32.mrf.mxu0
    %v7028 = vadd.f32 %v6675, %v7027
    %v7029 = vpop.f32.mrf.mxu0
    %v7030 = vadd.f32 %v6677, %v7029
    %7031 = vmatprep.mubr.bf16.mxu0 %v1320
    %7032 = vmatmul.mubr.bf16.gmra.mxu0 %v1319
    %v7033 = vpop.f32.mrf.mxu0
    %v7034 = vadd.f32 %v6681, %v7033
    %v7035 = vpop.f32.mrf.mxu0
    %v7036 = vadd.f32 %v6683, %v7035
    %v7037 = vpop.f32.mrf.mxu0
    %v7038 = vadd.f32 %v6685, %v7037
    %v7039 = vpop.f32.mrf.mxu0
    %v7040 = vadd.f32 %v6687, %v7039
    %7041 = vmatprep.mubr.bf16.mxu0 %v1327
    %7042 = vmatmul.mubr.bf16.gmra.mxu0 %v1326
    %v7043 = vpop.f32.mrf.mxu0
    %v7044 = vadd.f32 %v6691, %v7043
    %v7045 = vpop.f32.mrf.mxu0
    %v7046 = vadd.f32 %v6693, %v7045
    %v7047 = vpop.f32.mrf.mxu0
    %v7048 = vadd.f32 %v6695, %v7047
    %v7049 = vpop.f32.mrf.mxu0
    %v7050 = vadd.f32 %v6697, %v7049
    %7051 = vmatprep.mubr.bf16.mxu0 %v1334
    %7052 = vmatmul.mubr.bf16.gmra.mxu0 %v1333
    %v7053 = vpop.f32.mrf.mxu0
    %v7054 = vadd.f32 %v6701, %v7053
    %v7055 = vpop.f32.mrf.mxu0
    %v7056 = vadd.f32 %v6703, %v7055
    %v7057 = vpop.f32.mrf.mxu0
    %v7058 = vadd.f32 %v6705, %v7057
    %v7059 = vpop.f32.mrf.mxu0
    %v7060 = vadd.f32 %v6707, %v7059
    %7061 = vmatprep.mubr.bf16.mxu0 %v1341
    %7062 = vmatmul.mubr.bf16.gmra.mxu0 %v1340
    %v7063 = vpop.f32.mrf.mxu0
    %v7064 = vadd.f32 %v6711, %v7063
    %v7065 = vpop.f32.mrf.mxu0
    %v7066 = vadd.f32 %v6713, %v7065
    %v7067 = vpop.f32.mrf.mxu0
    %v7068 = vadd.f32 %v6715, %v7067
    %v7069 = vpop.f32.mrf.mxu0
    %v7070 = vadd.f32 %v6717, %v7069
    %7071 = vmatprep.mubr.bf16.mxu0 %v1348
    %7072 = vmatmul.mubr.bf16.gmra.mxu0 %v1347
    %v7073 = vpop.f32.mrf.mxu0
    %v7074 = vadd.f32 %v6721, %v7073
    %v7075 = vpop.f32.mrf.mxu0
    %v7076 = vadd.f32 %v6723, %v7075
    %v7077 = vpop.f32.mrf.mxu0
    %v7078 = vadd.f32 %v6725, %v7077
    %v7079 = vpop.f32.mrf.mxu0
    %v7080 = vadd.f32 %v6727, %v7079
    %7081 = vmatprep.mubr.bf16.mxu0 %v1355
    %7082 = vmatmul.mubr.bf16.gmra.mxu0 %v1354
    %v7083 = vpop.f32.mrf.mxu0
    %v7084 = vadd.f32 %v6731, %v7083
    %v7085 = vpop.f32.mrf.mxu0
    %v7086 = vadd.f32 %v6733, %v7085
    %v7087 = vpop.f32.mrf.mxu0
    %v7088 = vadd.f32 %v6735, %v7087
    %v7089 = vpop.f32.mrf.mxu0
    %v7090 = vadd.f32 %v6737, %v7089
    %7091 = vmatprep.mubr.bf16.mxu0 %v1362
    %7092 = vmatmul.mubr.bf16.gmra.mxu0 %v1361
    %v7093 = vpop.f32.mrf.mxu0
    %v7094 = vadd.f32 %v6741, %v7093
    %v7095 = vpop.f32.mrf.mxu0
    %v7096 = vadd.f32 %v6743, %v7095
    %v7097 = vpop.f32.mrf.mxu0
    %v7098 = vadd.f32 %v6745, %v7097
    %v7099 = vpop.f32.mrf.mxu0
    %v7100 = vadd.f32 %v6747, %v7099
    %7101 = vmatprep.mubr.bf16.mxu0 %v1369
    %7102 = vmatmul.mubr.bf16.gmra.mxu0 %v1368
    %v7103 = vpop.f32.mrf.mxu0
    %v7104 = vadd.f32 %v6751, %v7103
    %v7105 = vpop.f32.mrf.mxu0
    %v7106 = vadd.f32 %v6753, %v7105
    %v7107 = vpop.f32.mrf.mxu0
    %v7108 = vadd.f32 %v6755, %v7107
    %v7109 = vpop.f32.mrf.mxu0
    %v7110 = vadd.f32 %v6757, %v7109
    %7111 = vmatprep.mubr.bf16.mxu0 %v1376
    %7112 = vmatmul.mubr.bf16.gmra.mxu0 %v1375
    %v7113 = vpop.f32.mrf.mxu0
    %v7114 = vadd.f32 %v6761, %v7113
    %v7115 = vpop.f32.mrf.mxu0
    %v7116 = vadd.f32 %v6763, %v7115
    %v7117 = vpop.f32.mrf.mxu0
    %v7118 = vadd.f32 %v6765, %v7117
    %v7119 = vpop.f32.mrf.mxu0
    %v7120 = vadd.f32 %v6767, %v7119
    %7121 = vmatprep.mubr.bf16.mxu0 %v1383
    %7122 = vmatmul.mubr.bf16.gmra.mxu0 %v1382
    %v7123 = vpop.f32.mrf.mxu0
    %v7124 = vadd.f32 %v6771, %v7123
    %v7125 = vpop.f32.mrf.mxu0
    %v7126 = vadd.f32 %v6773, %v7125
    %v7127 = vpop.f32.mrf.mxu0
    %v7128 = vadd.f32 %v6775, %v7127
    %v7129 = vpop.f32.mrf.mxu0
    %v7130 = vadd.f32 %v6777, %v7129
    %7131 = vmatprep.mubr.bf16.mxu0 %v1390
    %7132 = vmatmul.mubr.bf16.gmra.mxu0 %v1389
    %v7133 = vpop.f32.mrf.mxu0
    %v7134 = vadd.f32 %v6781, %v7133
    %v7135 = vpop.f32.mrf.mxu0
    %v7136 = vadd.f32 %v6783, %v7135
    %v7137 = vpop.f32.mrf.mxu0
    %v7138 = vadd.f32 %v6785, %v7137
    %v7139 = vpop.f32.mrf.mxu0
    %v7140 = vadd.f32 %v6787, %v7139
    %7141 = vmatprep.mubr.bf16.mxu0 %v1397
    %7142 = vmatmul.mubr.bf16.gmra.mxu0 %v1396
    %v7143 = vpop.f32.mrf.mxu0
    %v7144 = vadd.f32 %v6791, %v7143
    %v7145 = vpop.f32.mrf.mxu0
    %v7146 = vadd.f32 %v6793, %v7145
    %v7147 = vpop.f32.mrf.mxu0
    %v7148 = vadd.f32 %v6795, %v7147
    %v7149 = vpop.f32.mrf.mxu0
    %v7150 = vadd.f32 %v6797, %v7149
    %7151 = vmatprep.mubr.bf16.mxu0 %v1404
    %7152 = vmatmul.mubr.bf16.gmra.mxu0 %v1403
    %v7153 = vpop.f32.mrf.mxu0
    %v7154 = vadd.f32 %v6801, %v7153
    %v7155 = vpop.f32.mrf.mxu0
    %v7156 = vadd.f32 %v6803, %v7155
    %v7157 = vpop.f32.mrf.mxu0
    %v7158 = vadd.f32 %v6805, %v7157
    %v7159 = vpop.f32.mrf.mxu0
    %v7160 = vadd.f32 %v6807, %v7159
    %7161 = vmatprep.mubr.bf16.mxu0 %v1411
    %7162 = vmatmul.mubr.bf16.gmra.mxu0 %v1410
    %v7163 = vpop.f32.mrf.mxu0
    %v7164 = vadd.f32 %v6811, %v7163
    %v7165 = vpop.f32.mrf.mxu0
    %v7166 = vadd.f32 %v6813, %v7165
    %v7167 = vpop.f32.mrf.mxu0
    %v7168 = vadd.f32 %v6815, %v7167
    %v7169 = vpop.f32.mrf.mxu0
    %v7170 = vadd.f32 %v6817, %v7169
    %7171 = vmatprep.mubr.bf16.mxu0 %v1418
    %7172 = vmatmul.mubr.bf16.gmra.mxu0 %v1417
    %v7173 = vpop.f32.mrf.mxu0
    %v7174 = vadd.f32 %v6821, %v7173
    %v7175 = vpop.f32.mrf.mxu0
    %v7176 = vadd.f32 %v6823, %v7175
    %v7177 = vpop.f32.mrf.mxu0
    %v7178 = vadd.f32 %v6825, %v7177
    %v7179 = vpop.f32.mrf.mxu0
    %v7180 = vadd.f32 %v6827, %v7179
    %7181 = vmatprep.mubr.bf16.mxu0 %v1425
    %7182 = vmatmul.mubr.bf16.gmra.mxu0 %v1424
    %v7183 = vpop.f32.mrf.mxu0
    %v7184 = vadd.f32 %v6831, %v7183
    %v7185 = vpop.f32.mrf.mxu0
    %v7186 = vadd.f32 %v6833, %v7185
    %v7187 = vpop.f32.mrf.mxu0
    %v7188 = vadd.f32 %v6835, %v7187
    %v7189 = vpop.f32.mrf.mxu0
    %v7190 = vadd.f32 %v6837, %v7189
    %7191 = vmatprep.mubr.bf16.mxu0 %v1432
    %7192 = vmatmul.mubr.bf16.gmra.mxu0 %v1431
    %v7193 = vpop.f32.mrf.mxu0
    %v7194 = vadd.f32 %v6841, %v7193
    %v7195 = vpop.f32.mrf.mxu0
    %v7196 = vadd.f32 %v6843, %v7195
    %v7197 = vpop.f32.mrf.mxu0
    %v7198 = vadd.f32 %v6845, %v7197
    %v7199 = vpop.f32.mrf.mxu0
    %v7200 = vadd.f32 %v6847, %v7199
    %7201 = vdwg.mxu0
    %7202 = vmatprep.subr.bf16.mxu0 0
    %7203 = vmatpush1.bf16.msra.mxu0 0
    %7204 = vmatprep.subr.bf16.mxu0 0
    %7205 = vmatpush1.bf16.msra.mxu0 0
    %7206 = vmatprep.subr.bf16.mxu0 0
    %7207 = vmatpush1.bf16.msra.mxu0 0
    %7208 = vmatprep.subr.bf16.mxu0 0
    %7209 = vmatpush1.bf16.msra.mxu0 0
    %7210 = vmatprep.subr.bf16.mxu0 %v6038
    %7211 = vmatpush1.bf16.msra.mxu0 %v6037
    %7212 = vmatprep.subr.bf16.mxu0 %v6036
    %7213 = vmatpush1.bf16.msra.mxu0 %v6035
    %7214 = vmatprep.subr.bf16.mxu0 %v6034
    %7215 = vmatpush1.bf16.msra.mxu0 %v6033
    %7216 = vmatprep.subr.bf16.mxu0 %v6032
    %7217 = vmatpush1.bf16.msra.mxu0 %v6031
    %7218 = vmatprep.subr.bf16.mxu0 0
    %7219 = vmatpush2.bf16.msra.mxu0 0
    %7220 = vmatprep.subr.bf16.mxu0 0
    %7221 = vmatpush2.bf16.msra.mxu0 0
    %7222 = vmatprep.subr.bf16.mxu0 0
    %7223 = vmatpush2.bf16.msra.mxu0 0
    %7224 = vmatprep.subr.bf16.mxu0 0
    %7225 = vmatpush2.bf16.msra.mxu0 0
    %7226 = vmatprep.subr.bf16.mxu0 0
    %7227 = vmatpush2.bf16.msra.mxu0 0
    %7228 = vmatprep.subr.bf16.mxu0 0
    %7229 = vmatpush2.bf16.msra.mxu0 0
    %7230 = vmatprep.subr.bf16.mxu0 0
    %7231 = vmatpush2.bf16.msra.mxu0 0
    %7232 = vmatprep.subr.bf16.mxu0 0
    %7233 = vmatpush2.bf16.msra.mxu0 0
    %7234 = vmatprep.mubr.bf16.mxu0 0
    %7235 = vmatmul.mubr.bf16.gmra.mxu0 %v2460
    %v7236 = vpop.f32.mrf.mxu0
    %v7237 = vadd.f32 %v6884, %v7236
    %v7238 = vpop.f32.mrf.mxu0
    %v7239 = vadd.f32 %v6886, %v7238
    %v7240 = vpop.f32.mrf.mxu0
    %v7241 = vadd.f32 %v6888, %v7240
    %v7242 = vpop.f32.mrf.mxu0
    %v7243 = vadd.f32 %v6890, %v7242
    %7244 = vmatprep.mubr.bf16.mxu0 0
    %7245 = vmatmul.mubr.bf16.gmra.mxu0 %v2463
    %v7246 = vpop.f32.mrf.mxu0
    %v7247 = vadd.f32 %v6894, %v7246
    %v7248 = vpop.f32.mrf.mxu0
    %v7249 = vadd.f32 %v6896, %v7248
    %v7250 = vpop.f32.mrf.mxu0
    %v7251 = vadd.f32 %v6898, %v7250
    %v7252 = vpop.f32.mrf.mxu0
    %v7253 = vadd.f32 %v6900, %v7252
    %7254 = vmatprep.mubr.bf16.mxu0 0
    %7255 = vmatmul.mubr.bf16.gmra.mxu0 %v2466
    %v7256 = vpop.f32.mrf.mxu0
    %v7257 = vadd.f32 %v6904, %v7256
    %v7258 = vpop.f32.mrf.mxu0
    %v7259 = vadd.f32 %v6906, %v7258
    %v7260 = vpop.f32.mrf.mxu0
    %v7261 = vadd.f32 %v6908, %v7260
    %v7262 = vpop.f32.mrf.mxu0
    %v7263 = vadd.f32 %v6910, %v7262
    %7264 = vmatprep.mubr.bf16.mxu0 0
    %7265 = vmatmul.mubr.bf16.gmra.mxu0 %v2469
    %v7266 = vpop.f32.mrf.mxu0
    %v7267 = vadd.f32 %v6914, %v7266
    %v7268 = vpop.f32.mrf.mxu0
    %v7269 = vadd.f32 %v6916, %v7268
    %v7270 = vpop.f32.mrf.mxu0
    %v7271 = vadd.f32 %v6918, %v7270
    %v7272 = vpop.f32.mrf.mxu0
    %v7273 = vadd.f32 %v6920, %v7272
    %7274 = vmatprep.mubr.bf16.mxu0 0
    %7275 = vmatmul.mubr.bf16.gmra.mxu0 %v2472
    %v7276 = vpop.f32.mrf.mxu0
    %v7277 = vadd.f32 %v6924, %v7276
    %v7278 = vpop.f32.mrf.mxu0
    %v7279 = vadd.f32 %v6926, %v7278
    %v7280 = vpop.f32.mrf.mxu0
    %v7281 = vadd.f32 %v6928, %v7280
    %v7282 = vpop.f32.mrf.mxu0
    %v7283 = vadd.f32 %v6930, %v7282
    %7284 = vmatprep.mubr.bf16.mxu0 0
    %7285 = vmatmul.mubr.bf16.gmra.mxu0 %v2475
    %v7286 = vpop.f32.mrf.mxu0
    %v7287 = vadd.f32 %v6934, %v7286
    %v7288 = vpop.f32.mrf.mxu0
    %v7289 = vadd.f32 %v6936, %v7288
    %v7290 = vpop.f32.mrf.mxu0
    %v7291 = vadd.f32 %v6938, %v7290
    %v7292 = vpop.f32.mrf.mxu0
    %v7293 = vadd.f32 %v6940, %v7292
    %7294 = vmatprep.mubr.bf16.mxu0 0
    %7295 = vmatmul.mubr.bf16.gmra.mxu0 %v2478
    %v7296 = vpop.f32.mrf.mxu0
    %v7297 = vadd.f32 %v6944, %v7296
    %v7298 = vpop.f32.mrf.mxu0
    %v7299 = vadd.f32 %v6946, %v7298
    %v7300 = vpop.f32.mrf.mxu0
    %v7301 = vadd.f32 %v6948, %v7300
    %v7302 = vpop.f32.mrf.mxu0
    %v7303 = vadd.f32 %v6950, %v7302
    %7304 = vmatprep.mubr.bf16.mxu0 0
    %7305 = vmatmul.mubr.bf16.gmra.mxu0 %v2481
    %v7306 = vpop.f32.mrf.mxu0
    %v7307 = vadd.f32 %v6954, %v7306
    %v7308 = vpop.f32.mrf.mxu0
    %v7309 = vadd.f32 %v6956, %v7308
    %v7310 = vpop.f32.mrf.mxu0
    %v7311 = vadd.f32 %v6958, %v7310
    %v7312 = vpop.f32.mrf.mxu0
    %v7313 = vadd.f32 %v6960, %v7312
    %7314 = vmatprep.mubr.bf16.mxu0 0
    %7315 = vmatmul.mubr.bf16.gmra.mxu0 %v2484
    %v7316 = vpop.f32.mrf.mxu0
    %v7317 = vadd.f32 %v6964, %v7316
    %v7318 = vpop.f32.mrf.mxu0
    %v7319 = vadd.f32 %v6966, %v7318
    %v7320 = vpop.f32.mrf.mxu0
    %v7321 = vadd.f32 %v6968, %v7320
    %v7322 = vpop.f32.mrf.mxu0
    %v7323 = vadd.f32 %v6970, %v7322
    %7324 = vmatprep.mubr.bf16.mxu0 0
    %7325 = vmatmul.mubr.bf16.gmra.mxu0 %v2487
    %v7326 = vpop.f32.mrf.mxu0
    %v7327 = vadd.f32 %v6974, %v7326
    %v7328 = vpop.f32.mrf.mxu0
    %v7329 = vadd.f32 %v6976, %v7328
    %v7330 = vpop.f32.mrf.mxu0
    %v7331 = vadd.f32 %v6978, %v7330
    %v7332 = vpop.f32.mrf.mxu0
    %v7333 = vadd.f32 %v6980, %v7332
    %7334 = vmatprep.mubr.bf16.mxu0 0
    %7335 = vmatmul.mubr.bf16.gmra.mxu0 %v2490
    %v7336 = vpop.f32.mrf.mxu0
    %v7337 = vadd.f32 %v6984, %v7336
    %v7338 = vpop.f32.mrf.mxu0
    %v7339 = vadd.f32 %v6986, %v7338
    %v7340 = vpop.f32.mrf.mxu0
    %v7341 = vadd.f32 %v6988, %v7340
    %v7342 = vpop.f32.mrf.mxu0
    %v7343 = vadd.f32 %v6990, %v7342
    %7344 = vmatprep.mubr.bf16.mxu0 0
    %7345 = vmatmul.mubr.bf16.gmra.mxu0 %v2493
    %v7346 = vpop.f32.mrf.mxu0
    %v7347 = vadd.f32 %v6994, %v7346
    %v7348 = vpop.f32.mrf.mxu0
    %v7349 = vadd.f32 %v6996, %v7348
    %v7350 = vpop.f32.mrf.mxu0
    %v7351 = vadd.f32 %v6998, %v7350
    %v7352 = vpop.f32.mrf.mxu0
    %v7353 = vadd.f32 %v7000, %v7352
    %7354 = vmatprep.mubr.bf16.mxu0 0
    %7355 = vmatmul.mubr.bf16.gmra.mxu0 %v2496
    %v7356 = vpop.f32.mrf.mxu0
    %v7357 = vadd.f32 %v7004, %v7356
    %v7358 = vpop.f32.mrf.mxu0
    %v7359 = vadd.f32 %v7006, %v7358
    %v7360 = vpop.f32.mrf.mxu0
    %v7361 = vadd.f32 %v7008, %v7360
    %v7362 = vpop.f32.mrf.mxu0
    %v7363 = vadd.f32 %v7010, %v7362
    %7364 = vmatprep.mubr.bf16.mxu0 0
    %7365 = vmatmul.mubr.bf16.gmra.mxu0 %v2499
    %v7366 = vpop.f32.mrf.mxu0
    %v7367 = vadd.f32 %v7014, %v7366
    %v7368 = vpop.f32.mrf.mxu0
    %v7369 = vadd.f32 %v7016, %v7368
    %v7370 = vpop.f32.mrf.mxu0
    %v7371 = vadd.f32 %v7018, %v7370
    %v7372 = vpop.f32.mrf.mxu0
    %v7373 = vadd.f32 %v7020, %v7372
    %7374 = vmatprep.mubr.bf16.mxu0 0
    %7375 = vmatmul.mubr.bf16.gmra.mxu0 %v2502
    %v7376 = vpop.f32.mrf.mxu0
    %v7377 = vadd.f32 %v7024, %v7376
    %v7378 = vpop.f32.mrf.mxu0
    %v7379 = vadd.f32 %v7026, %v7378
    %v7380 = vpop.f32.mrf.mxu0
    %v7381 = vadd.f32 %v7028, %v7380
    %v7382 = vpop.f32.mrf.mxu0
    %v7383 = vadd.f32 %v7030, %v7382
    %7384 = vmatprep.mubr.bf16.mxu0 0
    %7385 = vmatmul.mubr.bf16.gmra.mxu0 %v2505
    %v7386 = vpop.f32.mrf.mxu0
    %v7387 = vadd.f32 %v7034, %v7386
    %v7388 = vpop.f32.mrf.mxu0
    %v7389 = vadd.f32 %v7036, %v7388
    %v7390 = vpop.f32.mrf.mxu0
    %v7391 = vadd.f32 %v7038, %v7390
    %v7392 = vpop.f32.mrf.mxu0
    %v7393 = vadd.f32 %v7040, %v7392
    %7394 = vmatprep.mubr.bf16.mxu0 0
    %7395 = vmatmul.mubr.bf16.gmra.mxu0 %v2508
    %v7396 = vpop.f32.mrf.mxu0
    %v7397 = vadd.f32 %v7044, %v7396
    %v7398 = vpop.f32.mrf.mxu0
    %v7399 = vadd.f32 %v7046, %v7398
    %v7400 = vpop.f32.mrf.mxu0
    %v7401 = vadd.f32 %v7048, %v7400
    %v7402 = vpop.f32.mrf.mxu0
    %v7403 = vadd.f32 %v7050, %v7402
    %7404 = vmatprep.mubr.bf16.mxu0 0
    %7405 = vmatmul.mubr.bf16.gmra.mxu0 %v2511
    %v7406 = vpop.f32.mrf.mxu0
    %v7407 = vadd.f32 %v7054, %v7406
    %v7408 = vpop.f32.mrf.mxu0
    %v7409 = vadd.f32 %v7056, %v7408
    %v7410 = vpop.f32.mrf.mxu0
    %v7411 = vadd.f32 %v7058, %v7410
    %v7412 = vpop.f32.mrf.mxu0
    %v7413 = vadd.f32 %v7060, %v7412
    %7414 = vmatprep.mubr.bf16.mxu0 0
    %7415 = vmatmul.mubr.bf16.gmra.mxu0 %v2514
    %v7416 = vpop.f32.mrf.mxu0
    %v7417 = vadd.f32 %v7064, %v7416
    %v7418 = vpop.f32.mrf.mxu0
    %v7419 = vadd.f32 %v7066, %v7418
    %v7420 = vpop.f32.mrf.mxu0
    %v7421 = vadd.f32 %v7068, %v7420
    %v7422 = vpop.f32.mrf.mxu0
    %v7423 = vadd.f32 %v7070, %v7422
    %7424 = vmatprep.mubr.bf16.mxu0 0
    %7425 = vmatmul.mubr.bf16.gmra.mxu0 %v2517
    %v7426 = vpop.f32.mrf.mxu0
    %v7427 = vadd.f32 %v7074, %v7426
    %v7428 = vpop.f32.mrf.mxu0
    %v7429 = vadd.f32 %v7076, %v7428
    %v7430 = vpop.f32.mrf.mxu0
    %v7431 = vadd.f32 %v7078, %v7430
    %v7432 = vpop.f32.mrf.mxu0
    %v7433 = vadd.f32 %v7080, %v7432
    %7434 = vmatprep.mubr.bf16.mxu0 0
    %7435 = vmatmul.mubr.bf16.gmra.mxu0 %v2520
    %v7436 = vpop.f32.mrf.mxu0
    %v7437 = vadd.f32 %v7084, %v7436
    %v7438 = vpop.f32.mrf.mxu0
    %v7439 = vadd.f32 %v7086, %v7438
    %v7440 = vpop.f32.mrf.mxu0
    %v7441 = vadd.f32 %v7088, %v7440
    %v7442 = vpop.f32.mrf.mxu0
    %v7443 = vadd.f32 %v7090, %v7442
    %7444 = vmatprep.mubr.bf16.mxu0 0
    %7445 = vmatmul.mubr.bf16.gmra.mxu0 %v2523
    %v7446 = vpop.f32.mrf.mxu0
    %v7447 = vadd.f32 %v7094, %v7446
    %v7448 = vpop.f32.mrf.mxu0
    %v7449 = vadd.f32 %v7096, %v7448
    %v7450 = vpop.f32.mrf.mxu0
    %v7451 = vadd.f32 %v7098, %v7450
    %v7452 = vpop.f32.mrf.mxu0
    %v7453 = vadd.f32 %v7100, %v7452
    %7454 = vmatprep.mubr.bf16.mxu0 0
    %7455 = vmatmul.mubr.bf16.gmra.mxu0 %v2526
    %v7456 = vpop.f32.mrf.mxu0
    %v7457 = vadd.f32 %v7104, %v7456
    %v7458 = vpop.f32.mrf.mxu0
    %v7459 = vadd.f32 %v7106, %v7458
    %v7460 = vpop.f32.mrf.mxu0
    %v7461 = vadd.f32 %v7108, %v7460
    %v7462 = vpop.f32.mrf.mxu0
    %v7463 = vadd.f32 %v7110, %v7462
    %7464 = vmatprep.mubr.bf16.mxu0 0
    %7465 = vmatmul.mubr.bf16.gmra.mxu0 %v2529
    %v7466 = vpop.f32.mrf.mxu0
    %v7467 = vadd.f32 %v7114, %v7466
    %v7468 = vpop.f32.mrf.mxu0
    %v7469 = vadd.f32 %v7116, %v7468
    %v7470 = vpop.f32.mrf.mxu0
    %v7471 = vadd.f32 %v7118, %v7470
    %v7472 = vpop.f32.mrf.mxu0
    %v7473 = vadd.f32 %v7120, %v7472
    %7474 = vmatprep.mubr.bf16.mxu0 0
    %7475 = vmatmul.mubr.bf16.gmra.mxu0 %v2532
    %v7476 = vpop.f32.mrf.mxu0
    %v7477 = vadd.f32 %v7124, %v7476
    %v7478 = vpop.f32.mrf.mxu0
    %v7479 = vadd.f32 %v7126, %v7478
    %v7480 = vpop.f32.mrf.mxu0
    %v7481 = vadd.f32 %v7128, %v7480
    %v7482 = vpop.f32.mrf.mxu0
    %v7483 = vadd.f32 %v7130, %v7482
    %7484 = vmatprep.mubr.bf16.mxu0 0
    %7485 = vmatmul.mubr.bf16.gmra.mxu0 %v2535
    %v7486 = vpop.f32.mrf.mxu0
    %v7487 = vadd.f32 %v7134, %v7486
    %v7488 = vpop.f32.mrf.mxu0
    %v7489 = vadd.f32 %v7136, %v7488
    %v7490 = vpop.f32.mrf.mxu0
    %v7491 = vadd.f32 %v7138, %v7490
    %v7492 = vpop.f32.mrf.mxu0
    %v7493 = vadd.f32 %v7140, %v7492
    %7494 = vmatprep.mubr.bf16.mxu0 0
    %7495 = vmatmul.mubr.bf16.gmra.mxu0 %v2538
    %v7496 = vpop.f32.mrf.mxu0
    %v7497 = vadd.f32 %v7144, %v7496
    %v7498 = vpop.f32.mrf.mxu0
    %v7499 = vadd.f32 %v7146, %v7498
    %v7500 = vpop.f32.mrf.mxu0
    %v7501 = vadd.f32 %v7148, %v7500
    %v7502 = vpop.f32.mrf.mxu0
    %v7503 = vadd.f32 %v7150, %v7502
    %7504 = vmatprep.mubr.bf16.mxu0 0
    %7505 = vmatmul.mubr.bf16.gmra.mxu0 %v2541
    %v7506 = vpop.f32.mrf.mxu0
    %v7507 = vadd.f32 %v7154, %v7506
    %v7508 = vpop.f32.mrf.mxu0
    %v7509 = vadd.f32 %v7156, %v7508
    %v7510 = vpop.f32.mrf.mxu0
    %v7511 = vadd.f32 %v7158, %v7510
    %v7512 = vpop.f32.mrf.mxu0
    %v7513 = vadd.f32 %v7160, %v7512
    %7514 = vmatprep.mubr.bf16.mxu0 0
    %7515 = vmatmul.mubr.bf16.gmra.mxu0 %v2544
    %v7516 = vpop.f32.mrf.mxu0
    %v7517 = vadd.f32 %v7164, %v7516
    %v7518 = vpop.f32.mrf.mxu0
    %v7519 = vadd.f32 %v7166, %v7518
    %v7520 = vpop.f32.mrf.mxu0
    %v7521 = vadd.f32 %v7168, %v7520
    %v7522 = vpop.f32.mrf.mxu0
    %v7523 = vadd.f32 %v7170, %v7522
    %7524 = vmatprep.mubr.bf16.mxu0 0
    %7525 = vmatmul.mubr.bf16.gmra.mxu0 %v2547
    %v7526 = vpop.f32.mrf.mxu0
    %v7527 = vadd.f32 %v7174, %v7526
    %v7528 = vpop.f32.mrf.mxu0
    %v7529 = vadd.f32 %v7176, %v7528
    %v7530 = vpop.f32.mrf.mxu0
    %v7531 = vadd.f32 %v7178, %v7530
    %v7532 = vpop.f32.mrf.mxu0
    %v7533 = vadd.f32 %v7180, %v7532
    %7534 = vmatprep.mubr.bf16.mxu0 0
    %7535 = vmatmul.mubr.bf16.gmra.mxu0 %v2550
    %v7536 = vpop.f32.mrf.mxu0
    %v7537 = vadd.f32 %v7184, %v7536
    %v7538 = vpop.f32.mrf.mxu0
    %v7539 = vadd.f32 %v7186, %v7538
    %v7540 = vpop.f32.mrf.mxu0
    %v7541 = vadd.f32 %v7188, %v7540
    %v7542 = vpop.f32.mrf.mxu0
    %v7543 = vadd.f32 %v7190, %v7542
    %7544 = vmatprep.mubr.bf16.mxu0 0
    %7545 = vmatmul.mubr.bf16.gmra.mxu0 %v2553
    %v7546 = vpop.f32.mrf.mxu0
    %v7547 = vadd.f32 %v7194, %v7546
    %v7548 = vpop.f32.mrf.mxu0
    %v7549 = vadd.f32 %v7196, %v7548
    %v7550 = vpop.f32.mrf.mxu0
    %v7551 = vadd.f32 %v7198, %v7550
    %v7552 = vpop.f32.mrf.mxu0
    %v7553 = vadd.f32 %v7200, %v7552
    %7554 = vdwg.mxu0
    %v7555 = vmax.f32 %v7237, 0.0
    %v7556 = vmax.f32 %v7239, 0.0
    %v7557 = vmax.f32 %v7241, 0.0
    %v7558 = vmax.f32 %v7243, 0.0
    %v7559 = vmax.f32 %v7247, 0.0
    %v7560 = vmax.f32 %v7249, 0.0
    %v7561 = vmax.f32 %v7251, 0.0
    %v7562 = vmax.f32 %v7253, 0.0
    %v7563 = vmax.f32 %v7257, 0.0
    %v7564 = vmax.f32 %v7259, 0.0
    %v7565 = vmax.f32 %v7261, 0.0
    %v7566 = vmax.f32 %v7263, 0.0
    %v7567 = vmax.f32 %v7267, 0.0
    %v7568 = vmax.f32 %v7269, 0.0
    %v7569 = vmax.f32 %v7271, 0.0
    %v7570 = vmax.f32 %v7273, 0.0
    %v7571 = vmax.f32 %v7277, 0.0
    %v7572 = vmax.f32 %v7279, 0.0
    %v7573 = vmax.f32 %v7281, 0.0
    %v7574 = vmax.f32 %v7283, 0.0
    %v7575 = vmax.f32 %v7287, 0.0
    %v7576 = vmax.f32 %v7289, 0.0
    %v7577 = vmax.f32 %v7291, 0.0
    %v7578 = vmax.f32 %v7293, 0.0
    %v7579 = vmax.f32 %v7297, 0.0
    %v7580 = vmax.f32 %v7299, 0.0
    %v7581 = vmax.f32 %v7301, 0.0
    %v7582 = vmax.f32 %v7303, 0.0
    %v7583 = vmax.f32 %v7307, 0.0
    %v7584 = vmax.f32 %v7309, 0.0
    %v7585 = vmax.f32 %v7311, 0.0
    %v7586 = vmax.f32 %v7313, 0.0
    %v7587 = vmax.f32 %v7317, 0.0
    %v7588 = vmax.f32 %v7319, 0.0
    %v7589 = vmax.f32 %v7321, 0.0
    %v7590 = vmax.f32 %v7323, 0.0
    %v7591 = vmax.f32 %v7327, 0.0
    %v7592 = vmax.f32 %v7329, 0.0
    %v7593 = vmax.f32 %v7331, 0.0
    %v7594 = vmax.f32 %v7333, 0.0
    %v7595 = vmax.f32 %v7337, 0.0
    %v7596 = vmax.f32 %v7339, 0.0
    %v7597 = vmax.f32 %v7341, 0.0
    %v7598 = vmax.f32 %v7343, 0.0
    %v7599 = vmax.f32 %v7347, 0.0
    %v7600 = vmax.f32 %v7349, 0.0
    %v7601 = vmax.f32 %v7351, 0.0
    %v7602 = vmax.f32 %v7353, 0.0
    %v7603 = vmax.f32 %v7357, 0.0
    %v7604 = vmax.f32 %v7359, 0.0
    %v7605 = vmax.f32 %v7361, 0.0
    %v7606 = vmax.f32 %v7363, 0.0
    %v7607 = vmax.f32 %v7367, 0.0
    %v7608 = vmax.f32 %v7369, 0.0
    %v7609 = vmax.f32 %v7371, 0.0
    %v7610 = vmax.f32 %v7373, 0.0
    %v7611 = vmax.f32 %v7377, 0.0
    %v7612 = vmax.f32 %v7379, 0.0
    %v7613 = vmax.f32 %v7381, 0.0
    %v7614 = vmax.f32 %v7383, 0.0
    %v7615 = vmax.f32 %v7387, 0.0
    %v7616 = vmax.f32 %v7389, 0.0
    %v7617 = vmax.f32 %v7391, 0.0
    %v7618 = vmax.f32 %v7393, 0.0
    %v7619 = vmax.f32 %v7397, 0.0
    %v7620 = vmax.f32 %v7399, 0.0
    %v7621 = vmax.f32 %v7401, 0.0
    %v7622 = vmax.f32 %v7403, 0.0
    %v7623 = vmax.f32 %v7407, 0.0
    %v7624 = vmax.f32 %v7409, 0.0
    %v7625 = vmax.f32 %v7411, 0.0
    %v7626 = vmax.f32 %v7413, 0.0
    %v7627 = vmax.f32 %v7417, 0.0
    %v7628 = vmax.f32 %v7419, 0.0
    %v7629 = vmax.f32 %v7421, 0.0
    %v7630 = vmax.f32 %v7423, 0.0
    %v7631 = vmax.f32 %v7427, 0.0
    %v7632 = vmax.f32 %v7429, 0.0
    %v7633 = vmax.f32 %v7431, 0.0
    %v7634 = vmax.f32 %v7433, 0.0
    %v7635 = vmax.f32 %v7437, 0.0
    %v7636 = vmax.f32 %v7439, 0.0
    %v7637 = vmax.f32 %v7441, 0.0
    %v7638 = vmax.f32 %v7443, 0.0
    %v7639 = vmax.f32 %v7447, 0.0
    %v7640 = vmax.f32 %v7449, 0.0
    %v7641 = vmax.f32 %v7451, 0.0
    %v7642 = vmax.f32 %v7453, 0.0
    %v7643 = vmax.f32 %v7457, 0.0
    %v7644 = vmax.f32 %v7459, 0.0
    %v7645 = vmax.f32 %v7461, 0.0
    %v7646 = vmax.f32 %v7463, 0.0
    %v7647 = vmax.f32 %v7467, 0.0
    %v7648 = vmax.f32 %v7469, 0.0
    %v7649 = vmax.f32 %v7471, 0.0
    %v7650 = vmax.f32 %v7473, 0.0
    %v7651 = vmax.f32 %v7477, 0.0
    %v7652 = vmax.f32 %v7479, 0.0
    %v7653 = vmax.f32 %v7481, 0.0
    %v7654 = vmax.f32 %v7483, 0.0
    %v7655 = vmax.f32 %v7487, 0.0
    %v7656 = vmax.f32 %v7489, 0.0
    %v7657 = vmax.f32 %v7491, 0.0
    %v7658 = vmax.f32 %v7493, 0.0
    %v7659 = vmax.f32 %v7497, 0.0
    %v7660 = vmax.f32 %v7499, 0.0
    %v7661 = vmax.f32 %v7501, 0.0
    %v7662 = vmax.f32 %v7503, 0.0
    %v7663 = vmax.f32 %v7507, 0.0
    %v7664 = vmax.f32 %v7509, 0.0
    %v7665 = vmax.f32 %v7511, 0.0
    %v7666 = vmax.f32 %v7513, 0.0
    %v7667 = vmax.f32 %v7517, 0.0
    %v7668 = vmax.f32 %v7519, 0.0
    %v7669 = vmax.f32 %v7521, 0.0
    %v7670 = vmax.f32 %v7523, 0.0
    %v7671 = vmax.f32 %v7527, 0.0
    %v7672 = vmax.f32 %v7529, 0.0
    %v7673 = vmax.f32 %v7531, 0.0
    %v7674 = vmax.f32 %v7533, 0.0
    %v7675 = vmax.f32 %v7537, 0.0
    %v7676 = vmax.f32 %v7539, 0.0
    %v7677 = vmax.f32 %v7541, 0.0
    %v7678 = vmax.f32 %v7543, 0.0
    %v7679 = vmax.f32 %v7547, 0.0
    %v7680 = vmax.f32 %v7549, 0.0
    %v7681 = vmax.f32 %v7551, 0.0
    %v7682 = vmax.f32 %v7553, 0.0
    %v7683 = vpack.c.bf16 %v7557, %v7555
    %v7684 = vpack.c.bf16 %v7558, %v7556
    %v7685 = vpack.c.bf16 %v7561, %v7559
    %v7686 = vpack.c.bf16 %v7562, %v7560
    %v7687 = vpack.c.bf16 %v7565, %v7563
    %v7688 = vpack.c.bf16 %v7566, %v7564
    %v7689 = vpack.c.bf16 %v7569, %v7567
    %v7690 = vpack.c.bf16 %v7570, %v7568
    %v7691 = vpack.c.bf16 %v7573, %v7571
    %v7692 = vpack.c.bf16 %v7574, %v7572
    %v7693 = vpack.c.bf16 %v7577, %v7575
    %v7694 = vpack.c.bf16 %v7578, %v7576
    %v7695 = vpack.c.bf16 %v7581, %v7579
    %v7696 = vpack.c.bf16 %v7582, %v7580
    %v7697 = vpack.c.bf16 %v7585, %v7583
    %v7698 = vpack.c.bf16 %v7586, %v7584
    %v7699 = vpack.c.bf16 %v7589, %v7587
    %v7700 = vpack.c.bf16 %v7590, %v7588
    %v7701 = vpack.c.bf16 %v7593, %v7591
    %v7702 = vpack.c.bf16 %v7594, %v7592
    %v7703 = vpack.c.bf16 %v7597, %v7595
    %v7704 = vpack.c.bf16 %v7598, %v7596
    %v7705 = vpack.c.bf16 %v7601, %v7599
    %v7706 = vpack.c.bf16 %v7602, %v7600
    %v7707 = vpack.c.bf16 %v7605, %v7603
    %v7708 = vpack.c.bf16 %v7606, %v7604
    %v7709 = vpack.c.bf16 %v7609, %v7607
    %v7710 = vpack.c.bf16 %v7610, %v7608
    %v7711 = vpack.c.bf16 %v7613, %v7611
    %v7712 = vpack.c.bf16 %v7614, %v7612
    %v7713 = vpack.c.bf16 %v7617, %v7615
    %v7714 = vpack.c.bf16 %v7618, %v7616
    %v7715 = vpack.c.bf16 %v7621, %v7619
    %v7716 = vpack.c.bf16 %v7622, %v7620
    %v7717 = vpack.c.bf16 %v7625, %v7623
    %v7718 = vpack.c.bf16 %v7626, %v7624
    %v7719 = vpack.c.bf16 %v7629, %v7627
    %v7720 = vpack.c.bf16 %v7630, %v7628
    %v7721 = vpack.c.bf16 %v7633, %v7631
    %v7722 = vpack.c.bf16 %v7634, %v7632
    %v7723 = vpack.c.bf16 %v7637, %v7635
    %v7724 = vpack.c.bf16 %v7638, %v7636
    %v7725 = vpack.c.bf16 %v7641, %v7639
    %v7726 = vpack.c.bf16 %v7642, %v7640
    %v7727 = vpack.c.bf16 %v7645, %v7643
    %v7728 = vpack.c.bf16 %v7646, %v7644
    %v7729 = vpack.c.bf16 %v7649, %v7647
    %v7730 = vpack.c.bf16 %v7650, %v7648
    %v7731 = vpack.c.bf16 %v7653, %v7651
    %v7732 = vpack.c.bf16 %v7654, %v7652
    %v7733 = vpack.c.bf16 %v7657, %v7655
    %v7734 = vpack.c.bf16 %v7658, %v7656
    %v7735 = vpack.c.bf16 %v7661, %v7659
    %v7736 = vpack.c.bf16 %v7662, %v7660
    %v7737 = vpack.c.bf16 %v7665, %v7663
    %v7738 = vpack.c.bf16 %v7666, %v7664
    %v7739 = vpack.c.bf16 %v7669, %v7667
    %v7740 = vpack.c.bf16 %v7670, %v7668
    %v7741 = vpack.c.bf16 %v7673, %v7671
    %v7742 = vpack.c.bf16 %v7674, %v7672
    %v7743 = vpack.c.bf16 %v7677, %v7675
    %v7744 = vpack.c.bf16 %v7678, %v7676
    %v7745 = vpack.c.bf16 %v7681, %v7679
    %v7746 = vpack.c.bf16 %v7682, %v7680
    %v7811 = vunpack.c.l.b16 %v7683
    %v7812 = vunpack.c.l.b16 %v7684
    %v7813 = vunpack.c.h.b16 %v7683
    %v7814 = vunpack.c.h.b16 %v7684
    %v7815 = vunpack.c.l.b16 %v7685
    %v7816 = vunpack.c.l.b16 %v7686
    %v7817 = vunpack.c.h.b16 %v7685
    %v7818 = vunpack.c.h.b16 %v7686
    %v7819 = vunpack.c.l.b16 %v7687
    %v7820 = vunpack.c.l.b16 %v7688
    %v7821 = vunpack.c.h.b16 %v7687
    %v7822 = vunpack.c.h.b16 %v7688
    %v7823 = vunpack.c.l.b16 %v7689
    %v7824 = vunpack.c.l.b16 %v7690
    %v7825 = vunpack.c.h.b16 %v7689
    %v7826 = vunpack.c.h.b16 %v7690
    %v7827 = vunpack.c.l.b16 %v7691
    %v7828 = vunpack.c.l.b16 %v7692
    %v7829 = vunpack.c.h.b16 %v7691
    %v7830 = vunpack.c.h.b16 %v7692
    %v7831 = vunpack.c.l.b16 %v7693
    %v7832 = vunpack.c.l.b16 %v7694
    %v7833 = vunpack.c.h.b16 %v7693
    %v7834 = vunpack.c.h.b16 %v7694
    %v7835 = vunpack.c.l.b16 %v7695
    %v7836 = vunpack.c.l.b16 %v7696
    %v7837 = vunpack.c.h.b16 %v7695
    %v7838 = vunpack.c.h.b16 %v7696
    %v7839 = vunpack.c.l.b16 %v7697
    %v7840 = vunpack.c.l.b16 %v7698
    %v7841 = vunpack.c.h.b16 %v7697
    %v7842 = vunpack.c.h.b16 %v7698
    %v7843 = vunpack.c.l.b16 %v7699
    %v7844 = vunpack.c.l.b16 %v7700
    %v7845 = vunpack.c.h.b16 %v7699
    %v7846 = vunpack.c.h.b16 %v7700
    %v7847 = vunpack.c.l.b16 %v7701
    %v7848 = vunpack.c.l.b16 %v7702
    %v7849 = vunpack.c.h.b16 %v7701
    %v7850 = vunpack.c.h.b16 %v7702
    %v7851 = vunpack.c.l.b16 %v7703
    %v7852 = vunpack.c.l.b16 %v7704
    %v7853 = vunpack.c.h.b16 %v7703
    %v7854 = vunpack.c.h.b16 %v7704
    %v7855 = vunpack.c.l.b16 %v7705
    %v7856 = vunpack.c.l.b16 %v7706
    %v7857 = vunpack.c.h.b16 %v7705
    %v7858 = vunpack.c.h.b16 %v7706
    %v7859 = vunpack.c.l.b16 %v7707
    %v7860 = vunpack.c.l.b16 %v7708
    %v7861 = vunpack.c.h.b16 %v7707
    %v7862 = vunpack.c.h.b16 %v7708
    %v7863 = vunpack.c.l.b16 %v7709
    %v7864 = vunpack.c.l.b16 %v7710
    %v7865 = vunpack.c.h.b16 %v7709
    %v7866 = vunpack.c.h.b16 %v7710
    %v7867 = vunpack.c.l.b16 %v7711
    %v7868 = vunpack.c.l.b16 %v7712
    %v7869 = vunpack.c.h.b16 %v7711
    %v7870 = vunpack.c.h.b16 %v7712
    %v7871 = vunpack.c.l.b16 %v7713
    %v7872 = vunpack.c.l.b16 %v7714
    %v7873 = vunpack.c.h.b16 %v7713
    %v7874 = vunpack.c.h.b16 %v7714
    %v7875 = vunpack.c.l.b16 %v7715
    %v7876 = vunpack.c.l.b16 %v7716
    %v7877 = vunpack.c.h.b16 %v7715
    %v7878 = vunpack.c.h.b16 %v7716
    %v7879 = vunpack.c.l.b16 %v7717
    %v7880 = vunpack.c.l.b16 %v7718
    %v7881 = vunpack.c.h.b16 %v7717
    %v7882 = vunpack.c.h.b16 %v7718
    %v7883 = vunpack.c.l.b16 %v7719
    %v7884 = vunpack.c.l.b16 %v7720
    %v7885 = vunpack.c.h.b16 %v7719
    %v7886 = vunpack.c.h.b16 %v7720
    %v7887 = vunpack.c.l.b16 %v7721
    %v7888 = vunpack.c.l.b16 %v7722
    %v7889 = vunpack.c.h.b16 %v7721
    %v7890 = vunpack.c.h.b16 %v7722
    %v7891 = vunpack.c.l.b16 %v7723
    %v7892 = vunpack.c.l.b16 %v7724
    %v7893 = vunpack.c.h.b16 %v7723
    %v7894 = vunpack.c.h.b16 %v7724
    %v7895 = vunpack.c.l.b16 %v7725
    %v7896 = vunpack.c.l.b16 %v7726
    %v7897 = vunpack.c.h.b16 %v7725
    %v7898 = vunpack.c.h.b16 %v7726
    %v7899 = vunpack.c.l.b16 %v7727
    %v7900 = vunpack.c.l.b16 %v7728
    %v7901 = vunpack.c.h.b16 %v7727
    %v7902 = vunpack.c.h.b16 %v7728
    %v7903 = vunpack.c.l.b16 %v7729
    %v7904 = vunpack.c.l.b16 %v7730
    %v7905 = vunpack.c.h.b16 %v7729
    %v7906 = vunpack.c.h.b16 %v7730
    %v7907 = vunpack.c.l.b16 %v7731
    %v7908 = vunpack.c.l.b16 %v7732
    %v7909 = vunpack.c.h.b16 %v7731
    %v7910 = vunpack.c.h.b16 %v7732
    %v7911 = vunpack.c.l.b16 %v7733
    %v7912 = vunpack.c.l.b16 %v7734
    %v7913 = vunpack.c.h.b16 %v7733
    %v7914 = vunpack.c.h.b16 %v7734
    %v7915 = vunpack.c.l.b16 %v7735
    %v7916 = vunpack.c.l.b16 %v7736
    %v7917 = vunpack.c.h.b16 %v7735
    %v7918 = vunpack.c.h.b16 %v7736
    %v7919 = vunpack.c.l.b16 %v7737
    %v7920 = vunpack.c.l.b16 %v7738
    %v7921 = vunpack.c.h.b16 %v7737
    %v7922 = vunpack.c.h.b16 %v7738
    %v7923 = vunpack.c.l.b16 %v7739
    %v7924 = vunpack.c.l.b16 %v7740
    %v7925 = vunpack.c.h.b16 %v7739
    %v7926 = vunpack.c.h.b16 %v7740
    %v7927 = vunpack.c.l.b16 %v7741
    %v7928 = vunpack.c.l.b16 %v7742
    %v7929 = vunpack.c.h.b16 %v7741
    %v7930 = vunpack.c.h.b16 %v7742
    %v7931 = vunpack.c.l.b16 %v7743
    %v7932 = vunpack.c.l.b16 %v7744
    %v7933 = vunpack.c.h.b16 %v7743
    %v7934 = vunpack.c.h.b16 %v7744
    %v7935 = vunpack.c.l.b16 %v7745
    %v7936 = vunpack.c.l.b16 %v7746
    %v7937 = vunpack.c.h.b16 %v7745
    %v7938 = vunpack.c.h.b16 %v7746
    %v7939 = vpack.c.b16 %v7812, %v7811
    %v7940 = vpack.c.b16 %v7814, %v7813
    %v7941 = vpack.c.b16 %v7816, %v7815
    %v7942 = vpack.c.b16 %v7818, %v7817
    %v7943 = vpack.c.b16 %v7820, %v7819
    %v7944 = vpack.c.b16 %v7822, %v7821
    %v7945 = vpack.c.b16 %v7824, %v7823
    %v7946 = vpack.c.b16 %v7826, %v7825
    %v7947 = vpack.c.b16 %v7828, %v7827
    %v7948 = vpack.c.b16 %v7830, %v7829
    %v7949 = vpack.c.b16 %v7832, %v7831
    %v7950 = vpack.c.b16 %v7834, %v7833
    %v7951 = vpack.c.b16 %v7836, %v7835
    %v7952 = vpack.c.b16 %v7838, %v7837
    %v7953 = vpack.c.b16 %v7840, %v7839
    %v7954 = vpack.c.b16 %v7842, %v7841
    %v7955 = vpack.c.b16 %v7844, %v7843
    %v7956 = vpack.c.b16 %v7846, %v7845
    %v7957 = vpack.c.b16 %v7848, %v7847
    %v7958 = vpack.c.b16 %v7850, %v7849
    %v7959 = vpack.c.b16 %v7852, %v7851
    %v7960 = vpack.c.b16 %v7854, %v7853
    %v7961 = vpack.c.b16 %v7856, %v7855
    %v7962 = vpack.c.b16 %v7858, %v7857
    %v7963 = vpack.c.b16 %v7860, %v7859
    %v7964 = vpack.c.b16 %v7862, %v7861
    %v7965 = vpack.c.b16 %v7864, %v7863
    %v7966 = vpack.c.b16 %v7866, %v7865
    %v7967 = vpack.c.b16 %v7868, %v7867
    %v7968 = vpack.c.b16 %v7870, %v7869
    %v7969 = vpack.c.b16 %v7872, %v7871
    %v7970 = vpack.c.b16 %v7874, %v7873
    %v7971 = vpack.c.b16 %v7876, %v7875
    %v7972 = vpack.c.b16 %v7878, %v7877
    %v7973 = vpack.c.b16 %v7880, %v7879
    %v7974 = vpack.c.b16 %v7882, %v7881
    %v7975 = vpack.c.b16 %v7884, %v7883
    %v7976 = vpack.c.b16 %v7886, %v7885
    %v7977 = vpack.c.b16 %v7888, %v7887
    %v7978 = vpack.c.b16 %v7890, %v7889
    %v7979 = vpack.c.b16 %v7892, %v7891
    %v7980 = vpack.c.b16 %v7894, %v7893
    %v7981 = vpack.c.b16 %v7896, %v7895
    %v7982 = vpack.c.b16 %v7898, %v7897
    %v7983 = vpack.c.b16 %v7900, %v7899
    %v7984 = vpack.c.b16 %v7902, %v7901
    %v7985 = vpack.c.b16 %v7904, %v7903
    %v7986 = vpack.c.b16 %v7906, %v7905
    %v7987 = vpack.c.b16 %v7908, %v7907
    %v7988 = vpack.c.b16 %v7910, %v7909
    %v7989 = vpack.c.b16 %v7912, %v7911
    %v7990 = vpack.c.b16 %v7914, %v7913
    %v7991 = vpack.c.b16 %v7916, %v7915
    %v7992 = vpack.c.b16 %v7918, %v7917
    %v7993 = vpack.c.b16 %v7920, %v7919
    %v7994 = vpack.c.b16 %v7922, %v7921
    %v7995 = vpack.c.b16 %v7924, %v7923
    %v7996 = vpack.c.b16 %v7926, %v7925
    %v7997 = vpack.c.b16 %v7928, %v7927
    %v7998 = vpack.c.b16 %v7930, %v7929
    %v7999 = vpack.c.b16 %v7932, %v7931
    %v8000 = vpack.c.b16 %v7934, %v7933
    %v8001 = vpack.c.b16 %v7936, %v7935
    %v8002 = vpack.c.b16 %v7938, %v7937
    %8067 = vst [vmem:[#allocation4] sm:$0xff] %v7939
    %8068 = vst [vmem:[#allocation4 + $0x8] sm:$0xff] %v7940
    %8069 = vst [vmem:[#allocation4 + $0x10] sm:$0xff] %v7941
    %8070 = vst [vmem:[#allocation4 + $0x18] sm:$0xff] %v7942
    %8071 = vst [vmem:[#allocation4 + $0x20] sm:$0xff] %v7943
    %8072 = vst [vmem:[#allocation4 + $0x28] sm:$0xff] %v7944
    %8073 = vst [vmem:[#allocation4 + $0x30] sm:$0xff] %v7945
    %8074 = vst [vmem:[#allocation4 + $0x38] sm:$0xff] %v7946
    %8075 = vst [vmem:[#allocation4 + $0x40] sm:$0xff] %v7947
    %8076 = vst [vmem:[#allocation4 + $0x48] sm:$0xff] %v7948
    %8077 = vst [vmem:[#allocation4 + $0x50] sm:$0xff] %v7949
    %8078 = vst [vmem:[#allocation4 + $0x58] sm:$0xff] %v7950
    %8079 = vst [vmem:[#allocation4 + $0x60] sm:$0xff] %v7951
    %8080 = vst [vmem:[#allocation4 + $0x68] sm:$0xff] %v7952
    %8081 = vst [vmem:[#allocation4 + $0x70] sm:$0xff] %v7953
    %8082 = vst [vmem:[#allocation4 + $0x78] sm:$0xff] %v7954
    %8083 = vst [vmem:[#allocation4 + $0x80] sm:$0xff] %v7955
    %8084 = vst [vmem:[#allocation4 + $0x88] sm:$0xff] %v7956
    %8085 = vst [vmem:[#allocation4 + $0x90] sm:$0xff] %v7957
    %8086 = vst [vmem:[#allocation4 + $0x98] sm:$0xff] %v7958
    %8087 = vst [vmem:[#allocation4 + $0xa0] sm:$0xff] %v7959
    %8088 = vst [vmem:[#allocation4 + $0xa8] sm:$0xff] %v7960
    %8089 = vst [vmem:[#allocation4 + $0xb0] sm:$0xff] %v7961
    %8090 = vst [vmem:[#allocation4 + $0xb8] sm:$0xff] %v7962
    %8091 = vst [vmem:[#allocation4 + $0xc0] sm:$0xff] %v7963
    %8092 = vst [vmem:[#allocation4 + $0xc8] sm:$0xff] %v7964
    %8093 = vst [vmem:[#allocation4 + $0xd0] sm:$0xff] %v7965
    %8094 = vst [vmem:[#allocation4 + $0xd8] sm:$0xff] %v7966
    %8095 = vst [vmem:[#allocation4 + $0xe0] sm:$0xff] %v7967
    %8096 = vst [vmem:[#allocation4 + $0xe8] sm:$0xff] %v7968
    %8097 = vst [vmem:[#allocation4 + $0xf0] sm:$0xff] %v7969
    %8098 = vst [vmem:[#allocation4 + $0xf8] sm:$0xff] %v7970
    %8099 = vst [vmem:[#allocation4 + $0x100] sm:$0xff] %v7971
    %8100 = vst [vmem:[#allocation4 + $0x108] sm:$0xff] %v7972
    %8101 = vst [vmem:[#allocation4 + $0x110] sm:$0xff] %v7973
    %8102 = vst [vmem:[#allocation4 + $0x118] sm:$0xff] %v7974
    %8103 = vst [vmem:[#allocation4 + $0x120] sm:$0xff] %v7975
    %8104 = vst [vmem:[#allocation4 + $0x128] sm:$0xff] %v7976
    %8105 = vst [vmem:[#allocation4 + $0x130] sm:$0xff] %v7977
    %8106 = vst [vmem:[#allocation4 + $0x138] sm:$0xff] %v7978
    %8107 = vst [vmem:[#allocation4 + $0x140] sm:$0xff] %v7979
    %8108 = vst [vmem:[#allocation4 + $0x148] sm:$0xff] %v7980
    %8109 = vst [vmem:[#allocation4 + $0x150] sm:$0xff] %v7981
    %8110 = vst [vmem:[#allocation4 + $0x158] sm:$0xff] %v7982
    %8111 = vst [vmem:[#allocation4 + $0x160] sm:$0xff] %v7983
    %8112 = vst [vmem:[#allocation4 + $0x168] sm:$0xff] %v7984
    %8113 = vst [vmem:[#allocation4 + $0x170] sm:$0xff] %v7985
    %8114 = vst [vmem:[#allocation4 + $0x178] sm:$0xff] %v7986
    %8115 = vst [vmem:[#allocation4 + $0x180] sm:$0xff] %v7987
    %8116 = vst [vmem:[#allocation4 + $0x188] sm:$0xff] %v7988
    %8117 = vst [vmem:[#allocation4 + $0x190] sm:$0xff] %v7989
    %8118 = vst [vmem:[#allocation4 + $0x198] sm:$0xff] %v7990
    %8119 = vst [vmem:[#allocation4 + $0x1a0] sm:$0xff] %v7991
    %8120 = vst [vmem:[#allocation4 + $0x1a8] sm:$0xff] %v7992
    %8121 = vst [vmem:[#allocation4 + $0x1b0] sm:$0xff] %v7993
    %8122 = vst [vmem:[#allocation4 + $0x1b8] sm:$0xff] %v7994
    %8123 = vst [vmem:[#allocation4 + $0x1c0] sm:$0xff] %v7995
    %8124 = vst [vmem:[#allocation4 + $0x1c8] sm:$0xff] %v7996
    %8125 = vst [vmem:[#allocation4 + $0x1d0] sm:$0xff] %v7997
    %8126 = vst [vmem:[#allocation4 + $0x1d8] sm:$0xff] %v7998
    %8127 = vst [vmem:[#allocation4 + $0x1e0] sm:$0xff] %v7999
    %8128 = vst [vmem:[#allocation4 + $0x1e8] sm:$0xff] %v8000
    %8129 = vst [vmem:[#allocation4 + $0x1f0] sm:$0xff] %v8001
    %8130 = vst [vmem:[#allocation4 + $0x1f8] sm:$0xff] %v8002
    // Predicated region
    $region22: #{tpu_custom_call.1} parent=1 // pred_check
      _
    $region23: #{tpu_custom_call.1} parent=1 // pred_check_branch
      %8132 = sbr.rel (0) target = $region25
    $region24: #{tpu_custom_call.1} parent=1 // pred_region
      %s8134 = ssub.s32 24576, 24576
      %8135 = vsyncadd [#allocation3], %s8134
      %s8136 = sshll.u32 [#allocation2], 4
      %s8137 = int_to_ptr.vmem [resolvable:$true] %s8136
      %8142 = dma.vmem_to_hbm [thread:$0]  %s8137, 24576, %s5, [#allocation3], 384, 384, 24
    $region25: #{tpu_custom_call.1} parent=1 // pred_fallthru
      _
    // Predicated region
    $region26: #{tpu_custom_call.1} parent=1 // pred_check
      _
    $region27: #{tpu_custom_call.1} parent=1 // pred_check_branch
      %8144 = sbr.rel (0) target = $region29
    $region28: #{tpu_custom_call.1} parent=1 // pred_region
      %s8146 = ssub.s32 8192, 8192
      %8147 = vsyncadd [#allocation5], %s8146
      %s8148 = sshll.u32 [#allocation4], 4
      %s8149 = int_to_ptr.vmem [resolvable:$true] %s8148
      %8154 = dma.vmem_to_hbm [thread:$0]  %s8149, 8192, %s6, [#allocation5], 128, 128, 8
    $region29: #{tpu_custom_call.1} parent=1 // pred_fallthru
      _
    // Predicated region
    $region30: #{tpu_custom_call.1} parent=1 // pred_check
      _
    $region31: #{tpu_custom_call.1} parent=1 // pred_check_branch
      %8156 = sbr.rel (0) target = $region33
    $region32: #{tpu_custom_call.1} parent=1 // pred_region
      %8157 = dma.done [#allocation3], 24576
    $region33: #{tpu_custom_call.1} parent=1 // pred_fallthru
      _
    // Predicated region
    $region34: #{tpu_custom_call.1} parent=1 // pred_check
      _
    $region35: #{tpu_custom_call.1} parent=1 // pred_check_branch
      %8159 = sbr.rel (0) target = $region37
    $region36: #{tpu_custom_call.1} parent=1 // pred_region
      %8160 = dma.done [#allocation5], 8192
    $region37: #{tpu_custom_call.1} parent=1 // pred_fallthru
      _
    %8161 = vsyncpa [#allocation3], 1
    %8162 = vsyncpa [#allocation5], 1

</llo_original>
